<compile_context>
chip_gen: v7x
topology: tpu7x:2x2x1
jax: 0.10.0
libtpu: 0.0.40
codegen_flags: <defaults>
</compile_context>

<pallas_src>
import math
from functools import partial

import jax
import jax.numpy as jnp
from jax.experimental import pallas as pl
from jax.experimental.pallas import tpu as pltpu

LN_EPS = 1e-5  # PyTorch LayerNorm default eps
F32 = jnp.float32
BF16 = jnp.bfloat16


# ------------------------------ kernel helpers ------------------------------

def _layer_norm(y, g, b):
    mu = jnp.mean(y, axis=-1, keepdims=True)
    var = jnp.mean(jnp.square(y - mu), axis=-1, keepdims=True)
    return (y - mu) * jax.lax.rsqrt(var + LN_EPS) * g + b


def _mha_heads(Q, K, V, n_heads, head_dim, key_bias=None):
    """Multi-head attention on one sequence.  Q,K,V: (L, n_heads*head_dim) f32.
    Returns the concatenated per-head contexts (Lq, n_heads*head_dim) f32."""
    scale = 1.0 / math.sqrt(head_dim)
    heads = []
    for h in range(n_heads):                        # static unroll over heads
        lo, hi = h * head_dim, (h + 1) * head_dim
        s = jax.lax.dot_general(                    # Qh @ Kh^T without transpose
            Q[:, lo:hi].astype(BF16), K[:, lo:hi].astype(BF16),
            (((1,), (1,)), ((), ())), preferred_element_type=F32) * scale
        if key_bias is not None:
            s = s + key_bias                        # mask padded key columns
        s = s - jnp.max(s, axis=-1, keepdims=True)
        p = jnp.exp(s)
        p = p * pl.reciprocal(jnp.sum(p, axis=-1, keepdims=True), approx=True)
        heads.append(jnp.dot(p.astype(BF16), V[:, lo:hi].astype(BF16),
                             preferred_element_type=F32))
    return jnp.concatenate(heads, axis=-1)


# ------------------------- fused co-attention block --------------------------

def _coattn_block_kernel(
        xq_ref, xkv_ref,
        wmq_ref, bmq_ref, wlq_ref, blq_ref,          # query-stream MLP + co_linear
        wmk_ref, bmk_ref, wlk_ref, blk_ref,          # kv-stream MLP + co_linear
        wq_ref, bq_ref, wk_ref, bk_ref, wv_ref, bv_ref, wo_ref, bo_ref,
        ln1g_ref, ln1b_ref,
        w1_ref, b1_ref, w2_ref, b2_ref, ln2g_ref, ln2b_ref,
        o_ref,
        *, B, L, len_v, len_s, n_heads, head_dim, d_model):
    pid = pl.program_id(0)
    q_len = jnp.where(pid == 0, len_v, len_s)        # valid query rows
    kv_len = jnp.where(pid == 0, len_s, len_v)       # valid key/value rows

    d_feat = xq_ref.shape[-1]

    def mlp_lin(x_ref, wm, bm, wl, bl):
        # Linear(512->128) -> ReLU (Dropout = identity) -> co_linear(128->128)
        x = x_ref[0].reshape(B * L, d_feat).astype(BF16)
        h = jnp.dot(x, wm[0], preferred_element_type=F32) + bm[0]
        h = jnp.maximum(h, 0.0)
        return jnp.dot(h.astype(BF16), wl[0], preferred_element_type=F32) + bl[0]

    q_in = mlp_lin(xq_ref, wmq_ref, bmq_ref, wlq_ref, blq_ref)     # (B*L, d_model)
    kv_in = mlp_lin(xkv_ref, wmk_ref, bmk_ref, wlk_ref, blk_ref)   # (B*L, d_model)

    # Batched Q/K/V projections over the full (B*L, d_model) slab.
    Q = jnp.dot(q_in.astype(BF16), wq_ref[0], preferred_element_type=F32) + bq_ref[0]
    K = jnp.dot(kv_in.astype(BF16), wk_ref[0], preferred_element_type=F32) + bk_ref[0]
    V = jnp.dot(kv_in.astype(BF16), wv_ref[0], preferred_element_type=F32) + bv_ref[0]

    key_ids = jax.lax.broadcasted_iota(jnp.int32, (1, L), 1)
    key_bias = jnp.where(key_ids < kv_len, 0.0, -1e30)             # (1, L) f32

    ctx_rows = []
    for b in range(B):                                # static unroll over batch
        sl = slice(b * L, (b + 1) * L)
        ctx_rows.append(_mha_heads(Q[sl], K[sl], V[sl], n_heads, head_dim, key_bias))
    ctx = jnp.concatenate(ctx_rows, axis=0)           # (B*L, d_inner)

    # single output projection across all heads / batch rows
    attn = jnp.dot(ctx.astype(BF16), wo_ref[0], preferred_element_type=F32) + bo_ref[0]

    # residual (post-co_linear query features) + LayerNorm
    y = _layer_norm(attn + q_in, ln1g_ref[0], ln1b_ref[0])

    # position-wise FFN + residual + LayerNorm
    h1 = jnp.maximum(
        jnp.dot(y.astype(BF16), w1_ref[0], preferred_element_type=F32) + b1_ref[0], 0.0)
    z = jnp.dot(h1.astype(BF16), w2_ref[0], preferred_element_type=F32) + b2_ref[0]
    z = _layer_norm(z + y, ln2g_ref[0], ln2b_ref[0])  # (B*L, d_model)

    # torch.mean(content, -2) over the *valid* sequence positions only
    z3 = z.reshape(B, L, d_model)
    row_ids = jax.lax.broadcasted_iota(jnp.int32, (B, L, 1), 1)
    row_mask = (row_ids < q_len).astype(F32)
    content = jnp.sum(z3 * row_mask, axis=1) / q_len.astype(F32)   # (B, d_model)
    o_ref[0] = content.astype(o_ref.dtype)


def coattn_block(x_stacked, p, *, B, L, len_v, len_s, n_heads=4):
    d_model = p["w_lin"].shape[-1]
    d_inner = p["wq"].shape[-1]
    head_dim = d_inner // n_heads

    def sI(a):                                   # block of the current stream i
        shp = a.shape[1:]
        return pl.BlockSpec((1,) + shp, lambda i: (i,) + (0,) * len(shp))

    def sJ(a):                                   # block of the other stream 1-i
        shp = a.shape[1:]
        return pl.BlockSpec((1,) + shp, lambda i: (1 - i,) + (0,) * len(shp))

    args = [
        x_stacked, x_stacked,
        p["w_mlp"], p["b_mlp"], p["w_lin"], p["b_lin"],
        p["w_mlp"], p["b_mlp"], p["w_lin"], p["b_lin"],
        p["wq"], p["bq"], p["wk"], p["bk"], p["wv"], p["bv"], p["wo"], p["bo"],
        p["ln1_g"], p["ln1_b"],
        p["w1"], p["b1"], p["w2"], p["b2"], p["ln2_g"], p["ln2_b"],
    ]
    specs = [
        sI(x_stacked), sJ(x_stacked),
        sI(p["w_mlp"]), sI(p["b_mlp"]), sI(p["w_lin"]), sI(p["b_lin"]),
        sJ(p["w_mlp"]), sJ(p["b_mlp"]), sJ(p["w_lin"]), sJ(p["b_lin"]),
        sI(p["wq"]), sI(p["bq"]), sI(p["wk"]), sI(p["bk"]), sI(p["wv"]), sI(p["bv"]),
        sI(p["wo"]), sI(p["bo"]),
        sI(p["ln1_g"]), sI(p["ln1_b"]),
        sI(p["w1"]), sI(p["b1"]), sI(p["w2"]), sI(p["b2"]), sI(p["ln2_g"]), sI(p["ln2_b"]),
    ]
    return pl.pallas_call(
        partial(_coattn_block_kernel, B=B, L=L, len_v=len_v, len_s=len_s,
                n_heads=n_heads, head_dim=head_dim, d_model=d_model),
        out_shape=jax.ShapeDtypeStruct((2, B, d_model), jnp.float32),
        grid=(2,),
        in_specs=specs,
        out_specs=pl.BlockSpec((1, B, d_model), lambda i: (i, 0, 0)),
        compiler_params=pltpu.CompilerParams(dimension_semantics=("parallel",)),
    )(*args)


# --------------- fused TransformerEncoderLayer + final mean ------------------

def _trm_kernel(c_ref, wq_ref, bq_ref, wk_ref, bk_ref, wv_ref, bv_ref,
                wo_ref, bo_ref, ln1g_ref, ln1b_ref,
                w1_ref, b1_ref, w2_ref, b2_ref, ln2g_ref, ln2b_ref,
                o_ref, *, B, n_heads, head_dim, d_model):
    cs = c_ref[...]                                  # (2, B, d): [content_v, content_t]
    # fused sequence per batch is (t, v); flatten rows as [t_0..t_{B-1}, v_0..v_{B-1}]
    x = jnp.concatenate([cs[1], cs[0]], axis=0)      # (2B, d)

    xb = x.astype(BF16)
    Q = jnp.dot(xb, wq_ref[...], preferred_element_type=F32) + bq_ref[...]
    K = jnp.dot(xb, wk_ref[...], preferred_element_type=F32) + bk_ref[...]
    V = jnp.dot(xb, wv_ref[...], preferred_element_type=F32) + bv_ref[...]

    ctx_t, ctx_v = [], []
    for b in range(B):                               # static unroll over batch
        def pick(M):                                 # rows {t_b, v_b} of this batch
            return jnp.concatenate([M[b:b + 1], M[B + b:B + b + 1]], axis=0)
        cb = _mha_heads(pick(Q), pick(K), pick(V), n_heads, head_dim)   # (2, d)
        ctx_t.append(cb[0:1])
        ctx_v.append(cb[1:2])
    ctx = jnp.concatenate(ctx_t + ctx_v, axis=0)     # (2B, d), same row layout as x

    attn = jnp.dot(ctx.astype(BF16), wo_ref[...], preferred_element_type=F32) + bo_ref[...]
    y = _layer_norm(x + attn, ln1g_ref[...], ln1b_ref[...])

    h1 = jnp.maximum(
        jnp.dot(y.astype(BF16), w1_ref[...], preferred_element_type=F32) + b1_ref[...], 0.0)
    z = jnp.dot(h1.astype(BF16), w2_ref[...], preferred_element_type=F32) + b2_ref[...]
    z = _layer_norm(y + z, ln2g_ref[...], ln2b_ref[...])               # (2B, d)

    # torch.mean(fusion, 1): average the two sequence positions per batch row
    o_ref[...] = (0.5 * (z[:B] + z[B:])).astype(o_ref.dtype)


def trm_block(content, p, *, B, n_heads=2):
    d_model = p["wq"].shape[0]
    head_dim = d_model // n_heads

    def full(a):
        shp = a.shape
        return pl.BlockSpec(shp, lambda i: (0,) * len(shp))

    args = [content, p["wq"], p["bq"], p["wk"], p["bk"], p["wv"], p["bv"],
            p["wo"], p["bo"], p["ln1_g"], p["ln1_b"],
            p["w1"], p["b1"], p["w2"], p["b2"], p["ln2_g"], p["ln2_b"]]
    return pl.pallas_call(
        partial(_trm_kernel, B=B, n_heads=n_heads, head_dim=head_dim, d_model=d_model),
        out_shape=jax.ShapeDtypeStruct((B, d_model), jnp.float32),
        grid=(1,),
        in_specs=[full(a) for a in args],
        out_specs=pl.BlockSpec((B, d_model), lambda i: (0, 0)),
    )(*args)


# --------------------------- parameter creation ----------------------------

def init_params(key):
    keys = iter(jax.random.split(key, 64))

    def W(shape, scale=0.05):                         # MXU operands stored in bf16
        return (scale * jax.random.normal(next(keys), shape, jnp.float32)).astype(BF16)

    def Bv(shape, scale=0.05):                        # biases / LN params stay f32
        return scale * jax.random.normal(next(keys), shape, jnp.float32)

    d, d_in, d_inner, d_ff_co, d_ff_trm = 128, 512, 4 * 128, 128, 2048

    # stream 0 = visual (mlp_img, linear_v, mha_v, ffn_v); stream 1 = text.
    co = dict(
        w_mlp=W((2, d_in, d)), b_mlp=Bv((2, 1, d)),
        w_lin=W((2, d, d)),    b_lin=Bv((2, 1, d)),
        wq=W((2, d, d_inner)), bq=Bv((2, 1, d_inner)),
        wk=W((2, d, d_inner)), bk=Bv((2, 1, d_inner)),
        wv=W((2, d, d_inner)), bv=Bv((2, 1, d_inner)),
        wo=W((2, d_inner, d)), bo=Bv((2, 1, d)),
        ln1_g=jnp.ones((2, 1, d), F32), ln1_b=jnp.zeros((2, 1, d), F32),
        w1=W((2, d, d_ff_co)), b1=Bv((2, 1, d_ff_co)),
        w2=W((2, d_ff_co, d)), b2=Bv((2, 1, d)),
        ln2_g=jnp.ones((2, 1, d), F32), ln2_b=jnp.zeros((2, 1, d), F32),
    )
    # TransformerEncoderLayer(d_model=128, nhead=2, dim_feedforward=2048, post-norm, ReLU)
    trm = dict(
        wq=W((d, d)), bq=Bv((1, d)),
        wk=W((d, d)), bk=Bv((1, d)),
        wv=W((d, d)), bv=Bv((1, d)),
        wo=W((d, d)), bo=Bv((1, d)),
        ln1_g=jnp.ones((1, d), F32), ln1_b=jnp.zeros((1, d), F32),
        w1=W((d, d_ff_trm)), b1=Bv((1, d_ff_trm)),
        w2=W((d_ff_trm, d)), b2=Bv((1, d)),
        ln2_g=jnp.ones((1, d), F32), ln2_b=jnp.zeros((1, d), F32),
    )
    return dict(co=co, trm=trm)


# -------------------------------- forward ----------------------------------

def video_forward(params, all_phrase_semantic_fea, raw_visual_frames):
    B, Ls, _ = all_phrase_semantic_fea.shape
    _, Lv, _ = raw_visual_frames.shape

    # pad both streams to one shared sublane-friendly length; padded key columns
    # are masked in attention and the per-sequence mean divides by the true length.
    L = ((max(Ls, Lv) + 7) // 8) * 8
    vis = jnp.pad(raw_visual_frames, ((0, 0), (0, L - Lv), (0, 0)))
    txt = jnp.pad(all_phrase_semantic_fea, ((0, 0), (0, L - Ls), (0, 0)))
    x_stacked = jnp.stack([vis, txt], axis=0)                   # (2, B, L, 512)

    content = coattn_block(x_stacked, params["co"], B=B, L=L,
                           len_v=Lv, len_s=Ls, n_heads=4)       # (2, B, 128)
    return trm_block(content, params["trm"], B=B, n_heads=2)    # (B, 128)


# ---------------------------------- main ------------------------------------

if __name__ == "__main__":
    key = jax.random.PRNGKey(0)
    k_par, k_text, k_vis = jax.random.split(key, 3)

    params = init_params(k_par)

    B, Ls, Lv = 2, 8, 16  # small seq lengths (module's visual_len=83 in full config)
    all_phrase_semantic_fea = jax.random.normal(k_text, (B, Ls, 512), jnp.float32)
    raw_visual_frames = jax.random.normal(k_vis, (B, Lv, 512), jnp.float32)

    fwd = jax.jit(video_forward)
    out = jax.block_until_ready(fwd(params, all_phrase_semantic_fea, raw_visual_frames))
    assert out.shape == (B, 128), out.shape
    assert bool(jnp.all(jnp.isfinite(out)))
    print("KERNEL_OK")
</pallas_src>

<mosaic_0001>
module attributes {stable_mosaic.version = 11 : i64} {
  func.func @_trm_kernel(%arg0: i32, %arg1: memref<2x2x128xf32, #tpu.memory_space<vmem>>, %arg2: memref<128x128xbf16, #tpu.memory_space<vmem>>, %arg3: memref<1x128xf32, #tpu.memory_space<vmem>>, %arg4: memref<128x128xbf16, #tpu.memory_space<vmem>>, %arg5: memref<1x128xf32, #tpu.memory_space<vmem>>, %arg6: memref<128x128xbf16, #tpu.memory_space<vmem>>, %arg7: memref<1x128xf32, #tpu.memory_space<vmem>>, %arg8: memref<128x128xbf16, #tpu.memory_space<vmem>>, %arg9: memref<1x128xf32, #tpu.memory_space<vmem>>, %arg10: memref<1x128xf32, #tpu.memory_space<vmem>>, %arg11: memref<1x128xf32, #tpu.memory_space<vmem>>, %arg12: memref<128x2048xbf16, #tpu.memory_space<vmem>>, %arg13: memref<1x2048xf32, #tpu.memory_space<vmem>>, %arg14: memref<2048x128xbf16, #tpu.memory_space<vmem>>, %arg15: memref<1x128xf32, #tpu.memory_space<vmem>>, %arg16: memref<1x128xf32, #tpu.memory_space<vmem>>, %arg17: memref<1x128xf32, #tpu.memory_space<vmem>>, %arg18: memref<2x128xf32, #tpu.memory_space<vmem>>) attributes {dimension_semantics = [#tpu.dimension_semantics<arbitrary>], iteration_bounds = array<i64: 1>, scalar_prefetch = 0 : i64, scratch_operands = 0 : i64, tpu.core_type = #tpu.core_type<tc>, window_params = [{pipeline_mode = #tpu.pipeline_mode<synchronous>, transform_indices = @transform_0, window_bounds = array<i64: 2, 2, 128>}, {pipeline_mode = #tpu.pipeline_mode<synchronous>, transform_indices = @transform_1, window_bounds = array<i64: 128, 128>}, {pipeline_mode = #tpu.pipeline_mode<synchronous>, transform_indices = @transform_2, window_bounds = array<i64: 1, 128>}, {pipeline_mode = #tpu.pipeline_mode<synchronous>, transform_indices = @transform_3, window_bounds = array<i64: 128, 128>}, {pipeline_mode = #tpu.pipeline_mode<synchronous>, transform_indices = @transform_4, window_bounds = array<i64: 1, 128>}, {pipeline_mode = #tpu.pipeline_mode<synchronous>, transform_indices = @transform_5, window_bounds = array<i64: 128, 128>}, {pipeline_mode = #tpu.pipeline_mode<synchronous>, transform_indices = @transform_6, window_bounds = array<i64: 1, 128>}, {pipeline_mode = #tpu.pipeline_mode<synchronous>, transform_indices = @transform_7, window_bounds = array<i64: 128, 128>}, {pipeline_mode = #tpu.pipeline_mode<synchronous>, transform_indices = @transform_8, window_bounds = array<i64: 1, 128>}, {pipeline_mode = #tpu.pipeline_mode<synchronous>, transform_indices = @transform_9, window_bounds = array<i64: 1, 128>}, {pipeline_mode = #tpu.pipeline_mode<synchronous>, transform_indices = @transform_10, window_bounds = array<i64: 1, 128>}, {pipeline_mode = #tpu.pipeline_mode<synchronous>, transform_indices = @transform_11, window_bounds = array<i64: 128, 2048>}, {pipeline_mode = #tpu.pipeline_mode<synchronous>, transform_indices = @transform_12, window_bounds = array<i64: 1, 2048>}, {pipeline_mode = #tpu.pipeline_mode<synchronous>, transform_indices = @transform_13, window_bounds = array<i64: 2048, 128>}, {pipeline_mode = #tpu.pipeline_mode<synchronous>, transform_indices = @transform_14, window_bounds = array<i64: 1, 128>}, {pipeline_mode = #tpu.pipeline_mode<synchronous>, transform_indices = @transform_15, window_bounds = array<i64: 1, 128>}, {pipeline_mode = #tpu.pipeline_mode<synchronous>, transform_indices = @transform_16, window_bounds = array<i64: 1, 128>}, {pipeline_mode = #tpu.pipeline_mode<synchronous>, transform_indices = @transform_17, window_bounds = array<i64: 2, 128>}]} {
    %c0 = arith.constant 0 : index
    %c0_0 = arith.constant 0 : index
    %c0_1 = arith.constant 0 : index
    %0 = vector.load %arg1[%c0, %c0_0, %c0_1] : memref<2x2x128xf32, #tpu.memory_space<vmem>>, vector<2x2x128xf32>
    %1 = vector.extract_strided_slice %0 {offsets = [1, 0, 0], sizes = [1, 2, 128], strides = [1, 1, 1]} : vector<2x2x128xf32> to vector<1x2x128xf32>
    %2 = vector.shape_cast %1 : vector<1x2x128xf32> to vector<2x128xf32>
    %3 = vector.extract_strided_slice %0 {offsets = [0, 0, 0], sizes = [1, 2, 128], strides = [1, 1, 1]} : vector<2x2x128xf32> to vector<1x2x128xf32>
    %4 = vector.shape_cast %3 : vector<1x2x128xf32> to vector<2x128xf32>
    %5 = tpu.concatenate %2, %4 in 0 : vector<2x128xf32>, vector<2x128xf32> -> vector<4x128xf32>
    %6 = arith.truncf %5 : vector<4x128xf32> to vector<4x128xbf16>
    %c0_2 = arith.constant 0 : index
    %c0_3 = arith.constant 0 : index
    %7 = vector.load %arg2[%c0_2, %c0_3] : memref<128x128xbf16, #tpu.memory_space<vmem>>, vector<128x128xbf16>
    %cst = arith.constant dense<0.000000e+00> : vector<4x128xf32>
    %8 = tpu.matmul %6, %7, %cst {dimension_numbers = #tpu.dot_dimension_numbers<[1], [0], [0], [1], [0, 0, 1, 1], [], []>} : vector<4x128xbf16>, vector<128x128xbf16>, vector<4x128xf32> -> vector<4x128xf32>
    %c0_4 = arith.constant 0 : index
    %c0_5 = arith.constant 0 : index
    %9 = vector.load %arg3[%c0_4, %c0_5] : memref<1x128xf32, #tpu.memory_space<vmem>>, vector<1x128xf32>
    %10 = vector.broadcast %9 : vector<1x128xf32> to vector<4x128xf32>
    %11 = arith.addf %8, %10 : vector<4x128xf32>
    %c0_6 = arith.constant 0 : index
    %c0_7 = arith.constant 0 : index
    %12 = vector.load %arg4[%c0_6, %c0_7] : memref<128x128xbf16, #tpu.memory_space<vmem>>, vector<128x128xbf16>
    %cst_8 = arith.constant dense<0.000000e+00> : vector<4x128xf32>
    %13 = tpu.matmul %6, %12, %cst_8 {dimension_numbers = #tpu.dot_dimension_numbers<[1], [0], [0], [1], [0, 0, 1, 1], [], []>} : vector<4x128xbf16>, vector<128x128xbf16>, vector<4x128xf32> -> vector<4x128xf32>
    %c0_9 = arith.constant 0 : index
    %c0_10 = arith.constant 0 : index
    %14 = vector.load %arg5[%c0_9, %c0_10] : memref<1x128xf32, #tpu.memory_space<vmem>>, vector<1x128xf32>
    %15 = vector.broadcast %14 : vector<1x128xf32> to vector<4x128xf32>
    %16 = arith.addf %13, %15 : vector<4x128xf32>
    %c0_11 = arith.constant 0 : index
    %c0_12 = arith.constant 0 : index
    %17 = vector.load %arg6[%c0_11, %c0_12] : memref<128x128xbf16, #tpu.memory_space<vmem>>, vector<128x128xbf16>
    %cst_13 = arith.constant dense<0.000000e+00> : vector<4x128xf32>
    %18 = tpu.matmul %6, %17, %cst_13 {dimension_numbers = #tpu.dot_dimension_numbers<[1], [0], [0], [1], [0, 0, 1, 1], [], []>} : vector<4x128xbf16>, vector<128x128xbf16>, vector<4x128xf32> -> vector<4x128xf32>
    %c0_14 = arith.constant 0 : index
    %c0_15 = arith.constant 0 : index
    %19 = vector.load %arg7[%c0_14, %c0_15] : memref<1x128xf32, #tpu.memory_space<vmem>>, vector<1x128xf32>
    %20 = vector.broadcast %19 : vector<1x128xf32> to vector<4x128xf32>
    %21 = arith.addf %18, %20 : vector<4x128xf32>
    %22 = vector.extract_strided_slice %11 {offsets = [0, 0], sizes = [1, 128], strides = [1, 1]} : vector<4x128xf32> to vector<1x128xf32>
    %23 = vector.extract_strided_slice %11 {offsets = [2, 0], sizes = [1, 128], strides = [1, 1]} : vector<4x128xf32> to vector<1x128xf32>
    %24 = tpu.concatenate %22, %23 in 0 : vector<1x128xf32>, vector<1x128xf32> -> vector<2x128xf32>
    %25 = vector.extract_strided_slice %16 {offsets = [0, 0], sizes = [1, 128], strides = [1, 1]} : vector<4x128xf32> to vector<1x128xf32>
    %26 = vector.extract_strided_slice %16 {offsets = [2, 0], sizes = [1, 128], strides = [1, 1]} : vector<4x128xf32> to vector<1x128xf32>
    %27 = tpu.concatenate %25, %26 in 0 : vector<1x128xf32>, vector<1x128xf32> -> vector<2x128xf32>
    %28 = vector.extract_strided_slice %21 {offsets = [0, 0], sizes = [1, 128], strides = [1, 1]} : vector<4x128xf32> to vector<1x128xf32>
    %29 = vector.extract_strided_slice %21 {offsets = [2, 0], sizes = [1, 128], strides = [1, 1]} : vector<4x128xf32> to vector<1x128xf32>
    %30 = tpu.concatenate %28, %29 in 0 : vector<1x128xf32>, vector<1x128xf32> -> vector<2x128xf32>
    %31 = vector.extract_strided_slice %24 {offsets = [0, 0], sizes = [2, 64], strides = [1, 1]} : vector<2x128xf32> to vector<2x64xf32>
    %32 = arith.truncf %31 : vector<2x64xf32> to vector<2x64xbf16>
    %33 = vector.extract_strided_slice %27 {offsets = [0, 0], sizes = [2, 64], strides = [1, 1]} : vector<2x128xf32> to vector<2x64xf32>
    %34 = arith.truncf %33 : vector<2x64xf32> to vector<2x64xbf16>
    %cst_16 = arith.constant dense<0.000000e+00> : vector<2x2xf32>
    %35 = tpu.matmul %32, %34, %cst_16 {dimension_numbers = #tpu.dot_dimension_numbers<[1], [1], [0], [0], [0, 0, 1, 0], [], []>} : vector<2x64xbf16>, vector<2x64xbf16>, vector<2x2xf32> -> vector<2x2xf32>
    %cst_17 = arith.constant 1.250000e-01 : f32
    %36 = vector.broadcast %cst_17 : f32 to vector<2x2xf32>
    %37 = arith.mulf %35, %36 : vector<2x2xf32>
    %cst_18 = arith.constant dense<0xFF800000> : vector<2xf32>
    %38 = vector.multi_reduction <maximumf>, %37, %cst_18 [1] : vector<2x2xf32> to vector<2xf32>
    %39 = vector.shape_cast %38 : vector<2xf32> to vector<2x1xf32>
    %40 = vector.broadcast %39 : vector<2x1xf32> to vector<2x2xf32>
    %41 = arith.subf %37, %40 : vector<2x2xf32>
    %42 = math.exp %41 : vector<2x2xf32>
    %cst_19 = arith.constant dense<0.000000e+00> : vector<2xf32>
    %43 = vector.multi_reduction <add>, %42, %cst_19 [1] : vector<2x2xf32> to vector<2xf32>
    %44 = vector.shape_cast %43 : vector<2xf32> to vector<2x1xf32>
    %45 = tpu.reciprocal %44 {approx = true} : vector<2x1xf32> -> vector<2x1xf32>
    %46 = vector.broadcast %45 : vector<2x1xf32> to vector<2x2xf32>
    %47 = arith.mulf %42, %46 : vector<2x2xf32>
    %48 = arith.truncf %47 : vector<2x2xf32> to vector<2x2xbf16>
    %49 = vector.extract_strided_slice %30 {offsets = [0, 0], sizes = [2, 64], strides = [1, 1]} : vector<2x128xf32> to vector<2x64xf32>
    %50 = arith.truncf %49 : vector<2x64xf32> to vector<2x64xbf16>
    %cst_20 = arith.constant dense<0.000000e+00> : vector<2x64xf32>
    %51 = tpu.matmul %48, %50, %cst_20 {dimension_numbers = #tpu.dot_dimension_numbers<[1], [0], [0], [1], [0, 0, 1, 1], [], []>} : vector<2x2xbf16>, vector<2x64xbf16>, vector<2x64xf32> -> vector<2x64xf32>
    %52 = vector.extract_strided_slice %24 {offsets = [0, 64], sizes = [2, 64], strides = [1, 1]} : vector<2x128xf32> to vector<2x64xf32>
    %53 = arith.truncf %52 : vector<2x64xf32> to vector<2x64xbf16>
    %54 = vector.extract_strided_slice %27 {offsets = [0, 64], sizes = [2, 64], strides = [1, 1]} : vector<2x128xf32> to vector<2x64xf32>
    %55 = arith.truncf %54 : vector<2x64xf32> to vector<2x64xbf16>
    %cst_21 = arith.constant dense<0.000000e+00> : vector<2x2xf32>
    %56 = tpu.matmul %53, %55, %cst_21 {dimension_numbers = #tpu.dot_dimension_numbers<[1], [1], [0], [0], [0, 0, 1, 0], [], []>} : vector<2x64xbf16>, vector<2x64xbf16>, vector<2x2xf32> -> vector<2x2xf32>
    %cst_22 = arith.constant 1.250000e-01 : f32
    %57 = vector.broadcast %cst_22 : f32 to vector<2x2xf32>
    %58 = arith.mulf %56, %57 : vector<2x2xf32>
    %cst_23 = arith.constant dense<0xFF800000> : vector<2xf32>
    %59 = vector.multi_reduction <maximumf>, %58, %cst_23 [1] : vector<2x2xf32> to vector<2xf32>
    %60 = vector.shape_cast %59 : vector<2xf32> to vector<2x1xf32>
    %61 = vector.broadcast %60 : vector<2x1xf32> to vector<2x2xf32>
    %62 = arith.subf %58, %61 : vector<2x2xf32>
    %63 = math.exp %62 : vector<2x2xf32>
    %cst_24 = arith.constant dense<0.000000e+00> : vector<2xf32>
    %64 = vector.multi_reduction <add>, %63, %cst_24 [1] : vector<2x2xf32> to vector<2xf32>
    %65 = vector.shape_cast %64 : vector<2xf32> to vector<2x1xf32>
    %66 = tpu.reciprocal %65 {approx = true} : vector<2x1xf32> -> vector<2x1xf32>
    %67 = vector.broadcast %66 : vector<2x1xf32> to vector<2x2xf32>
    %68 = arith.mulf %63, %67 : vector<2x2xf32>
    %69 = arith.truncf %68 : vector<2x2xf32> to vector<2x2xbf16>
    %70 = vector.extract_strided_slice %30 {offsets = [0, 64], sizes = [2, 64], strides = [1, 1]} : vector<2x128xf32> to vector<2x64xf32>
    %71 = arith.truncf %70 : vector<2x64xf32> to vector<2x64xbf16>
    %cst_25 = arith.constant dense<0.000000e+00> : vector<2x64xf32>
    %72 = tpu.matmul %69, %71, %cst_25 {dimension_numbers = #tpu.dot_dimension_numbers<[1], [0], [0], [1], [0, 0, 1, 1], [], []>} : vector<2x2xbf16>, vector<2x64xbf16>, vector<2x64xf32> -> vector<2x64xf32>
    %73 = tpu.concatenate %51, %72 in 1 : vector<2x64xf32>, vector<2x64xf32> -> vector<2x128xf32>
    %74 = vector.extract_strided_slice %73 {offsets = [0, 0], sizes = [1, 128], strides = [1, 1]} : vector<2x128xf32> to vector<1x128xf32>
    %75 = vector.extract_strided_slice %73 {offsets = [1, 0], sizes = [1, 128], strides = [1, 1]} : vector<2x128xf32> to vector<1x128xf32>
    %76 = vector.extract_strided_slice %11 {offsets = [1, 0], sizes = [1, 128], strides = [1, 1]} : vector<4x128xf32> to vector<1x128xf32>
    %77 = vector.extract_strided_slice %11 {offsets = [3, 0], sizes = [1, 128], strides = [1, 1]} : vector<4x128xf32> to vector<1x128xf32>
    %78 = tpu.concatenate %76, %77 in 0 : vector<1x128xf32>, vector<1x128xf32> -> vector<2x128xf32>
    %79 = vector.extract_strided_slice %16 {offsets = [1, 0], sizes = [1, 128], strides = [1, 1]} : vector<4x128xf32> to vector<1x128xf32>
    %80 = vector.extract_strided_slice %16 {offsets = [3, 0], sizes = [1, 128], strides = [1, 1]} : vector<4x128xf32> to vector<1x128xf32>
    %81 = tpu.concatenate %79, %80 in 0 : vector<1x128xf32>, vector<1x128xf32> -> vector<2x128xf32>
    %82 = vector.extract_strided_slice %21 {offsets = [1, 0], sizes = [1, 128], strides = [1, 1]} : vector<4x128xf32> to vector<1x128xf32>
    %83 = vector.extract_strided_slice %21 {offsets = [3, 0], sizes = [1, 128], strides = [1, 1]} : vector<4x128xf32> to vector<1x128xf32>
    %84 = tpu.concatenate %82, %83 in 0 : vector<1x128xf32>, vector<1x128xf32> -> vector<2x128xf32>
    %85 = vector.extract_strided_slice %78 {offsets = [0, 0], sizes = [2, 64], strides = [1, 1]} : vector<2x128xf32> to vector<2x64xf32>
    %86 = arith.truncf %85 : vector<2x64xf32> to vector<2x64xbf16>
    %87 = vector.extract_strided_slice %81 {offsets = [0, 0], sizes = [2, 64], strides = [1, 1]} : vector<2x128xf32> to vector<2x64xf32>
    %88 = arith.truncf %87 : vector<2x64xf32> to vector<2x64xbf16>
    %cst_26 = arith.constant dense<0.000000e+00> : vector<2x2xf32>
    %89 = tpu.matmul %86, %88, %cst_26 {dimension_numbers = #tpu.dot_dimension_numbers<[1], [1], [0], [0], [0, 0, 1, 0], [], []>} : vector<2x64xbf16>, vector<2x64xbf16>, vector<2x2xf32> -> vector<2x2xf32>
    %cst_27 = arith.constant 1.250000e-01 : f32
    %90 = vector.broadcast %cst_27 : f32 to vector<2x2xf32>
    %91 = arith.mulf %89, %90 : vector<2x2xf32>
    %cst_28 = arith.constant dense<0xFF800000> : vector<2xf32>
    %92 = vector.multi_reduction <maximumf>, %91, %cst_28 [1] : vector<2x2xf32> to vector<2xf32>
    %93 = vector.shape_cast %92 : vector<2xf32> to vector<2x1xf32>
    %94 = vector.broadcast %93 : vector<2x1xf32> to vector<2x2xf32>
    %95 = arith.subf %91, %94 : vector<2x2xf32>
    %96 = math.exp %95 : vector<2x2xf32>
    %cst_29 = arith.constant dense<0.000000e+00> : vector<2xf32>
    %97 = vector.multi_reduction <add>, %96, %cst_29 [1] : vector<2x2xf32> to vector<2xf32>
    %98 = vector.shape_cast %97 : vector<2xf32> to vector<2x1xf32>
    %99 = tpu.reciprocal %98 {approx = true} : vector<2x1xf32> -> vector<2x1xf32>
    %100 = vector.broadcast %99 : vector<2x1xf32> to vector<2x2xf32>
    %101 = arith.mulf %96, %100 : vector<2x2xf32>
    %102 = arith.truncf %101 : vector<2x2xf32> to vector<2x2xbf16>
    %103 = vector.extract_strided_slice %84 {offsets = [0, 0], sizes = [2, 64], strides = [1, 1]} : vector<2x128xf32> to vector<2x64xf32>
    %104 = arith.truncf %103 : vector<2x64xf32> to vector<2x64xbf16>
    %cst_30 = arith.constant dense<0.000000e+00> : vector<2x64xf32>
    %105 = tpu.matmul %102, %104, %cst_30 {dimension_numbers = #tpu.dot_dimension_numbers<[1], [0], [0], [1], [0, 0, 1, 1], [], []>} : vector<2x2xbf16>, vector<2x64xbf16>, vector<2x64xf32> -> vector<2x64xf32>
    %106 = vector.extract_strided_slice %78 {offsets = [0, 64], sizes = [2, 64], strides = [1, 1]} : vector<2x128xf32> to vector<2x64xf32>
    %107 = arith.truncf %106 : vector<2x64xf32> to vector<2x64xbf16>
    %108 = vector.extract_strided_slice %81 {offsets = [0, 64], sizes = [2, 64], strides = [1, 1]} : vector<2x128xf32> to vector<2x64xf32>
    %109 = arith.truncf %108 : vector<2x64xf32> to vector<2x64xbf16>
    %cst_31 = arith.constant dense<0.000000e+00> : vector<2x2xf32>
    %110 = tpu.matmul %107, %109, %cst_31 {dimension_numbers = #tpu.dot_dimension_numbers<[1], [1], [0], [0], [0, 0, 1, 0], [], []>} : vector<2x64xbf16>, vector<2x64xbf16>, vector<2x2xf32> -> vector<2x2xf32>
    %cst_32 = arith.constant 1.250000e-01 : f32
    %111 = vector.broadcast %cst_32 : f32 to vector<2x2xf32>
    %112 = arith.mulf %110, %111 : vector<2x2xf32>
    %cst_33 = arith.constant dense<0xFF800000> : vector<2xf32>
    %113 = vector.multi_reduction <maximumf>, %112, %cst_33 [1] : vector<2x2xf32> to vector<2xf32>
    %114 = vector.shape_cast %113 : vector<2xf32> to vector<2x1xf32>
    %115 = vector.broadcast %114 : vector<2x1xf32> to vector<2x2xf32>
    %116 = arith.subf %112, %115 : vector<2x2xf32>
    %117 = math.exp %116 : vector<2x2xf32>
    %cst_34 = arith.constant dense<0.000000e+00> : vector<2xf32>
    %118 = vector.multi_reduction <add>, %117, %cst_34 [1] : vector<2x2xf32> to vector<2xf32>
    %119 = vector.shape_cast %118 : vector<2xf32> to vector<2x1xf32>
    %120 = tpu.reciprocal %119 {approx = true} : vector<2x1xf32> -> vector<2x1xf32>
    %121 = vector.broadcast %120 : vector<2x1xf32> to vector<2x2xf32>
    %122 = arith.mulf %117, %121 : vector<2x2xf32>
    %123 = arith.truncf %122 : vector<2x2xf32> to vector<2x2xbf16>
    %124 = vector.extract_strided_slice %84 {offsets = [0, 64], sizes = [2, 64], strides = [1, 1]} : vector<2x128xf32> to vector<2x64xf32>
    %125 = arith.truncf %124 : vector<2x64xf32> to vector<2x64xbf16>
    %cst_35 = arith.constant dense<0.000000e+00> : vector<2x64xf32>
    %126 = tpu.matmul %123, %125, %cst_35 {dimension_numbers = #tpu.dot_dimension_numbers<[1], [0], [0], [1], [0, 0, 1, 1], [], []>} : vector<2x2xbf16>, vector<2x64xbf16>, vector<2x64xf32> -> vector<2x64xf32>
    %127 = tpu.concatenate %105, %126 in 1 : vector<2x64xf32>, vector<2x64xf32> -> vector<2x128xf32>
    %128 = vector.extract_strided_slice %127 {offsets = [0, 0], sizes = [1, 128], strides = [1, 1]} : vector<2x128xf32> to vector<1x128xf32>
    %129 = vector.extract_strided_slice %127 {offsets = [1, 0], sizes = [1, 128], strides = [1, 1]} : vector<2x128xf32> to vector<1x128xf32>
    %130 = tpu.concatenate %74, %128, %75, %129 in 0 : vector<1x128xf32>, vector<1x128xf32>, vector<1x128xf32>, vector<1x128xf32> -> vector<4x128xf32>
    %131 = arith.truncf %130 : vector<4x128xf32> to vector<4x128xbf16>
    %c0_36 = arith.constant 0 : index
    %c0_37 = arith.constant 0 : index
    %132 = vector.load %arg8[%c0_36, %c0_37] : memref<128x128xbf16, #tpu.memory_space<vmem>>, vector<128x128xbf16>
    %cst_38 = arith.constant dense<0.000000e+00> : vector<4x128xf32>
    %133 = tpu.matmul %131, %132, %cst_38 {dimension_numbers = #tpu.dot_dimension_numbers<[1], [0], [0], [1], [0, 0, 1, 1], [], []>} : vector<4x128xbf16>, vector<128x128xbf16>, vector<4x128xf32> -> vector<4x128xf32>
    %c0_39 = arith.constant 0 : index
    %c0_40 = arith.constant 0 : index
    %134 = vector.load %arg9[%c0_39, %c0_40] : memref<1x128xf32, #tpu.memory_space<vmem>>, vector<1x128xf32>
    %135 = vector.broadcast %134 : vector<1x128xf32> to vector<4x128xf32>
    %136 = arith.addf %133, %135 : vector<4x128xf32>
    %137 = arith.addf %5, %136 : vector<4x128xf32>
    %c0_41 = arith.constant 0 : index
    %c0_42 = arith.constant 0 : index
    %138 = vector.load %arg10[%c0_41, %c0_42] : memref<1x128xf32, #tpu.memory_space<vmem>>, vector<1x128xf32>
    %c0_43 = arith.constant 0 : index
    %c0_44 = arith.constant 0 : index
    %139 = vector.load %arg11[%c0_43, %c0_44] : memref<1x128xf32, #tpu.memory_space<vmem>>, vector<1x128xf32>
    %cst_45 = arith.constant dense<0.000000e+00> : vector<4xf32>
    %140 = vector.multi_reduction <add>, %137, %cst_45 [1] : vector<4x128xf32> to vector<4xf32>
    %141 = vector.shape_cast %140 : vector<4xf32> to vector<4x1xf32>
    %cst_46 = arith.constant 1.280000e+02 : f32
    %142 = vector.broadcast %cst_46 : f32 to vector<4x1xf32>
    %143 = arith.divf %141, %142 : vector<4x1xf32>
    %144 = vector.broadcast %143 : vector<4x1xf32> to vector<4x128xf32>
    %145 = arith.subf %137, %144 : vector<4x128xf32>
    %146 = arith.mulf %145, %145 : vector<4x128xf32>
    %cst_47 = arith.constant dense<0.000000e+00> : vector<4xf32>
    %147 = vector.multi_reduction <add>, %146, %cst_47 [1] : vector<4x128xf32> to vector<4xf32>
    %148 = vector.shape_cast %147 : vector<4xf32> to vector<4x1xf32>
    %cst_48 = arith.constant 1.280000e+02 : f32
    %149 = vector.broadcast %cst_48 : f32 to vector<4x1xf32>
    %150 = arith.divf %148, %149 : vector<4x1xf32>
    %151 = vector.broadcast %143 : vector<4x1xf32> to vector<4x128xf32>
    %152 = arith.subf %137, %151 : vector<4x128xf32>
    %cst_49 = arith.constant 9.99999974E-6 : f32
    %153 = vector.broadcast %cst_49 : f32 to vector<4x1xf32>
    %154 = arith.addf %150, %153 : vector<4x1xf32>
    %155 = math.rsqrt %154 : vector<4x1xf32>
    %156 = vector.broadcast %155 : vector<4x1xf32> to vector<4x128xf32>
    %157 = arith.mulf %152, %156 : vector<4x128xf32>
    %158 = vector.broadcast %138 : vector<1x128xf32> to vector<4x128xf32>
    %159 = arith.mulf %157, %158 : vector<4x128xf32>
    %160 = vector.broadcast %139 : vector<1x128xf32> to vector<4x128xf32>
    %161 = arith.addf %159, %160 : vector<4x128xf32>
    %162 = arith.truncf %161 : vector<4x128xf32> to vector<4x128xbf16>
    %c0_50 = arith.constant 0 : index
    %c0_51 = arith.constant 0 : index
    %163 = vector.load %arg12[%c0_50, %c0_51] : memref<128x2048xbf16, #tpu.memory_space<vmem>>, vector<128x2048xbf16>
    %cst_52 = arith.constant dense<0.000000e+00> : vector<4x2048xf32>
    %164 = tpu.matmul %162, %163, %cst_52 {dimension_numbers = #tpu.dot_dimension_numbers<[1], [0], [0], [1], [0, 0, 1, 1], [], []>} : vector<4x128xbf16>, vector<128x2048xbf16>, vector<4x2048xf32> -> vector<4x2048xf32>
    %c0_53 = arith.constant 0 : index
    %c0_54 = arith.constant 0 : index
    %165 = vector.load %arg13[%c0_53, %c0_54] : memref<1x2048xf32, #tpu.memory_space<vmem>>, vector<1x2048xf32>
    %166 = vector.broadcast %165 : vector<1x2048xf32> to vector<4x2048xf32>
    %167 = arith.addf %164, %166 : vector<4x2048xf32>
    %cst_55 = arith.constant 0.000000e+00 : f32
    %168 = vector.broadcast %cst_55 : f32 to vector<4x2048xf32>
    %169 = arith.maximumf %167, %168 : vector<4x2048xf32>
    %170 = arith.truncf %169 : vector<4x2048xf32> to vector<4x2048xbf16>
    %c0_56 = arith.constant 0 : index
    %c0_57 = arith.constant 0 : index
    %171 = vector.load %arg14[%c0_56, %c0_57] : memref<2048x128xbf16, #tpu.memory_space<vmem>>, vector<2048x128xbf16>
    %cst_58 = arith.constant dense<0.000000e+00> : vector<4x128xf32>
    %172 = tpu.matmul %170, %171, %cst_58 {dimension_numbers = #tpu.dot_dimension_numbers<[1], [0], [0], [1], [0, 0, 1, 1], [], []>} : vector<4x2048xbf16>, vector<2048x128xbf16>, vector<4x128xf32> -> vector<4x128xf32>
    %c0_59 = arith.constant 0 : index
    %c0_60 = arith.constant 0 : index
    %173 = vector.load %arg15[%c0_59, %c0_60] : memref<1x128xf32, #tpu.memory_space<vmem>>, vector<1x128xf32>
    %174 = vector.broadcast %173 : vector<1x128xf32> to vector<4x128xf32>
    %175 = arith.addf %172, %174 : vector<4x128xf32>
    %176 = arith.addf %161, %175 : vector<4x128xf32>
    %c0_61 = arith.constant 0 : index
    %c0_62 = arith.constant 0 : index
    %177 = vector.load %arg16[%c0_61, %c0_62] : memref<1x128xf32, #tpu.memory_space<vmem>>, vector<1x128xf32>
    %c0_63 = arith.constant 0 : index
    %c0_64 = arith.constant 0 : index
    %178 = vector.load %arg17[%c0_63, %c0_64] : memref<1x128xf32, #tpu.memory_space<vmem>>, vector<1x128xf32>
    %cst_65 = arith.constant dense<0.000000e+00> : vector<4xf32>
    %179 = vector.multi_reduction <add>, %176, %cst_65 [1] : vector<4x128xf32> to vector<4xf32>
    %180 = vector.shape_cast %179 : vector<4xf32> to vector<4x1xf32>
    %cst_66 = arith.constant 1.280000e+02 : f32
    %181 = vector.broadcast %cst_66 : f32 to vector<4x1xf32>
    %182 = arith.divf %180, %181 : vector<4x1xf32>
    %183 = vector.broadcast %182 : vector<4x1xf32> to vector<4x128xf32>
    %184 = arith.subf %176, %183 : vector<4x128xf32>
    %185 = arith.mulf %184, %184 : vector<4x128xf32>
    %cst_67 = arith.constant dense<0.000000e+00> : vector<4xf32>
    %186 = vector.multi_reduction <add>, %185, %cst_67 [1] : vector<4x128xf32> to vector<4xf32>
    %187 = vector.shape_cast %186 : vector<4xf32> to vector<4x1xf32>
    %cst_68 = arith.constant 1.280000e+02 : f32
    %188 = vector.broadcast %cst_68 : f32 to vector<4x1xf32>
    %189 = arith.divf %187, %188 : vector<4x1xf32>
    %190 = vector.broadcast %182 : vector<4x1xf32> to vector<4x128xf32>
    %191 = arith.subf %176, %190 : vector<4x128xf32>
    %cst_69 = arith.constant 9.99999974E-6 : f32
    %192 = vector.broadcast %cst_69 : f32 to vector<4x1xf32>
    %193 = arith.addf %189, %192 : vector<4x1xf32>
    %194 = math.rsqrt %193 : vector<4x1xf32>
    %195 = vector.broadcast %194 : vector<4x1xf32> to vector<4x128xf32>
    %196 = arith.mulf %191, %195 : vector<4x128xf32>
    %197 = vector.broadcast %177 : vector<1x128xf32> to vector<4x128xf32>
    %198 = arith.mulf %196, %197 : vector<4x128xf32>
    %199 = vector.broadcast %178 : vector<1x128xf32> to vector<4x128xf32>
    %200 = arith.addf %198, %199 : vector<4x128xf32>
    %201 = vector.extract_strided_slice %200 {offsets = [0, 0], sizes = [2, 128], strides = [1, 1]} : vector<4x128xf32> to vector<2x128xf32>
    %202 = vector.extract_strided_slice %200 {offsets = [2, 0], sizes = [2, 128], strides = [1, 1]} : vector<4x128xf32> to vector<2x128xf32>
    %203 = arith.addf %201, %202 : vector<2x128xf32>
    %cst_70 = arith.constant 5.000000e-01 : f32
    %204 = vector.broadcast %cst_70 : f32 to vector<2x128xf32>
    %205 = arith.mulf %204, %203 : vector<2x128xf32>
    %c0_71 = arith.constant 0 : index
    %c0_72 = arith.constant 0 : index
    %206 = vector.load %arg18[%c0_71, %c0_72] : memref<2x128xf32, #tpu.memory_space<vmem>>, vector<2x128xf32>
    tpu.vector_store %arg18[%c0_71, %c0_72], %205 {strides = array<i32>} : memref<2x128xf32, #tpu.memory_space<vmem>>, vector<2x128xf32>,
    return
  }
  func.func @transform_0(%arg0: i32) -> (i32, i32, i32) {
    %c0_i32 = arith.constant 0 : i32
    %c0_i32_0 = arith.constant 0 : i32
    %c0_i32_1 = arith.constant 0 : i32
    %c0_i32_2 = arith.constant 0 : i32
    return %c0_i32, %c0_i32_0, %c0_i32_1 : i32, i32, i32
  }
  func.func @transform_1(%arg0: i32) -> (i32, i32) {
    %c0_i32 = arith.constant 0 : i32
    %c0_i32_0 = arith.constant 0 : i32
    %c0_i32_1 = arith.constant 0 : i32
    return %c0_i32, %c0_i32_0 : i32, i32
  }
  func.func @transform_2(%arg0: i32) -> (i32, i32) {
    %c0_i32 = arith.constant 0 : i32
    %c0_i32_0 = arith.constant 0 : i32
    %c0_i32_1 = arith.constant 0 : i32
    return %c0_i32, %c0_i32_0 : i32, i32
  }
  func.func @transform_3(%arg0: i32) -> (i32, i32) {
    %c0_i32 = arith.constant 0 : i32
    %c0_i32_0 = arith.constant 0 : i32
    %c0_i32_1 = arith.constant 0 : i32
    return %c0_i32, %c0_i32_0 : i32, i32
  }
  func.func @transform_4(%arg0: i32) -> (i32, i32) {
    %c0_i32 = arith.constant 0 : i32
    %c0_i32_0 = arith.constant 0 : i32
    %c0_i32_1 = arith.constant 0 : i32
    return %c0_i32, %c0_i32_0 : i32, i32
  }
  func.func @transform_5(%arg0: i32) -> (i32, i32) {
    %c0_i32 = arith.constant 0 : i32
    %c0_i32_0 = arith.constant 0 : i32
    %c0_i32_1 = arith.constant 0 : i32
    return %c0_i32, %c0_i32_0 : i32, i32
  }
  func.func @transform_6(%arg0: i32) -> (i32, i32) {
    %c0_i32 = arith.constant 0 : i32
    %c0_i32_0 = arith.constant 0 : i32
    %c0_i32_1 = arith.constant 0 : i32
    return %c0_i32, %c0_i32_0 : i32, i32
  }
  func.func @transform_7(%arg0: i32) -> (i32, i32) {
    %c0_i32 = arith.constant 0 : i32
    %c0_i32_0 = arith.constant 0 : i32
    %c0_i32_1 = arith.constant 0 : i32
    return %c0_i32, %c0_i32_0 : i32, i32
  }
  func.func @transform_8(%arg0: i32) -> (i32, i32) {
    %c0_i32 = arith.constant 0 : i32
    %c0_i32_0 = arith.constant 0 : i32
    %c0_i32_1 = arith.constant 0 : i32
    return %c0_i32, %c0_i32_0 : i32, i32
  }
  func.func @transform_9(%arg0: i32) -> (i32, i32) {
    %c0_i32 = arith.constant 0 : i32
    %c0_i32_0 = arith.constant 0 : i32
    %c0_i32_1 = arith.constant 0 : i32
    return %c0_i32, %c0_i32_0 : i32, i32
  }
  func.func @transform_10(%arg0: i32) -> (i32, i32) {
    %c0_i32 = arith.constant 0 : i32
    %c0_i32_0 = arith.constant 0 : i32
    %c0_i32_1 = arith.constant 0 : i32
    return %c0_i32, %c0_i32_0 : i32, i32
  }
  func.func @transform_11(%arg0: i32) -> (i32, i32) {
    %c0_i32 = arith.constant 0 : i32
    %c0_i32_0 = arith.constant 0 : i32
    %c0_i32_1 = arith.constant 0 : i32
    return %c0_i32, %c0_i32_0 : i32, i32
  }
  func.func @transform_12(%arg0: i32) -> (i32, i32) {
    %c0_i32 = arith.constant 0 : i32
    %c0_i32_0 = arith.constant 0 : i32
    %c0_i32_1 = arith.constant 0 : i32
    return %c0_i32, %c0_i32_0 : i32, i32
  }
  func.func @transform_13(%arg0: i32) -> (i32, i32) {
    %c0_i32 = arith.constant 0 : i32
    %c0_i32_0 = arith.constant 0 : i32
    %c0_i32_1 = arith.constant 0 : i32
    return %c0_i32, %c0_i32_0 : i32, i32
  }
  func.func @transform_14(%arg0: i32) -> (i32, i32) {
    %c0_i32 = arith.constant 0 : i32
    %c0_i32_0 = arith.constant 0 : i32
    %c0_i32_1 = arith.constant 0 : i32
    return %c0_i32, %c0_i32_0 : i32, i32
  }
  func.func @transform_15(%arg0: i32) -> (i32, i32) {
    %c0_i32 = arith.constant 0 : i32
    %c0_i32_0 = arith.constant 0 : i32
    %c0_i32_1 = arith.constant 0 : i32
    return %c0_i32, %c0_i32_0 : i32, i32
  }
  func.func @transform_16(%arg0: i32) -> (i32, i32) {
    %c0_i32 = arith.constant 0 : i32
    %c0_i32_0 = arith.constant 0 : i32
    %c0_i32_1 = arith.constant 0 : i32
    return %c0_i32, %c0_i32_0 : i32, i32
  }
  func.func @transform_17(%arg0: i32) -> (i32, i32) {
    %c0_i32 = arith.constant 0 : i32
    %c0_i32_0 = arith.constant 0 : i32
    %c0_i32_1 = arith.constant 0 : i32
    return %c0_i32, %c0_i32_0 : i32, i32
  }
}

module attributes {stable_mosaic.version = 11 : i64} {
  func.func @_coattn_block_kernel(%arg0: i32, %arg1: memref<1x2x16x512xf32, #tpu.memory_space<vmem>>, %arg2: memref<1x2x16x512xf32, #tpu.memory_space<vmem>>, %arg3: memref<1x512x128xbf16, #tpu.memory_space<vmem>>, %arg4: memref<1x1x128xf32, #tpu.memory_space<vmem>>, %arg5: memref<1x128x128xbf16, #tpu.memory_space<vmem>>, %arg6: memref<1x1x128xf32, #tpu.memory_space<vmem>>, %arg7: memref<1x512x128xbf16, #tpu.memory_space<vmem>>, %arg8: memref<1x1x128xf32, #tpu.memory_space<vmem>>, %arg9: memref<1x128x128xbf16, #tpu.memory_space<vmem>>, %arg10: memref<1x1x128xf32, #tpu.memory_space<vmem>>, %arg11: memref<1x128x512xbf16, #tpu.memory_space<vmem>>, %arg12: memref<1x1x512xf32, #tpu.memory_space<vmem>>, %arg13: memref<1x128x512xbf16, #tpu.memory_space<vmem>>, %arg14: memref<1x1x512xf32, #tpu.memory_space<vmem>>, %arg15: memref<1x128x512xbf16, #tpu.memory_space<vmem>>, %arg16: memref<1x1x512xf32, #tpu.memory_space<vmem>>, %arg17: memref<1x512x128xbf16, #tpu.memory_space<vmem>>, %arg18: memref<1x1x128xf32, #tpu.memory_space<vmem>>, %arg19: memref<1x1x128xf32, #tpu.memory_space<vmem>>, %arg20: memref<1x1x128xf32, #tpu.memory_space<vmem>>, %arg21: memref<1x128x128xbf16, #tpu.memory_space<vmem>>, %arg22: memref<1x1x128xf32, #tpu.memory_space<vmem>>, %arg23: memref<1x128x128xbf16, #tpu.memory_space<vmem>>, %arg24: memref<1x1x128xf32, #tpu.memory_space<vmem>>, %arg25: memref<1x1x128xf32, #tpu.memory_space<vmem>>, %arg26: memref<1x1x128xf32, #tpu.memory_space<vmem>>, %arg27: memref<1x2x128xf32, #tpu.memory_space<vmem>>) attributes {dimension_semantics = [#tpu.dimension_semantics<parallel>], iteration_bounds = array<i64: 2>, scalar_prefetch = 0 : i64, scratch_operands = 0 : i64, tpu.core_type = #tpu.core_type<tc>, window_params = [{transform_indices = @transform_0, window_bounds = array<i64: 1, 2, 16, 512>}, {transform_indices = @transform_1, window_bounds = array<i64: 1, 2, 16, 512>}, {transform_indices = @transform_2, window_bounds = array<i64: 1, 512, 128>}, {transform_indices = @transform_3, window_bounds = array<i64: 1, 1, 128>}, {transform_indices = @transform_4, window_bounds = array<i64: 1, 128, 128>}, {transform_indices = @transform_5, window_bounds = array<i64: 1, 1, 128>}, {transform_indices = @transform_6, window_bounds = array<i64: 1, 512, 128>}, {transform_indices = @transform_7, window_bounds = array<i64: 1, 1, 128>}, {transform_indices = @transform_8, window_bounds = array<i64: 1, 128, 128>}, {transform_indices = @transform_9, window_bounds = array<i64: 1, 1, 128>}, {transform_indices = @transform_10, window_bounds = array<i64: 1, 128, 512>}, {transform_indices = @transform_11, window_bounds = array<i64: 1, 1, 512>}, {transform_indices = @transform_12, window_bounds = array<i64: 1, 128, 512>}, {transform_indices = @transform_13, window_bounds = array<i64: 1, 1, 512>}, {transform_indices = @transform_14, window_bounds = array<i64: 1, 128, 512>}, {transform_indices = @transform_15, window_bounds = array<i64: 1, 1, 512>}, {transform_indices = @transform_16, window_bounds = array<i64: 1, 512, 128>}, {transform_indices = @transform_17, window_bounds = array<i64: 1, 1, 128>}, {transform_indices = @transform_18, window_bounds = array<i64: 1, 1, 128>}, {transform_indices = @transform_19, window_bounds = array<i64: 1, 1, 128>}, {transform_indices = @transform_20, window_bounds = array<i64: 1, 128, 128>}, {transform_indices = @transform_21, window_bounds = array<i64: 1, 1, 128>}, {transform_indices = @transform_22, window_bounds = array<i64: 1, 128, 128>}, {transform_indices = @transform_23, window_bounds = array<i64: 1, 1, 128>}, {transform_indices = @transform_24, window_bounds = array<i64: 1, 1, 128>}, {transform_indices = @transform_25, window_bounds = array<i64: 1, 1, 128>}, {transform_indices = @transform_26, window_bounds = array<i64: 1, 2, 128>}]} {
    %c0_i32 = arith.constant 0 : i32
    %0 = arith.cmpi eq, %arg0, %c0_i32 : i32
    %c16_i32 = arith.constant 16 : i32
    %c8_i32 = arith.constant 8 : i32
    %1 = arith.select %0, %c16_i32, %c8_i32 : i32
    %c0_i32_0 = arith.constant 0 : i32
    %2 = arith.cmpi eq, %arg0, %c0_i32_0 : i32
    %c8_i32_1 = arith.constant 8 : i32
    %c16_i32_2 = arith.constant 16 : i32
    %3 = arith.select %2, %c8_i32_1, %c16_i32_2 : i32
    %c0 = arith.constant 0 : index
    %c0_3 = arith.constant 0 : index
    %c0_4 = arith.constant 0 : index
    %c0_5 = arith.constant 0 : index
    %4 = vector.load %arg1[%c0, %c0_3, %c0_4, %c0_5] : memref<1x2x16x512xf32, #tpu.memory_space<vmem>>, vector<1x2x16x512xf32>
    %5 = vector.shape_cast %4 : vector<1x2x16x512xf32> to vector<2x16x512xf32>
    %6 = vector.shape_cast %5 : vector<2x16x512xf32> to vector<32x512xf32>
    %7 = arith.truncf %6 : vector<32x512xf32> to vector<32x512xbf16>
    %c0_6 = arith.constant 0 : index
    %c0_7 = arith.constant 0 : index
    %c0_8 = arith.constant 0 : index
    %8 = vector.load %arg3[%c0_6, %c0_7, %c0_8] : memref<1x512x128xbf16, #tpu.memory_space<vmem>>, vector<1x512x128xbf16>
    %9 = vector.shape_cast %8 : vector<1x512x128xbf16> to vector<512x128xbf16>
    %cst = arith.constant dense<0.000000e+00> : vector<32x128xf32>
    %10 = tpu.matmul %7, %9, %cst {dimension_numbers = #tpu.dot_dimension_numbers<[1], [0], [0], [1], [0, 0, 1, 1], [], []>} : vector<32x512xbf16>, vector<512x128xbf16>, vector<32x128xf32> -> vector<32x128xf32>
    %c0_9 = arith.constant 0 : index
    %c0_10 = arith.constant 0 : index
    %c0_11 = arith.constant 0 : index
    %11 = vector.load %arg4[%c0_9, %c0_10, %c0_11] : memref<1x1x128xf32, #tpu.memory_space<vmem>>, vector<1x1x128xf32>
    %12 = vector.shape_cast %11 : vector<1x1x128xf32> to vector<1x128xf32>
    %13 = vector.broadcast %12 : vector<1x128xf32> to vector<32x128xf32>
    %14 = arith.addf %10, %13 : vector<32x128xf32>
    %cst_12 = arith.constant 0.000000e+00 : f32
    %15 = vector.broadcast %cst_12 : f32 to vector<32x128xf32>
    %16 = arith.maximumf %14, %15 : vector<32x128xf32>
    %17 = arith.truncf %16 : vector<32x128xf32> to vector<32x128xbf16>
    %c0_13 = arith.constant 0 : index
    %c0_14 = arith.constant 0 : index
    %c0_15 = arith.constant 0 : index
    %18 = vector.load %arg5[%c0_13, %c0_14, %c0_15] : memref<1x128x128xbf16, #tpu.memory_space<vmem>>, vector<1x128x128xbf16>
    %19 = vector.shape_cast %18 : vector<1x128x128xbf16> to vector<128x128xbf16>
    %cst_16 = arith.constant dense<0.000000e+00> : vector<32x128xf32>
    %20 = tpu.matmul %17, %19, %cst_16 {dimension_numbers = #tpu.dot_dimension_numbers<[1], [0], [0], [1], [0, 0, 1, 1], [], []>} : vector<32x128xbf16>, vector<128x128xbf16>, vector<32x128xf32> -> vector<32x128xf32>
    %c0_17 = arith.constant 0 : index
    %c0_18 = arith.constant 0 : index
    %c0_19 = arith.constant 0 : index
    %21 = vector.load %arg6[%c0_17, %c0_18, %c0_19] : memref<1x1x128xf32, #tpu.memory_space<vmem>>, vector<1x1x128xf32>
    %22 = vector.shape_cast %21 : vector<1x1x128xf32> to vector<1x128xf32>
    %23 = vector.broadcast %22 : vector<1x128xf32> to vector<32x128xf32>
    %24 = arith.addf %20, %23 : vector<32x128xf32>
    %c0_20 = arith.constant 0 : index
    %c0_21 = arith.constant 0 : index
    %c0_22 = arith.constant 0 : index
    %c0_23 = arith.constant 0 : index
    %25 = vector.load %arg2[%c0_20, %c0_21, %c0_22, %c0_23] : memref<1x2x16x512xf32, #tpu.memory_space<vmem>>, vector<1x2x16x512xf32>
    %26 = vector.shape_cast %25 : vector<1x2x16x512xf32> to vector<2x16x512xf32>
    %27 = vector.shape_cast %26 : vector<2x16x512xf32> to vector<32x512xf32>
    %28 = arith.truncf %27 : vector<32x512xf32> to vector<32x512xbf16>
    %c0_24 = arith.constant 0 : index
    %c0_25 = arith.constant 0 : index
    %c0_26 = arith.constant 0 : index
    %29 = vector.load %arg7[%c0_24, %c0_25, %c0_26] : memref<1x512x128xbf16, #tpu.memory_space<vmem>>, vector<1x512x128xbf16>
    %30 = vector.shape_cast %29 : vector<1x512x128xbf16> to vector<512x128xbf16>
    %cst_27 = arith.constant dense<0.000000e+00> : vector<32x128xf32>
    %31 = tpu.matmul %28, %30, %cst_27 {dimension_numbers = #tpu.dot_dimension_numbers<[1], [0], [0], [1], [0, 0, 1, 1], [], []>} : vector<32x512xbf16>, vector<512x128xbf16>, vector<32x128xf32> -> vector<32x128xf32>
    %c0_28 = arith.constant 0 : index
    %c0_29 = arith.constant 0 : index
    %c0_30 = arith.constant 0 : index
    %32 = vector.load %arg8[%c0_28, %c0_29, %c0_30] : memref<1x1x128xf32, #tpu.memory_space<vmem>>, vector<1x1x128xf32>
    %33 = vector.shape_cast %32 : vector<1x1x128xf32> to vector<1x128xf32>
    %34 = vector.broadcast %33 : vector<1x128xf32> to vector<32x128xf32>
    %35 = arith.addf %31, %34 : vector<32x128xf32>
    %cst_31 = arith.constant 0.000000e+00 : f32
    %36 = vector.broadcast %cst_31 : f32 to vector<32x128xf32>
    %37 = arith.maximumf %35, %36 : vector<32x128xf32>
    %38 = arith.truncf %37 : vector<32x128xf32> to vector<32x128xbf16>
    %c0_32 = arith.constant 0 : index
    %c0_33 = arith.constant 0 : index
    %c0_34 = arith.constant 0 : index
    %39 = vector.load %arg9[%c0_32, %c0_33, %c0_34] : memref<1x128x128xbf16, #tpu.memory_space<vmem>>, vector<1x128x128xbf16>
    %40 = vector.shape_cast %39 : vector<1x128x128xbf16> to vector<128x128xbf16>
    %cst_35 = arith.constant dense<0.000000e+00> : vector<32x128xf32>
    %41 = tpu.matmul %38, %40, %cst_35 {dimension_numbers = #tpu.dot_dimension_numbers<[1], [0], [0], [1], [0, 0, 1, 1], [], []>} : vector<32x128xbf16>, vector<128x128xbf16>, vector<32x128xf32> -> vector<32x128xf32>
    %c0_36 = arith.constant 0 : index
    %c0_37 = arith.constant 0 : index
    %c0_38 = arith.constant 0 : index
    %42 = vector.load %arg10[%c0_36, %c0_37, %c0_38] : memref<1x1x128xf32, #tpu.memory_space<vmem>>, vector<1x1x128xf32>
    %43 = vector.shape_cast %42 : vector<1x1x128xf32> to vector<1x128xf32>
    %44 = vector.broadcast %43 : vector<1x128xf32> to vector<32x128xf32>
    %45 = arith.addf %41, %44 : vector<32x128xf32>
    %46 = arith.truncf %24 : vector<32x128xf32> to vector<32x128xbf16>
    %c0_39 = arith.constant 0 : index
    %c0_40 = arith.constant 0 : index
    %c0_41 = arith.constant 0 : index
    %47 = vector.load %arg11[%c0_39, %c0_40, %c0_41] : memref<1x128x512xbf16, #tpu.memory_space<vmem>>, vector<1x128x512xbf16>
    %48 = vector.shape_cast %47 : vector<1x128x512xbf16> to vector<128x512xbf16>
    %cst_42 = arith.constant dense<0.000000e+00> : vector<32x512xf32>
    %49 = tpu.matmul %46, %48, %cst_42 {dimension_numbers = #tpu.dot_dimension_numbers<[1], [0], [0], [1], [0, 0, 1, 1], [], []>} : vector<32x128xbf16>, vector<128x512xbf16>, vector<32x512xf32> -> vector<32x512xf32>
    %c0_43 = arith.constant 0 : index
    %c0_44 = arith.constant 0 : index
    %c0_45 = arith.constant 0 : index
    %50 = vector.load %arg12[%c0_43, %c0_44, %c0_45] : memref<1x1x512xf32, #tpu.memory_space<vmem>>, vector<1x1x512xf32>
    %51 = vector.shape_cast %50 : vector<1x1x512xf32> to vector<1x512xf32>
    %52 = vector.broadcast %51 : vector<1x512xf32> to vector<32x512xf32>
    %53 = arith.addf %49, %52 : vector<32x512xf32>
    %54 = arith.truncf %45 : vector<32x128xf32> to vector<32x128xbf16>
    %c0_46 = arith.constant 0 : index
    %c0_47 = arith.constant 0 : index
    %c0_48 = arith.constant 0 : index
    %55 = vector.load %arg13[%c0_46, %c0_47, %c0_48] : memref<1x128x512xbf16, #tpu.memory_space<vmem>>, vector<1x128x512xbf16>
    %56 = vector.shape_cast %55 : vector<1x128x512xbf16> to vector<128x512xbf16>
    %cst_49 = arith.constant dense<0.000000e+00> : vector<32x512xf32>
    %57 = tpu.matmul %54, %56, %cst_49 {dimension_numbers = #tpu.dot_dimension_numbers<[1], [0], [0], [1], [0, 0, 1, 1], [], []>} : vector<32x128xbf16>, vector<128x512xbf16>, vector<32x512xf32> -> vector<32x512xf32>
    %c0_50 = arith.constant 0 : index
    %c0_51 = arith.constant 0 : index
    %c0_52 = arith.constant 0 : index
    %58 = vector.load %arg14[%c0_50, %c0_51, %c0_52] : memref<1x1x512xf32, #tpu.memory_space<vmem>>, vector<1x1x512xf32>
    %59 = vector.shape_cast %58 : vector<1x1x512xf32> to vector<1x512xf32>
    %60 = vector.broadcast %59 : vector<1x512xf32> to vector<32x512xf32>
    %61 = arith.addf %57, %60 : vector<32x512xf32>
    %62 = arith.truncf %45 : vector<32x128xf32> to vector<32x128xbf16>
    %c0_53 = arith.constant 0 : index
    %c0_54 = arith.constant 0 : index
    %c0_55 = arith.constant 0 : index
    %63 = vector.load %arg15[%c0_53, %c0_54, %c0_55] : memref<1x128x512xbf16, #tpu.memory_space<vmem>>, vector<1x128x512xbf16>
    %64 = vector.shape_cast %63 : vector<1x128x512xbf16> to vector<128x512xbf16>
    %cst_56 = arith.constant dense<0.000000e+00> : vector<32x512xf32>
    %65 = tpu.matmul %62, %64, %cst_56 {dimension_numbers = #tpu.dot_dimension_numbers<[1], [0], [0], [1], [0, 0, 1, 1], [], []>} : vector<32x128xbf16>, vector<128x512xbf16>, vector<32x512xf32> -> vector<32x512xf32>
    %c0_57 = arith.constant 0 : index
    %c0_58 = arith.constant 0 : index
    %c0_59 = arith.constant 0 : index
    %66 = vector.load %arg16[%c0_57, %c0_58, %c0_59] : memref<1x1x512xf32, #tpu.memory_space<vmem>>, vector<1x1x512xf32>
    %67 = vector.shape_cast %66 : vector<1x1x512xf32> to vector<1x512xf32>
    %68 = vector.broadcast %67 : vector<1x512xf32> to vector<32x512xf32>
    %69 = arith.addf %65, %68 : vector<32x512xf32>
    %70 = tpu.iota {dimensions = array<i32: 1>} : vector<1x16xi32>
    %71 = vector.broadcast %3 : i32 to vector<1x16xi32>
    %72 = arith.cmpi slt, %70, %71 : vector<1x16xi32>
    %cst_60 = arith.constant 0.000000e+00 : f32
    %cst_61 = arith.constant -1.000000e+30 : f32
    %73 = vector.broadcast %cst_60 : f32 to vector<1x16xf32>
    %74 = vector.broadcast %cst_61 : f32 to vector<1x16xf32>
    %75 = arith.select %72, %73, %74 : vector<1x16xi1>, vector<1x16xf32>
    %76 = vector.extract_strided_slice %53 {offsets = [0, 0], sizes = [16, 512], strides = [1, 1]} : vector<32x512xf32> to vector<16x512xf32>
    %77 = vector.extract_strided_slice %61 {offsets = [0, 0], sizes = [16, 512], strides = [1, 1]} : vector<32x512xf32> to vector<16x512xf32>
    %78 = vector.extract_strided_slice %69 {offsets = [0, 0], sizes = [16, 512], strides = [1, 1]} : vector<32x512xf32> to vector<16x512xf32>
    %79 = vector.extract_strided_slice %76 {offsets = [0, 0], sizes = [16, 128], strides = [1, 1]} : vector<16x512xf32> to vector<16x128xf32>
    %80 = arith.truncf %79 : vector<16x128xf32> to vector<16x128xbf16>
    %81 = vector.extract_strided_slice %77 {offsets = [0, 0], sizes = [16, 128], strides = [1, 1]} : vector<16x512xf32> to vector<16x128xf32>
    %82 = arith.truncf %81 : vector<16x128xf32> to vector<16x128xbf16>
    %cst_62 = arith.constant dense<0.000000e+00> : vector<16x16xf32>
    %83 = tpu.matmul %80, %82, %cst_62 {dimension_numbers = #tpu.dot_dimension_numbers<[1], [1], [0], [0], [0, 0, 1, 0], [], []>} : vector<16x128xbf16>, vector<16x128xbf16>, vector<16x16xf32> -> vector<16x16xf32>
    %cst_63 = arith.constant 0.0883883461 : f32
    %84 = vector.broadcast %cst_63 : f32 to vector<16x16xf32>
    %85 = arith.mulf %83, %84 : vector<16x16xf32>
    %86 = vector.broadcast %75 : vector<1x16xf32> to vector<16x16xf32>
    %87 = arith.addf %85, %86 : vector<16x16xf32>
    %cst_64 = arith.constant dense<0xFF800000> : vector<16xf32>
    %88 = vector.multi_reduction <maximumf>, %87, %cst_64 [1] : vector<16x16xf32> to vector<16xf32>
    %89 = vector.shape_cast %88 : vector<16xf32> to vector<16x1xf32>
    %90 = vector.broadcast %89 : vector<16x1xf32> to vector<16x16xf32>
    %91 = arith.subf %87, %90 : vector<16x16xf32>
    %92 = math.exp %91 : vector<16x16xf32>
    %cst_65 = arith.constant dense<0.000000e+00> : vector<16xf32>
    %93 = vector.multi_reduction <add>, %92, %cst_65 [1] : vector<16x16xf32> to vector<16xf32>
    %94 = vector.shape_cast %93 : vector<16xf32> to vector<16x1xf32>
    %95 = tpu.reciprocal %94 {approx = true} : vector<16x1xf32> -> vector<16x1xf32>
    %96 = vector.broadcast %95 : vector<16x1xf32> to vector<16x16xf32>
    %97 = arith.mulf %92, %96 : vector<16x16xf32>
    %98 = arith.truncf %97 : vector<16x16xf32> to vector<16x16xbf16>
    %99 = vector.extract_strided_slice %78 {offsets = [0, 0], sizes = [16, 128], strides = [1, 1]} : vector<16x512xf32> to vector<16x128xf32>
    %100 = arith.truncf %99 : vector<16x128xf32> to vector<16x128xbf16>
    %cst_66 = arith.constant dense<0.000000e+00> : vector<16x128xf32>
    %101 = tpu.matmul %98, %100, %cst_66 {dimension_numbers = #tpu.dot_dimension_numbers<[1], [0], [0], [1], [0, 0, 1, 1], [], []>} : vector<16x16xbf16>, vector<16x128xbf16>, vector<16x128xf32> -> vector<16x128xf32>
    %102 = vector.extract_strided_slice %76 {offsets = [0, 128], sizes = [16, 128], strides = [1, 1]} : vector<16x512xf32> to vector<16x128xf32>
    %103 = arith.truncf %102 : vector<16x128xf32> to vector<16x128xbf16>
    %104 = vector.extract_strided_slice %77 {offsets = [0, 128], sizes = [16, 128], strides = [1, 1]} : vector<16x512xf32> to vector<16x128xf32>
    %105 = arith.truncf %104 : vector<16x128xf32> to vector<16x128xbf16>
    %cst_67 = arith.constant dense<0.000000e+00> : vector<16x16xf32>
    %106 = tpu.matmul %103, %105, %cst_67 {dimension_numbers = #tpu.dot_dimension_numbers<[1], [1], [0], [0], [0, 0, 1, 0], [], []>} : vector<16x128xbf16>, vector<16x128xbf16>, vector<16x16xf32> -> vector<16x16xf32>
    %cst_68 = arith.constant 0.0883883461 : f32
    %107 = vector.broadcast %cst_68 : f32 to vector<16x16xf32>
    %108 = arith.mulf %106, %107 : vector<16x16xf32>
    %109 = vector.broadcast %75 : vector<1x16xf32> to vector<16x16xf32>
    %110 = arith.addf %108, %109 : vector<16x16xf32>
    %cst_69 = arith.constant dense<0xFF800000> : vector<16xf32>
    %111 = vector.multi_reduction <maximumf>, %110, %cst_69 [1] : vector<16x16xf32> to vector<16xf32>
    %112 = vector.shape_cast %111 : vector<16xf32> to vector<16x1xf32>
    %113 = vector.broadcast %112 : vector<16x1xf32> to vector<16x16xf32>
    %114 = arith.subf %110, %113 : vector<16x16xf32>
    %115 = math.exp %114 : vector<16x16xf32>
    %cst_70 = arith.constant dense<0.000000e+00> : vector<16xf32>
    %116 = vector.multi_reduction <add>, %115, %cst_70 [1] : vector<16x16xf32> to vector<16xf32>
    %117 = vector.shape_cast %116 : vector<16xf32> to vector<16x1xf32>
    %118 = tpu.reciprocal %117 {approx = true} : vector<16x1xf32> -> vector<16x1xf32>
    %119 = vector.broadcast %118 : vector<16x1xf32> to vector<16x16xf32>
    %120 = arith.mulf %115, %119 : vector<16x16xf32>
    %121 = arith.truncf %120 : vector<16x16xf32> to vector<16x16xbf16>
    %122 = vector.extract_strided_slice %78 {offsets = [0, 128], sizes = [16, 128], strides = [1, 1]} : vector<16x512xf32> to vector<16x128xf32>
    %123 = arith.truncf %122 : vector<16x128xf32> to vector<16x128xbf16>
    %cst_71 = arith.constant dense<0.000000e+00> : vector<16x128xf32>
    %124 = tpu.matmul %121, %123, %cst_71 {dimension_numbers = #tpu.dot_dimension_numbers<[1], [0], [0], [1], [0, 0, 1, 1], [], []>} : vector<16x16xbf16>, vector<16x128xbf16>, vector<16x128xf32> -> vector<16x128xf32>
    %125 = vector.extract_strided_slice %76 {offsets = [0, 256], sizes = [16, 128], strides = [1, 1]} : vector<16x512xf32> to vector<16x128xf32>
    %126 = arith.truncf %125 : vector<16x128xf32> to vector<16x128xbf16>
    %127 = vector.extract_strided_slice %77 {offsets = [0, 256], sizes = [16, 128], strides = [1, 1]} : vector<16x512xf32> to vector<16x128xf32>
    %128 = arith.truncf %127 : vector<16x128xf32> to vector<16x128xbf16>
    %cst_72 = arith.constant dense<0.000000e+00> : vector<16x16xf32>
    %129 = tpu.matmul %126, %128, %cst_72 {dimension_numbers = #tpu.dot_dimension_numbers<[1], [1], [0], [0], [0, 0, 1, 0], [], []>} : vector<16x128xbf16>, vector<16x128xbf16>, vector<16x16xf32> -> vector<16x16xf32>
    %cst_73 = arith.constant 0.0883883461 : f32
    %130 = vector.broadcast %cst_73 : f32 to vector<16x16xf32>
    %131 = arith.mulf %129, %130 : vector<16x16xf32>
    %132 = vector.broadcast %75 : vector<1x16xf32> to vector<16x16xf32>
    %133 = arith.addf %131, %132 : vector<16x16xf32>
    %cst_74 = arith.constant dense<0xFF800000> : vector<16xf32>
    %134 = vector.multi_reduction <maximumf>, %133, %cst_74 [1] : vector<16x16xf32> to vector<16xf32>
    %135 = vector.shape_cast %134 : vector<16xf32> to vector<16x1xf32>
    %136 = vector.broadcast %135 : vector<16x1xf32> to vector<16x16xf32>
    %137 = arith.subf %133, %136 : vector<16x16xf32>
    %138 = math.exp %137 : vector<16x16xf32>
    %cst_75 = arith.constant dense<0.000000e+00> : vector<16xf32>
    %139 = vector.multi_reduction <add>, %138, %cst_75 [1] : vector<16x16xf32> to vector<16xf32>
    %140 = vector.shape_cast %139 : vector<16xf32> to vector<16x1xf32>
    %141 = tpu.reciprocal %140 {approx = true} : vector<16x1xf32> -> vector<16x1xf32>
    %142 = vector.broadcast %141 : vector<16x1xf32> to vector<16x16xf32>
    %143 = arith.mulf %138, %142 : vector<16x16xf32>
    %144 = arith.truncf %143 : vector<16x16xf32> to vector<16x16xbf16>
    %145 = vector.extract_strided_slice %78 {offsets = [0, 256], sizes = [16, 128], strides = [1, 1]} : vector<16x512xf32> to vector<16x128xf32>
    %146 = arith.truncf %145 : vector<16x128xf32> to vector<16x128xbf16>
    %cst_76 = arith.constant dense<0.000000e+00> : vector<16x128xf32>
    %147 = tpu.matmul %144, %146, %cst_76 {dimension_numbers = #tpu.dot_dimension_numbers<[1], [0], [0], [1], [0, 0, 1, 1], [], []>} : vector<16x16xbf16>, vector<16x128xbf16>, vector<16x128xf32> -> vector<16x128xf32>
    %148 = vector.extract_strided_slice %76 {offsets = [0, 384], sizes = [16, 128], strides = [1, 1]} : vector<16x512xf32> to vector<16x128xf32>
    %149 = arith.truncf %148 : vector<16x128xf32> to vector<16x128xbf16>
    %150 = vector.extract_strided_slice %77 {offsets = [0, 384], sizes = [16, 128], strides = [1, 1]} : vector<16x512xf32> to vector<16x128xf32>
    %151 = arith.truncf %150 : vector<16x128xf32> to vector<16x128xbf16>
    %cst_77 = arith.constant dense<0.000000e+00> : vector<16x16xf32>
    %152 = tpu.matmul %149, %151, %cst_77 {dimension_numbers = #tpu.dot_dimension_numbers<[1], [1], [0], [0], [0, 0, 1, 0], [], []>} : vector<16x128xbf16>, vector<16x128xbf16>, vector<16x16xf32> -> vector<16x16xf32>
    %cst_78 = arith.constant 0.0883883461 : f32
    %153 = vector.broadcast %cst_78 : f32 to vector<16x16xf32>
    %154 = arith.mulf %152, %153 : vector<16x16xf32>
    %155 = vector.broadcast %75 : vector<1x16xf32> to vector<16x16xf32>
    %156 = arith.addf %154, %155 : vector<16x16xf32>
    %cst_79 = arith.constant dense<0xFF800000> : vector<16xf32>
    %157 = vector.multi_reduction <maximumf>, %156, %cst_79 [1] : vector<16x16xf32> to vector<16xf32>
    %158 = vector.shape_cast %157 : vector<16xf32> to vector<16x1xf32>
    %159 = vector.broadcast %158 : vector<16x1xf32> to vector<16x16xf32>
    %160 = arith.subf %156, %159 : vector<16x16xf32>
    %161 = math.exp %160 : vector<16x16xf32>
    %cst_80 = arith.constant dense<0.000000e+00> : vector<16xf32>
    %162 = vector.multi_reduction <add>, %161, %cst_80 [1] : vector<16x16xf32> to vector<16xf32>
    %163 = vector.shape_cast %162 : vector<16xf32> to vector<16x1xf32>
    %164 = tpu.reciprocal %163 {approx = true} : vector<16x1xf32> -> vector<16x1xf32>
    %165 = vector.broadcast %164 : vector<16x1xf32> to vector<16x16xf32>
    %166 = arith.mulf %161, %165 : vector<16x16xf32>
    %167 = arith.truncf %166 : vector<16x16xf32> to vector<16x16xbf16>
    %168 = vector.extract_strided_slice %78 {offsets = [0, 384], sizes = [16, 128], strides = [1, 1]} : vector<16x512xf32> to vector<16x128xf32>
    %169 = arith.truncf %168 : vector<16x128xf32> to vector<16x128xbf16>
    %cst_81 = arith.constant dense<0.000000e+00> : vector<16x128xf32>
    %170 = tpu.matmul %167, %169, %cst_81 {dimension_numbers = #tpu.dot_dimension_numbers<[1], [0], [0], [1], [0, 0, 1, 1], [], []>} : vector<16x16xbf16>, vector<16x128xbf16>, vector<16x128xf32> -> vector<16x128xf32>
    %171 = tpu.concatenate %101, %124, %147, %170 in 1 : vector<16x128xf32>, vector<16x128xf32>, vector<16x128xf32>, vector<16x128xf32> -> vector<16x512xf32>
    %172 = vector.extract_strided_slice %53 {offsets = [16, 0], sizes = [16, 512], strides = [1, 1]} : vector<32x512xf32> to vector<16x512xf32>
    %173 = vector.extract_strided_slice %61 {offsets = [16, 0], sizes = [16, 512], strides = [1, 1]} : vector<32x512xf32> to vector<16x512xf32>
    %174 = vector.extract_strided_slice %69 {offsets = [16, 0], sizes = [16, 512], strides = [1, 1]} : vector<32x512xf32> to vector<16x512xf32>
    %175 = vector.extract_strided_slice %172 {offsets = [0, 0], sizes = [16, 128], strides = [1, 1]} : vector<16x512xf32> to vector<16x128xf32>
    %176 = arith.truncf %175 : vector<16x128xf32> to vector<16x128xbf16>
    %177 = vector.extract_strided_slice %173 {offsets = [0, 0], sizes = [16, 128], strides = [1, 1]} : vector<16x512xf32> to vector<16x128xf32>
    %178 = arith.truncf %177 : vector<16x128xf32> to vector<16x128xbf16>
    %cst_82 = arith.constant dense<0.000000e+00> : vector<16x16xf32>
    %179 = tpu.matmul %176, %178, %cst_82 {dimension_numbers = #tpu.dot_dimension_numbers<[1], [1], [0], [0], [0, 0, 1, 0], [], []>} : vector<16x128xbf16>, vector<16x128xbf16>, vector<16x16xf32> -> vector<16x16xf32>
    %cst_83 = arith.constant 0.0883883461 : f32
    %180 = vector.broadcast %cst_83 : f32 to vector<16x16xf32>
    %181 = arith.mulf %179, %180 : vector<16x16xf32>
    %182 = vector.broadcast %75 : vector<1x16xf32> to vector<16x16xf32>
    %183 = arith.addf %181, %182 : vector<16x16xf32>
    %cst_84 = arith.constant dense<0xFF800000> : vector<16xf32>
    %184 = vector.multi_reduction <maximumf>, %183, %cst_84 [1] : vector<16x16xf32> to vector<16xf32>
    %185 = vector.shape_cast %184 : vector<16xf32> to vector<16x1xf32>
    %186 = vector.broadcast %185 : vector<16x1xf32> to vector<16x16xf32>
    %187 = arith.subf %183, %186 : vector<16x16xf32>
    %188 = math.exp %187 : vector<16x16xf32>
    %cst_85 = arith.constant dense<0.000000e+00> : vector<16xf32>
    %189 = vector.multi_reduction <add>, %188, %cst_85 [1] : vector<16x16xf32> to vector<16xf32>
    %190 = vector.shape_cast %189 : vector<16xf32> to vector<16x1xf32>
    %191 = tpu.reciprocal %190 {approx = true} : vector<16x1xf32> -> vector<16x1xf32>
    %192 = vector.broadcast %191 : vector<16x1xf32> to vector<16x16xf32>
    %193 = arith.mulf %188, %192 : vector<16x16xf32>
    %194 = arith.truncf %193 : vector<16x16xf32> to vector<16x16xbf16>
    %195 = vector.extract_strided_slice %174 {offsets = [0, 0], sizes = [16, 128], strides = [1, 1]} : vector<16x512xf32> to vector<16x128xf32>
    %196 = arith.truncf %195 : vector<16x128xf32> to vector<16x128xbf16>
    %cst_86 = arith.constant dense<0.000000e+00> : vector<16x128xf32>
    %197 = tpu.matmul %194, %196, %cst_86 {dimension_numbers = #tpu.dot_dimension_numbers<[1], [0], [0], [1], [0, 0, 1, 1], [], []>} : vector<16x16xbf16>, vector<16x128xbf16>, vector<16x128xf32> -> vector<16x128xf32>
    %198 = vector.extract_strided_slice %172 {offsets = [0, 128], sizes = [16, 128], strides = [1, 1]} : vector<16x512xf32> to vector<16x128xf32>
    %199 = arith.truncf %198 : vector<16x128xf32> to vector<16x128xbf16>
    %200 = vector.extract_strided_slice %173 {offsets = [0, 128], sizes = [16, 128], strides = [1, 1]} : vector<16x512xf32> to vector<16x128xf32>
    %201 = arith.truncf %200 : vector<16x128xf32> to vector<16x128xbf16>
    %cst_87 = arith.constant dense<0.000000e+00> : vector<16x16xf32>
    %202 = tpu.matmul %199, %201, %cst_87 {dimension_numbers = #tpu.dot_dimension_numbers<[1], [1], [0], [0], [0, 0, 1, 0], [], []>} : vector<16x128xbf16>, vector<16x128xbf16>, vector<16x16xf32> -> vector<16x16xf32>
    %cst_88 = arith.constant 0.0883883461 : f32
    %203 = vector.broadcast %cst_88 : f32 to vector<16x16xf32>
    %204 = arith.mulf %202, %203 : vector<16x16xf32>
    %205 = vector.broadcast %75 : vector<1x16xf32> to vector<16x16xf32>
    %206 = arith.addf %204, %205 : vector<16x16xf32>
    %cst_89 = arith.constant dense<0xFF800000> : vector<16xf32>
    %207 = vector.multi_reduction <maximumf>, %206, %cst_89 [1] : vector<16x16xf32> to vector<16xf32>
    %208 = vector.shape_cast %207 : vector<16xf32> to vector<16x1xf32>
    %209 = vector.broadcast %208 : vector<16x1xf32> to vector<16x16xf32>
    %210 = arith.subf %206, %209 : vector<16x16xf32>
    %211 = math.exp %210 : vector<16x16xf32>
    %cst_90 = arith.constant dense<0.000000e+00> : vector<16xf32>
    %212 = vector.multi_reduction <add>, %211, %cst_90 [1] : vector<16x16xf32> to vector<16xf32>
    %213 = vector.shape_cast %212 : vector<16xf32> to vector<16x1xf32>
    %214 = tpu.reciprocal %213 {approx = true} : vector<16x1xf32> -> vector<16x1xf32>
    %215 = vector.broadcast %214 : vector<16x1xf32> to vector<16x16xf32>
    %216 = arith.mulf %211, %215 : vector<16x16xf32>
    %217 = arith.truncf %216 : vector<16x16xf32> to vector<16x16xbf16>
    %218 = vector.extract_strided_slice %174 {offsets = [0, 128], sizes = [16, 128], strides = [1, 1]} : vector<16x512xf32> to vector<16x128xf32>
    %219 = arith.truncf %218 : vector<16x128xf32> to vector<16x128xbf16>
    %cst_91 = arith.constant dense<0.000000e+00> : vector<16x128xf32>
    %220 = tpu.matmul %217, %219, %cst_91 {dimension_numbers = #tpu.dot_dimension_numbers<[1], [0], [0], [1], [0, 0, 1, 1], [], []>} : vector<16x16xbf16>, vector<16x128xbf16>, vector<16x128xf32> -> vector<16x128xf32>
    %221 = vector.extract_strided_slice %172 {offsets = [0, 256], sizes = [16, 128], strides = [1, 1]} : vector<16x512xf32> to vector<16x128xf32>
    %222 = arith.truncf %221 : vector<16x128xf32> to vector<16x128xbf16>
    %223 = vector.extract_strided_slice %173 {offsets = [0, 256], sizes = [16, 128], strides = [1, 1]} : vector<16x512xf32> to vector<16x128xf32>
    %224 = arith.truncf %223 : vector<16x128xf32> to vector<16x128xbf16>
    %cst_92 = arith.constant dense<0.000000e+00> : vector<16x16xf32>
    %225 = tpu.matmul %222, %224, %cst_92 {dimension_numbers = #tpu.dot_dimension_numbers<[1], [1], [0], [0], [0, 0, 1, 0], [], []>} : vector<16x128xbf16>, vector<16x128xbf16>, vector<16x16xf32> -> vector<16x16xf32>
    %cst_93 = arith.constant 0.0883883461 : f32
    %226 = vector.broadcast %cst_93 : f32 to vector<16x16xf32>
    %227 = arith.mulf %225, %226 : vector<16x16xf32>
    %228 = vector.broadcast %75 : vector<1x16xf32> to vector<16x16xf32>
    %229 = arith.addf %227, %228 : vector<16x16xf32>
    %cst_94 = arith.constant dense<0xFF800000> : vector<16xf32>
    %230 = vector.multi_reduction <maximumf>, %229, %cst_94 [1] : vector<16x16xf32> to vector<16xf32>
    %231 = vector.shape_cast %230 : vector<16xf32> to vector<16x1xf32>
    %232 = vector.broadcast %231 : vector<16x1xf32> to vector<16x16xf32>
    %233 = arith.subf %229, %232 : vector<16x16xf32>
    %234 = math.exp %233 : vector<16x16xf32>
    %cst_95 = arith.constant dense<0.000000e+00> : vector<16xf32>
    %235 = vector.multi_reduction <add>, %234, %cst_95 [1] : vector<16x16xf32> to vector<16xf32>
    %236 = vector.shape_cast %235 : vector<16xf32> to vector<16x1xf32>
    %237 = tpu.reciprocal %236 {approx = true} : vector<16x1xf32> -> vector<16x1xf32>
    %238 = vector.broadcast %237 : vector<16x1xf32> to vector<16x16xf32>
    %239 = arith.mulf %234, %238 : vector<16x16xf32>
    %240 = arith.truncf %239 : vector<16x16xf32> to vector<16x16xbf16>
    %241 = vector.extract_strided_slice %174 {offsets = [0, 256], sizes = [16, 128], strides = [1, 1]} : vector<16x512xf32> to vector<16x128xf32>
    %242 = arith.truncf %241 : vector<16x128xf32> to vector<16x128xbf16>
    %cst_96 = arith.constant dense<0.000000e+00> : vector<16x128xf32>
    %243 = tpu.matmul %240, %242, %cst_96 {dimension_numbers = #tpu.dot_dimension_numbers<[1], [0], [0], [1], [0, 0, 1, 1], [], []>} : vector<16x16xbf16>, vector<16x128xbf16>, vector<16x128xf32> -> vector<16x128xf32>
    %244 = vector.extract_strided_slice %172 {offsets = [0, 384], sizes = [16, 128], strides = [1, 1]} : vector<16x512xf32> to vector<16x128xf32>
    %245 = arith.truncf %244 : vector<16x128xf32> to vector<16x128xbf16>
    %246 = vector.extract_strided_slice %173 {offsets = [0, 384], sizes = [16, 128], strides = [1, 1]} : vector<16x512xf32> to vector<16x128xf32>
    %247 = arith.truncf %246 : vector<16x128xf32> to vector<16x128xbf16>
    %cst_97 = arith.constant dense<0.000000e+00> : vector<16x16xf32>
    %248 = tpu.matmul %245, %247, %cst_97 {dimension_numbers = #tpu.dot_dimension_numbers<[1], [1], [0], [0], [0, 0, 1, 0], [], []>} : vector<16x128xbf16>, vector<16x128xbf16>, vector<16x16xf32> -> vector<16x16xf32>
    %cst_98 = arith.constant 0.0883883461 : f32
    %249 = vector.broadcast %cst_98 : f32 to vector<16x16xf32>
    %250 = arith.mulf %248, %249 : vector<16x16xf32>
    %251 = vector.broadcast %75 : vector<1x16xf32> to vector<16x16xf32>
    %252 = arith.addf %250, %251 : vector<16x16xf32>
    %cst_99 = arith.constant dense<0xFF800000> : vector<16xf32>
    %253 = vector.multi_reduction <maximumf>, %252, %cst_99 [1] : vector<16x16xf32> to vector<16xf32>
    %254 = vector.shape_cast %253 : vector<16xf32> to vector<16x1xf32>
    %255 = vector.broadcast %254 : vector<16x1xf32> to vector<16x16xf32>
    %256 = arith.subf %252, %255 : vector<16x16xf32>
    %257 = math.exp %256 : vector<16x16xf32>
    %cst_100 = arith.constant dense<0.000000e+00> : vector<16xf32>
    %258 = vector.multi_reduction <add>, %257, %cst_100 [1] : vector<16x16xf32> to vector<16xf32>
    %259 = vector.shape_cast %258 : vector<16xf32> to vector<16x1xf32>
    %260 = tpu.reciprocal %259 {approx = true} : vector<16x1xf32> -> vector<16x1xf32>
    %261 = vector.broadcast %260 : vector<16x1xf32> to vector<16x16xf32>
    %262 = arith.mulf %257, %261 : vector<16x16xf32>
    %263 = arith.truncf %262 : vector<16x16xf32> to vector<16x16xbf16>
    %264 = vector.extract_strided_slice %174 {offsets = [0, 384], sizes = [16, 128], strides = [1, 1]} : vector<16x512xf32> to vector<16x128xf32>
    %265 = arith.truncf %264 : vector<16x128xf32> to vector<16x128xbf16>
    %cst_101 = arith.constant dense<0.000000e+00> : vector<16x128xf32>
    %266 = tpu.matmul %263, %265, %cst_101 {dimension_numbers = #tpu.dot_dimension_numbers<[1], [0], [0], [1], [0, 0, 1, 1], [], []>} : vector<16x16xbf16>, vector<16x128xbf16>, vector<16x128xf32> -> vector<16x128xf32>
    %267 = tpu.concatenate %197, %220, %243, %266 in 1 : vector<16x128xf32>, vector<16x128xf32>, vector<16x128xf32>, vector<16x128xf32> -> vector<16x512xf32>
    %268 = tpu.concatenate %171, %267 in 0 : vector<16x512xf32>, vector<16x512xf32> -> vector<32x512xf32>
    %269 = arith.truncf %268 : vector<32x512xf32> to vector<32x512xbf16>
    %c0_102 = arith.constant 0 : index
    %c0_103 = arith.constant 0 : index
    %c0_104 = arith.constant 0 : index
    %270 = vector.load %arg17[%c0_102, %c0_103, %c0_104] : memref<1x512x128xbf16, #tpu.memory_space<vmem>>, vector<1x512x128xbf16>
    %271 = vector.shape_cast %270 : vector<1x512x128xbf16> to vector<512x128xbf16>
    %cst_105 = arith.constant dense<0.000000e+00> : vector<32x128xf32>
    %272 = tpu.matmul %269, %271, %cst_105 {dimension_numbers = #tpu.dot_dimension_numbers<[1], [0], [0], [1], [0, 0, 1, 1], [], []>} : vector<32x512xbf16>, vector<512x128xbf16>, vector<32x128xf32> -> vector<32x128xf32>
    %c0_106 = arith.constant 0 : index
    %c0_107 = arith.constant 0 : index
    %c0_108 = arith.constant 0 : index
    %273 = vector.load %arg18[%c0_106, %c0_107, %c0_108] : memref<1x1x128xf32, #tpu.memory_space<vmem>>, vector<1x1x128xf32>
    %274 = vector.shape_cast %273 : vector<1x1x128xf32> to vector<1x128xf32>
    %275 = vector.broadcast %274 : vector<1x128xf32> to vector<32x128xf32>
    %276 = arith.addf %272, %275 : vector<32x128xf32>
    %277 = arith.addf %276, %24 : vector<32x128xf32>
    %c0_109 = arith.constant 0 : index
    %c0_110 = arith.constant 0 : index
    %c0_111 = arith.constant 0 : index
    %278 = vector.load %arg19[%c0_109, %c0_110, %c0_111] : memref<1x1x128xf32, #tpu.memory_space<vmem>>, vector<1x1x128xf32>
    %279 = vector.shape_cast %278 : vector<1x1x128xf32> to vector<1x128xf32>
    %c0_112 = arith.constant 0 : index
    %c0_113 = arith.constant 0 : index
    %c0_114 = arith.constant 0 : index
    %280 = vector.load %arg20[%c0_112, %c0_113, %c0_114] : memref<1x1x128xf32, #tpu.memory_space<vmem>>, vector<1x1x128xf32>
    %281 = vector.shape_cast %280 : vector<1x1x128xf32> to vector<1x128xf32>
    %cst_115 = arith.constant dense<0.000000e+00> : vector<32xf32>
    %282 = vector.multi_reduction <add>, %277, %cst_115 [1] : vector<32x128xf32> to vector<32xf32>
    %283 = vector.shape_cast %282 : vector<32xf32> to vector<32x1xf32>
    %cst_116 = arith.constant 1.280000e+02 : f32
    %284 = vector.broadcast %cst_116 : f32 to vector<32x1xf32>
    %285 = arith.divf %283, %284 : vector<32x1xf32>
    %286 = vector.broadcast %285 : vector<32x1xf32> to vector<32x128xf32>
    %287 = arith.subf %277, %286 : vector<32x128xf32>
    %288 = arith.mulf %287, %287 : vector<32x128xf32>
    %cst_117 = arith.constant dense<0.000000e+00> : vector<32xf32>
    %289 = vector.multi_reduction <add>, %288, %cst_117 [1] : vector<32x128xf32> to vector<32xf32>
    %290 = vector.shape_cast %289 : vector<32xf32> to vector<32x1xf32>
    %cst_118 = arith.constant 1.280000e+02 : f32
    %291 = vector.broadcast %cst_118 : f32 to vector<32x1xf32>
    %292 = arith.divf %290, %291 : vector<32x1xf32>
    %293 = vector.broadcast %285 : vector<32x1xf32> to vector<32x128xf32>
    %294 = arith.subf %277, %293 : vector<32x128xf32>
    %cst_119 = arith.constant 9.99999974E-6 : f32
    %295 = vector.broadcast %cst_119 : f32 to vector<32x1xf32>
    %296 = arith.addf %292, %295 : vector<32x1xf32>
    %297 = math.rsqrt %296 : vector<32x1xf32>
    %298 = vector.broadcast %297 : vector<32x1xf32> to vector<32x128xf32>
    %299 = arith.mulf %294, %298 : vector<32x128xf32>
    %300 = vector.broadcast %279 : vector<1x128xf32> to vector<32x128xf32>
    %301 = arith.mulf %299, %300 : vector<32x128xf32>
    %302 = vector.broadcast %281 : vector<1x128xf32> to vector<32x128xf32>
    %303 = arith.addf %301, %302 : vector<32x128xf32>
    %304 = arith.truncf %303 : vector<32x128xf32> to vector<32x128xbf16>
    %c0_120 = arith.constant 0 : index
    %c0_121 = arith.constant 0 : index
    %c0_122 = arith.constant 0 : index
    %305 = vector.load %arg21[%c0_120, %c0_121, %c0_122] : memref<1x128x128xbf16, #tpu.memory_space<vmem>>, vector<1x128x128xbf16>
    %306 = vector.shape_cast %305 : vector<1x128x128xbf16> to vector<128x128xbf16>
    %cst_123 = arith.constant dense<0.000000e+00> : vector<32x128xf32>
    %307 = tpu.matmul %304, %306, %cst_123 {dimension_numbers = #tpu.dot_dimension_numbers<[1], [0], [0], [1], [0, 0, 1, 1], [], []>} : vector<32x128xbf16>, vector<128x128xbf16>, vector<32x128xf32> -> vector<32x128xf32>
    %c0_124 = arith.constant 0 : index
    %c0_125 = arith.constant 0 : index
    %c0_126 = arith.constant 0 : index
    %308 = vector.load %arg22[%c0_124, %c0_125, %c0_126] : memref<1x1x128xf32, #tpu.memory_space<vmem>>, vector<1x1x128xf32>
    %309 = vector.shape_cast %308 : vector<1x1x128xf32> to vector<1x128xf32>
    %310 = vector.broadcast %309 : vector<1x128xf32> to vector<32x128xf32>
    %311 = arith.addf %307, %310 : vector<32x128xf32>
    %cst_127 = arith.constant 0.000000e+00 : f32
    %312 = vector.broadcast %cst_127 : f32 to vector<32x128xf32>
    %313 = arith.maximumf %311, %312 : vector<32x128xf32>
    %314 = arith.truncf %313 : vector<32x128xf32> to vector<32x128xbf16>
    %c0_128 = arith.constant 0 : index
    %c0_129 = arith.constant 0 : index
    %c0_130 = arith.constant 0 : index
    %315 = vector.load %arg23[%c0_128, %c0_129, %c0_130] : memref<1x128x128xbf16, #tpu.memory_space<vmem>>, vector<1x128x128xbf16>
    %316 = vector.shape_cast %315 : vector<1x128x128xbf16> to vector<128x128xbf16>
    %cst_131 = arith.constant dense<0.000000e+00> : vector<32x128xf32>
    %317 = tpu.matmul %314, %316, %cst_131 {dimension_numbers = #tpu.dot_dimension_numbers<[1], [0], [0], [1], [0, 0, 1, 1], [], []>} : vector<32x128xbf16>, vector<128x128xbf16>, vector<32x128xf32> -> vector<32x128xf32>
    %c0_132 = arith.constant 0 : index
    %c0_133 = arith.constant 0 : index
    %c0_134 = arith.constant 0 : index
    %318 = vector.load %arg24[%c0_132, %c0_133, %c0_134] : memref<1x1x128xf32, #tpu.memory_space<vmem>>, vector<1x1x128xf32>
    %319 = vector.shape_cast %318 : vector<1x1x128xf32> to vector<1x128xf32>
    %320 = vector.broadcast %319 : vector<1x128xf32> to vector<32x128xf32>
    %321 = arith.addf %317, %320 : vector<32x128xf32>
    %322 = arith.addf %321, %303 : vector<32x128xf32>
    %c0_135 = arith.constant 0 : index
    %c0_136 = arith.constant 0 : index
    %c0_137 = arith.constant 0 : index
    %323 = vector.load %arg25[%c0_135, %c0_136, %c0_137] : memref<1x1x128xf32, #tpu.memory_space<vmem>>, vector<1x1x128xf32>
    %324 = vector.shape_cast %323 : vector<1x1x128xf32> to vector<1x128xf32>
    %c0_138 = arith.constant 0 : index
    %c0_139 = arith.constant 0 : index
    %c0_140 = arith.constant 0 : index
    %325 = vector.load %arg26[%c0_138, %c0_139, %c0_140] : memref<1x1x128xf32, #tpu.memory_space<vmem>>, vector<1x1x128xf32>
    %326 = vector.shape_cast %325 : vector<1x1x128xf32> to vector<1x128xf32>
    %cst_141 = arith.constant dense<0.000000e+00> : vector<32xf32>
    %327 = vector.multi_reduction <add>, %322, %cst_141 [1] : vector<32x128xf32> to vector<32xf32>
    %328 = vector.shape_cast %327 : vector<32xf32> to vector<32x1xf32>
    %cst_142 = arith.constant 1.280000e+02 : f32
    %329 = vector.broadcast %cst_142 : f32 to vector<32x1xf32>
    %330 = arith.divf %328, %329 : vector<32x1xf32>
    %331 = vector.broadcast %330 : vector<32x1xf32> to vector<32x128xf32>
    %332 = arith.subf %322, %331 : vector<32x128xf32>
    %333 = arith.mulf %332, %332 : vector<32x128xf32>
    %cst_143 = arith.constant dense<0.000000e+00> : vector<32xf32>
    %334 = vector.multi_reduction <add>, %333, %cst_143 [1] : vector<32x128xf32> to vector<32xf32>
    %335 = vector.shape_cast %334 : vector<32xf32> to vector<32x1xf32>
    %cst_144 = arith.constant 1.280000e+02 : f32
    %336 = vector.broadcast %cst_144 : f32 to vector<32x1xf32>
    %337 = arith.divf %335, %336 : vector<32x1xf32>
    %338 = vector.broadcast %330 : vector<32x1xf32> to vector<32x128xf32>
    %339 = arith.subf %322, %338 : vector<32x128xf32>
    %cst_145 = arith.constant 9.99999974E-6 : f32
    %340 = vector.broadcast %cst_145 : f32 to vector<32x1xf32>
    %341 = arith.addf %337, %340 : vector<32x1xf32>
    %342 = math.rsqrt %341 : vector<32x1xf32>
    %343 = vector.broadcast %342 : vector<32x1xf32> to vector<32x128xf32>
    %344 = arith.mulf %339, %343 : vector<32x128xf32>
    %345 = vector.broadcast %324 : vector<1x128xf32> to vector<32x128xf32>
    %346 = arith.mulf %344, %345 : vector<32x128xf32>
    %347 = vector.broadcast %326 : vector<1x128xf32> to vector<32x128xf32>
    %348 = arith.addf %346, %347 : vector<32x128xf32>
    %349 = vector.shape_cast %348 : vector<32x128xf32> to vector<2x16x128xf32>
    %350 = tpu.iota {dimensions = array<i32: 1>} : vector<2x16x1xi32>
    %351 = vector.broadcast %1 : i32 to vector<2x16x1xi32>
    %352 = arith.cmpi slt, %350, %351 : vector<2x16x1xi32>
    %353 = arith.extui %352 : vector<2x16x1xi1> to vector<2x16x1xi32>
    %354 = arith.sitofp %353 : vector<2x16x1xi32> to vector<2x16x1xf32>
    %355 = vector.broadcast %354 : vector<2x16x1xf32> to vector<2x16x128xf32>
    %356 = arith.mulf %349, %355 : vector<2x16x128xf32>
    %cst_146 = arith.constant dense<0.000000e+00> : vector<2x128xf32>
    %357 = vector.multi_reduction <add>, %356, %cst_146 [1] : vector<2x16x128xf32> to vector<2x128xf32>
    %358 = arith.sitofp %1 : i32 to f32
    %359 = vector.broadcast %358 : f32 to vector<2x128xf32>
    %360 = arith.divf %357, %359 : vector<2x128xf32>
    %c0_147 = arith.constant 0 : index
    %c0_148 = arith.constant 0 : index
    %c0_149 = arith.constant 0 : index
    %361 = vector.load %arg27[%c0_147, %c0_148, %c0_149] : memref<1x2x128xf32, #tpu.memory_space<vmem>>, vector<1x2x128xf32>
    %362 = vector.shape_cast %361 : vector<1x2x128xf32> to vector<2x128xf32>
    %363 = vector.shape_cast %360 : vector<2x128xf32> to vector<1x2x128xf32>
    tpu.vector_store %arg27[%c0_147, %c0_148, %c0_149], %363 {strides = array<i32>} : memref<1x2x128xf32, #tpu.memory_space<vmem>>, vector<1x2x128xf32>,
    return
  }
  func.func @transform_0(%arg0: i32) -> (i32, i32, i32, i32) {
    %c0_i32 = arith.constant 0 : i32
    %c0_i32_0 = arith.constant 0 : i32
    %c0_i32_1 = arith.constant 0 : i32
    %c0_i32_2 = arith.constant 0 : i32
    return %arg0, %c0_i32, %c0_i32_0, %c0_i32_1 : i32, i32, i32, i32
  }
  func.func @transform_1(%arg0: i32) -> (i32, i32, i32, i32) {
    %c1_i32 = arith.constant 1 : i32
    %0 = arith.subi %c1_i32, %arg0 : i32
    %c0_i32 = arith.constant 0 : i32
    %c0_i32_0 = arith.constant 0 : i32
    %c0_i32_1 = arith.constant 0 : i32
    %c0_i32_2 = arith.constant 0 : i32
    return %0, %c0_i32, %c0_i32_0, %c0_i32_1 : i32, i32, i32, i32
  }
  func.func @transform_2(%arg0: i32) -> (i32, i32, i32) {
    %c0_i32 = arith.constant 0 : i32
    %c0_i32_0 = arith.constant 0 : i32
    %c0_i32_1 = arith.constant 0 : i32
    return %arg0, %c0_i32, %c0_i32_0 : i32, i32, i32
  }
  func.func @transform_3(%arg0: i32) -> (i32, i32, i32) {
    %c0_i32 = arith.constant 0 : i32
    %c0_i32_0 = arith.constant 0 : i32
    %c0_i32_1 = arith.constant 0 : i32
    return %arg0, %c0_i32, %c0_i32_0 : i32, i32, i32
  }
  func.func @transform_4(%arg0: i32) -> (i32, i32, i32) {
    %c0_i32 = arith.constant 0 : i32
    %c0_i32_0 = arith.constant 0 : i32
    %c0_i32_1 = arith.constant 0 : i32
    return %arg0, %c0_i32, %c0_i32_0 : i32, i32, i32
  }
  func.func @transform_5(%arg0: i32) -> (i32, i32, i32) {
    %c0_i32 = arith.constant 0 : i32
    %c0_i32_0 = arith.constant 0 : i32
    %c0_i32_1 = arith.constant 0 : i32
    return %arg0, %c0_i32, %c0_i32_0 : i32, i32, i32
  }
  func.func @transform_6(%arg0: i32) -> (i32, i32, i32) {
    %c1_i32 = arith.constant 1 : i32
    %0 = arith.subi %c1_i32, %arg0 : i32
    %c0_i32 = arith.constant 0 : i32
    %c0_i32_0 = arith.constant 0 : i32
    %c0_i32_1 = arith.constant 0 : i32
    return %0, %c0_i32, %c0_i32_0 : i32, i32, i32
  }
  func.func @transform_7(%arg0: i32) -> (i32, i32, i32) {
    %c1_i32 = arith.constant 1 : i32
    %0 = arith.subi %c1_i32, %arg0 : i32
    %c0_i32 = arith.constant 0 : i32
    %c0_i32_0 = arith.constant 0 : i32
    %c0_i32_1 = arith.constant 0 : i32
    return %0, %c0_i32, %c0_i32_0 : i32, i32, i32
  }
  func.func @transform_8(%arg0: i32) -> (i32, i32, i32) {
    %c1_i32 = arith.constant 1 : i32
    %0 = arith.subi %c1_i32, %arg0 : i32
    %c0_i32 = arith.constant 0 : i32
    %c0_i32_0 = arith.constant 0 : i32
    %c0_i32_1 = arith.constant 0 : i32
    return %0, %c0_i32, %c0_i32_0 : i32, i32, i32
  }
  func.func @transform_9(%arg0: i32) -> (i32, i32, i32) {
    %c1_i32 = arith.constant 1 : i32
    %0 = arith.subi %c1_i32, %arg0 : i32
    %c0_i32 = arith.constant 0 : i32
    %c0_i32_0 = arith.constant 0 : i32
    %c0_i32_1 = arith.constant 0 : i32
    return %0, %c0_i32, %c0_i32_0 : i32, i32, i32
  }
  func.func @transform_10(%arg0: i32) -> (i32, i32, i32) {
    %c0_i32 = arith.constant 0 : i32
    %c0_i32_0 = arith.constant 0 : i32
    %c0_i32_1 = arith.constant 0 : i32
    return %arg0, %c0_i32, %c0_i32_0 : i32, i32, i32
  }
  func.func @transform_11(%arg0: i32) -> (i32, i32, i32) {
    %c0_i32 = arith.constant 0 : i32
    %c0_i32_0 = arith.constant 0 : i32
    %c0_i32_1 = arith.constant 0 : i32
    return %arg0, %c0_i32, %c0_i32_0 : i32, i32, i32
  }
  func.func @transform_12(%arg0: i32) -> (i32, i32, i32) {
    %c0_i32 = arith.constant 0 : i32
    %c0_i32_0 = arith.constant 0 : i32
    %c0_i32_1 = arith.constant 0 : i32
    return %arg0, %c0_i32, %c0_i32_0 : i32, i32, i32
  }
  func.func @transform_13(%arg0: i32) -> (i32, i32, i32) {
    %c0_i32 = arith.constant 0 : i32
    %c0_i32_0 = arith.constant 0 : i32
    %c0_i32_1 = arith.constant 0 : i32
    return %arg0, %c0_i32, %c0_i32_0 : i32, i32, i32
  }
  func.func @transform_14(%arg0: i32) -> (i32, i32, i32) {
    %c0_i32 = arith.constant 0 : i32
    %c0_i32_0 = arith.constant 0 : i32
    %c0_i32_1 = arith.constant 0 : i32
    return %arg0, %c0_i32, %c0_i32_0 : i32, i32, i32
  }
  func.func @transform_15(%arg0: i32) -> (i32, i32, i32) {
    %c0_i32 = arith.constant 0 : i32
    %c0_i32_0 = arith.constant 0 : i32
    %c0_i32_1 = arith.constant 0 : i32
    return %arg0, %c0_i32, %c0_i32_0 : i32, i32, i32
  }
  func.func @transform_16(%arg0: i32) -> (i32, i32, i32) {
    %c0_i32 = arith.constant 0 : i32
    %c0_i32_0 = arith.constant 0 : i32
    %c0_i32_1 = arith.constant 0 : i32
    return %arg0, %c0_i32, %c0_i32_0 : i32, i32, i32
  }
  func.func @transform_17(%arg0: i32) -> (i32, i32, i32) {
    %c0_i32 = arith.constant 0 : i32
    %c0_i32_0 = arith.constant 0 : i32
    %c0_i32_1 = arith.constant 0 : i32
    return %arg0, %c0_i32, %c0_i32_0 : i32, i32, i32
  }
  func.func @transform_18(%arg0: i32) -> (i32, i32, i32) {
    %c0_i32 = arith.constant 0 : i32
    %c0_i32_0 = arith.constant 0 : i32
    %c0_i32_1 = arith.constant 0 : i32
    return %arg0, %c0_i32, %c0_i32_0 : i32, i32, i32
  }
  func.func @transform_19(%arg0: i32) -> (i32, i32, i32) {
    %c0_i32 = arith.constant 0 : i32
    %c0_i32_0 = arith.constant 0 : i32
    %c0_i32_1 = arith.constant 0 : i32
    return %arg0, %c0_i32, %c0_i32_0 : i32, i32, i32
  }
  func.func @transform_20(%arg0: i32) -> (i32, i32, i32) {
    %c0_i32 = arith.constant 0 : i32
    %c0_i32_0 = arith.constant 0 : i32
    %c0_i32_1 = arith.constant 0 : i32
    return %arg0, %c0_i32, %c0_i32_0 : i32, i32, i32
  }
  func.func @transform_21(%arg0: i32) -> (i32, i32, i32) {
    %c0_i32 = arith.constant 0 : i32
    %c0_i32_0 = arith.constant 0 : i32
    %c0_i32_1 = arith.constant 0 : i32
    return %arg0, %c0_i32, %c0_i32_0 : i32, i32, i32
  }
  func.func @transform_22(%arg0: i32) -> (i32, i32, i32) {
    %c0_i32 = arith.constant 0 : i32
    %c0_i32_0 = arith.constant 0 : i32
    %c0_i32_1 = arith.constant 0 : i32
    return %arg0, %c0_i32, %c0_i32_0 : i32, i32, i32
  }
  func.func @transform_23(%arg0: i32) -> (i32, i32, i32) {
    %c0_i32 = arith.constant 0 : i32
    %c0_i32_0 = arith.constant 0 : i32
    %c0_i32_1 = arith.constant 0 : i32
    return %arg0, %c0_i32, %c0_i32_0 : i32, i32, i32
  }
  func.func @transform_24(%arg0: i32) -> (i32, i32, i32) {
    %c0_i32 = arith.constant 0 : i32
    %c0_i32_0 = arith.constant 0 : i32
    %c0_i32_1 = arith.constant 0 : i32
    return %arg0, %c0_i32, %c0_i32_0 : i32, i32, i32
  }
  func.func @transform_25(%arg0: i32) -> (i32, i32, i32) {
    %c0_i32 = arith.constant 0 : i32
    %c0_i32_0 = arith.constant 0 : i32
    %c0_i32_1 = arith.constant 0 : i32
    return %arg0, %c0_i32, %c0_i32_0 : i32, i32, i32
  }
  func.func @transform_26(%arg0: i32) -> (i32, i32, i32) {
    %c0_i32 = arith.constant 0 : i32
    %c0_i32_0 = arith.constant 0 : i32
    %c0_i32_1 = arith.constant 0 : i32
    return %arg0, %c0_i32, %c0_i32_0 : i32, i32, i32
  }
}

</mosaic_0001>

<llo_original>
// kernel: video_forward.3
$region0: #{video_forward.3}
  #allocation0 [shape = 'u32[]', space=smem, size = 0x4, offset = 0x4, fixed_abs, tag = 'smem constant byte address 0x4 - core index']
  #allocation1 [shape = 'u32[144,128]{1,0:T(1,128)}', space=vmem, size = 0x12000, scoped, tag = 'internal scratch']
  %s0 = inlined_call_operand.vmem [shape: f32[2,2,128], index: 0, kind: input, shape index: {}]
  %s1 = inlined_call_operand.vmem [shape: bf16[128,128], index: 1, kind: input, shape index: {}]
  %s2 = inlined_call_operand.vmem [shape: f32[1,128], index: 2, kind: input, shape index: {}]
  %s3 = inlined_call_operand.vmem [shape: bf16[128,128], index: 3, kind: input, shape index: {}]
  %s4 = inlined_call_operand.vmem [shape: f32[1,128], index: 4, kind: input, shape index: {}]
  %s5 = inlined_call_operand.vmem [shape: bf16[128,128], index: 5, kind: input, shape index: {}]
  %s6 = inlined_call_operand.vmem [shape: f32[1,128], index: 6, kind: input, shape index: {}]
  %s7 = inlined_call_operand.vmem [shape: bf16[128,128], index: 7, kind: input, shape index: {}]
  %s8 = inlined_call_operand.vmem [shape: f32[1,128], index: 8, kind: input, shape index: {}]
  %s9 = inlined_call_operand.vmem [shape: f32[1,128], index: 9, kind: input, shape index: {}]
  %s10 = inlined_call_operand.vmem [shape: f32[1,128], index: 10, kind: input, shape index: {}]
  %s11 = inlined_call_operand.vmem [shape: bf16[128,2048], index: 11, kind: input, shape index: {}]
  %s12 = inlined_call_operand.vmem [shape: f32[1,2048], index: 12, kind: input, shape index: {}]
  %s13 = inlined_call_operand.vmem [shape: bf16[2048,128], index: 13, kind: input, shape index: {}]
  %s14 = inlined_call_operand.vmem [shape: f32[1,128], index: 14, kind: input, shape index: {}]
  %s15 = inlined_call_operand.vmem [shape: f32[1,128], index: 15, kind: input, shape index: {}]
  %s16 = inlined_call_operand.vmem [shape: f32[1,128], index: 16, kind: input, shape index: {}]
  %s17 = inlined_call_operand.hbm [shape: f32[2,128], index: 17, kind: output, shape index: {}]
  %s18 = sld [smem:[#allocation0]]
  $region78: #{video_forward.3} parent=0
    _
  %s20 = ssub.s32 1, %s18
  %s21 = scalar_select 0, %s20, %s18
  $region1: #{video_forward.3} parent=0
    #allocation2 [shape = 'u8[1024]{0}', space=vmem, size = 0x400, scoped, tag = 'output window, operand 0, single buffered']
    #allocation3 [shape = 's32[1]{0}', space=sflag, size = 0x4, scoped, tag = 'scoped memory for video_forward.3']
    %22 = vsyncpa [#allocation3], 0
    // Predicated region
    $region2: #{video_forward.3} parent=1 // pred_check
      _
    $region3: #{video_forward.3} parent=1 // pred_check_branch
      %24 = sbr.rel (0) target = $region5
    $region4: #{video_forward.3} parent=1 // pred_region
      _
    $region5: #{video_forward.3} parent=1 // pred_fallthru
      _
    // Predicated region
    $region6: #{video_forward.3} parent=1 // pred_check
      _
    $region7: #{video_forward.3} parent=1 // pred_check_branch
      %26 = sbr.rel (0) target = $region9
    $region8: #{video_forward.3} parent=1 // pred_region
      _
    $region9: #{video_forward.3} parent=1 // pred_fallthru
      _
    // Predicated region
    $region10: #{video_forward.3} parent=1 // pred_check
      _
    $region11: #{video_forward.3} parent=1 // pred_check_branch
      %28 = sbr.rel (0) target = $region13
    $region12: #{video_forward.3} parent=1 // pred_region
      _
    $region13: #{video_forward.3} parent=1 // pred_fallthru
      _
    // Predicated region
    $region14: #{video_forward.3} parent=1 // pred_check
      _
    $region15: #{video_forward.3} parent=1 // pred_check_branch
      %30 = sbr.rel (0) target = $region17
    $region16: #{video_forward.3} parent=1 // pred_region
      _
    $region17: #{video_forward.3} parent=1 // pred_fallthru
      _
    // Predicated region
    $region18: #{video_forward.3} parent=1 // pred_check
      _
    $region19: #{video_forward.3} parent=1 // pred_check_branch
      %32 = sbr.rel (0) target = $region21
    $region20: #{video_forward.3} parent=1 // pred_region
      _
    $region21: #{video_forward.3} parent=1 // pred_fallthru
      _
    // Predicated region
    $region22: #{video_forward.3} parent=1 // pred_check
      _
    $region23: #{video_forward.3} parent=1 // pred_check_branch
      %34 = sbr.rel (0) target = $region25
    $region24: #{video_forward.3} parent=1 // pred_region
      _
    $region25: #{video_forward.3} parent=1 // pred_fallthru
      _
    // Predicated region
    $region26: #{video_forward.3} parent=1 // pred_check
      _
    $region27: #{video_forward.3} parent=1 // pred_check_branch
      %36 = sbr.rel (0) target = $region29
    $region28: #{video_forward.3} parent=1 // pred_region
      _
    $region29: #{video_forward.3} parent=1 // pred_fallthru
      _
    // Predicated region
    $region30: #{video_forward.3} parent=1 // pred_check
      _
    $region31: #{video_forward.3} parent=1 // pred_check_branch
      %38 = sbr.rel (0) target = $region33
    $region32: #{video_forward.3} parent=1 // pred_region
      _
    $region33: #{video_forward.3} parent=1 // pred_fallthru
      _
    // Predicated region
    $region34: #{video_forward.3} parent=1 // pred_check
      _
    $region35: #{video_forward.3} parent=1 // pred_check_branch
      %40 = sbr.rel (0) target = $region37
    $region36: #{video_forward.3} parent=1 // pred_region
      _
    $region37: #{video_forward.3} parent=1 // pred_fallthru
      _
    // Predicated region
    $region38: #{video_forward.3} parent=1 // pred_check
      _
    $region39: #{video_forward.3} parent=1 // pred_check_branch
      %42 = sbr.rel (0) target = $region41
    $region40: #{video_forward.3} parent=1 // pred_region
      _
    $region41: #{video_forward.3} parent=1 // pred_fallthru
      _
    // Predicated region
    $region42: #{video_forward.3} parent=1 // pred_check
      _
    $region43: #{video_forward.3} parent=1 // pred_check_branch
      %44 = sbr.rel (0) target = $region45
    $region44: #{video_forward.3} parent=1 // pred_region
      _
    $region45: #{video_forward.3} parent=1 // pred_fallthru
      _
    // Predicated region
    $region46: #{video_forward.3} parent=1 // pred_check
      _
    $region47: #{video_forward.3} parent=1 // pred_check_branch
      %46 = sbr.rel (0) target = $region49
    $region48: #{video_forward.3} parent=1 // pred_region
      _
    $region49: #{video_forward.3} parent=1 // pred_fallthru
      _
    // Predicated region
    $region50: #{video_forward.3} parent=1 // pred_check
      _
    $region51: #{video_forward.3} parent=1 // pred_check_branch
      %48 = sbr.rel (0) target = $region53
    $region52: #{video_forward.3} parent=1 // pred_region
      _
    $region53: #{video_forward.3} parent=1 // pred_fallthru
      _
    // Predicated region
    $region54: #{video_forward.3} parent=1 // pred_check
      _
    $region55: #{video_forward.3} parent=1 // pred_check_branch
      %50 = sbr.rel (0) target = $region57
    $region56: #{video_forward.3} parent=1 // pred_region
      _
    $region57: #{video_forward.3} parent=1 // pred_fallthru
      _
    // Predicated region
    $region58: #{video_forward.3} parent=1 // pred_check
      _
    $region59: #{video_forward.3} parent=1 // pred_check_branch
      %52 = sbr.rel (0) target = $region61
    $region60: #{video_forward.3} parent=1 // pred_region
      _
    $region61: #{video_forward.3} parent=1 // pred_fallthru
      _
    // Predicated region
    $region62: #{video_forward.3} parent=1 // pred_check
      _
    $region63: #{video_forward.3} parent=1 // pred_check_branch
      %54 = sbr.rel (0) target = $region65
    $region64: #{video_forward.3} parent=1 // pred_region
      _
    $region65: #{video_forward.3} parent=1 // pred_fallthru
      _
    // Predicated region
    $region66: #{video_forward.3} parent=1 // pred_check
      _
    $region67: #{video_forward.3} parent=1 // pred_check_branch
      %56 = sbr.rel (0) target = $region69
    $region68: #{video_forward.3} parent=1 // pred_region
      _
    $region69: #{video_forward.3} parent=1 // pred_fallthru
      _
    %v58 = vld [vmem:[%s0] sm:$0x3]
    %v59 = vld [vmem:[%s0 + $0x2] sm:$0x3]
    %v61 = vrot.slane %v58, 6
    %vm63 = vcmask 1041408
    %v64 = vsel %vm63, %v59, %v61
    %v65 = vpack.c.bf16 %v64, %v64
    %v66 = vld [vmem:[%s1] sm:$0xf]
    %v67 = vld [vmem:[%s1 + $0x4] sm:$0xf]
    %v68 = vld [vmem:[%s1 + $0x8] sm:$0xf]
    %v69 = vld [vmem:[%s1 + $0xc] sm:$0xf]
    %v70 = vld [vmem:[%s1 + $0x10] sm:$0xf]
    %v71 = vld [vmem:[%s1 + $0x14] sm:$0xf]
    %v72 = vld [vmem:[%s1 + $0x18] sm:$0xf]
    %v73 = vld [vmem:[%s1 + $0x1c] sm:$0xf]
    %v74 = vld [vmem:[%s1 + $0x20] sm:$0xf]
    %v75 = vld [vmem:[%s1 + $0x24] sm:$0xf]
    %v76 = vld [vmem:[%s1 + $0x28] sm:$0xf]
    %v77 = vld [vmem:[%s1 + $0x2c] sm:$0xf]
    %v78 = vld [vmem:[%s1 + $0x30] sm:$0xf]
    %v79 = vld [vmem:[%s1 + $0x34] sm:$0xf]
    %v80 = vld [vmem:[%s1 + $0x38] sm:$0xf]
    %v81 = vld [vmem:[%s1 + $0x3c] sm:$0xf]
    %v82 = vld [vmem:[%s2] sm:$0x1]
    %v84 = vlaneseq
    %v85 = vshrl.u32 %v84, 7
    %v86 = vsub.s32 0, %v85
    %v87 = vrot.slane %v82, %v86
    %v105 = vunpack.c.l.b16 %v66
    %v106 = vunpack.c.l.b16 %v67
    %v107 = vunpack.c.l.b16 %v68
    %v108 = vunpack.c.l.b16 %v69
    %v109 = vunpack.c.l.b16 %v70
    %v110 = vunpack.c.l.b16 %v71
    %v111 = vunpack.c.l.b16 %v72
    %v112 = vunpack.c.l.b16 %v73
    %v113 = vunpack.c.l.b16 %v74
    %v114 = vunpack.c.l.b16 %v75
    %v115 = vunpack.c.l.b16 %v76
    %v116 = vunpack.c.l.b16 %v77
    %v117 = vunpack.c.l.b16 %v78
    %v118 = vunpack.c.l.b16 %v79
    %v119 = vunpack.c.l.b16 %v80
    %v120 = vunpack.c.l.b16 %v81
    %v121 = vpack.c.b16 %v106, %v105
    %v122 = vpack.c.b16 %v108, %v107
    %v123 = vpack.c.b16 %v110, %v109
    %v124 = vpack.c.b16 %v112, %v111
    %v125 = vpack.c.b16 %v114, %v113
    %v126 = vpack.c.b16 %v116, %v115
    %v127 = vpack.c.b16 %v118, %v117
    %v128 = vpack.c.b16 %v120, %v119
    %137 = vmatprep.subr.bf16.mxu0 0
    %138 = vmatpush1.bf16.msra.mxu0 %v121
    %139 = vmatprep.subr.bf16.mxu0 0
    %140 = vmatpush1.bf16.msra.mxu0 %v122
    %141 = vmatprep.subr.bf16.mxu0 0
    %142 = vmatpush1.bf16.msra.mxu0 %v123
    %143 = vmatprep.subr.bf16.mxu0 0
    %144 = vmatpush1.bf16.msra.mxu0 %v124
    %145 = vmatprep.subr.bf16.mxu0 0
    %146 = vmatpush1.bf16.msra.mxu0 %v125
    %147 = vmatprep.subr.bf16.mxu0 0
    %148 = vmatpush1.bf16.msra.mxu0 %v126
    %149 = vmatprep.subr.bf16.mxu0 0
    %150 = vmatpush1.bf16.msra.mxu0 %v127
    %151 = vmatprep.subr.bf16.mxu0 0
    %152 = vmatpush1.bf16.msra.mxu0 %v128
    %153 = vmatprep.subr.bf16.mxu0 0
    %154 = vmatpush1.bf16.msra.mxu0 0
    %155 = vmatprep.subr.bf16.mxu0 0
    %156 = vmatpush1.bf16.msra.mxu0 0
    %157 = vmatprep.subr.bf16.mxu0 0
    %158 = vmatpush1.bf16.msra.mxu0 0
    %159 = vmatprep.subr.bf16.mxu0 0
    %160 = vmatpush1.bf16.msra.mxu0 0
    %161 = vmatprep.subr.bf16.mxu0 0
    %162 = vmatpush1.bf16.msra.mxu0 0
    %163 = vmatprep.subr.bf16.mxu0 0
    %164 = vmatpush1.bf16.msra.mxu0 0
    %165 = vmatprep.subr.bf16.mxu0 0
    %166 = vmatpush1.bf16.msra.mxu0 0
    %167 = vmatprep.subr.bf16.mxu0 0
    %168 = vmatpush1.bf16.msra.mxu0 0
    %169 = vmatprep.mubr.bf16.mxu0 0
    %170 = vmatmul.mubr.bf16.gmra.mrb[0].mxu0 %v65
    %v171 = vpop.f32.mrb[0].mxu0
    %v172 = vadd.f32 %v87, %v171
    %v173 = vpop.f32.mrb[0].mxu0
    %v174 = vpop.f32.mrb[0].mxu0
    %v175 = vpop.f32.mrb[0].mxu0
    %176 = vdwg.mxu0
    %v177 = vld [vmem:[%s3] sm:$0xf]
    %v178 = vld [vmem:[%s3 + $0x4] sm:$0xf]
    %v179 = vld [vmem:[%s3 + $0x8] sm:$0xf]
    %v180 = vld [vmem:[%s3 + $0xc] sm:$0xf]
    %v181 = vld [vmem:[%s3 + $0x10] sm:$0xf]
    %v182 = vld [vmem:[%s3 + $0x14] sm:$0xf]
    %v183 = vld [vmem:[%s3 + $0x18] sm:$0xf]
    %v184 = vld [vmem:[%s3 + $0x1c] sm:$0xf]
    %v185 = vld [vmem:[%s3 + $0x20] sm:$0xf]
    %v186 = vld [vmem:[%s3 + $0x24] sm:$0xf]
    %v187 = vld [vmem:[%s3 + $0x28] sm:$0xf]
    %v188 = vld [vmem:[%s3 + $0x2c] sm:$0xf]
    %v189 = vld [vmem:[%s3 + $0x30] sm:$0xf]
    %v190 = vld [vmem:[%s3 + $0x34] sm:$0xf]
    %v191 = vld [vmem:[%s3 + $0x38] sm:$0xf]
    %v192 = vld [vmem:[%s3 + $0x3c] sm:$0xf]
    %v193 = vld [vmem:[%s4] sm:$0x1]
    %v195 = vlaneseq
    %v196 = vshrl.u32 %v195, 7
    %v197 = vsub.s32 0, %v196
    %v198 = vrot.slane %v193, %v197
    %v216 = vunpack.c.l.b16 %v177
    %v217 = vunpack.c.l.b16 %v178
    %v218 = vunpack.c.l.b16 %v179
    %v219 = vunpack.c.l.b16 %v180
    %v220 = vunpack.c.l.b16 %v181
    %v221 = vunpack.c.l.b16 %v182
    %v222 = vunpack.c.l.b16 %v183
    %v223 = vunpack.c.l.b16 %v184
    %v224 = vunpack.c.l.b16 %v185
    %v225 = vunpack.c.l.b16 %v186
    %v226 = vunpack.c.l.b16 %v187
    %v227 = vunpack.c.l.b16 %v188
    %v228 = vunpack.c.l.b16 %v189
    %v229 = vunpack.c.l.b16 %v190
    %v230 = vunpack.c.l.b16 %v191
    %v231 = vunpack.c.l.b16 %v192
    %v232 = vpack.c.b16 %v217, %v216
    %v233 = vpack.c.b16 %v219, %v218
    %v234 = vpack.c.b16 %v221, %v220
    %v235 = vpack.c.b16 %v223, %v222
    %v236 = vpack.c.b16 %v225, %v224
    %v237 = vpack.c.b16 %v227, %v226
    %v238 = vpack.c.b16 %v229, %v228
    %v239 = vpack.c.b16 %v231, %v230
    %248 = vmatprep.subr.bf16.mxu0 0
    %249 = vmatpush1.bf16.msra.mxu0 %v232
    %250 = vmatprep.subr.bf16.mxu0 0
    %251 = vmatpush1.bf16.msra.mxu0 %v233
    %252 = vmatprep.subr.bf16.mxu0 0
    %253 = vmatpush1.bf16.msra.mxu0 %v234
    %254 = vmatprep.subr.bf16.mxu0 0
    %255 = vmatpush1.bf16.msra.mxu0 %v235
    %256 = vmatprep.subr.bf16.mxu0 0
    %257 = vmatpush1.bf16.msra.mxu0 %v236
    %258 = vmatprep.subr.bf16.mxu0 0
    %259 = vmatpush1.bf16.msra.mxu0 %v237
    %260 = vmatprep.subr.bf16.mxu0 0
    %261 = vmatpush1.bf16.msra.mxu0 %v238
    %262 = vmatprep.subr.bf16.mxu0 0
    %263 = vmatpush1.bf16.msra.mxu0 %v239
    %264 = vmatprep.subr.bf16.mxu0 0
    %265 = vmatpush1.bf16.msra.mxu0 0
    %266 = vmatprep.subr.bf16.mxu0 0
    %267 = vmatpush1.bf16.msra.mxu0 0
    %268 = vmatprep.subr.bf16.mxu0 0
    %269 = vmatpush1.bf16.msra.mxu0 0
    %270 = vmatprep.subr.bf16.mxu0 0
    %271 = vmatpush1.bf16.msra.mxu0 0
    %272 = vmatprep.subr.bf16.mxu0 0
    %273 = vmatpush1.bf16.msra.mxu0 0
    %274 = vmatprep.subr.bf16.mxu0 0
    %275 = vmatpush1.bf16.msra.mxu0 0
    %276 = vmatprep.subr.bf16.mxu0 0
    %277 = vmatpush1.bf16.msra.mxu0 0
    %278 = vmatprep.subr.bf16.mxu0 0
    %279 = vmatpush1.bf16.msra.mxu0 0
    %280 = vmatprep.mubr.bf16.mxu0 0
    %281 = vmatmul.mubr.bf16.gmra.mrb[0].mxu0 %v65
    %v282 = vpop.f32.mrb[0].mxu0
    %v283 = vadd.f32 %v198, %v282
    %v284 = vpop.f32.mrb[0].mxu0
    %v285 = vpop.f32.mrb[0].mxu0
    %v286 = vpop.f32.mrb[0].mxu0
    %287 = vdwg.mxu0
    %v288 = vld [vmem:[%s5] sm:$0xf]
    %v289 = vld [vmem:[%s5 + $0x4] sm:$0xf]
    %v290 = vld [vmem:[%s5 + $0x8] sm:$0xf]
    %v291 = vld [vmem:[%s5 + $0xc] sm:$0xf]
    %v292 = vld [vmem:[%s5 + $0x10] sm:$0xf]
    %v293 = vld [vmem:[%s5 + $0x14] sm:$0xf]
    %v294 = vld [vmem:[%s5 + $0x18] sm:$0xf]
    %v295 = vld [vmem:[%s5 + $0x1c] sm:$0xf]
    %v296 = vld [vmem:[%s5 + $0x20] sm:$0xf]
    %v297 = vld [vmem:[%s5 + $0x24] sm:$0xf]
    %v298 = vld [vmem:[%s5 + $0x28] sm:$0xf]
    %v299 = vld [vmem:[%s5 + $0x2c] sm:$0xf]
    %v300 = vld [vmem:[%s5 + $0x30] sm:$0xf]
    %v301 = vld [vmem:[%s5 + $0x34] sm:$0xf]
    %v302 = vld [vmem:[%s5 + $0x38] sm:$0xf]
    %v303 = vld [vmem:[%s5 + $0x3c] sm:$0xf]
    %v304 = vld [vmem:[%s6] sm:$0x1]
    %v306 = vlaneseq
    %v307 = vshrl.u32 %v306, 7
    %v308 = vsub.s32 0, %v307
    %v309 = vrot.slane %v304, %v308
    %v327 = vunpack.c.l.b16 %v288
    %v328 = vunpack.c.l.b16 %v289
    %v329 = vunpack.c.l.b16 %v290
    %v330 = vunpack.c.l.b16 %v291
    %v331 = vunpack.c.l.b16 %v292
    %v332 = vunpack.c.l.b16 %v293
    %v333 = vunpack.c.l.b16 %v294
    %v334 = vunpack.c.l.b16 %v295
    %v335 = vunpack.c.l.b16 %v296
    %v336 = vunpack.c.l.b16 %v297
    %v337 = vunpack.c.l.b16 %v298
    %v338 = vunpack.c.l.b16 %v299
    %v339 = vunpack.c.l.b16 %v300
    %v340 = vunpack.c.l.b16 %v301
    %v341 = vunpack.c.l.b16 %v302
    %v342 = vunpack.c.l.b16 %v303
    %v343 = vpack.c.b16 %v328, %v327
    %v344 = vpack.c.b16 %v330, %v329
    %v345 = vpack.c.b16 %v332, %v331
    %v346 = vpack.c.b16 %v334, %v333
    %v347 = vpack.c.b16 %v336, %v335
    %v348 = vpack.c.b16 %v338, %v337
    %v349 = vpack.c.b16 %v340, %v339
    %v350 = vpack.c.b16 %v342, %v341
    %359 = vmatprep.subr.bf16.mxu0 0
    %360 = vmatpush1.bf16.msra.mxu0 %v343
    %361 = vmatprep.subr.bf16.mxu0 0
    %362 = vmatpush1.bf16.msra.mxu0 %v344
    %363 = vmatprep.subr.bf16.mxu0 0
    %364 = vmatpush1.bf16.msra.mxu0 %v345
    %365 = vmatprep.subr.bf16.mxu0 0
    %366 = vmatpush1.bf16.msra.mxu0 %v346
    %367 = vmatprep.subr.bf16.mxu0 0
    %368 = vmatpush1.bf16.msra.mxu0 %v347
    %369 = vmatprep.subr.bf16.mxu0 0
    %370 = vmatpush1.bf16.msra.mxu0 %v348
    %371 = vmatprep.subr.bf16.mxu0 0
    %372 = vmatpush1.bf16.msra.mxu0 %v349
    %373 = vmatprep.subr.bf16.mxu0 0
    %374 = vmatpush1.bf16.msra.mxu0 %v350
    %375 = vmatprep.subr.bf16.mxu0 0
    %376 = vmatpush1.bf16.msra.mxu0 0
    %377 = vmatprep.subr.bf16.mxu0 0
    %378 = vmatpush1.bf16.msra.mxu0 0
    %379 = vmatprep.subr.bf16.mxu0 0
    %380 = vmatpush1.bf16.msra.mxu0 0
    %381 = vmatprep.subr.bf16.mxu0 0
    %382 = vmatpush1.bf16.msra.mxu0 0
    %383 = vmatprep.subr.bf16.mxu0 0
    %384 = vmatpush1.bf16.msra.mxu0 0
    %385 = vmatprep.subr.bf16.mxu0 0
    %386 = vmatpush1.bf16.msra.mxu0 0
    %387 = vmatprep.subr.bf16.mxu0 0
    %388 = vmatpush1.bf16.msra.mxu0 0
    %389 = vmatprep.subr.bf16.mxu0 0
    %390 = vmatpush1.bf16.msra.mxu0 0
    %391 = vmatprep.mubr.bf16.mxu0 0
    %392 = vmatmul.mubr.bf16.gmra.mrb[0].mxu0 %v65
    %v393 = vpop.f32.mrb[0].mxu0
    %v394 = vadd.f32 %v309, %v393
    %v395 = vpop.f32.mrb[0].mxu0
    %v396 = vpop.f32.mrb[0].mxu0
    %v397 = vpop.f32.mrb[0].mxu0
    %398 = vdwg.mxu0
    %v400 = vrot.slane %v172, 1
    %vm402 = vcmask 1040384
    %v403 = vsel %vm402, %v172, %v400
    %v405 = vrot.slane %v283, 1
    %v407 = vsel %vm402, %v283, %v405
    %v409 = vrot.slane %v394, 1
    %v411 = vsel %vm402, %v394, %v409
    %v412 = vpack.c.bf16 %v403, %v403
    %v413 = vpack.c.bf16 %v407, %v407
    %vm414 = vcmask 523264
    %v416 = vsel %vm414, %v412, 0
    %v419 = vsel %vm414, %v413, 0
    %421 = vmatprep.subr.bf16.mxu0 0
    %422 = vmatpush1.bf16.xpose.msra.mxu0 %v419
    %423 = vmatprep.subr.bf16.mxu0 0
    %424 = vmatpush1.bf16.xpose.msra.mxu0 0
    %425 = vmatprep.subr.bf16.mxu0 0
    %426 = vmatpush1.bf16.xpose.msra.mxu0 0
    %427 = vmatprep.subr.bf16.mxu0 0
    %428 = vmatpush1.bf16.xpose.msra.mxu0 0
    %429 = vmatprep.subr.bf16.mxu0 0
    %430 = vmatpush1.bf16.xpose.msra.mxu0 0
    %431 = vmatprep.subr.bf16.mxu0 0
    %432 = vmatpush1.bf16.xpose.msra.mxu0 0
    %433 = vmatprep.subr.bf16.mxu0 0
    %434 = vmatpush1.bf16.xpose.msra.mxu0 0
    %435 = vmatprep.subr.bf16.mxu0 0
    %436 = vmatpush1.bf16.xpose.msra.mxu0 0
    %437 = vmatprep.subr.bf16.mxu0 0
    %438 = vmatpush1.bf16.xpose.msra.mxu0 0
    %439 = vmatprep.subr.bf16.mxu0 0
    %440 = vmatpush1.bf16.xpose.msra.mxu0 0
    %441 = vmatprep.subr.bf16.mxu0 0
    %442 = vmatpush1.bf16.xpose.msra.mxu0 0
    %443 = vmatprep.subr.bf16.mxu0 0
    %444 = vmatpush1.bf16.xpose.msra.mxu0 0
    %445 = vmatprep.subr.bf16.mxu0 0
    %446 = vmatpush1.bf16.xpose.msra.mxu0 0
    %447 = vmatprep.subr.bf16.mxu0 0
    %448 = vmatpush1.bf16.xpose.msra.mxu0 0
    %449 = vmatprep.subr.bf16.mxu0 0
    %450 = vmatpush1.bf16.xpose.msra.mxu0 0
    %451 = vmatprep.subr.bf16.mxu0 0
    %452 = vmatpush1.bf16.xpose.msra.mxu0 0
    %453 = vmatprep.mubr.bf16.mxu0 0
    %454 = vmatmul.mubr.bf16.gmra.mrb[0].mxu0 %v416
    %v455 = vpop.f32.mrb[0].mxu0
    %v456 = vadd.f32 0.0, %v455
    %v457 = vpop.f32.mrb[0].mxu0
    %v458 = vpop.f32.mrb[0].mxu0
    %v459 = vpop.f32.mrb[0].mxu0
    %460 = vdwg.mxu0
    %v461 = vmul.f32 %v456, 0.125
    %vm462 = vcmask 9216
    %v463 = vsel %vm462, %v461, -inf
    %464 = vmax.xlane.f32.xlu0 %v463
    %v465 = vpop.xlane.xlu0 %464
    %v466 = vsub.f32 %v461, %v465
    %v467 = vmul.f32 %v466, 1.442695
    %v468 = vpow.pop %v467
    %v469 = vsel %vm462, %v468, 0.0
    %470 = vadd.xlane.f32.xlu0 %v469
    %v471 = vpop.xlane.xlu0 %470
    %v472 = vrcp.pop %v471
    %v473 = vmul.f32 %v468, %v472
    %v474 = vpack.c.bf16 %v473, %v473
    %v475 = vpack.c.bf16 %v411, %v411
    %vm476 = vcmask 15360
    %v478 = vsel %vm476, %v474, 0
    %v481 = vsel %vm402, %v475, 0
    %483 = vmatprep.subr.bf16.mxu0 0
    %484 = vmatpush1.bf16.msra.mxu0 %v481
    %485 = vmatprep.subr.bf16.mxu0 0
    %486 = vmatpush1.bf16.msra.mxu0 0
    %487 = vmatprep.subr.bf16.mxu0 0
    %488 = vmatpush1.bf16.msra.mxu0 0
    %489 = vmatprep.subr.bf16.mxu0 0
    %490 = vmatpush1.bf16.msra.mxu0 0
    %491 = vmatprep.subr.bf16.mxu0 0
    %492 = vmatpush1.bf16.msra.mxu0 0
    %493 = vmatprep.subr.bf16.mxu0 0
    %494 = vmatpush1.bf16.msra.mxu0 0
    %495 = vmatprep.subr.bf16.mxu0 0
    %496 = vmatpush1.bf16.msra.mxu0 0
    %497 = vmatprep.subr.bf16.mxu0 0
    %498 = vmatpush1.bf16.msra.mxu0 0
    %499 = vmatprep.subr.bf16.mxu0 0
    %500 = vmatpush1.bf16.msra.mxu0 0
    %501 = vmatprep.subr.bf16.mxu0 0
    %502 = vmatpush1.bf16.msra.mxu0 0
    %503 = vmatprep.subr.bf16.mxu0 0
    %504 = vmatpush1.bf16.msra.mxu0 0
    %505 = vmatprep.subr.bf16.mxu0 0
    %506 = vmatpush1.bf16.msra.mxu0 0
    %507 = vmatprep.subr.bf16.mxu0 0
    %508 = vmatpush1.bf16.msra.mxu0 0
    %509 = vmatprep.subr.bf16.mxu0 0
    %510 = vmatpush1.bf16.msra.mxu0 0
    %511 = vmatprep.subr.bf16.mxu0 0
    %512 = vmatpush1.bf16.msra.mxu0 0
    %513 = vmatprep.subr.bf16.mxu0 0
    %514 = vmatpush1.bf16.msra.mxu0 0
    %515 = vmatprep.mubr.bf16.mxu0 0
    %516 = vmatmul.mubr.bf16.gmra.mrb[0].mxu0 %v478
    %v517 = vpop.f32.mrb[0].mxu0
    %v518 = vadd.f32 0.0, %v517
    %v519 = vpop.f32.mrb[0].mxu0
    %v520 = vpop.f32.mrb[0].mxu0
    %v521 = vpop.f32.mrb[0].mxu0
    %522 = vdwg.mxu0
    %524 = vrot.lane.b32.xlu0 %v412, 64
    %v525 = vpop.permute.xlu0 %524
    %527 = vrot.lane.b32.xlu0 %v413, 64
    %v528 = vpop.permute.xlu0 %527
    %v530 = vsel %vm414, %v525, 0
    %v533 = vsel %vm414, %v528, 0
    %535 = vmatprep.subr.bf16.mxu0 0
    %536 = vmatpush1.bf16.xpose.msra.mxu0 %v533
    %537 = vmatprep.subr.bf16.mxu0 0
    %538 = vmatpush1.bf16.xpose.msra.mxu0 0
    %539 = vmatprep.subr.bf16.mxu0 0
    %540 = vmatpush1.bf16.xpose.msra.mxu0 0
    %541 = vmatprep.subr.bf16.mxu0 0
    %542 = vmatpush1.bf16.xpose.msra.mxu0 0
    %543 = vmatprep.subr.bf16.mxu0 0
    %544 = vmatpush1.bf16.xpose.msra.mxu0 0
    %545 = vmatprep.subr.bf16.mxu0 0
    %546 = vmatpush1.bf16.xpose.msra.mxu0 0
    %547 = vmatprep.subr.bf16.mxu0 0
    %548 = vmatpush1.bf16.xpose.msra.mxu0 0
    %549 = vmatprep.subr.bf16.mxu0 0
    %550 = vmatpush1.bf16.xpose.msra.mxu0 0
    %551 = vmatprep.subr.bf16.mxu0 0
    %552 = vmatpush1.bf16.xpose.msra.mxu0 0
    %553 = vmatprep.subr.bf16.mxu0 0
    %554 = vmatpush1.bf16.xpose.msra.mxu0 0
    %555 = vmatprep.subr.bf16.mxu0 0
    %556 = vmatpush1.bf16.xpose.msra.mxu0 0
    %557 = vmatprep.subr.bf16.mxu0 0
    %558 = vmatpush1.bf16.xpose.msra.mxu0 0
    %559 = vmatprep.subr.bf16.mxu0 0
    %560 = vmatpush1.bf16.xpose.msra.mxu0 0
    %561 = vmatprep.subr.bf16.mxu0 0
    %562 = vmatpush1.bf16.xpose.msra.mxu0 0
    %563 = vmatprep.subr.bf16.mxu0 0
    %564 = vmatpush1.bf16.xpose.msra.mxu0 0
    %565 = vmatprep.subr.bf16.mxu0 0
    %566 = vmatpush1.bf16.xpose.msra.mxu0 0
    %567 = vmatprep.mubr.bf16.mxu0 0
    %568 = vmatmul.mubr.bf16.gmra.mrb[0].mxu0 %v530
    %v569 = vpop.f32.mrb[0].mxu0
    %v570 = vadd.f32 0.0, %v569
    %v571 = vpop.f32.mrb[0].mxu0
    %v572 = vpop.f32.mrb[0].mxu0
    %v573 = vpop.f32.mrb[0].mxu0
    %574 = vdwg.mxu0
    %v575 = vmul.f32 %v570, 0.125
    %v576 = vsel %vm462, %v575, -inf
    %577 = vmax.xlane.f32.xlu0 %v576
    %v578 = vpop.xlane.xlu0 %577
    %v579 = vsub.f32 %v575, %v578
    %v580 = vmul.f32 %v579, 1.442695
    %v581 = vpow.pop %v580
    %v582 = vsel %vm462, %v581, 0.0
    %583 = vadd.xlane.f32.xlu0 %v582
    %v584 = vpop.xlane.xlu0 %583
    %v585 = vrcp.pop %v584
    %v586 = vmul.f32 %v581, %v585
    %v587 = vpack.c.bf16 %v586, %v586
    %589 = vrot.lane.b32.xlu0 %v475, 64
    %v590 = vpop.permute.xlu0 %589
    %v592 = vsel %vm476, %v587, 0
    %v595 = vsel %vm402, %v590, 0
    %597 = vmatprep.subr.bf16.mxu0 0
    %598 = vmatpush1.bf16.msra.mxu0 %v595
    %599 = vmatprep.subr.bf16.mxu0 0
    %600 = vmatpush1.bf16.msra.mxu0 0
    %601 = vmatprep.subr.bf16.mxu0 0
    %602 = vmatpush1.bf16.msra.mxu0 0
    %603 = vmatprep.subr.bf16.mxu0 0
    %604 = vmatpush1.bf16.msra.mxu0 0
    %605 = vmatprep.subr.bf16.mxu0 0
    %606 = vmatpush1.bf16.msra.mxu0 0
    %607 = vmatprep.subr.bf16.mxu0 0
    %608 = vmatpush1.bf16.msra.mxu0 0
    %609 = vmatprep.subr.bf16.mxu0 0
    %610 = vmatpush1.bf16.msra.mxu0 0
    %611 = vmatprep.subr.bf16.mxu0 0
    %612 = vmatpush1.bf16.msra.mxu0 0
    %613 = vmatprep.subr.bf16.mxu0 0
    %614 = vmatpush1.bf16.msra.mxu0 0
    %615 = vmatprep.subr.bf16.mxu0 0
    %616 = vmatpush1.bf16.msra.mxu0 0
    %617 = vmatprep.subr.bf16.mxu0 0
    %618 = vmatpush1.bf16.msra.mxu0 0
    %619 = vmatprep.subr.bf16.mxu0 0
    %620 = vmatpush1.bf16.msra.mxu0 0
    %621 = vmatprep.subr.bf16.mxu0 0
    %622 = vmatpush1.bf16.msra.mxu0 0
    %623 = vmatprep.subr.bf16.mxu0 0
    %624 = vmatpush1.bf16.msra.mxu0 0
    %625 = vmatprep.subr.bf16.mxu0 0
    %626 = vmatpush1.bf16.msra.mxu0 0
    %627 = vmatprep.subr.bf16.mxu0 0
    %628 = vmatpush1.bf16.msra.mxu0 0
    %629 = vmatprep.mubr.bf16.mxu0 0
    %630 = vmatmul.mubr.bf16.gmra.mrb[0].mxu0 %v592
    %v631 = vpop.f32.mrb[0].mxu0
    %v632 = vadd.f32 0.0, %v631
    %v633 = vpop.f32.mrb[0].mxu0
    %v634 = vpop.f32.mrb[0].mxu0
    %v635 = vpop.f32.mrb[0].mxu0
    %636 = vdwg.mxu0
    %638 = vrot.lane.b32.xlu0 %v632, 64
    %v639 = vpop.permute.xlu0 %638
    %v641 = vsel %vm414, %v518, %v639
    %v642 = vrot.slane %v172, 2
    %v644 = vsel %vm402, %v400, %v642
    %v645 = vrot.slane %v283, 2
    %v647 = vsel %vm402, %v405, %v645
    %v648 = vrot.slane %v394, 2
    %v650 = vsel %vm402, %v409, %v648
    %v651 = vpack.c.bf16 %v644, %v644
    %v652 = vpack.c.bf16 %v647, %v647
    %v654 = vsel %vm414, %v651, 0
    %v657 = vsel %vm414, %v652, 0
    %659 = vmatprep.subr.bf16.mxu0 0
    %660 = vmatpush1.bf16.xpose.msra.mxu0 %v657
    %661 = vmatprep.subr.bf16.mxu0 0
    %662 = vmatpush1.bf16.xpose.msra.mxu0 0
    %663 = vmatprep.subr.bf16.mxu0 0
    %664 = vmatpush1.bf16.xpose.msra.mxu0 0
    %665 = vmatprep.subr.bf16.mxu0 0
    %666 = vmatpush1.bf16.xpose.msra.mxu0 0
    %667 = vmatprep.subr.bf16.mxu0 0
    %668 = vmatpush1.bf16.xpose.msra.mxu0 0
    %669 = vmatprep.subr.bf16.mxu0 0
    %670 = vmatpush1.bf16.xpose.msra.mxu0 0
    %671 = vmatprep.subr.bf16.mxu0 0
    %672 = vmatpush1.bf16.xpose.msra.mxu0 0
    %673 = vmatprep.subr.bf16.mxu0 0
    %674 = vmatpush1.bf16.xpose.msra.mxu0 0
    %675 = vmatprep.subr.bf16.mxu0 0
    %676 = vmatpush1.bf16.xpose.msra.mxu0 0
    %677 = vmatprep.subr.bf16.mxu0 0
    %678 = vmatpush1.bf16.xpose.msra.mxu0 0
    %679 = vmatprep.subr.bf16.mxu0 0
    %680 = vmatpush1.bf16.xpose.msra.mxu0 0
    %681 = vmatprep.subr.bf16.mxu0 0
    %682 = vmatpush1.bf16.xpose.msra.mxu0 0
    %683 = vmatprep.subr.bf16.mxu0 0
    %684 = vmatpush1.bf16.xpose.msra.mxu0 0
    %685 = vmatprep.subr.bf16.mxu0 0
    %686 = vmatpush1.bf16.xpose.msra.mxu0 0
    %687 = vmatprep.subr.bf16.mxu0 0
    %688 = vmatpush1.bf16.xpose.msra.mxu0 0
    %689 = vmatprep.subr.bf16.mxu0 0
    %690 = vmatpush1.bf16.xpose.msra.mxu0 0
    %691 = vmatprep.mubr.bf16.mxu0 0
    %692 = vmatmul.mubr.bf16.gmra.mrb[0].mxu0 %v654
    %v693 = vpop.f32.mrb[0].mxu0
    %v694 = vadd.f32 0.0, %v693
    %v695 = vpop.f32.mrb[0].mxu0
    %v696 = vpop.f32.mrb[0].mxu0
    %v697 = vpop.f32.mrb[0].mxu0
    %698 = vdwg.mxu0
    %v699 = vmul.f32 %v694, 0.125
    %v700 = vsel %vm462, %v699, -inf
    %701 = vmax.xlane.f32.xlu0 %v700
    %v702 = vpop.xlane.xlu0 %701
    %v703 = vsub.f32 %v699, %v702
    %v704 = vmul.f32 %v703, 1.442695
    %v705 = vpow.pop %v704
    %v706 = vsel %vm462, %v705, 0.0
    %707 = vadd.xlane.f32.xlu0 %v706
    %v708 = vpop.xlane.xlu0 %707
    %v709 = vrcp.pop %v708
    %v710 = vmul.f32 %v705, %v709
    %v711 = vpack.c.bf16 %v710, %v710
    %v712 = vpack.c.bf16 %v650, %v650
    %v714 = vsel %vm476, %v711, 0
    %v717 = vsel %vm402, %v712, 0
    %719 = vmatprep.subr.bf16.mxu0 0
    %720 = vmatpush1.bf16.msra.mxu0 %v717
    %721 = vmatprep.subr.bf16.mxu0 0
    %722 = vmatpush1.bf16.msra.mxu0 0
    %723 = vmatprep.subr.bf16.mxu0 0
    %724 = vmatpush1.bf16.msra.mxu0 0
    %725 = vmatprep.subr.bf16.mxu0 0
    %726 = vmatpush1.bf16.msra.mxu0 0
    %727 = vmatprep.subr.bf16.mxu0 0
    %728 = vmatpush1.bf16.msra.mxu0 0
    %729 = vmatprep.subr.bf16.mxu0 0
    %730 = vmatpush1.bf16.msra.mxu0 0
    %731 = vmatprep.subr.bf16.mxu0 0
    %732 = vmatpush1.bf16.msra.mxu0 0
    %733 = vmatprep.subr.bf16.mxu0 0
    %734 = vmatpush1.bf16.msra.mxu0 0
    %735 = vmatprep.subr.bf16.mxu0 0
    %736 = vmatpush1.bf16.msra.mxu0 0
    %737 = vmatprep.subr.bf16.mxu0 0
    %738 = vmatpush1.bf16.msra.mxu0 0
    %739 = vmatprep.subr.bf16.mxu0 0
    %740 = vmatpush1.bf16.msra.mxu0 0
    %741 = vmatprep.subr.bf16.mxu0 0
    %742 = vmatpush1.bf16.msra.mxu0 0
    %743 = vmatprep.subr.bf16.mxu0 0
    %744 = vmatpush1.bf16.msra.mxu0 0
    %745 = vmatprep.subr.bf16.mxu0 0
    %746 = vmatpush1.bf16.msra.mxu0 0
    %747 = vmatprep.subr.bf16.mxu0 0
    %748 = vmatpush1.bf16.msra.mxu0 0
    %749 = vmatprep.subr.bf16.mxu0 0
    %750 = vmatpush1.bf16.msra.mxu0 0
    %751 = vmatprep.mubr.bf16.mxu0 0
    %752 = vmatmul.mubr.bf16.gmra.mrb[0].mxu0 %v714
    %v753 = vpop.f32.mrb[0].mxu0
    %v754 = vadd.f32 0.0, %v753
    %v755 = vpop.f32.mrb[0].mxu0
    %v756 = vpop.f32.mrb[0].mxu0
    %v757 = vpop.f32.mrb[0].mxu0
    %758 = vdwg.mxu0
    %760 = vrot.lane.b32.xlu0 %v651, 64
    %v761 = vpop.permute.xlu0 %760
    %763 = vrot.lane.b32.xlu0 %v652, 64
    %v764 = vpop.permute.xlu0 %763
    %v766 = vsel %vm414, %v761, 0
    %v769 = vsel %vm414, %v764, 0
    %771 = vmatprep.subr.bf16.mxu0 0
    %772 = vmatpush1.bf16.xpose.msra.mxu0 %v769
    %773 = vmatprep.subr.bf16.mxu0 0
    %774 = vmatpush1.bf16.xpose.msra.mxu0 0
    %775 = vmatprep.subr.bf16.mxu0 0
    %776 = vmatpush1.bf16.xpose.msra.mxu0 0
    %777 = vmatprep.subr.bf16.mxu0 0
    %778 = vmatpush1.bf16.xpose.msra.mxu0 0
    %779 = vmatprep.subr.bf16.mxu0 0
    %780 = vmatpush1.bf16.xpose.msra.mxu0 0
    %781 = vmatprep.subr.bf16.mxu0 0
    %782 = vmatpush1.bf16.xpose.msra.mxu0 0
    %783 = vmatprep.subr.bf16.mxu0 0
    %784 = vmatpush1.bf16.xpose.msra.mxu0 0
    %785 = vmatprep.subr.bf16.mxu0 0
    %786 = vmatpush1.bf16.xpose.msra.mxu0 0
    %787 = vmatprep.subr.bf16.mxu0 0
    %788 = vmatpush1.bf16.xpose.msra.mxu0 0
    %789 = vmatprep.subr.bf16.mxu0 0
    %790 = vmatpush1.bf16.xpose.msra.mxu0 0
    %791 = vmatprep.subr.bf16.mxu0 0
    %792 = vmatpush1.bf16.xpose.msra.mxu0 0
    %793 = vmatprep.subr.bf16.mxu0 0
    %794 = vmatpush1.bf16.xpose.msra.mxu0 0
    %795 = vmatprep.subr.bf16.mxu0 0
    %796 = vmatpush1.bf16.xpose.msra.mxu0 0
    %797 = vmatprep.subr.bf16.mxu0 0
    %798 = vmatpush1.bf16.xpose.msra.mxu0 0
    %799 = vmatprep.subr.bf16.mxu0 0
    %800 = vmatpush1.bf16.xpose.msra.mxu0 0
    %801 = vmatprep.subr.bf16.mxu0 0
    %802 = vmatpush1.bf16.xpose.msra.mxu0 0
    %803 = vmatprep.mubr.bf16.mxu0 0
    %804 = vmatmul.mubr.bf16.gmra.mrb[0].mxu0 %v766
    %v805 = vpop.f32.mrb[0].mxu0
    %v806 = vadd.f32 0.0, %v805
    %v807 = vpop.f32.mrb[0].mxu0
    %v808 = vpop.f32.mrb[0].mxu0
    %v809 = vpop.f32.mrb[0].mxu0
    %810 = vdwg.mxu0
    %v811 = vmul.f32 %v806, 0.125
    %v812 = vsel %vm462, %v811, -inf
    %813 = vmax.xlane.f32.xlu0 %v812
    %v814 = vpop.xlane.xlu0 %813
    %v815 = vsub.f32 %v811, %v814
    %v816 = vmul.f32 %v815, 1.442695
    %v817 = vpow.pop %v816
    %v818 = vsel %vm462, %v817, 0.0
    %819 = vadd.xlane.f32.xlu0 %v818
    %v820 = vpop.xlane.xlu0 %819
    %v821 = vrcp.pop %v820
    %v822 = vmul.f32 %v817, %v821
    %v823 = vpack.c.bf16 %v822, %v822
    %825 = vrot.lane.b32.xlu0 %v712, 64
    %v826 = vpop.permute.xlu0 %825
    %v828 = vsel %vm476, %v823, 0
    %v831 = vsel %vm402, %v826, 0
    %833 = vmatprep.subr.bf16.mxu0 0
    %834 = vmatpush1.bf16.msra.mxu0 %v831
    %835 = vmatprep.subr.bf16.mxu0 0
    %836 = vmatpush1.bf16.msra.mxu0 0
    %837 = vmatprep.subr.bf16.mxu0 0
    %838 = vmatpush1.bf16.msra.mxu0 0
    %839 = vmatprep.subr.bf16.mxu0 0
    %840 = vmatpush1.bf16.msra.mxu0 0
    %841 = vmatprep.subr.bf16.mxu0 0
    %842 = vmatpush1.bf16.msra.mxu0 0
    %843 = vmatprep.subr.bf16.mxu0 0
    %844 = vmatpush1.bf16.msra.mxu0 0
    %845 = vmatprep.subr.bf16.mxu0 0
    %846 = vmatpush1.bf16.msra.mxu0 0
    %847 = vmatprep.subr.bf16.mxu0 0
    %848 = vmatpush1.bf16.msra.mxu0 0
    %849 = vmatprep.subr.bf16.mxu0 0
    %850 = vmatpush1.bf16.msra.mxu0 0
    %851 = vmatprep.subr.bf16.mxu0 0
    %852 = vmatpush1.bf16.msra.mxu0 0
    %853 = vmatprep.subr.bf16.mxu0 0
    %854 = vmatpush1.bf16.msra.mxu0 0
    %855 = vmatprep.subr.bf16.mxu0 0
    %856 = vmatpush1.bf16.msra.mxu0 0
    %857 = vmatprep.subr.bf16.mxu0 0
    %858 = vmatpush1.bf16.msra.mxu0 0
    %859 = vmatprep.subr.bf16.mxu0 0
    %860 = vmatpush1.bf16.msra.mxu0 0
    %861 = vmatprep.subr.bf16.mxu0 0
    %862 = vmatpush1.bf16.msra.mxu0 0
    %863 = vmatprep.subr.bf16.mxu0 0
    %864 = vmatpush1.bf16.msra.mxu0 0
    %865 = vmatprep.mubr.bf16.mxu0 0
    %866 = vmatmul.mubr.bf16.gmra.mrb[0].mxu0 %v828
    %v867 = vpop.f32.mrb[0].mxu0
    %v868 = vadd.f32 0.0, %v867
    %v869 = vpop.f32.mrb[0].mxu0
    %v870 = vpop.f32.mrb[0].mxu0
    %v871 = vpop.f32.mrb[0].mxu0
    %872 = vdwg.mxu0
    %874 = vrot.lane.b32.xlu0 %v868, 64
    %v875 = vpop.permute.xlu0 %874
    %v877 = vsel %vm414, %v754, %v875
    %v879 = vrot.slane %v877, 7
    %v882 = vrot.slane %v641, 7
    %v884 = vrot.slane %v877, 6
    %v886 = vsel %vm402, %v641, %v879
    %v887 = vsel %vm63, %v886, %v882
    %vm888 = vcmask 1042432
    %v889 = vsel %vm888, %v887, %v884
    %v890 = vpack.c.bf16 %v889, %v889
    %v891 = vld [vmem:[%s7] sm:$0xf]
    %v892 = vld [vmem:[%s7 + $0x4] sm:$0xf]
    %v893 = vld [vmem:[%s7 + $0x8] sm:$0xf]
    %v894 = vld [vmem:[%s7 + $0xc] sm:$0xf]
    %v895 = vld [vmem:[%s7 + $0x10] sm:$0xf]
    %v896 = vld [vmem:[%s7 + $0x14] sm:$0xf]
    %v897 = vld [vmem:[%s7 + $0x18] sm:$0xf]
    %v898 = vld [vmem:[%s7 + $0x1c] sm:$0xf]
    %v899 = vld [vmem:[%s7 + $0x20] sm:$0xf]
    %v900 = vld [vmem:[%s7 + $0x24] sm:$0xf]
    %v901 = vld [vmem:[%s7 + $0x28] sm:$0xf]
    %v902 = vld [vmem:[%s7 + $0x2c] sm:$0xf]
    %v903 = vld [vmem:[%s7 + $0x30] sm:$0xf]
    %v904 = vld [vmem:[%s7 + $0x34] sm:$0xf]
    %v905 = vld [vmem:[%s7 + $0x38] sm:$0xf]
    %v906 = vld [vmem:[%s7 + $0x3c] sm:$0xf]
    %v907 = vld [vmem:[%s8] sm:$0x1]
    %v909 = vlaneseq
    %v910 = vshrl.u32 %v909, 7
    %v911 = vsub.s32 0, %v910
    %v912 = vrot.slane %v907, %v911
    %v930 = vunpack.c.l.b16 %v891
    %v931 = vunpack.c.l.b16 %v892
    %v932 = vunpack.c.l.b16 %v893
    %v933 = vunpack.c.l.b16 %v894
    %v934 = vunpack.c.l.b16 %v895
    %v935 = vunpack.c.l.b16 %v896
    %v936 = vunpack.c.l.b16 %v897
    %v937 = vunpack.c.l.b16 %v898
    %v938 = vunpack.c.l.b16 %v899
    %v939 = vunpack.c.l.b16 %v900
    %v940 = vunpack.c.l.b16 %v901
    %v941 = vunpack.c.l.b16 %v902
    %v942 = vunpack.c.l.b16 %v903
    %v943 = vunpack.c.l.b16 %v904
    %v944 = vunpack.c.l.b16 %v905
    %v945 = vunpack.c.l.b16 %v906
    %v946 = vpack.c.b16 %v931, %v930
    %v947 = vpack.c.b16 %v933, %v932
    %v948 = vpack.c.b16 %v935, %v934
    %v949 = vpack.c.b16 %v937, %v936
    %v950 = vpack.c.b16 %v939, %v938
    %v951 = vpack.c.b16 %v941, %v940
    %v952 = vpack.c.b16 %v943, %v942
    %v953 = vpack.c.b16 %v945, %v944
    %962 = vmatprep.subr.bf16.mxu0 0
    %963 = vmatpush1.bf16.msra.mxu0 %v946
    %964 = vmatprep.subr.bf16.mxu0 0
    %965 = vmatpush1.bf16.msra.mxu0 %v947
    %966 = vmatprep.subr.bf16.mxu0 0
    %967 = vmatpush1.bf16.msra.mxu0 %v948
    %968 = vmatprep.subr.bf16.mxu0 0
    %969 = vmatpush1.bf16.msra.mxu0 %v949
    %970 = vmatprep.subr.bf16.mxu0 0
    %971 = vmatpush1.bf16.msra.mxu0 %v950
    %972 = vmatprep.subr.bf16.mxu0 0
    %973 = vmatpush1.bf16.msra.mxu0 %v951
    %974 = vmatprep.subr.bf16.mxu0 0
    %975 = vmatpush1.bf16.msra.mxu0 %v952
    %976 = vmatprep.subr.bf16.mxu0 0
    %977 = vmatpush1.bf16.msra.mxu0 %v953
    %978 = vmatprep.subr.bf16.mxu0 0
    %979 = vmatpush1.bf16.msra.mxu0 0
    %980 = vmatprep.subr.bf16.mxu0 0
    %981 = vmatpush1.bf16.msra.mxu0 0
    %982 = vmatprep.subr.bf16.mxu0 0
    %983 = vmatpush1.bf16.msra.mxu0 0
    %984 = vmatprep.subr.bf16.mxu0 0
    %985 = vmatpush1.bf16.msra.mxu0 0
    %986 = vmatprep.subr.bf16.mxu0 0
    %987 = vmatpush1.bf16.msra.mxu0 0
    %988 = vmatprep.subr.bf16.mxu0 0
    %989 = vmatpush1.bf16.msra.mxu0 0
    %990 = vmatprep.subr.bf16.mxu0 0
    %991 = vmatpush1.bf16.msra.mxu0 0
    %992 = vmatprep.subr.bf16.mxu0 0
    %993 = vmatpush1.bf16.msra.mxu0 0
    %994 = vmatprep.mubr.bf16.mxu0 0
    %995 = vmatmul.mubr.bf16.gmra.mrb[0].mxu0 %v890
    %v996 = vpop.f32.mrb[0].mxu0
    %v997 = vadd.f32 %v912, %v996
    %v998 = vpop.f32.mrb[0].mxu0
    %v999 = vpop.f32.mrb[0].mxu0
    %v1000 = vpop.f32.mrb[0].mxu0
    %1001 = vdwg.mxu0
    %v1002 = vadd.f32 %v64, %v997
    %v1003 = vld [vmem:[%s9] sm:$0x1]
    %v1004 = vld [vmem:[%s10] sm:$0x1]
    %vm1005 = vcmask 1043456
    %v1006 = vsel %vm1005, %v1002, 0.0
    %1007 = vadd.xlane.f32.xlu0 %v1006
    %v1008 = vpop.xlane.xlu0 %1007
    %v1009 = vrcp.pop 128.0
    %v1010 = vmul.f32 %v1008, %v1009
    %v1011 = vsub.f32 %v1002, %v1010
    %v1012 = vmul.f32 %v1011, %v1011
    %v1013 = vsel %vm1005, %v1012, 0.0
    %1014 = vadd.xlane.f32.xlu0 %v1013
    %v1015 = vpop.xlane.xlu0 %1014
    %v1016 = vmul.f32 %v1015, %v1009
    %v1017 = vadd.f32 %v1016, 1e-05
    %v1018 = vrsqrt.pop %v1017
    %v1019 = vmul.f32 %v1011, %v1018
    %v1021 = vlaneseq
    %v1022 = vshrl.u32 %v1021, 7
    %v1023 = vsub.s32 0, %v1022
    %v1024 = vrot.slane %v1003, %v1023
    %v1026 = vmul.f32 %v1019, %v1024
    %v1028 = vlaneseq
    %v1029 = vshrl.u32 %v1028, 7
    %v1030 = vsub.s32 0, %v1029
    %v1031 = vrot.slane %v1004, %v1030
    %v1033 = vadd.f32 %v1026, %v1031
    %v1034 = vpack.c.bf16 %v1033, %v1033
    %v1035 = vld [vmem:[%s11] sm:$0xff]
    %v1036 = vld [vmem:[%s11 + $0x8] sm:$0xff]
    %v1037 = vld [vmem:[%s11 + $0x10] sm:$0xff]
    %v1038 = vld [vmem:[%s11 + $0x18] sm:$0xff]
    %v1039 = vld [vmem:[%s11 + $0x20] sm:$0xff]
    %v1040 = vld [vmem:[%s11 + $0x28] sm:$0xff]
    %v1041 = vld [vmem:[%s11 + $0x30] sm:$0xff]
    %v1042 = vld [vmem:[%s11 + $0x38] sm:$0xff]
    %v1043 = vld [vmem:[%s11 + $0x40] sm:$0xff]
    %v1044 = vld [vmem:[%s11 + $0x48] sm:$0xff]
    %v1045 = vld [vmem:[%s11 + $0x50] sm:$0xff]
    %v1046 = vld [vmem:[%s11 + $0x58] sm:$0xff]
    %v1047 = vld [vmem:[%s11 + $0x60] sm:$0xff]
    %v1048 = vld [vmem:[%s11 + $0x68] sm:$0xff]
    %v1049 = vld [vmem:[%s11 + $0x70] sm:$0xff]
    %v1050 = vld [vmem:[%s11 + $0x78] sm:$0xff]
    %v1051 = vld [vmem:[%s11 + $0x80] sm:$0xff]
    %v1052 = vld [vmem:[%s11 + $0x88] sm:$0xff]
    %v1053 = vld [vmem:[%s11 + $0x90] sm:$0xff]
    %v1054 = vld [vmem:[%s11 + $0x98] sm:$0xff]
    %v1055 = vld [vmem:[%s11 + $0xa0] sm:$0xff]
    %v1056 = vld [vmem:[%s11 + $0xa8] sm:$0xff]
    %v1057 = vld [vmem:[%s11 + $0xb0] sm:$0xff]
    %v1058 = vld [vmem:[%s11 + $0xb8] sm:$0xff]
    %v1059 = vld [vmem:[%s11 + $0xc0] sm:$0xff]
    %v1060 = vld [vmem:[%s11 + $0xc8] sm:$0xff]
    %v1061 = vld [vmem:[%s11 + $0xd0] sm:$0xff]
    %v1062 = vld [vmem:[%s11 + $0xd8] sm:$0xff]
    %v1063 = vld [vmem:[%s11 + $0xe0] sm:$0xff]
    %v1064 = vld [vmem:[%s11 + $0xe8] sm:$0xff]
    %v1065 = vld [vmem:[%s11 + $0xf0] sm:$0xff]
    %v1066 = vld [vmem:[%s11 + $0xf8] sm:$0xff]
    %v1067 = vld [vmem:[%s11 + $0x100] sm:$0xff]
    %v1068 = vld [vmem:[%s11 + $0x108] sm:$0xff]
    %v1069 = vld [vmem:[%s11 + $0x110] sm:$0xff]
    %v1070 = vld [vmem:[%s11 + $0x118] sm:$0xff]
    %v1071 = vld [vmem:[%s11 + $0x120] sm:$0xff]
    %v1072 = vld [vmem:[%s11 + $0x128] sm:$0xff]
    %v1073 = vld [vmem:[%s11 + $0x130] sm:$0xff]
    %v1074 = vld [vmem:[%s11 + $0x138] sm:$0xff]
    %v1075 = vld [vmem:[%s11 + $0x140] sm:$0xff]
    %v1076 = vld [vmem:[%s11 + $0x148] sm:$0xff]
    %v1077 = vld [vmem:[%s11 + $0x150] sm:$0xff]
    %v1078 = vld [vmem:[%s11 + $0x158] sm:$0xff]
    %v1079 = vld [vmem:[%s11 + $0x160] sm:$0xff]
    %v1080 = vld [vmem:[%s11 + $0x168] sm:$0xff]
    %v1081 = vld [vmem:[%s11 + $0x170] sm:$0xff]
    %v1082 = vld [vmem:[%s11 + $0x178] sm:$0xff]
    %v1083 = vld [vmem:[%s11 + $0x180] sm:$0xff]
    %v1084 = vld [vmem:[%s11 + $0x188] sm:$0xff]
    %v1085 = vld [vmem:[%s11 + $0x190] sm:$0xff]
    %v1086 = vld [vmem:[%s11 + $0x198] sm:$0xff]
    %v1087 = vld [vmem:[%s11 + $0x1a0] sm:$0xff]
    %v1088 = vld [vmem:[%s11 + $0x1a8] sm:$0xff]
    %v1089 = vld [vmem:[%s11 + $0x1b0] sm:$0xff]
    %v1090 = vld [vmem:[%s11 + $0x1b8] sm:$0xff]
    %v1091 = vld [vmem:[%s11 + $0x1c0] sm:$0xff]
    %v1092 = vld [vmem:[%s11 + $0x1c8] sm:$0xff]
    %v1093 = vld [vmem:[%s11 + $0x1d0] sm:$0xff]
    %v1094 = vld [vmem:[%s11 + $0x1d8] sm:$0xff]
    %v1095 = vld [vmem:[%s11 + $0x1e0] sm:$0xff]
    %v1096 = vld [vmem:[%s11 + $0x1e8] sm:$0xff]
    %v1097 = vld [vmem:[%s11 + $0x1f0] sm:$0xff]
    %v1098 = vld [vmem:[%s11 + $0x1f8] sm:$0xff]
    %v1099 = vld [vmem:[%s11 + $0x200] sm:$0xff]
    %v1100 = vld [vmem:[%s11 + $0x208] sm:$0xff]
    %v1101 = vld [vmem:[%s11 + $0x210] sm:$0xff]
    %v1102 = vld [vmem:[%s11 + $0x218] sm:$0xff]
    %v1103 = vld [vmem:[%s11 + $0x220] sm:$0xff]
    %v1104 = vld [vmem:[%s11 + $0x228] sm:$0xff]
    %v1105 = vld [vmem:[%s11 + $0x230] sm:$0xff]
    %v1106 = vld [vmem:[%s11 + $0x238] sm:$0xff]
    %v1107 = vld [vmem:[%s11 + $0x240] sm:$0xff]
    %v1108 = vld [vmem:[%s11 + $0x248] sm:$0xff]
    %v1109 = vld [vmem:[%s11 + $0x250] sm:$0xff]
    %v1110 = vld [vmem:[%s11 + $0x258] sm:$0xff]
    %v1111 = vld [vmem:[%s11 + $0x260] sm:$0xff]
    %v1112 = vld [vmem:[%s11 + $0x268] sm:$0xff]
    %v1113 = vld [vmem:[%s11 + $0x270] sm:$0xff]
    %v1114 = vld [vmem:[%s11 + $0x278] sm:$0xff]
    %v1115 = vld [vmem:[%s11 + $0x280] sm:$0xff]
    %v1116 = vld [vmem:[%s11 + $0x288] sm:$0xff]
    %v1117 = vld [vmem:[%s11 + $0x290] sm:$0xff]
    %v1118 = vld [vmem:[%s11 + $0x298] sm:$0xff]
    %v1119 = vld [vmem:[%s11 + $0x2a0] sm:$0xff]
    %v1120 = vld [vmem:[%s11 + $0x2a8] sm:$0xff]
    %v1121 = vld [vmem:[%s11 + $0x2b0] sm:$0xff]
    %v1122 = vld [vmem:[%s11 + $0x2b8] sm:$0xff]
    %v1123 = vld [vmem:[%s11 + $0x2c0] sm:$0xff]
    %v1124 = vld [vmem:[%s11 + $0x2c8] sm:$0xff]
    %v1125 = vld [vmem:[%s11 + $0x2d0] sm:$0xff]
    %v1126 = vld [vmem:[%s11 + $0x2d8] sm:$0xff]
    %v1127 = vld [vmem:[%s11 + $0x2e0] sm:$0xff]
    %v1128 = vld [vmem:[%s11 + $0x2e8] sm:$0xff]
    %v1129 = vld [vmem:[%s11 + $0x2f0] sm:$0xff]
    %v1130 = vld [vmem:[%s11 + $0x2f8] sm:$0xff]
    %v1131 = vld [vmem:[%s11 + $0x300] sm:$0xff]
    %v1132 = vld [vmem:[%s11 + $0x308] sm:$0xff]
    %v1133 = vld [vmem:[%s11 + $0x310] sm:$0xff]
    %v1134 = vld [vmem:[%s11 + $0x318] sm:$0xff]
    %v1135 = vld [vmem:[%s11 + $0x320] sm:$0xff]
    %v1136 = vld [vmem:[%s11 + $0x328] sm:$0xff]
    %v1137 = vld [vmem:[%s11 + $0x330] sm:$0xff]
    %v1138 = vld [vmem:[%s11 + $0x338] sm:$0xff]
    %v1139 = vld [vmem:[%s11 + $0x340] sm:$0xff]
    %v1140 = vld [vmem:[%s11 + $0x348] sm:$0xff]
    %v1141 = vld [vmem:[%s11 + $0x350] sm:$0xff]
    %v1142 = vld [vmem:[%s11 + $0x358] sm:$0xff]
    %v1143 = vld [vmem:[%s11 + $0x360] sm:$0xff]
    %v1144 = vld [vmem:[%s11 + $0x368] sm:$0xff]
    %v1145 = vld [vmem:[%s11 + $0x370] sm:$0xff]
    %v1146 = vld [vmem:[%s11 + $0x378] sm:$0xff]
    %v1147 = vld [vmem:[%s11 + $0x380] sm:$0xff]
    %v1148 = vld [vmem:[%s11 + $0x388] sm:$0xff]
    %v1149 = vld [vmem:[%s11 + $0x390] sm:$0xff]
    %v1150 = vld [vmem:[%s11 + $0x398] sm:$0xff]
    %v1151 = vld [vmem:[%s11 + $0x3a0] sm:$0xff]
    %v1152 = vld [vmem:[%s11 + $0x3a8] sm:$0xff]
    %v1153 = vld [vmem:[%s11 + $0x3b0] sm:$0xff]
    %v1154 = vld [vmem:[%s11 + $0x3b8] sm:$0xff]
    %v1155 = vld [vmem:[%s11 + $0x3c0] sm:$0xff]
    %v1156 = vld [vmem:[%s11 + $0x3c8] sm:$0xff]
    %v1157 = vld [vmem:[%s11 + $0x3d0] sm:$0xff]
    %v1158 = vld [vmem:[%s11 + $0x3d8] sm:$0xff]
    %v1159 = vld [vmem:[%s11 + $0x3e0] sm:$0xff]
    %v1160 = vld [vmem:[%s11 + $0x3e8] sm:$0xff]
    %v1161 = vld [vmem:[%s11 + $0x3f0] sm:$0xff]
    %v1162 = vld [vmem:[%s11 + $0x3f8] sm:$0xff]
    %v1163 = vld [vmem:[%s12] sm:$0xff]
    %v1164 = vld [vmem:[%s12 + $0x8] sm:$0xff]
    %v1167 = vlaneseq
    %v1168 = vshrl.u32 %v1167, 7
    %v1169 = vsub.s32 0, %v1168
    %v1170 = vrot.slane %v1163, %v1169
    %v1171 = vlaneseq
    %v1172 = vshrl.u32 %v1171, 7
    %v1173 = vsub.s32 1, %v1172
    %v1174 = vrot.slane %v1163, %v1173
    %v1175 = vlaneseq
    %v1176 = vshrl.u32 %v1175, 7
    %v1177 = vsub.s32 2, %v1176
    %v1178 = vrot.slane %v1163, %v1177
    %v1179 = vlaneseq
    %v1180 = vshrl.u32 %v1179, 7
    %v1181 = vsub.s32 3, %v1180
    %v1182 = vrot.slane %v1163, %v1181
    %v1183 = vlaneseq
    %v1184 = vshrl.u32 %v1183, 7
    %v1185 = vsub.s32 4, %v1184
    %v1186 = vrot.slane %v1163, %v1185
    %v1187 = vlaneseq
    %v1188 = vshrl.u32 %v1187, 7
    %v1189 = vsub.s32 5, %v1188
    %v1190 = vrot.slane %v1163, %v1189
    %v1191 = vlaneseq
    %v1192 = vshrl.u32 %v1191, 7
    %v1193 = vsub.s32 6, %v1192
    %v1194 = vrot.slane %v1163, %v1193
    %v1195 = vlaneseq
    %v1196 = vshrl.u32 %v1195, 7
    %v1197 = vsub.s32 7, %v1196
    %v1198 = vrot.slane %v1163, %v1197
    %v1199 = vlaneseq
    %v1200 = vshrl.u32 %v1199, 7
    %v1201 = vsub.s32 0, %v1200
    %v1202 = vrot.slane %v1164, %v1201
    %v1203 = vlaneseq
    %v1204 = vshrl.u32 %v1203, 7
    %v1205 = vsub.s32 1, %v1204
    %v1206 = vrot.slane %v1164, %v1205
    %v1207 = vlaneseq
    %v1208 = vshrl.u32 %v1207, 7
    %v1209 = vsub.s32 2, %v1208
    %v1210 = vrot.slane %v1164, %v1209
    %v1211 = vlaneseq
    %v1212 = vshrl.u32 %v1211, 7
    %v1213 = vsub.s32 3, %v1212
    %v1214 = vrot.slane %v1164, %v1213
    %v1215 = vlaneseq
    %v1216 = vshrl.u32 %v1215, 7
    %v1217 = vsub.s32 4, %v1216
    %v1218 = vrot.slane %v1164, %v1217
    %v1219 = vlaneseq
    %v1220 = vshrl.u32 %v1219, 7
    %v1221 = vsub.s32 5, %v1220
    %v1222 = vrot.slane %v1164, %v1221
    %v1223 = vlaneseq
    %v1224 = vshrl.u32 %v1223, 7
    %v1225 = vsub.s32 6, %v1224
    %v1226 = vrot.slane %v1164, %v1225
    %v1227 = vlaneseq
    %v1228 = vshrl.u32 %v1227, 7
    %v1229 = vsub.s32 7, %v1228
    %v1230 = vrot.slane %v1164, %v1229
    %v1375 = vunpack.c.l.b16 %v1035
    %v1376 = vunpack.c.h.b16 %v1035
    %v1377 = vunpack.c.l.b16 %v1036
    %v1378 = vunpack.c.h.b16 %v1036
    %v1379 = vunpack.c.l.b16 %v1037
    %v1380 = vunpack.c.h.b16 %v1037
    %v1381 = vunpack.c.l.b16 %v1038
    %v1382 = vunpack.c.h.b16 %v1038
    %v1383 = vunpack.c.l.b16 %v1039
    %v1384 = vunpack.c.h.b16 %v1039
    %v1385 = vunpack.c.l.b16 %v1040
    %v1386 = vunpack.c.h.b16 %v1040
    %v1387 = vunpack.c.l.b16 %v1041
    %v1388 = vunpack.c.h.b16 %v1041
    %v1389 = vunpack.c.l.b16 %v1042
    %v1390 = vunpack.c.h.b16 %v1042
    %v1391 = vunpack.c.l.b16 %v1043
    %v1392 = vunpack.c.h.b16 %v1043
    %v1393 = vunpack.c.l.b16 %v1044
    %v1394 = vunpack.c.h.b16 %v1044
    %v1395 = vunpack.c.l.b16 %v1045
    %v1396 = vunpack.c.h.b16 %v1045
    %v1397 = vunpack.c.l.b16 %v1046
    %v1398 = vunpack.c.h.b16 %v1046
    %v1399 = vunpack.c.l.b16 %v1047
    %v1400 = vunpack.c.h.b16 %v1047
    %v1401 = vunpack.c.l.b16 %v1048
    %v1402 = vunpack.c.h.b16 %v1048
    %v1403 = vunpack.c.l.b16 %v1049
    %v1404 = vunpack.c.h.b16 %v1049
    %v1405 = vunpack.c.l.b16 %v1050
    %v1406 = vunpack.c.h.b16 %v1050
    %v1407 = vunpack.c.l.b16 %v1051
    %v1408 = vunpack.c.h.b16 %v1051
    %v1409 = vunpack.c.l.b16 %v1052
    %v1410 = vunpack.c.h.b16 %v1052
    %v1411 = vunpack.c.l.b16 %v1053
    %v1412 = vunpack.c.h.b16 %v1053
    %v1413 = vunpack.c.l.b16 %v1054
    %v1414 = vunpack.c.h.b16 %v1054
    %v1415 = vunpack.c.l.b16 %v1055
    %v1416 = vunpack.c.h.b16 %v1055
    %v1417 = vunpack.c.l.b16 %v1056
    %v1418 = vunpack.c.h.b16 %v1056
    %v1419 = vunpack.c.l.b16 %v1057
    %v1420 = vunpack.c.h.b16 %v1057
    %v1421 = vunpack.c.l.b16 %v1058
    %v1422 = vunpack.c.h.b16 %v1058
    %v1423 = vunpack.c.l.b16 %v1059
    %v1424 = vunpack.c.h.b16 %v1059
    %v1425 = vunpack.c.l.b16 %v1060
    %v1426 = vunpack.c.h.b16 %v1060
    %v1427 = vunpack.c.l.b16 %v1061
    %v1428 = vunpack.c.h.b16 %v1061
    %v1429 = vunpack.c.l.b16 %v1062
    %v1430 = vunpack.c.h.b16 %v1062
    %v1431 = vunpack.c.l.b16 %v1063
    %v1432 = vunpack.c.h.b16 %v1063
    %v1433 = vunpack.c.l.b16 %v1064
    %v1434 = vunpack.c.h.b16 %v1064
    %v1435 = vunpack.c.l.b16 %v1065
    %v1436 = vunpack.c.h.b16 %v1065
    %v1437 = vunpack.c.l.b16 %v1066
    %v1438 = vunpack.c.h.b16 %v1066
    %v1439 = vunpack.c.l.b16 %v1067
    %v1440 = vunpack.c.h.b16 %v1067
    %v1441 = vunpack.c.l.b16 %v1068
    %v1442 = vunpack.c.h.b16 %v1068
    %v1443 = vunpack.c.l.b16 %v1069
    %v1444 = vunpack.c.h.b16 %v1069
    %v1445 = vunpack.c.l.b16 %v1070
    %v1446 = vunpack.c.h.b16 %v1070
    %v1447 = vunpack.c.l.b16 %v1071
    %v1448 = vunpack.c.h.b16 %v1071
    %v1449 = vunpack.c.l.b16 %v1072
    %v1450 = vunpack.c.h.b16 %v1072
    %v1451 = vunpack.c.l.b16 %v1073
    %v1452 = vunpack.c.h.b16 %v1073
    %v1453 = vunpack.c.l.b16 %v1074
    %v1454 = vunpack.c.h.b16 %v1074
    %v1455 = vunpack.c.l.b16 %v1075
    %v1456 = vunpack.c.h.b16 %v1075
    %v1457 = vunpack.c.l.b16 %v1076
    %v1458 = vunpack.c.h.b16 %v1076
    %v1459 = vunpack.c.l.b16 %v1077
    %v1460 = vunpack.c.h.b16 %v1077
    %v1461 = vunpack.c.l.b16 %v1078
    %v1462 = vunpack.c.h.b16 %v1078
    %v1463 = vunpack.c.l.b16 %v1079
    %v1464 = vunpack.c.h.b16 %v1079
    %v1465 = vunpack.c.l.b16 %v1080
    %v1466 = vunpack.c.h.b16 %v1080
    %v1467 = vunpack.c.l.b16 %v1081
    %v1468 = vunpack.c.h.b16 %v1081
    %v1469 = vunpack.c.l.b16 %v1082
    %v1470 = vunpack.c.h.b16 %v1082
    %v1471 = vunpack.c.l.b16 %v1083
    %v1472 = vunpack.c.h.b16 %v1083
    %v1473 = vunpack.c.l.b16 %v1084
    %v1474 = vunpack.c.h.b16 %v1084
    %v1475 = vunpack.c.l.b16 %v1085
    %v1476 = vunpack.c.h.b16 %v1085
    %v1477 = vunpack.c.l.b16 %v1086
    %v1478 = vunpack.c.h.b16 %v1086
    %v1479 = vunpack.c.l.b16 %v1087
    %v1480 = vunpack.c.h.b16 %v1087
    %v1481 = vunpack.c.l.b16 %v1088
    %v1482 = vunpack.c.h.b16 %v1088
    %v1483 = vunpack.c.l.b16 %v1089
    %v1484 = vunpack.c.h.b16 %v1089
    %v1485 = vunpack.c.l.b16 %v1090
    %v1486 = vunpack.c.h.b16 %v1090
    %v1487 = vunpack.c.l.b16 %v1091
    %v1488 = vunpack.c.h.b16 %v1091
    %v1489 = vunpack.c.l.b16 %v1092
    %v1490 = vunpack.c.h.b16 %v1092
    %v1491 = vunpack.c.l.b16 %v1093
    %v1492 = vunpack.c.h.b16 %v1093
    %v1493 = vunpack.c.l.b16 %v1094
    %v1494 = vunpack.c.h.b16 %v1094
    %v1495 = vunpack.c.l.b16 %v1095
    %v1496 = vunpack.c.h.b16 %v1095
    %v1497 = vunpack.c.l.b16 %v1096
    %v1498 = vunpack.c.h.b16 %v1096
    %v1499 = vunpack.c.l.b16 %v1097
    %v1500 = vunpack.c.h.b16 %v1097
    %v1501 = vunpack.c.l.b16 %v1098
    %v1502 = vunpack.c.h.b16 %v1098
    %v1503 = vunpack.c.l.b16 %v1099
    %v1504 = vunpack.c.h.b16 %v1099
    %v1505 = vunpack.c.l.b16 %v1100
    %v1506 = vunpack.c.h.b16 %v1100
    %v1507 = vunpack.c.l.b16 %v1101
    %v1508 = vunpack.c.h.b16 %v1101
    %v1509 = vunpack.c.l.b16 %v1102
    %v1510 = vunpack.c.h.b16 %v1102
    %v1511 = vunpack.c.l.b16 %v1103
    %v1512 = vunpack.c.h.b16 %v1103
    %v1513 = vunpack.c.l.b16 %v1104
    %v1514 = vunpack.c.h.b16 %v1104
    %v1515 = vunpack.c.l.b16 %v1105
    %v1516 = vunpack.c.h.b16 %v1105
    %v1517 = vunpack.c.l.b16 %v1106
    %v1518 = vunpack.c.h.b16 %v1106
    %v1519 = vunpack.c.l.b16 %v1107
    %v1520 = vunpack.c.h.b16 %v1107
    %v1521 = vunpack.c.l.b16 %v1108
    %v1522 = vunpack.c.h.b16 %v1108
    %v1523 = vunpack.c.l.b16 %v1109
    %v1524 = vunpack.c.h.b16 %v1109
    %v1525 = vunpack.c.l.b16 %v1110
    %v1526 = vunpack.c.h.b16 %v1110
    %v1527 = vunpack.c.l.b16 %v1111
    %v1528 = vunpack.c.h.b16 %v1111
    %v1529 = vunpack.c.l.b16 %v1112
    %v1530 = vunpack.c.h.b16 %v1112
    %v1531 = vunpack.c.l.b16 %v1113
    %v1532 = vunpack.c.h.b16 %v1113
    %v1533 = vunpack.c.l.b16 %v1114
    %v1534 = vunpack.c.h.b16 %v1114
    %v1535 = vunpack.c.l.b16 %v1115
    %v1536 = vunpack.c.h.b16 %v1115
    %v1537 = vunpack.c.l.b16 %v1116
    %v1538 = vunpack.c.h.b16 %v1116
    %v1539 = vunpack.c.l.b16 %v1117
    %v1540 = vunpack.c.h.b16 %v1117
    %v1541 = vunpack.c.l.b16 %v1118
    %v1542 = vunpack.c.h.b16 %v1118
    %v1543 = vunpack.c.l.b16 %v1119
    %v1544 = vunpack.c.h.b16 %v1119
    %v1545 = vunpack.c.l.b16 %v1120
    %v1546 = vunpack.c.h.b16 %v1120
    %v1547 = vunpack.c.l.b16 %v1121
    %v1548 = vunpack.c.h.b16 %v1121
    %v1549 = vunpack.c.l.b16 %v1122
    %v1550 = vunpack.c.h.b16 %v1122
    %v1551 = vunpack.c.l.b16 %v1123
    %v1552 = vunpack.c.h.b16 %v1123
    %v1553 = vunpack.c.l.b16 %v1124
    %v1554 = vunpack.c.h.b16 %v1124
    %v1555 = vunpack.c.l.b16 %v1125
    %v1556 = vunpack.c.h.b16 %v1125
    %v1557 = vunpack.c.l.b16 %v1126
    %v1558 = vunpack.c.h.b16 %v1126
    %v1559 = vunpack.c.l.b16 %v1127
    %v1560 = vunpack.c.h.b16 %v1127
    %v1561 = vunpack.c.l.b16 %v1128
    %v1562 = vunpack.c.h.b16 %v1128
    %v1563 = vunpack.c.l.b16 %v1129
    %v1564 = vunpack.c.h.b16 %v1129
    %v1565 = vunpack.c.l.b16 %v1130
    %v1566 = vunpack.c.h.b16 %v1130
    %v1567 = vunpack.c.l.b16 %v1131
    %v1568 = vunpack.c.h.b16 %v1131
    %v1569 = vunpack.c.l.b16 %v1132
    %v1570 = vunpack.c.h.b16 %v1132
    %v1571 = vunpack.c.l.b16 %v1133
    %v1572 = vunpack.c.h.b16 %v1133
    %v1573 = vunpack.c.l.b16 %v1134
    %v1574 = vunpack.c.h.b16 %v1134
    %v1575 = vunpack.c.l.b16 %v1135
    %v1576 = vunpack.c.h.b16 %v1135
    %v1577 = vunpack.c.l.b16 %v1136
    %v1578 = vunpack.c.h.b16 %v1136
    %v1579 = vunpack.c.l.b16 %v1137
    %v1580 = vunpack.c.h.b16 %v1137
    %v1581 = vunpack.c.l.b16 %v1138
    %v1582 = vunpack.c.h.b16 %v1138
    %v1583 = vunpack.c.l.b16 %v1139
    %v1584 = vunpack.c.h.b16 %v1139
    %v1585 = vunpack.c.l.b16 %v1140
    %v1586 = vunpack.c.h.b16 %v1140
    %v1587 = vunpack.c.l.b16 %v1141
    %v1588 = vunpack.c.h.b16 %v1141
    %v1589 = vunpack.c.l.b16 %v1142
    %v1590 = vunpack.c.h.b16 %v1142
    %v1591 = vunpack.c.l.b16 %v1143
    %v1592 = vunpack.c.h.b16 %v1143
    %v1593 = vunpack.c.l.b16 %v1144
    %v1594 = vunpack.c.h.b16 %v1144
    %v1595 = vunpack.c.l.b16 %v1145
    %v1596 = vunpack.c.h.b16 %v1145
    %v1597 = vunpack.c.l.b16 %v1146
    %v1598 = vunpack.c.h.b16 %v1146
    %v1599 = vunpack.c.l.b16 %v1147
    %v1600 = vunpack.c.h.b16 %v1147
    %v1601 = vunpack.c.l.b16 %v1148
    %v1602 = vunpack.c.h.b16 %v1148
    %v1603 = vunpack.c.l.b16 %v1149
    %v1604 = vunpack.c.h.b16 %v1149
    %v1605 = vunpack.c.l.b16 %v1150
    %v1606 = vunpack.c.h.b16 %v1150
    %v1607 = vunpack.c.l.b16 %v1151
    %v1608 = vunpack.c.h.b16 %v1151
    %v1609 = vunpack.c.l.b16 %v1152
    %v1610 = vunpack.c.h.b16 %v1152
    %v1611 = vunpack.c.l.b16 %v1153
    %v1612 = vunpack.c.h.b16 %v1153
    %v1613 = vunpack.c.l.b16 %v1154
    %v1614 = vunpack.c.h.b16 %v1154
    %v1615 = vunpack.c.l.b16 %v1155
    %v1616 = vunpack.c.h.b16 %v1155
    %v1617 = vunpack.c.l.b16 %v1156
    %v1618 = vunpack.c.h.b16 %v1156
    %v1619 = vunpack.c.l.b16 %v1157
    %v1620 = vunpack.c.h.b16 %v1157
    %v1621 = vunpack.c.l.b16 %v1158
    %v1622 = vunpack.c.h.b16 %v1158
    %v1623 = vunpack.c.l.b16 %v1159
    %v1624 = vunpack.c.h.b16 %v1159
    %v1625 = vunpack.c.l.b16 %v1160
    %v1626 = vunpack.c.h.b16 %v1160
    %v1627 = vunpack.c.l.b16 %v1161
    %v1628 = vunpack.c.h.b16 %v1161
    %v1629 = vunpack.c.l.b16 %v1162
    %v1630 = vunpack.c.h.b16 %v1162
    %v1631 = vpack.c.b16 %v1391, %v1375
    %v1632 = vpack.c.b16 %v1392, %v1376
    %v1633 = vpack.c.b16 %v1393, %v1377
    %v1634 = vpack.c.b16 %v1394, %v1378
    %v1635 = vpack.c.b16 %v1395, %v1379
    %v1636 = vpack.c.b16 %v1396, %v1380
    %v1637 = vpack.c.b16 %v1397, %v1381
    %v1638 = vpack.c.b16 %v1398, %v1382
    %v1639 = vpack.c.b16 %v1399, %v1383
    %v1640 = vpack.c.b16 %v1400, %v1384
    %v1641 = vpack.c.b16 %v1401, %v1385
    %v1642 = vpack.c.b16 %v1402, %v1386
    %v1643 = vpack.c.b16 %v1403, %v1387
    %v1644 = vpack.c.b16 %v1404, %v1388
    %v1645 = vpack.c.b16 %v1405, %v1389
    %v1646 = vpack.c.b16 %v1406, %v1390
    %v1647 = vpack.c.b16 %v1423, %v1407
    %v1648 = vpack.c.b16 %v1424, %v1408
    %v1649 = vpack.c.b16 %v1425, %v1409
    %v1650 = vpack.c.b16 %v1426, %v1410
    %v1651 = vpack.c.b16 %v1427, %v1411
    %v1652 = vpack.c.b16 %v1428, %v1412
    %v1653 = vpack.c.b16 %v1429, %v1413
    %v1654 = vpack.c.b16 %v1430, %v1414
    %v1655 = vpack.c.b16 %v1431, %v1415
    %v1656 = vpack.c.b16 %v1432, %v1416
    %v1657 = vpack.c.b16 %v1433, %v1417
    %v1658 = vpack.c.b16 %v1434, %v1418
    %v1659 = vpack.c.b16 %v1435, %v1419
    %v1660 = vpack.c.b16 %v1436, %v1420
    %v1661 = vpack.c.b16 %v1437, %v1421
    %v1662 = vpack.c.b16 %v1438, %v1422
    %v1663 = vpack.c.b16 %v1455, %v1439
    %v1664 = vpack.c.b16 %v1456, %v1440
    %v1665 = vpack.c.b16 %v1457, %v1441
    %v1666 = vpack.c.b16 %v1458, %v1442
    %v1667 = vpack.c.b16 %v1459, %v1443
    %v1668 = vpack.c.b16 %v1460, %v1444
    %v1669 = vpack.c.b16 %v1461, %v1445
    %v1670 = vpack.c.b16 %v1462, %v1446
    %v1671 = vpack.c.b16 %v1463, %v1447
    %v1672 = vpack.c.b16 %v1464, %v1448
    %v1673 = vpack.c.b16 %v1465, %v1449
    %v1674 = vpack.c.b16 %v1466, %v1450
    %v1675 = vpack.c.b16 %v1467, %v1451
    %v1676 = vpack.c.b16 %v1468, %v1452
    %v1677 = vpack.c.b16 %v1469, %v1453
    %v1678 = vpack.c.b16 %v1470, %v1454
    %v1679 = vpack.c.b16 %v1487, %v1471
    %v1680 = vpack.c.b16 %v1488, %v1472
    %v1681 = vpack.c.b16 %v1489, %v1473
    %v1682 = vpack.c.b16 %v1490, %v1474
    %v1683 = vpack.c.b16 %v1491, %v1475
    %v1684 = vpack.c.b16 %v1492, %v1476
    %v1685 = vpack.c.b16 %v1493, %v1477
    %v1686 = vpack.c.b16 %v1494, %v1478
    %v1687 = vpack.c.b16 %v1495, %v1479
    %v1688 = vpack.c.b16 %v1496, %v1480
    %v1689 = vpack.c.b16 %v1497, %v1481
    %v1690 = vpack.c.b16 %v1498, %v1482
    %v1691 = vpack.c.b16 %v1499, %v1483
    %v1692 = vpack.c.b16 %v1500, %v1484
    %v1693 = vpack.c.b16 %v1501, %v1485
    %v1694 = vpack.c.b16 %v1502, %v1486
    %v1695 = vpack.c.b16 %v1519, %v1503
    %v1696 = vpack.c.b16 %v1520, %v1504
    %v1697 = vpack.c.b16 %v1521, %v1505
    %v1698 = vpack.c.b16 %v1522, %v1506
    %v1699 = vpack.c.b16 %v1523, %v1507
    %v1700 = vpack.c.b16 %v1524, %v1508
    %v1701 = vpack.c.b16 %v1525, %v1509
    %v1702 = vpack.c.b16 %v1526, %v1510
    %v1703 = vpack.c.b16 %v1527, %v1511
    %v1704 = vpack.c.b16 %v1528, %v1512
    %v1705 = vpack.c.b16 %v1529, %v1513
    %v1706 = vpack.c.b16 %v1530, %v1514
    %v1707 = vpack.c.b16 %v1531, %v1515
    %v1708 = vpack.c.b16 %v1532, %v1516
    %v1709 = vpack.c.b16 %v1533, %v1517
    %v1710 = vpack.c.b16 %v1534, %v1518
    %v1711 = vpack.c.b16 %v1551, %v1535
    %v1712 = vpack.c.b16 %v1552, %v1536
    %v1713 = vpack.c.b16 %v1553, %v1537
    %v1714 = vpack.c.b16 %v1554, %v1538
    %v1715 = vpack.c.b16 %v1555, %v1539
    %v1716 = vpack.c.b16 %v1556, %v1540
    %v1717 = vpack.c.b16 %v1557, %v1541
    %v1718 = vpack.c.b16 %v1558, %v1542
    %v1719 = vpack.c.b16 %v1559, %v1543
    %v1720 = vpack.c.b16 %v1560, %v1544
    %v1721 = vpack.c.b16 %v1561, %v1545
    %v1722 = vpack.c.b16 %v1562, %v1546
    %v1723 = vpack.c.b16 %v1563, %v1547
    %v1724 = vpack.c.b16 %v1564, %v1548
    %v1725 = vpack.c.b16 %v1565, %v1549
    %v1726 = vpack.c.b16 %v1566, %v1550
    %v1727 = vpack.c.b16 %v1583, %v1567
    %v1728 = vpack.c.b16 %v1584, %v1568
    %v1729 = vpack.c.b16 %v1585, %v1569
    %v1730 = vpack.c.b16 %v1586, %v1570
    %v1731 = vpack.c.b16 %v1587, %v1571
    %v1732 = vpack.c.b16 %v1588, %v1572
    %v1733 = vpack.c.b16 %v1589, %v1573
    %v1734 = vpack.c.b16 %v1590, %v1574
    %v1735 = vpack.c.b16 %v1591, %v1575
    %v1736 = vpack.c.b16 %v1592, %v1576
    %v1737 = vpack.c.b16 %v1593, %v1577
    %v1738 = vpack.c.b16 %v1594, %v1578
    %v1739 = vpack.c.b16 %v1595, %v1579
    %v1740 = vpack.c.b16 %v1596, %v1580
    %v1741 = vpack.c.b16 %v1597, %v1581
    %v1742 = vpack.c.b16 %v1598, %v1582
    %v1743 = vpack.c.b16 %v1615, %v1599
    %v1744 = vpack.c.b16 %v1616, %v1600
    %v1745 = vpack.c.b16 %v1617, %v1601
    %v1746 = vpack.c.b16 %v1618, %v1602
    %v1747 = vpack.c.b16 %v1619, %v1603
    %v1748 = vpack.c.b16 %v1620, %v1604
    %v1749 = vpack.c.b16 %v1621, %v1605
    %v1750 = vpack.c.b16 %v1622, %v1606
    %v1751 = vpack.c.b16 %v1623, %v1607
    %v1752 = vpack.c.b16 %v1624, %v1608
    %v1753 = vpack.c.b16 %v1625, %v1609
    %v1754 = vpack.c.b16 %v1626, %v1610
    %v1755 = vpack.c.b16 %v1627, %v1611
    %v1756 = vpack.c.b16 %v1628, %v1612
    %v1757 = vpack.c.b16 %v1629, %v1613
    %v1758 = vpack.c.b16 %v1630, %v1614
    %1887 = vmatprep.subr.bf16.mxu0 %v1632
    %1888 = vmatpush1.bf16.msra.mxu0 %v1631
    %1889 = vmatprep.subr.bf16.mxu0 %v1648
    %1890 = vmatpush1.bf16.msra.mxu0 %v1647
    %1891 = vmatprep.subr.bf16.mxu0 %v1664
    %1892 = vmatpush1.bf16.msra.mxu0 %v1663
    %1893 = vmatprep.subr.bf16.mxu0 %v1680
    %1894 = vmatpush1.bf16.msra.mxu0 %v1679
    %1895 = vmatprep.subr.bf16.mxu0 %v1696
    %1896 = vmatpush1.bf16.msra.mxu0 %v1695
    %1897 = vmatprep.subr.bf16.mxu0 %v1712
    %1898 = vmatpush1.bf16.msra.mxu0 %v1711
    %1899 = vmatprep.subr.bf16.mxu0 %v1728
    %1900 = vmatpush1.bf16.msra.mxu0 %v1727
    %1901 = vmatprep.subr.bf16.mxu0 %v1744
    %1902 = vmatpush1.bf16.msra.mxu0 %v1743
    %1903 = vmatprep.subr.bf16.mxu0 0
    %1904 = vmatpush1.bf16.msra.mxu0 0
    %1905 = vmatprep.subr.bf16.mxu0 0
    %1906 = vmatpush1.bf16.msra.mxu0 0
    %1907 = vmatprep.subr.bf16.mxu0 0
    %1908 = vmatpush1.bf16.msra.mxu0 0
    %1909 = vmatprep.subr.bf16.mxu0 0
    %1910 = vmatpush1.bf16.msra.mxu0 0
    %1911 = vmatprep.subr.bf16.mxu0 0
    %1912 = vmatpush1.bf16.msra.mxu0 0
    %1913 = vmatprep.subr.bf16.mxu0 0
    %1914 = vmatpush1.bf16.msra.mxu0 0
    %1915 = vmatprep.subr.bf16.mxu0 0
    %1916 = vmatpush1.bf16.msra.mxu0 0
    %1917 = vmatprep.subr.bf16.mxu0 0
    %1918 = vmatpush1.bf16.msra.mxu0 0
    %1919 = vmatprep.mubr.bf16.mxu0 0
    %1920 = vmatmul.mubr.bf16.gmra.mrb[0].mxu0 %v1034
    %v1921 = vpop.f32.mrb[0].mxu0
    %v1922 = vadd.f32 %v1170, %v1921
    %v1923 = vpop.f32.mrb[0].mxu0
    %v1924 = vadd.f32 %v1174, %v1923
    %v1925 = vpop.f32.mrb[0].mxu0
    %v1926 = vpop.f32.mrb[0].mxu0
    %1927 = vdwg.mxu0
    %1928 = vmatprep.subr.bf16.mxu0 %v1634
    %1929 = vmatpush1.bf16.msra.mxu0 %v1633
    %1930 = vmatprep.subr.bf16.mxu0 %v1650
    %1931 = vmatpush1.bf16.msra.mxu0 %v1649
    %1932 = vmatprep.subr.bf16.mxu0 %v1666
    %1933 = vmatpush1.bf16.msra.mxu0 %v1665
    %1934 = vmatprep.subr.bf16.mxu0 %v1682
    %1935 = vmatpush1.bf16.msra.mxu0 %v1681
    %1936 = vmatprep.subr.bf16.mxu0 %v1698
    %1937 = vmatpush1.bf16.msra.mxu0 %v1697
    %1938 = vmatprep.subr.bf16.mxu0 %v1714
    %1939 = vmatpush1.bf16.msra.mxu0 %v1713
    %1940 = vmatprep.subr.bf16.mxu0 %v1730
    %1941 = vmatpush1.bf16.msra.mxu0 %v1729
    %1942 = vmatprep.subr.bf16.mxu0 %v1746
    %1943 = vmatpush1.bf16.msra.mxu0 %v1745
    %1944 = vmatprep.subr.bf16.mxu0 0
    %1945 = vmatpush1.bf16.msra.mxu0 0
    %1946 = vmatprep.subr.bf16.mxu0 0
    %1947 = vmatpush1.bf16.msra.mxu0 0
    %1948 = vmatprep.subr.bf16.mxu0 0
    %1949 = vmatpush1.bf16.msra.mxu0 0
    %1950 = vmatprep.subr.bf16.mxu0 0
    %1951 = vmatpush1.bf16.msra.mxu0 0
    %1952 = vmatprep.subr.bf16.mxu0 0
    %1953 = vmatpush1.bf16.msra.mxu0 0
    %1954 = vmatprep.subr.bf16.mxu0 0
    %1955 = vmatpush1.bf16.msra.mxu0 0
    %1956 = vmatprep.subr.bf16.mxu0 0
    %1957 = vmatpush1.bf16.msra.mxu0 0
    %1958 = vmatprep.subr.bf16.mxu0 0
    %1959 = vmatpush1.bf16.msra.mxu0 0
    %1960 = vmatprep.mubr.bf16.mxu0 0
    %1961 = vmatmul.mubr.bf16.gmra.mrb[0].mxu0 %v1034
    %v1962 = vpop.f32.mrb[0].mxu0
    %v1963 = vadd.f32 %v1178, %v1962
    %v1964 = vpop.f32.mrb[0].mxu0
    %v1965 = vadd.f32 %v1182, %v1964
    %v1966 = vpop.f32.mrb[0].mxu0
    %v1967 = vpop.f32.mrb[0].mxu0
    %1968 = vdwg.mxu0
    %1969 = vmatprep.subr.bf16.mxu0 %v1636
    %1970 = vmatpush1.bf16.msra.mxu0 %v1635
    %1971 = vmatprep.subr.bf16.mxu0 %v1652
    %1972 = vmatpush1.bf16.msra.mxu0 %v1651
    %1973 = vmatprep.subr.bf16.mxu0 %v1668
    %1974 = vmatpush1.bf16.msra.mxu0 %v1667
    %1975 = vmatprep.subr.bf16.mxu0 %v1684
    %1976 = vmatpush1.bf16.msra.mxu0 %v1683
    %1977 = vmatprep.subr.bf16.mxu0 %v1700
    %1978 = vmatpush1.bf16.msra.mxu0 %v1699
    %1979 = vmatprep.subr.bf16.mxu0 %v1716
    %1980 = vmatpush1.bf16.msra.mxu0 %v1715
    %1981 = vmatprep.subr.bf16.mxu0 %v1732
    %1982 = vmatpush1.bf16.msra.mxu0 %v1731
    %1983 = vmatprep.subr.bf16.mxu0 %v1748
    %1984 = vmatpush1.bf16.msra.mxu0 %v1747
    %1985 = vmatprep.subr.bf16.mxu0 0
    %1986 = vmatpush1.bf16.msra.mxu0 0
    %1987 = vmatprep.subr.bf16.mxu0 0
    %1988 = vmatpush1.bf16.msra.mxu0 0
    %1989 = vmatprep.subr.bf16.mxu0 0
    %1990 = vmatpush1.bf16.msra.mxu0 0
    %1991 = vmatprep.subr.bf16.mxu0 0
    %1992 = vmatpush1.bf16.msra.mxu0 0
    %1993 = vmatprep.subr.bf16.mxu0 0
    %1994 = vmatpush1.bf16.msra.mxu0 0
    %1995 = vmatprep.subr.bf16.mxu0 0
    %1996 = vmatpush1.bf16.msra.mxu0 0
    %1997 = vmatprep.subr.bf16.mxu0 0
    %1998 = vmatpush1.bf16.msra.mxu0 0
    %1999 = vmatprep.subr.bf16.mxu0 0
    %2000 = vmatpush1.bf16.msra.mxu0 0
    %2001 = vmatprep.mubr.bf16.mxu0 0
    %2002 = vmatmul.mubr.bf16.gmra.mrb[0].mxu0 %v1034
    %v2003 = vpop.f32.mrb[0].mxu0
    %v2004 = vadd.f32 %v1186, %v2003
    %v2005 = vpop.f32.mrb[0].mxu0
    %v2006 = vadd.f32 %v1190, %v2005
    %v2007 = vpop.f32.mrb[0].mxu0
    %v2008 = vpop.f32.mrb[0].mxu0
    %2009 = vdwg.mxu0
    %2010 = vmatprep.subr.bf16.mxu0 %v1638
    %2011 = vmatpush1.bf16.msra.mxu0 %v1637
    %2012 = vmatprep.subr.bf16.mxu0 %v1654
    %2013 = vmatpush1.bf16.msra.mxu0 %v1653
    %2014 = vmatprep.subr.bf16.mxu0 %v1670
    %2015 = vmatpush1.bf16.msra.mxu0 %v1669
    %2016 = vmatprep.subr.bf16.mxu0 %v1686
    %2017 = vmatpush1.bf16.msra.mxu0 %v1685
    %2018 = vmatprep.subr.bf16.mxu0 %v1702
    %2019 = vmatpush1.bf16.msra.mxu0 %v1701
    %2020 = vmatprep.subr.bf16.mxu0 %v1718
    %2021 = vmatpush1.bf16.msra.mxu0 %v1717
    %2022 = vmatprep.subr.bf16.mxu0 %v1734
    %2023 = vmatpush1.bf16.msra.mxu0 %v1733
    %2024 = vmatprep.subr.bf16.mxu0 %v1750
    %2025 = vmatpush1.bf16.msra.mxu0 %v1749
    %2026 = vmatprep.subr.bf16.mxu0 0
    %2027 = vmatpush1.bf16.msra.mxu0 0
    %2028 = vmatprep.subr.bf16.mxu0 0
    %2029 = vmatpush1.bf16.msra.mxu0 0
    %2030 = vmatprep.subr.bf16.mxu0 0
    %2031 = vmatpush1.bf16.msra.mxu0 0
    %2032 = vmatprep.subr.bf16.mxu0 0
    %2033 = vmatpush1.bf16.msra.mxu0 0
    %2034 = vmatprep.subr.bf16.mxu0 0
    %2035 = vmatpush1.bf16.msra.mxu0 0
    %2036 = vmatprep.subr.bf16.mxu0 0
    %2037 = vmatpush1.bf16.msra.mxu0 0
    %2038 = vmatprep.subr.bf16.mxu0 0
    %2039 = vmatpush1.bf16.msra.mxu0 0
    %2040 = vmatprep.subr.bf16.mxu0 0
    %2041 = vmatpush1.bf16.msra.mxu0 0
    %2042 = vmatprep.mubr.bf16.mxu0 0
    %2043 = vmatmul.mubr.bf16.gmra.mrb[0].mxu0 %v1034
    %v2044 = vpop.f32.mrb[0].mxu0
    %v2045 = vadd.f32 %v1194, %v2044
    %v2046 = vpop.f32.mrb[0].mxu0
    %v2047 = vadd.f32 %v1198, %v2046
    %v2048 = vpop.f32.mrb[0].mxu0
    %v2049 = vpop.f32.mrb[0].mxu0
    %2050 = vdwg.mxu0
    %2051 = vmatprep.subr.bf16.mxu0 %v1640
    %2052 = vmatpush1.bf16.msra.mxu0 %v1639
    %2053 = vmatprep.subr.bf16.mxu0 %v1656
    %2054 = vmatpush1.bf16.msra.mxu0 %v1655
    %2055 = vmatprep.subr.bf16.mxu0 %v1672
    %2056 = vmatpush1.bf16.msra.mxu0 %v1671
    %2057 = vmatprep.subr.bf16.mxu0 %v1688
    %2058 = vmatpush1.bf16.msra.mxu0 %v1687
    %2059 = vmatprep.subr.bf16.mxu0 %v1704
    %2060 = vmatpush1.bf16.msra.mxu0 %v1703
    %2061 = vmatprep.subr.bf16.mxu0 %v1720
    %2062 = vmatpush1.bf16.msra.mxu0 %v1719
    %2063 = vmatprep.subr.bf16.mxu0 %v1736
    %2064 = vmatpush1.bf16.msra.mxu0 %v1735
    %2065 = vmatprep.subr.bf16.mxu0 %v1752
    %2066 = vmatpush1.bf16.msra.mxu0 %v1751
    %2067 = vmatprep.subr.bf16.mxu0 0
    %2068 = vmatpush1.bf16.msra.mxu0 0
    %2069 = vmatprep.subr.bf16.mxu0 0
    %2070 = vmatpush1.bf16.msra.mxu0 0
    %2071 = vmatprep.subr.bf16.mxu0 0
    %2072 = vmatpush1.bf16.msra.mxu0 0
    %2073 = vmatprep.subr.bf16.mxu0 0
    %2074 = vmatpush1.bf16.msra.mxu0 0
    %2075 = vmatprep.subr.bf16.mxu0 0
    %2076 = vmatpush1.bf16.msra.mxu0 0
    %2077 = vmatprep.subr.bf16.mxu0 0
    %2078 = vmatpush1.bf16.msra.mxu0 0
    %2079 = vmatprep.subr.bf16.mxu0 0
    %2080 = vmatpush1.bf16.msra.mxu0 0
    %2081 = vmatprep.subr.bf16.mxu0 0
    %2082 = vmatpush1.bf16.msra.mxu0 0
    %2083 = vmatprep.mubr.bf16.mxu0 0
    %2084 = vmatmul.mubr.bf16.gmra.mrb[0].mxu0 %v1034
    %v2085 = vpop.f32.mrb[0].mxu0
    %v2086 = vadd.f32 %v1202, %v2085
    %v2087 = vpop.f32.mrb[0].mxu0
    %v2088 = vadd.f32 %v1206, %v2087
    %v2089 = vpop.f32.mrb[0].mxu0
    %v2090 = vpop.f32.mrb[0].mxu0
    %2091 = vdwg.mxu0
    %2092 = vmatprep.subr.bf16.mxu0 %v1642
    %2093 = vmatpush1.bf16.msra.mxu0 %v1641
    %2094 = vmatprep.subr.bf16.mxu0 %v1658
    %2095 = vmatpush1.bf16.msra.mxu0 %v1657
    %2096 = vmatprep.subr.bf16.mxu0 %v1674
    %2097 = vmatpush1.bf16.msra.mxu0 %v1673
    %2098 = vmatprep.subr.bf16.mxu0 %v1690
    %2099 = vmatpush1.bf16.msra.mxu0 %v1689
    %2100 = vmatprep.subr.bf16.mxu0 %v1706
    %2101 = vmatpush1.bf16.msra.mxu0 %v1705
    %2102 = vmatprep.subr.bf16.mxu0 %v1722
    %2103 = vmatpush1.bf16.msra.mxu0 %v1721
    %2104 = vmatprep.subr.bf16.mxu0 %v1738
    %2105 = vmatpush1.bf16.msra.mxu0 %v1737
    %2106 = vmatprep.subr.bf16.mxu0 %v1754
    %2107 = vmatpush1.bf16.msra.mxu0 %v1753
    %2108 = vmatprep.subr.bf16.mxu0 0
    %2109 = vmatpush1.bf16.msra.mxu0 0
    %2110 = vmatprep.subr.bf16.mxu0 0
    %2111 = vmatpush1.bf16.msra.mxu0 0
    %2112 = vmatprep.subr.bf16.mxu0 0
    %2113 = vmatpush1.bf16.msra.mxu0 0
    %2114 = vmatprep.subr.bf16.mxu0 0
    %2115 = vmatpush1.bf16.msra.mxu0 0
    %2116 = vmatprep.subr.bf16.mxu0 0
    %2117 = vmatpush1.bf16.msra.mxu0 0
    %2118 = vmatprep.subr.bf16.mxu0 0
    %2119 = vmatpush1.bf16.msra.mxu0 0
    %2120 = vmatprep.subr.bf16.mxu0 0
    %2121 = vmatpush1.bf16.msra.mxu0 0
    %2122 = vmatprep.subr.bf16.mxu0 0
    %2123 = vmatpush1.bf16.msra.mxu0 0
    %2124 = vmatprep.mubr.bf16.mxu0 0
    %2125 = vmatmul.mubr.bf16.gmra.mrb[0].mxu0 %v1034
    %v2126 = vpop.f32.mrb[0].mxu0
    %v2127 = vadd.f32 %v1210, %v2126
    %v2128 = vpop.f32.mrb[0].mxu0
    %v2129 = vadd.f32 %v1214, %v2128
    %v2130 = vpop.f32.mrb[0].mxu0
    %v2131 = vpop.f32.mrb[0].mxu0
    %2132 = vdwg.mxu0
    %2133 = vmatprep.subr.bf16.mxu0 %v1644
    %2134 = vmatpush1.bf16.msra.mxu0 %v1643
    %2135 = vmatprep.subr.bf16.mxu0 %v1660
    %2136 = vmatpush1.bf16.msra.mxu0 %v1659
    %2137 = vmatprep.subr.bf16.mxu0 %v1676
    %2138 = vmatpush1.bf16.msra.mxu0 %v1675
    %2139 = vmatprep.subr.bf16.mxu0 %v1692
    %2140 = vmatpush1.bf16.msra.mxu0 %v1691
    %2141 = vmatprep.subr.bf16.mxu0 %v1708
    %2142 = vmatpush1.bf16.msra.mxu0 %v1707
    %2143 = vmatprep.subr.bf16.mxu0 %v1724
    %2144 = vmatpush1.bf16.msra.mxu0 %v1723
    %2145 = vmatprep.subr.bf16.mxu0 %v1740
    %2146 = vmatpush1.bf16.msra.mxu0 %v1739
    %2147 = vmatprep.subr.bf16.mxu0 %v1756
    %2148 = vmatpush1.bf16.msra.mxu0 %v1755
    %2149 = vmatprep.subr.bf16.mxu0 0
    %2150 = vmatpush1.bf16.msra.mxu0 0
    %2151 = vmatprep.subr.bf16.mxu0 0
    %2152 = vmatpush1.bf16.msra.mxu0 0
    %2153 = vmatprep.subr.bf16.mxu0 0
    %2154 = vmatpush1.bf16.msra.mxu0 0
    %2155 = vmatprep.subr.bf16.mxu0 0
    %2156 = vmatpush1.bf16.msra.mxu0 0
    %2157 = vmatprep.subr.bf16.mxu0 0
    %2158 = vmatpush1.bf16.msra.mxu0 0
    %2159 = vmatprep.subr.bf16.mxu0 0
    %2160 = vmatpush1.bf16.msra.mxu0 0
    %2161 = vmatprep.subr.bf16.mxu0 0
    %2162 = vmatpush1.bf16.msra.mxu0 0
    %2163 = vmatprep.subr.bf16.mxu0 0
    %2164 = vmatpush1.bf16.msra.mxu0 0
    %2165 = vmatprep.mubr.bf16.mxu0 0
    %2166 = vmatmul.mubr.bf16.gmra.mrb[0].mxu0 %v1034
    %v2167 = vpop.f32.mrb[0].mxu0
    %v2168 = vadd.f32 %v1218, %v2167
    %v2169 = vpop.f32.mrb[0].mxu0
    %v2170 = vadd.f32 %v1222, %v2169
    %v2171 = vpop.f32.mrb[0].mxu0
    %v2172 = vpop.f32.mrb[0].mxu0
    %2173 = vdwg.mxu0
    %2174 = vmatprep.subr.bf16.mxu0 %v1646
    %2175 = vmatpush1.bf16.msra.mxu0 %v1645
    %2176 = vmatprep.subr.bf16.mxu0 %v1662
    %2177 = vmatpush1.bf16.msra.mxu0 %v1661
    %2178 = vmatprep.subr.bf16.mxu0 %v1678
    %2179 = vmatpush1.bf16.msra.mxu0 %v1677
    %2180 = vmatprep.subr.bf16.mxu0 %v1694
    %2181 = vmatpush1.bf16.msra.mxu0 %v1693
    %2182 = vmatprep.subr.bf16.mxu0 %v1710
    %2183 = vmatpush1.bf16.msra.mxu0 %v1709
    %2184 = vmatprep.subr.bf16.mxu0 %v1726
    %2185 = vmatpush1.bf16.msra.mxu0 %v1725
    %2186 = vmatprep.subr.bf16.mxu0 %v1742
    %2187 = vmatpush1.bf16.msra.mxu0 %v1741
    %2188 = vmatprep.subr.bf16.mxu0 %v1758
    %2189 = vmatpush1.bf16.msra.mxu0 %v1757
    %2190 = vmatprep.subr.bf16.mxu0 0
    %2191 = vmatpush1.bf16.msra.mxu0 0
    %2192 = vmatprep.subr.bf16.mxu0 0
    %2193 = vmatpush1.bf16.msra.mxu0 0
    %2194 = vmatprep.subr.bf16.mxu0 0
    %2195 = vmatpush1.bf16.msra.mxu0 0
    %2196 = vmatprep.subr.bf16.mxu0 0
    %2197 = vmatpush1.bf16.msra.mxu0 0
    %2198 = vmatprep.subr.bf16.mxu0 0
    %2199 = vmatpush1.bf16.msra.mxu0 0
    %2200 = vmatprep.subr.bf16.mxu0 0
    %2201 = vmatpush1.bf16.msra.mxu0 0
    %2202 = vmatprep.subr.bf16.mxu0 0
    %2203 = vmatpush1.bf16.msra.mxu0 0
    %2204 = vmatprep.subr.bf16.mxu0 0
    %2205 = vmatpush1.bf16.msra.mxu0 0
    %2206 = vmatprep.mubr.bf16.mxu0 0
    %2207 = vmatmul.mubr.bf16.gmra.mrb[0].mxu0 %v1034
    %v2208 = vpop.f32.mrb[0].mxu0
    %v2209 = vadd.f32 %v1226, %v2208
    %v2210 = vpop.f32.mrb[0].mxu0
    %v2211 = vadd.f32 %v1230, %v2210
    %v2212 = vpop.f32.mrb[0].mxu0
    %v2213 = vpop.f32.mrb[0].mxu0
    %2214 = vdwg.mxu0
    %v2215 = vmax.f32 %v1922, 0.0
    %v2216 = vmax.f32 %v1924, 0.0
    %v2217 = vmax.f32 %v1963, 0.0
    %v2218 = vmax.f32 %v1965, 0.0
    %v2219 = vmax.f32 %v2004, 0.0
    %v2220 = vmax.f32 %v2006, 0.0
    %v2221 = vmax.f32 %v2045, 0.0
    %v2222 = vmax.f32 %v2047, 0.0
    %v2223 = vmax.f32 %v2086, 0.0
    %v2224 = vmax.f32 %v2088, 0.0
    %v2225 = vmax.f32 %v2127, 0.0
    %v2226 = vmax.f32 %v2129, 0.0
    %v2227 = vmax.f32 %v2168, 0.0
    %v2228 = vmax.f32 %v2170, 0.0
    %v2229 = vmax.f32 %v2209, 0.0
    %v2230 = vmax.f32 %v2211, 0.0
    %v2231 = vpack.c.bf16 %v2215, %v2215
    %v2232 = vpack.c.bf16 %v2216, %v2216
    %v2233 = vpack.c.bf16 %v2217, %v2217
    %v2234 = vpack.c.bf16 %v2218, %v2218
    %v2235 = vpack.c.bf16 %v2219, %v2219
    %v2236 = vpack.c.bf16 %v2220, %v2220
    %v2237 = vpack.c.bf16 %v2221, %v2221
    %v2238 = vpack.c.bf16 %v2222, %v2222
    %v2239 = vpack.c.bf16 %v2223, %v2223
    %v2240 = vpack.c.bf16 %v2224, %v2224
    %v2241 = vpack.c.bf16 %v2225, %v2225
    %v2242 = vpack.c.bf16 %v2226, %v2226
    %v2243 = vpack.c.bf16 %v2227, %v2227
    %v2244 = vpack.c.bf16 %v2228, %v2228
    %v2245 = vpack.c.bf16 %v2229, %v2229
    %v2246 = vpack.c.bf16 %v2230, %v2230
    %v2247 = vld [vmem:[%s13] sm:$0xf]
    %v2248 = vld [vmem:[%s13 + $0x4] sm:$0xf]
    %v2249 = vld [vmem:[%s13 + $0x8] sm:$0xf]
    %v2250 = vld [vmem:[%s13 + $0xc] sm:$0xf]
    %v2251 = vld [vmem:[%s13 + $0x10] sm:$0xf]
    %v2252 = vld [vmem:[%s13 + $0x14] sm:$0xf]
    %v2253 = vld [vmem:[%s13 + $0x18] sm:$0xf]
    %v2254 = vld [vmem:[%s13 + $0x1c] sm:$0xf]
    %v2255 = vld [vmem:[%s13 + $0x20] sm:$0xf]
    %v2256 = vld [vmem:[%s13 + $0x24] sm:$0xf]
    %v2257 = vld [vmem:[%s13 + $0x28] sm:$0xf]
    %v2258 = vld [vmem:[%s13 + $0x2c] sm:$0xf]
    %v2259 = vld [vmem:[%s13 + $0x30] sm:$0xf]
    %v2260 = vld [vmem:[%s13 + $0x34] sm:$0xf]
    %v2261 = vld [vmem:[%s13 + $0x38] sm:$0xf]
    %v2262 = vld [vmem:[%s13 + $0x3c] sm:$0xf]
    %v2263 = vld [vmem:[%s13 + $0x40] sm:$0xf]
    %v2264 = vld [vmem:[%s13 + $0x44] sm:$0xf]
    %v2265 = vld [vmem:[%s13 + $0x48] sm:$0xf]
    %v2266 = vld [vmem:[%s13 + $0x4c] sm:$0xf]
    %v2267 = vld [vmem:[%s13 + $0x50] sm:$0xf]
    %v2268 = vld [vmem:[%s13 + $0x54] sm:$0xf]
    %v2269 = vld [vmem:[%s13 + $0x58] sm:$0xf]
    %v2270 = vld [vmem:[%s13 + $0x5c] sm:$0xf]
    %v2271 = vld [vmem:[%s13 + $0x60] sm:$0xf]
    %v2272 = vld [vmem:[%s13 + $0x64] sm:$0xf]
    %v2273 = vld [vmem:[%s13 + $0x68] sm:$0xf]
    %v2274 = vld [vmem:[%s13 + $0x6c] sm:$0xf]
    %v2275 = vld [vmem:[%s13 + $0x70] sm:$0xf]
    %v2276 = vld [vmem:[%s13 + $0x74] sm:$0xf]
    %v2277 = vld [vmem:[%s13 + $0x78] sm:$0xf]
    %v2278 = vld [vmem:[%s13 + $0x7c] sm:$0xf]
    %v2279 = vld [vmem:[%s13 + $0x80] sm:$0xf]
    %v2280 = vld [vmem:[%s13 + $0x84] sm:$0xf]
    %v2281 = vld [vmem:[%s13 + $0x88] sm:$0xf]
    %v2282 = vld [vmem:[%s13 + $0x8c] sm:$0xf]
    %v2283 = vld [vmem:[%s13 + $0x90] sm:$0xf]
    %v2284 = vld [vmem:[%s13 + $0x94] sm:$0xf]
    %v2285 = vld [vmem:[%s13 + $0x98] sm:$0xf]
    %v2286 = vld [vmem:[%s13 + $0x9c] sm:$0xf]
    %v2287 = vld [vmem:[%s13 + $0xa0] sm:$0xf]
    %v2288 = vld [vmem:[%s13 + $0xa4] sm:$0xf]
    %v2289 = vld [vmem:[%s13 + $0xa8] sm:$0xf]
    %v2290 = vld [vmem:[%s13 + $0xac] sm:$0xf]
    %v2291 = vld [vmem:[%s13 + $0xb0] sm:$0xf]
    %v2292 = vld [vmem:[%s13 + $0xb4] sm:$0xf]
    %v2293 = vld [vmem:[%s13 + $0xb8] sm:$0xf]
    %v2294 = vld [vmem:[%s13 + $0xbc] sm:$0xf]
    %v2295 = vld [vmem:[%s13 + $0xc0] sm:$0xf]
    %v2296 = vld [vmem:[%s13 + $0xc4] sm:$0xf]
    %v2297 = vld [vmem:[%s13 + $0xc8] sm:$0xf]
    %v2298 = vld [vmem:[%s13 + $0xcc] sm:$0xf]
    %v2299 = vld [vmem:[%s13 + $0xd0] sm:$0xf]
    %v2300 = vld [vmem:[%s13 + $0xd4] sm:$0xf]
    %v2301 = vld [vmem:[%s13 + $0xd8] sm:$0xf]
    %v2302 = vld [vmem:[%s13 + $0xdc] sm:$0xf]
    %v2303 = vld [vmem:[%s13 + $0xe0] sm:$0xf]
    %v2304 = vld [vmem:[%s13 + $0xe4] sm:$0xf]
    %v2305 = vld [vmem:[%s13 + $0xe8] sm:$0xf]
    %v2306 = vld [vmem:[%s13 + $0xec] sm:$0xf]
    %v2307 = vld [vmem:[%s13 + $0xf0] sm:$0xf]
    %v2308 = vld [vmem:[%s13 + $0xf4] sm:$0xf]
    %v2309 = vld [vmem:[%s13 + $0xf8] sm:$0xf]
    %v2310 = vld [vmem:[%s13 + $0xfc] sm:$0xf]
    %v2311 = vld [vmem:[%s13 + $0x100] sm:$0xf]
    %v2312 = vld [vmem:[%s13 + $0x104] sm:$0xf]
    %v2313 = vld [vmem:[%s13 + $0x108] sm:$0xf]
    %v2314 = vld [vmem:[%s13 + $0x10c] sm:$0xf]
    %v2315 = vld [vmem:[%s13 + $0x110] sm:$0xf]
    %v2316 = vld [vmem:[%s13 + $0x114] sm:$0xf]
    %v2317 = vld [vmem:[%s13 + $0x118] sm:$0xf]
    %v2318 = vld [vmem:[%s13 + $0x11c] sm:$0xf]
    %v2319 = vld [vmem:[%s13 + $0x120] sm:$0xf]
    %v2320 = vld [vmem:[%s13 + $0x124] sm:$0xf]
    %v2321 = vld [vmem:[%s13 + $0x128] sm:$0xf]
    %v2322 = vld [vmem:[%s13 + $0x12c] sm:$0xf]
    %v2323 = vld [vmem:[%s13 + $0x130] sm:$0xf]
    %v2324 = vld [vmem:[%s13 + $0x134] sm:$0xf]
    %v2325 = vld [vmem:[%s13 + $0x138] sm:$0xf]
    %v2326 = vld [vmem:[%s13 + $0x13c] sm:$0xf]
    %v2327 = vld [vmem:[%s13 + $0x140] sm:$0xf]
    %v2328 = vld [vmem:[%s13 + $0x144] sm:$0xf]
    %v2329 = vld [vmem:[%s13 + $0x148] sm:$0xf]
    %v2330 = vld [vmem:[%s13 + $0x14c] sm:$0xf]
    %v2331 = vld [vmem:[%s13 + $0x150] sm:$0xf]
    %v2332 = vld [vmem:[%s13 + $0x154] sm:$0xf]
    %v2333 = vld [vmem:[%s13 + $0x158] sm:$0xf]
    %v2334 = vld [vmem:[%s13 + $0x15c] sm:$0xf]
    %v2335 = vld [vmem:[%s13 + $0x160] sm:$0xf]
    %v2336 = vld [vmem:[%s13 + $0x164] sm:$0xf]
    %v2337 = vld [vmem:[%s13 + $0x168] sm:$0xf]
    %v2338 = vld [vmem:[%s13 + $0x16c] sm:$0xf]
    %v2339 = vld [vmem:[%s13 + $0x170] sm:$0xf]
    %v2340 = vld [vmem:[%s13 + $0x174] sm:$0xf]
    %v2341 = vld [vmem:[%s13 + $0x178] sm:$0xf]
    %v2342 = vld [vmem:[%s13 + $0x17c] sm:$0xf]
    %v2343 = vld [vmem:[%s13 + $0x180] sm:$0xf]
    %v2344 = vld [vmem:[%s13 + $0x184] sm:$0xf]
    %v2345 = vld [vmem:[%s13 + $0x188] sm:$0xf]
    %v2346 = vld [vmem:[%s13 + $0x18c] sm:$0xf]
    %v2347 = vld [vmem:[%s13 + $0x190] sm:$0xf]
    %v2348 = vld [vmem:[%s13 + $0x194] sm:$0xf]
    %v2349 = vld [vmem:[%s13 + $0x198] sm:$0xf]
    %v2350 = vld [vmem:[%s13 + $0x19c] sm:$0xf]
    %v2351 = vld [vmem:[%s13 + $0x1a0] sm:$0xf]
    %v2352 = vld [vmem:[%s13 + $0x1a4] sm:$0xf]
    %v2353 = vld [vmem:[%s13 + $0x1a8] sm:$0xf]
    %v2354 = vld [vmem:[%s13 + $0x1ac] sm:$0xf]
    %v2355 = vld [vmem:[%s13 + $0x1b0] sm:$0xf]
    %v2356 = vld [vmem:[%s13 + $0x1b4] sm:$0xf]
    %v2357 = vld [vmem:[%s13 + $0x1b8] sm:$0xf]
    %v2358 = vld [vmem:[%s13 + $0x1bc] sm:$0xf]
    %v2359 = vld [vmem:[%s13 + $0x1c0] sm:$0xf]
    %v2360 = vld [vmem:[%s13 + $0x1c4] sm:$0xf]
    %v2361 = vld [vmem:[%s13 + $0x1c8] sm:$0xf]
    %v2362 = vld [vmem:[%s13 + $0x1cc] sm:$0xf]
    %v2363 = vld [vmem:[%s13 + $0x1d0] sm:$0xf]
    %v2364 = vld [vmem:[%s13 + $0x1d4] sm:$0xf]
    %v2365 = vld [vmem:[%s13 + $0x1d8] sm:$0xf]
    %v2366 = vld [vmem:[%s13 + $0x1dc] sm:$0xf]
    %v2367 = vld [vmem:[%s13 + $0x1e0] sm:$0xf]
    %v2368 = vld [vmem:[%s13 + $0x1e4] sm:$0xf]
    %v2369 = vld [vmem:[%s13 + $0x1e8] sm:$0xf]
    %v2370 = vld [vmem:[%s13 + $0x1ec] sm:$0xf]
    %v2371 = vld [vmem:[%s13 + $0x1f0] sm:$0xf]
    %v2372 = vld [vmem:[%s13 + $0x1f4] sm:$0xf]
    %v2373 = vld [vmem:[%s13 + $0x1f8] sm:$0xf]
    %v2374 = vld [vmem:[%s13 + $0x1fc] sm:$0xf]
    %v2375 = vld [vmem:[%s13 + $0x200] sm:$0xf]
    %v2376 = vld [vmem:[%s13 + $0x204] sm:$0xf]
    %v2377 = vld [vmem:[%s13 + $0x208] sm:$0xf]
    %v2378 = vld [vmem:[%s13 + $0x20c] sm:$0xf]
    %v2379 = vld [vmem:[%s13 + $0x210] sm:$0xf]
    %v2380 = vld [vmem:[%s13 + $0x214] sm:$0xf]
    %v2381 = vld [vmem:[%s13 + $0x218] sm:$0xf]
    %v2382 = vld [vmem:[%s13 + $0x21c] sm:$0xf]
    %v2383 = vld [vmem:[%s13 + $0x220] sm:$0xf]
    %v2384 = vld [vmem:[%s13 + $0x224] sm:$0xf]
    %v2385 = vld [vmem:[%s13 + $0x228] sm:$0xf]
    %v2386 = vld [vmem:[%s13 + $0x22c] sm:$0xf]
    %v2387 = vld [vmem:[%s13 + $0x230] sm:$0xf]
    %v2388 = vld [vmem:[%s13 + $0x234] sm:$0xf]
    %v2389 = vld [vmem:[%s13 + $0x238] sm:$0xf]
    %v2390 = vld [vmem:[%s13 + $0x23c] sm:$0xf]
    %v2391 = vld [vmem:[%s13 + $0x240] sm:$0xf]
    %v2392 = vld [vmem:[%s13 + $0x244] sm:$0xf]
    %v2393 = vld [vmem:[%s13 + $0x248] sm:$0xf]
    %v2394 = vld [vmem:[%s13 + $0x24c] sm:$0xf]
    %v2395 = vld [vmem:[%s13 + $0x250] sm:$0xf]
    %v2396 = vld [vmem:[%s13 + $0x254] sm:$0xf]
    %v2397 = vld [vmem:[%s13 + $0x258] sm:$0xf]
    %v2398 = vld [vmem:[%s13 + $0x25c] sm:$0xf]
    %v2399 = vld [vmem:[%s13 + $0x260] sm:$0xf]
    %v2400 = vld [vmem:[%s13 + $0x264] sm:$0xf]
    %v2401 = vld [vmem:[%s13 + $0x268] sm:$0xf]
    %v2402 = vld [vmem:[%s13 + $0x26c] sm:$0xf]
    %v2403 = vld [vmem:[%s13 + $0x270] sm:$0xf]
    %v2404 = vld [vmem:[%s13 + $0x274] sm:$0xf]
    %v2405 = vld [vmem:[%s13 + $0x278] sm:$0xf]
    %v2406 = vld [vmem:[%s13 + $0x27c] sm:$0xf]
    %v2407 = vld [vmem:[%s13 + $0x280] sm:$0xf]
    %v2408 = vld [vmem:[%s13 + $0x284] sm:$0xf]
    %v2409 = vld [vmem:[%s13 + $0x288] sm:$0xf]
    %v2410 = vld [vmem:[%s13 + $0x28c] sm:$0xf]
    %v2411 = vld [vmem:[%s13 + $0x290] sm:$0xf]
    %v2412 = vld [vmem:[%s13 + $0x294] sm:$0xf]
    %v2413 = vld [vmem:[%s13 + $0x298] sm:$0xf]
    %v2414 = vld [vmem:[%s13 + $0x29c] sm:$0xf]
    %v2415 = vld [vmem:[%s13 + $0x2a0] sm:$0xf]
    %v2416 = vld [vmem:[%s13 + $0x2a4] sm:$0xf]
    %v2417 = vld [vmem:[%s13 + $0x2a8] sm:$0xf]
    %v2418 = vld [vmem:[%s13 + $0x2ac] sm:$0xf]
    %v2419 = vld [vmem:[%s13 + $0x2b0] sm:$0xf]
    %v2420 = vld [vmem:[%s13 + $0x2b4] sm:$0xf]
    %v2421 = vld [vmem:[%s13 + $0x2b8] sm:$0xf]
    %v2422 = vld [vmem:[%s13 + $0x2bc] sm:$0xf]
    %v2423 = vld [vmem:[%s13 + $0x2c0] sm:$0xf]
    %v2424 = vld [vmem:[%s13 + $0x2c4] sm:$0xf]
    %v2425 = vld [vmem:[%s13 + $0x2c8] sm:$0xf]
    %v2426 = vld [vmem:[%s13 + $0x2cc] sm:$0xf]
    %v2427 = vld [vmem:[%s13 + $0x2d0] sm:$0xf]
    %v2428 = vld [vmem:[%s13 + $0x2d4] sm:$0xf]
    %v2429 = vld [vmem:[%s13 + $0x2d8] sm:$0xf]
    %v2430 = vld [vmem:[%s13 + $0x2dc] sm:$0xf]
    %v2431 = vld [vmem:[%s13 + $0x2e0] sm:$0xf]
    %v2432 = vld [vmem:[%s13 + $0x2e4] sm:$0xf]
    %v2433 = vld [vmem:[%s13 + $0x2e8] sm:$0xf]
    %v2434 = vld [vmem:[%s13 + $0x2ec] sm:$0xf]
    %v2435 = vld [vmem:[%s13 + $0x2f0] sm:$0xf]
    %v2436 = vld [vmem:[%s13 + $0x2f4] sm:$0xf]
    %v2437 = vld [vmem:[%s13 + $0x2f8] sm:$0xf]
    %v2438 = vld [vmem:[%s13 + $0x2fc] sm:$0xf]
    %v2439 = vld [vmem:[%s13 + $0x300] sm:$0xf]
    %v2440 = vld [vmem:[%s13 + $0x304] sm:$0xf]
    %v2441 = vld [vmem:[%s13 + $0x308] sm:$0xf]
    %v2442 = vld [vmem:[%s13 + $0x30c] sm:$0xf]
    %v2443 = vld [vmem:[%s13 + $0x310] sm:$0xf]
    %v2444 = vld [vmem:[%s13 + $0x314] sm:$0xf]
    %v2445 = vld [vmem:[%s13 + $0x318] sm:$0xf]
    %v2446 = vld [vmem:[%s13 + $0x31c] sm:$0xf]
    %v2447 = vld [vmem:[%s13 + $0x320] sm:$0xf]
    %v2448 = vld [vmem:[%s13 + $0x324] sm:$0xf]
    %v2449 = vld [vmem:[%s13 + $0x328] sm:$0xf]
    %v2450 = vld [vmem:[%s13 + $0x32c] sm:$0xf]
    %v2451 = vld [vmem:[%s13 + $0x330] sm:$0xf]
    %v2452 = vld [vmem:[%s13 + $0x334] sm:$0xf]
    %v2453 = vld [vmem:[%s13 + $0x338] sm:$0xf]
    %v2454 = vld [vmem:[%s13 + $0x33c] sm:$0xf]
    %v2455 = vld [vmem:[%s13 + $0x340] sm:$0xf]
    %v2456 = vld [vmem:[%s13 + $0x344] sm:$0xf]
    %v2457 = vld [vmem:[%s13 + $0x348] sm:$0xf]
    %v2458 = vld [vmem:[%s13 + $0x34c] sm:$0xf]
    %v2459 = vld [vmem:[%s13 + $0x350] sm:$0xf]
    %v2460 = vld [vmem:[%s13 + $0x354] sm:$0xf]
    %v2461 = vld [vmem:[%s13 + $0x358] sm:$0xf]
    %v2462 = vld [vmem:[%s13 + $0x35c] sm:$0xf]
    %v2463 = vld [vmem:[%s13 + $0x360] sm:$0xf]
    %v2464 = vld [vmem:[%s13 + $0x364] sm:$0xf]
    %v2465 = vld [vmem:[%s13 + $0x368] sm:$0xf]
    %v2466 = vld [vmem:[%s13 + $0x36c] sm:$0xf]
    %v2467 = vld [vmem:[%s13 + $0x370] sm:$0xf]
    %v2468 = vld [vmem:[%s13 + $0x374] sm:$0xf]
    %v2469 = vld [vmem:[%s13 + $0x378] sm:$0xf]
    %v2470 = vld [vmem:[%s13 + $0x37c] sm:$0xf]
    %v2471 = vld [vmem:[%s13 + $0x380] sm:$0xf]
    %v2472 = vld [vmem:[%s13 + $0x384] sm:$0xf]
    %v2473 = vld [vmem:[%s13 + $0x388] sm:$0xf]
    %v2474 = vld [vmem:[%s13 + $0x38c] sm:$0xf]
    %v2475 = vld [vmem:[%s13 + $0x390] sm:$0xf]
    %v2476 = vld [vmem:[%s13 + $0x394] sm:$0xf]
    %v2477 = vld [vmem:[%s13 + $0x398] sm:$0xf]
    %v2478 = vld [vmem:[%s13 + $0x39c] sm:$0xf]
    %v2479 = vld [vmem:[%s13 + $0x3a0] sm:$0xf]
    %v2480 = vld [vmem:[%s13 + $0x3a4] sm:$0xf]
    %v2481 = vld [vmem:[%s13 + $0x3a8] sm:$0xf]
    %v2482 = vld [vmem:[%s13 + $0x3ac] sm:$0xf]
    %v2483 = vld [vmem:[%s13 + $0x3b0] sm:$0xf]
    %v2484 = vld [vmem:[%s13 + $0x3b4] sm:$0xf]
    %v2485 = vld [vmem:[%s13 + $0x3b8] sm:$0xf]
    %v2486 = vld [vmem:[%s13 + $0x3bc] sm:$0xf]
    %v2487 = vld [vmem:[%s13 + $0x3c0] sm:$0xf]
    %v2488 = vld [vmem:[%s13 + $0x3c4] sm:$0xf]
    %v2489 = vld [vmem:[%s13 + $0x3c8] sm:$0xf]
    %v2490 = vld [vmem:[%s13 + $0x3cc] sm:$0xf]
    %v2491 = vld [vmem:[%s13 + $0x3d0] sm:$0xf]
    %v2492 = vld [vmem:[%s13 + $0x3d4] sm:$0xf]
    %v2493 = vld [vmem:[%s13 + $0x3d8] sm:$0xf]
    %v2494 = vld [vmem:[%s13 + $0x3dc] sm:$0xf]
    %v2495 = vld [vmem:[%s13 + $0x3e0] sm:$0xf]
    %v2496 = vld [vmem:[%s13 + $0x3e4] sm:$0xf]
    %v2497 = vld [vmem:[%s13 + $0x3e8] sm:$0xf]
    %v2498 = vld [vmem:[%s13 + $0x3ec] sm:$0xf]
    %v2499 = vld [vmem:[%s13 + $0x3f0] sm:$0xf]
    %v2500 = vld [vmem:[%s13 + $0x3f4] sm:$0xf]
    %v2501 = vld [vmem:[%s13 + $0x3f8] sm:$0xf]
    %v2502 = vld [vmem:[%s13 + $0x3fc] sm:$0xf]
    %v2503 = vld [vmem:[%s14] sm:$0x1]
    %v2505 = vlaneseq
    %v2506 = vshrl.u32 %v2505, 7
    %v2507 = vsub.s32 0, %v2506
    %v2508 = vrot.slane %v2503, %v2507
    %v2766 = vunpack.c.l.b16 %v2247
    %v2767 = vunpack.c.l.b16 %v2248
    %v2768 = vunpack.c.l.b16 %v2249
    %v2769 = vunpack.c.l.b16 %v2250
    %v2770 = vunpack.c.l.b16 %v2251
    %v2771 = vunpack.c.l.b16 %v2252
    %v2772 = vunpack.c.l.b16 %v2253
    %v2773 = vunpack.c.l.b16 %v2254
    %v2774 = vunpack.c.l.b16 %v2255
    %v2775 = vunpack.c.l.b16 %v2256
    %v2776 = vunpack.c.l.b16 %v2257
    %v2777 = vunpack.c.l.b16 %v2258
    %v2778 = vunpack.c.l.b16 %v2259
    %v2779 = vunpack.c.l.b16 %v2260
    %v2780 = vunpack.c.l.b16 %v2261
    %v2781 = vunpack.c.l.b16 %v2262
    %v2782 = vunpack.c.l.b16 %v2263
    %v2783 = vunpack.c.l.b16 %v2264
    %v2784 = vunpack.c.l.b16 %v2265
    %v2785 = vunpack.c.l.b16 %v2266
    %v2786 = vunpack.c.l.b16 %v2267
    %v2787 = vunpack.c.l.b16 %v2268
    %v2788 = vunpack.c.l.b16 %v2269
    %v2789 = vunpack.c.l.b16 %v2270
    %v2790 = vunpack.c.l.b16 %v2271
    %v2791 = vunpack.c.l.b16 %v2272
    %v2792 = vunpack.c.l.b16 %v2273
    %v2793 = vunpack.c.l.b16 %v2274
    %v2794 = vunpack.c.l.b16 %v2275
    %v2795 = vunpack.c.l.b16 %v2276
    %v2796 = vunpack.c.l.b16 %v2277
    %v2797 = vunpack.c.l.b16 %v2278
    %v2798 = vunpack.c.l.b16 %v2279
    %v2799 = vunpack.c.l.b16 %v2280
    %v2800 = vunpack.c.l.b16 %v2281
    %v2801 = vunpack.c.l.b16 %v2282
    %v2802 = vunpack.c.l.b16 %v2283
    %v2803 = vunpack.c.l.b16 %v2284
    %v2804 = vunpack.c.l.b16 %v2285
    %v2805 = vunpack.c.l.b16 %v2286
    %v2806 = vunpack.c.l.b16 %v2287
    %v2807 = vunpack.c.l.b16 %v2288
    %v2808 = vunpack.c.l.b16 %v2289
    %v2809 = vunpack.c.l.b16 %v2290
    %v2810 = vunpack.c.l.b16 %v2291
    %v2811 = vunpack.c.l.b16 %v2292
    %v2812 = vunpack.c.l.b16 %v2293
    %v2813 = vunpack.c.l.b16 %v2294
    %v2814 = vunpack.c.l.b16 %v2295
    %v2815 = vunpack.c.l.b16 %v2296
    %v2816 = vunpack.c.l.b16 %v2297
    %v2817 = vunpack.c.l.b16 %v2298
    %v2818 = vunpack.c.l.b16 %v2299
    %v2819 = vunpack.c.l.b16 %v2300
    %v2820 = vunpack.c.l.b16 %v2301
    %v2821 = vunpack.c.l.b16 %v2302
    %v2822 = vunpack.c.l.b16 %v2303
    %v2823 = vunpack.c.l.b16 %v2304
    %v2824 = vunpack.c.l.b16 %v2305
    %v2825 = vunpack.c.l.b16 %v2306
    %v2826 = vunpack.c.l.b16 %v2307
    %v2827 = vunpack.c.l.b16 %v2308
    %v2828 = vunpack.c.l.b16 %v2309
    %v2829 = vunpack.c.l.b16 %v2310
    %v2830 = vunpack.c.l.b16 %v2311
    %v2831 = vunpack.c.l.b16 %v2312
    %v2832 = vunpack.c.l.b16 %v2313
    %v2833 = vunpack.c.l.b16 %v2314
    %v2834 = vunpack.c.l.b16 %v2315
    %v2835 = vunpack.c.l.b16 %v2316
    %v2836 = vunpack.c.l.b16 %v2317
    %v2837 = vunpack.c.l.b16 %v2318
    %v2838 = vunpack.c.l.b16 %v2319
    %v2839 = vunpack.c.l.b16 %v2320
    %v2840 = vunpack.c.l.b16 %v2321
    %v2841 = vunpack.c.l.b16 %v2322
    %v2842 = vunpack.c.l.b16 %v2323
    %v2843 = vunpack.c.l.b16 %v2324
    %v2844 = vunpack.c.l.b16 %v2325
    %v2845 = vunpack.c.l.b16 %v2326
    %v2846 = vunpack.c.l.b16 %v2327
    %v2847 = vunpack.c.l.b16 %v2328
    %v2848 = vunpack.c.l.b16 %v2329
    %v2849 = vunpack.c.l.b16 %v2330
    %v2850 = vunpack.c.l.b16 %v2331
    %v2851 = vunpack.c.l.b16 %v2332
    %v2852 = vunpack.c.l.b16 %v2333
    %v2853 = vunpack.c.l.b16 %v2334
    %v2854 = vunpack.c.l.b16 %v2335
    %v2855 = vunpack.c.l.b16 %v2336
    %v2856 = vunpack.c.l.b16 %v2337
    %v2857 = vunpack.c.l.b16 %v2338
    %v2858 = vunpack.c.l.b16 %v2339
    %v2859 = vunpack.c.l.b16 %v2340
    %v2860 = vunpack.c.l.b16 %v2341
    %v2861 = vunpack.c.l.b16 %v2342
    %v2862 = vunpack.c.l.b16 %v2343
    %v2863 = vunpack.c.l.b16 %v2344
    %v2864 = vunpack.c.l.b16 %v2345
    %v2865 = vunpack.c.l.b16 %v2346
    %v2866 = vunpack.c.l.b16 %v2347
    %v2867 = vunpack.c.l.b16 %v2348
    %v2868 = vunpack.c.l.b16 %v2349
    %v2869 = vunpack.c.l.b16 %v2350
    %v2870 = vunpack.c.l.b16 %v2351
    %v2871 = vunpack.c.l.b16 %v2352
    %v2872 = vunpack.c.l.b16 %v2353
    %v2873 = vunpack.c.l.b16 %v2354
    %v2874 = vunpack.c.l.b16 %v2355
    %v2875 = vunpack.c.l.b16 %v2356
    %v2876 = vunpack.c.l.b16 %v2357
    %v2877 = vunpack.c.l.b16 %v2358
    %v2878 = vunpack.c.l.b16 %v2359
    %v2879 = vunpack.c.l.b16 %v2360
    %v2880 = vunpack.c.l.b16 %v2361
    %v2881 = vunpack.c.l.b16 %v2362
    %v2882 = vunpack.c.l.b16 %v2363
    %v2883 = vunpack.c.l.b16 %v2364
    %v2884 = vunpack.c.l.b16 %v2365
    %v2885 = vunpack.c.l.b16 %v2366
    %v2886 = vunpack.c.l.b16 %v2367
    %v2887 = vunpack.c.l.b16 %v2368
    %v2888 = vunpack.c.l.b16 %v2369
    %v2889 = vunpack.c.l.b16 %v2370
    %v2890 = vunpack.c.l.b16 %v2371
    %v2891 = vunpack.c.l.b16 %v2372
    %v2892 = vunpack.c.l.b16 %v2373
    %v2893 = vunpack.c.l.b16 %v2374
    %v2894 = vunpack.c.l.b16 %v2375
    %v2895 = vunpack.c.l.b16 %v2376
    %v2896 = vunpack.c.l.b16 %v2377
    %v2897 = vunpack.c.l.b16 %v2378
    %v2898 = vunpack.c.l.b16 %v2379
    %v2899 = vunpack.c.l.b16 %v2380
    %v2900 = vunpack.c.l.b16 %v2381
    %v2901 = vunpack.c.l.b16 %v2382
    %v2902 = vunpack.c.l.b16 %v2383
    %v2903 = vunpack.c.l.b16 %v2384
    %v2904 = vunpack.c.l.b16 %v2385
    %v2905 = vunpack.c.l.b16 %v2386
    %v2906 = vunpack.c.l.b16 %v2387
    %v2907 = vunpack.c.l.b16 %v2388
    %v2908 = vunpack.c.l.b16 %v2389
    %v2909 = vunpack.c.l.b16 %v2390
    %v2910 = vunpack.c.l.b16 %v2391
    %v2911 = vunpack.c.l.b16 %v2392
    %v2912 = vunpack.c.l.b16 %v2393
    %v2913 = vunpack.c.l.b16 %v2394
    %v2914 = vunpack.c.l.b16 %v2395
    %v2915 = vunpack.c.l.b16 %v2396
    %v2916 = vunpack.c.l.b16 %v2397
    %v2917 = vunpack.c.l.b16 %v2398
    %v2918 = vunpack.c.l.b16 %v2399
    %v2919 = vunpack.c.l.b16 %v2400
    %v2920 = vunpack.c.l.b16 %v2401
    %v2921 = vunpack.c.l.b16 %v2402
    %v2922 = vunpack.c.l.b16 %v2403
    %v2923 = vunpack.c.l.b16 %v2404
    %v2924 = vunpack.c.l.b16 %v2405
    %v2925 = vunpack.c.l.b16 %v2406
    %v2926 = vunpack.c.l.b16 %v2407
    %v2927 = vunpack.c.l.b16 %v2408
    %v2928 = vunpack.c.l.b16 %v2409
    %v2929 = vunpack.c.l.b16 %v2410
    %v2930 = vunpack.c.l.b16 %v2411
    %v2931 = vunpack.c.l.b16 %v2412
    %v2932 = vunpack.c.l.b16 %v2413
    %v2933 = vunpack.c.l.b16 %v2414
    %v2934 = vunpack.c.l.b16 %v2415
    %v2935 = vunpack.c.l.b16 %v2416
    %v2936 = vunpack.c.l.b16 %v2417
    %v2937 = vunpack.c.l.b16 %v2418
    %v2938 = vunpack.c.l.b16 %v2419
    %v2939 = vunpack.c.l.b16 %v2420
    %v2940 = vunpack.c.l.b16 %v2421
    %v2941 = vunpack.c.l.b16 %v2422
    %v2942 = vunpack.c.l.b16 %v2423
    %v2943 = vunpack.c.l.b16 %v2424
    %v2944 = vunpack.c.l.b16 %v2425
    %v2945 = vunpack.c.l.b16 %v2426
    %v2946 = vunpack.c.l.b16 %v2427
    %v2947 = vunpack.c.l.b16 %v2428
    %v2948 = vunpack.c.l.b16 %v2429
    %v2949 = vunpack.c.l.b16 %v2430
    %v2950 = vunpack.c.l.b16 %v2431
    %v2951 = vunpack.c.l.b16 %v2432
    %v2952 = vunpack.c.l.b16 %v2433
    %v2953 = vunpack.c.l.b16 %v2434
    %v2954 = vunpack.c.l.b16 %v2435
    %v2955 = vunpack.c.l.b16 %v2436
    %v2956 = vunpack.c.l.b16 %v2437
    %v2957 = vunpack.c.l.b16 %v2438
    %v2958 = vunpack.c.l.b16 %v2439
    %v2959 = vunpack.c.l.b16 %v2440
    %v2960 = vunpack.c.l.b16 %v2441
    %v2961 = vunpack.c.l.b16 %v2442
    %v2962 = vunpack.c.l.b16 %v2443
    %v2963 = vunpack.c.l.b16 %v2444
    %v2964 = vunpack.c.l.b16 %v2445
    %v2965 = vunpack.c.l.b16 %v2446
    %v2966 = vunpack.c.l.b16 %v2447
    %v2967 = vunpack.c.l.b16 %v2448
    %v2968 = vunpack.c.l.b16 %v2449
    %v2969 = vunpack.c.l.b16 %v2450
    %v2970 = vunpack.c.l.b16 %v2451
    %v2971 = vunpack.c.l.b16 %v2452
    %v2972 = vunpack.c.l.b16 %v2453
    %v2973 = vunpack.c.l.b16 %v2454
    %v2974 = vunpack.c.l.b16 %v2455
    %v2975 = vunpack.c.l.b16 %v2456
    %v2976 = vunpack.c.l.b16 %v2457
    %v2977 = vunpack.c.l.b16 %v2458
    %v2978 = vunpack.c.l.b16 %v2459
    %v2979 = vunpack.c.l.b16 %v2460
    %v2980 = vunpack.c.l.b16 %v2461
    %v2981 = vunpack.c.l.b16 %v2462
    %v2982 = vunpack.c.l.b16 %v2463
    %v2983 = vunpack.c.l.b16 %v2464
    %v2984 = vunpack.c.l.b16 %v2465
    %v2985 = vunpack.c.l.b16 %v2466
    %v2986 = vunpack.c.l.b16 %v2467
    %v2987 = vunpack.c.l.b16 %v2468
    %v2988 = vunpack.c.l.b16 %v2469
    %v2989 = vunpack.c.l.b16 %v2470
    %v2990 = vunpack.c.l.b16 %v2471
    %v2991 = vunpack.c.l.b16 %v2472
    %v2992 = vunpack.c.l.b16 %v2473
    %v2993 = vunpack.c.l.b16 %v2474
    %v2994 = vunpack.c.l.b16 %v2475
    %v2995 = vunpack.c.l.b16 %v2476
    %v2996 = vunpack.c.l.b16 %v2477
    %v2997 = vunpack.c.l.b16 %v2478
    %v2998 = vunpack.c.l.b16 %v2479
    %v2999 = vunpack.c.l.b16 %v2480
    %v3000 = vunpack.c.l.b16 %v2481
    %v3001 = vunpack.c.l.b16 %v2482
    %v3002 = vunpack.c.l.b16 %v2483
    %v3003 = vunpack.c.l.b16 %v2484
    %v3004 = vunpack.c.l.b16 %v2485
    %v3005 = vunpack.c.l.b16 %v2486
    %v3006 = vunpack.c.l.b16 %v2487
    %v3007 = vunpack.c.l.b16 %v2488
    %v3008 = vunpack.c.l.b16 %v2489
    %v3009 = vunpack.c.l.b16 %v2490
    %v3010 = vunpack.c.l.b16 %v2491
    %v3011 = vunpack.c.l.b16 %v2492
    %v3012 = vunpack.c.l.b16 %v2493
    %v3013 = vunpack.c.l.b16 %v2494
    %v3014 = vunpack.c.l.b16 %v2495
    %v3015 = vunpack.c.l.b16 %v2496
    %v3016 = vunpack.c.l.b16 %v2497
    %v3017 = vunpack.c.l.b16 %v2498
    %v3018 = vunpack.c.l.b16 %v2499
    %v3019 = vunpack.c.l.b16 %v2500
    %v3020 = vunpack.c.l.b16 %v2501
    %v3021 = vunpack.c.l.b16 %v2502
    %v3022 = vpack.c.b16 %v2767, %v2766
    %v3023 = vpack.c.b16 %v2769, %v2768
    %v3024 = vpack.c.b16 %v2771, %v2770
    %v3025 = vpack.c.b16 %v2773, %v2772
    %v3026 = vpack.c.b16 %v2775, %v2774
    %v3027 = vpack.c.b16 %v2777, %v2776
    %v3028 = vpack.c.b16 %v2779, %v2778
    %v3029 = vpack.c.b16 %v2781, %v2780
    %v3030 = vpack.c.b16 %v2783, %v2782
    %v3031 = vpack.c.b16 %v2785, %v2784
    %v3032 = vpack.c.b16 %v2787, %v2786
    %v3033 = vpack.c.b16 %v2789, %v2788
    %v3034 = vpack.c.b16 %v2791, %v2790
    %v3035 = vpack.c.b16 %v2793, %v2792
    %v3036 = vpack.c.b16 %v2795, %v2794
    %v3037 = vpack.c.b16 %v2797, %v2796
    %v3038 = vpack.c.b16 %v2799, %v2798
    %v3039 = vpack.c.b16 %v2801, %v2800
    %v3040 = vpack.c.b16 %v2803, %v2802
    %v3041 = vpack.c.b16 %v2805, %v2804
    %v3042 = vpack.c.b16 %v2807, %v2806
    %v3043 = vpack.c.b16 %v2809, %v2808
    %v3044 = vpack.c.b16 %v2811, %v2810
    %v3045 = vpack.c.b16 %v2813, %v2812
    %v3046 = vpack.c.b16 %v2815, %v2814
    %v3047 = vpack.c.b16 %v2817, %v2816
    %v3048 = vpack.c.b16 %v2819, %v2818
    %v3049 = vpack.c.b16 %v2821, %v2820
    %v3050 = vpack.c.b16 %v2823, %v2822
    %v3051 = vpack.c.b16 %v2825, %v2824
    %v3052 = vpack.c.b16 %v2827, %v2826
    %v3053 = vpack.c.b16 %v2829, %v2828
    %v3054 = vpack.c.b16 %v2831, %v2830
    %v3055 = vpack.c.b16 %v2833, %v2832
    %v3056 = vpack.c.b16 %v2835, %v2834
    %v3057 = vpack.c.b16 %v2837, %v2836
    %v3058 = vpack.c.b16 %v2839, %v2838
    %v3059 = vpack.c.b16 %v2841, %v2840
    %v3060 = vpack.c.b16 %v2843, %v2842
    %v3061 = vpack.c.b16 %v2845, %v2844
    %v3062 = vpack.c.b16 %v2847, %v2846
    %v3063 = vpack.c.b16 %v2849, %v2848
    %v3064 = vpack.c.b16 %v2851, %v2850
    %v3065 = vpack.c.b16 %v2853, %v2852
    %v3066 = vpack.c.b16 %v2855, %v2854
    %v3067 = vpack.c.b16 %v2857, %v2856
    %v3068 = vpack.c.b16 %v2859, %v2858
    %v3069 = vpack.c.b16 %v2861, %v2860
    %v3070 = vpack.c.b16 %v2863, %v2862
    %v3071 = vpack.c.b16 %v2865, %v2864
    %v3072 = vpack.c.b16 %v2867, %v2866
    %v3073 = vpack.c.b16 %v2869, %v2868
    %v3074 = vpack.c.b16 %v2871, %v2870
    %v3075 = vpack.c.b16 %v2873, %v2872
    %v3076 = vpack.c.b16 %v2875, %v2874
    %v3077 = vpack.c.b16 %v2877, %v2876
    %v3078 = vpack.c.b16 %v2879, %v2878
    %v3079 = vpack.c.b16 %v2881, %v2880
    %v3080 = vpack.c.b16 %v2883, %v2882
    %v3081 = vpack.c.b16 %v2885, %v2884
    %v3082 = vpack.c.b16 %v2887, %v2886
    %v3083 = vpack.c.b16 %v2889, %v2888
    %v3084 = vpack.c.b16 %v2891, %v2890
    %v3085 = vpack.c.b16 %v2893, %v2892
    %v3086 = vpack.c.b16 %v2895, %v2894
    %v3087 = vpack.c.b16 %v2897, %v2896
    %v3088 = vpack.c.b16 %v2899, %v2898
    %v3089 = vpack.c.b16 %v2901, %v2900
    %v3090 = vpack.c.b16 %v2903, %v2902
    %v3091 = vpack.c.b16 %v2905, %v2904
    %v3092 = vpack.c.b16 %v2907, %v2906
    %v3093 = vpack.c.b16 %v2909, %v2908
    %v3094 = vpack.c.b16 %v2911, %v2910
    %v3095 = vpack.c.b16 %v2913, %v2912
    %v3096 = vpack.c.b16 %v2915, %v2914
    %v3097 = vpack.c.b16 %v2917, %v2916
    %v3098 = vpack.c.b16 %v2919, %v2918
    %v3099 = vpack.c.b16 %v2921, %v2920
    %v3100 = vpack.c.b16 %v2923, %v2922
    %v3101 = vpack.c.b16 %v2925, %v2924
    %v3102 = vpack.c.b16 %v2927, %v2926
    %v3103 = vpack.c.b16 %v2929, %v2928
    %v3104 = vpack.c.b16 %v2931, %v2930
    %v3105 = vpack.c.b16 %v2933, %v2932
    %v3106 = vpack.c.b16 %v2935, %v2934
    %v3107 = vpack.c.b16 %v2937, %v2936
    %v3108 = vpack.c.b16 %v2939, %v2938
    %v3109 = vpack.c.b16 %v2941, %v2940
    %v3110 = vpack.c.b16 %v2943, %v2942
    %v3111 = vpack.c.b16 %v2945, %v2944
    %v3112 = vpack.c.b16 %v2947, %v2946
    %v3113 = vpack.c.b16 %v2949, %v2948
    %v3114 = vpack.c.b16 %v2951, %v2950
    %v3115 = vpack.c.b16 %v2953, %v2952
    %v3116 = vpack.c.b16 %v2955, %v2954
    %v3117 = vpack.c.b16 %v2957, %v2956
    %v3118 = vpack.c.b16 %v2959, %v2958
    %v3119 = vpack.c.b16 %v2961, %v2960
    %v3120 = vpack.c.b16 %v2963, %v2962
    %v3121 = vpack.c.b16 %v2965, %v2964
    %v3122 = vpack.c.b16 %v2967, %v2966
    %v3123 = vpack.c.b16 %v2969, %v2968
    %v3124 = vpack.c.b16 %v2971, %v2970
    %v3125 = vpack.c.b16 %v2973, %v2972
    %v3126 = vpack.c.b16 %v2975, %v2974
    %v3127 = vpack.c.b16 %v2977, %v2976
    %v3128 = vpack.c.b16 %v2979, %v2978
    %v3129 = vpack.c.b16 %v2981, %v2980
    %v3130 = vpack.c.b16 %v2983, %v2982
    %v3131 = vpack.c.b16 %v2985, %v2984
    %v3132 = vpack.c.b16 %v2987, %v2986
    %v3133 = vpack.c.b16 %v2989, %v2988
    %v3134 = vpack.c.b16 %v2991, %v2990
    %v3135 = vpack.c.b16 %v2993, %v2992
    %v3136 = vpack.c.b16 %v2995, %v2994
    %v3137 = vpack.c.b16 %v2997, %v2996
    %v3138 = vpack.c.b16 %v2999, %v2998
    %v3139 = vpack.c.b16 %v3001, %v3000
    %v3140 = vpack.c.b16 %v3003, %v3002
    %v3141 = vpack.c.b16 %v3005, %v3004
    %v3142 = vpack.c.b16 %v3007, %v3006
    %v3143 = vpack.c.b16 %v3009, %v3008
    %v3144 = vpack.c.b16 %v3011, %v3010
    %v3145 = vpack.c.b16 %v3013, %v3012
    %v3146 = vpack.c.b16 %v3015, %v3014
    %v3147 = vpack.c.b16 %v3017, %v3016
    %v3148 = vpack.c.b16 %v3019, %v3018
    %v3149 = vpack.c.b16 %v3021, %v3020
    %3278 = vmatprep.subr.bf16.mxu0 0
    %3279 = vmatpush1.bf16.msra.mxu0 %v3022
    %3280 = vmatprep.subr.bf16.mxu0 0
    %3281 = vmatpush1.bf16.msra.mxu0 %v3023
    %3282 = vmatprep.subr.bf16.mxu0 0
    %3283 = vmatpush1.bf16.msra.mxu0 %v3024
    %3284 = vmatprep.subr.bf16.mxu0 0
    %3285 = vmatpush1.bf16.msra.mxu0 %v3025
    %3286 = vmatprep.subr.bf16.mxu0 0
    %3287 = vmatpush1.bf16.msra.mxu0 %v3026
    %3288 = vmatprep.subr.bf16.mxu0 0
    %3289 = vmatpush1.bf16.msra.mxu0 %v3027
    %3290 = vmatprep.subr.bf16.mxu0 0
    %3291 = vmatpush1.bf16.msra.mxu0 %v3028
    %3292 = vmatprep.subr.bf16.mxu0 0
    %3293 = vmatpush1.bf16.msra.mxu0 %v3029
    %3294 = vmatprep.subr.bf16.mxu0 0
    %3295 = vmatpush1.bf16.msra.mxu0 %v3030
    %3296 = vmatprep.subr.bf16.mxu0 0
    %3297 = vmatpush1.bf16.msra.mxu0 %v3031
    %3298 = vmatprep.subr.bf16.mxu0 0
    %3299 = vmatpush1.bf16.msra.mxu0 %v3032
    %3300 = vmatprep.subr.bf16.mxu0 0
    %3301 = vmatpush1.bf16.msra.mxu0 %v3033
    %3302 = vmatprep.subr.bf16.mxu0 0
    %3303 = vmatpush1.bf16.msra.mxu0 %v3034
    %3304 = vmatprep.subr.bf16.mxu0 0
    %3305 = vmatpush1.bf16.msra.mxu0 %v3035
    %3306 = vmatprep.subr.bf16.mxu0 0
    %3307 = vmatpush1.bf16.msra.mxu0 %v3036
    %3308 = vmatprep.subr.bf16.mxu0 0
    %3309 = vmatpush1.bf16.msra.mxu0 %v3037
    %3310 = vmatprep.mubr.bf16.mxu0 %v2232
    %3311 = vmatmul.mubr.bf16.gmra.mrb[0].mxu0 %v2231
    %v3312 = vpop.f32.mrb[0].mxu0
    %v3313 = vadd.f32 %v2508, %v3312
    %v3314 = vpop.f32.mrb[0].mxu0
    %v3315 = vpop.f32.mrb[0].mxu0
    %v3316 = vpop.f32.mrb[0].mxu0
    %3317 = vdwg.mxu0
    %3318 = vmatprep.subr.bf16.mxu0 0
    %3319 = vmatpush1.bf16.msra.mxu0 %v3038
    %3320 = vmatprep.subr.bf16.mxu0 0
    %3321 = vmatpush1.bf16.msra.mxu0 %v3039
    %3322 = vmatprep.subr.bf16.mxu0 0
    %3323 = vmatpush1.bf16.msra.mxu0 %v3040
    %3324 = vmatprep.subr.bf16.mxu0 0
    %3325 = vmatpush1.bf16.msra.mxu0 %v3041
    %3326 = vmatprep.subr.bf16.mxu0 0
    %3327 = vmatpush1.bf16.msra.mxu0 %v3042
    %3328 = vmatprep.subr.bf16.mxu0 0
    %3329 = vmatpush1.bf16.msra.mxu0 %v3043
    %3330 = vmatprep.subr.bf16.mxu0 0
    %3331 = vmatpush1.bf16.msra.mxu0 %v3044
    %3332 = vmatprep.subr.bf16.mxu0 0
    %3333 = vmatpush1.bf16.msra.mxu0 %v3045
    %3334 = vmatprep.subr.bf16.mxu0 0
    %3335 = vmatpush1.bf16.msra.mxu0 %v3046
    %3336 = vmatprep.subr.bf16.mxu0 0
    %3337 = vmatpush1.bf16.msra.mxu0 %v3047
    %3338 = vmatprep.subr.bf16.mxu0 0
    %3339 = vmatpush1.bf16.msra.mxu0 %v3048
    %3340 = vmatprep.subr.bf16.mxu0 0
    %3341 = vmatpush1.bf16.msra.mxu0 %v3049
    %3342 = vmatprep.subr.bf16.mxu0 0
    %3343 = vmatpush1.bf16.msra.mxu0 %v3050
    %3344 = vmatprep.subr.bf16.mxu0 0
    %3345 = vmatpush1.bf16.msra.mxu0 %v3051
    %3346 = vmatprep.subr.bf16.mxu0 0
    %3347 = vmatpush1.bf16.msra.mxu0 %v3052
    %3348 = vmatprep.subr.bf16.mxu0 0
    %3349 = vmatpush1.bf16.msra.mxu0 %v3053
    %3350 = vmatprep.mubr.bf16.mxu0 %v2234
    %3351 = vmatmul.mubr.bf16.gmra.mrb[0].mxu0 %v2233
    %v3352 = vpop.f32.mrb[0].mxu0
    %v3353 = vadd.f32 %v3313, %v3352
    %v3354 = vpop.f32.mrb[0].mxu0
    %v3355 = vpop.f32.mrb[0].mxu0
    %v3356 = vpop.f32.mrb[0].mxu0
    %3357 = vdwg.mxu0
    %3358 = vmatprep.subr.bf16.mxu0 0
    %3359 = vmatpush1.bf16.msra.mxu0 %v3054
    %3360 = vmatprep.subr.bf16.mxu0 0
    %3361 = vmatpush1.bf16.msra.mxu0 %v3055
    %3362 = vmatprep.subr.bf16.mxu0 0
    %3363 = vmatpush1.bf16.msra.mxu0 %v3056
    %3364 = vmatprep.subr.bf16.mxu0 0
    %3365 = vmatpush1.bf16.msra.mxu0 %v3057
    %3366 = vmatprep.subr.bf16.mxu0 0
    %3367 = vmatpush1.bf16.msra.mxu0 %v3058
    %3368 = vmatprep.subr.bf16.mxu0 0
    %3369 = vmatpush1.bf16.msra.mxu0 %v3059
    %3370 = vmatprep.subr.bf16.mxu0 0
    %3371 = vmatpush1.bf16.msra.mxu0 %v3060
    %3372 = vmatprep.subr.bf16.mxu0 0
    %3373 = vmatpush1.bf16.msra.mxu0 %v3061
    %3374 = vmatprep.subr.bf16.mxu0 0
    %3375 = vmatpush1.bf16.msra.mxu0 %v3062
    %3376 = vmatprep.subr.bf16.mxu0 0
    %3377 = vmatpush1.bf16.msra.mxu0 %v3063
    %3378 = vmatprep.subr.bf16.mxu0 0
    %3379 = vmatpush1.bf16.msra.mxu0 %v3064
    %3380 = vmatprep.subr.bf16.mxu0 0
    %3381 = vmatpush1.bf16.msra.mxu0 %v3065
    %3382 = vmatprep.subr.bf16.mxu0 0
    %3383 = vmatpush1.bf16.msra.mxu0 %v3066
    %3384 = vmatprep.subr.bf16.mxu0 0
    %3385 = vmatpush1.bf16.msra.mxu0 %v3067
    %3386 = vmatprep.subr.bf16.mxu0 0
    %3387 = vmatpush1.bf16.msra.mxu0 %v3068
    %3388 = vmatprep.subr.bf16.mxu0 0
    %3389 = vmatpush1.bf16.msra.mxu0 %v3069
    %3390 = vmatprep.mubr.bf16.mxu0 %v2236
    %3391 = vmatmul.mubr.bf16.gmra.mrb[0].mxu0 %v2235
    %v3392 = vpop.f32.mrb[0].mxu0
    %v3393 = vadd.f32 %v3353, %v3392
    %v3394 = vpop.f32.mrb[0].mxu0
    %v3395 = vpop.f32.mrb[0].mxu0
    %v3396 = vpop.f32.mrb[0].mxu0
    %3397 = vdwg.mxu0
    %3398 = vmatprep.subr.bf16.mxu0 0
    %3399 = vmatpush1.bf16.msra.mxu0 %v3070
    %3400 = vmatprep.subr.bf16.mxu0 0
    %3401 = vmatpush1.bf16.msra.mxu0 %v3071
    %3402 = vmatprep.subr.bf16.mxu0 0
    %3403 = vmatpush1.bf16.msra.mxu0 %v3072
    %3404 = vmatprep.subr.bf16.mxu0 0
    %3405 = vmatpush1.bf16.msra.mxu0 %v3073
    %3406 = vmatprep.subr.bf16.mxu0 0
    %3407 = vmatpush1.bf16.msra.mxu0 %v3074
    %3408 = vmatprep.subr.bf16.mxu0 0
    %3409 = vmatpush1.bf16.msra.mxu0 %v3075
    %3410 = vmatprep.subr.bf16.mxu0 0
    %3411 = vmatpush1.bf16.msra.mxu0 %v3076
    %3412 = vmatprep.subr.bf16.mxu0 0
    %3413 = vmatpush1.bf16.msra.mxu0 %v3077
    %3414 = vmatprep.subr.bf16.mxu0 0
    %3415 = vmatpush1.bf16.msra.mxu0 %v3078
    %3416 = vmatprep.subr.bf16.mxu0 0
    %3417 = vmatpush1.bf16.msra.mxu0 %v3079
    %3418 = vmatprep.subr.bf16.mxu0 0
    %3419 = vmatpush1.bf16.msra.mxu0 %v3080
    %3420 = vmatprep.subr.bf16.mxu0 0
    %3421 = vmatpush1.bf16.msra.mxu0 %v3081
    %3422 = vmatprep.subr.bf16.mxu0 0
    %3423 = vmatpush1.bf16.msra.mxu0 %v3082
    %3424 = vmatprep.subr.bf16.mxu0 0
    %3425 = vmatpush1.bf16.msra.mxu0 %v3083
    %3426 = vmatprep.subr.bf16.mxu0 0
    %3427 = vmatpush1.bf16.msra.mxu0 %v3084
    %3428 = vmatprep.subr.bf16.mxu0 0
    %3429 = vmatpush1.bf16.msra.mxu0 %v3085
    %3430 = vmatprep.mubr.bf16.mxu0 %v2238
    %3431 = vmatmul.mubr.bf16.gmra.mrb[0].mxu0 %v2237
    %v3432 = vpop.f32.mrb[0].mxu0
    %v3433 = vadd.f32 %v3393, %v3432
    %v3434 = vpop.f32.mrb[0].mxu0
    %v3435 = vpop.f32.mrb[0].mxu0
    %v3436 = vpop.f32.mrb[0].mxu0
    %3437 = vdwg.mxu0
    %3438 = vmatprep.subr.bf16.mxu0 0
    %3439 = vmatpush1.bf16.msra.mxu0 %v3086
    %3440 = vmatprep.subr.bf16.mxu0 0
    %3441 = vmatpush1.bf16.msra.mxu0 %v3087
    %3442 = vmatprep.subr.bf16.mxu0 0
    %3443 = vmatpush1.bf16.msra.mxu0 %v3088
    %3444 = vmatprep.subr.bf16.mxu0 0
    %3445 = vmatpush1.bf16.msra.mxu0 %v3089
    %3446 = vmatprep.subr.bf16.mxu0 0
    %3447 = vmatpush1.bf16.msra.mxu0 %v3090
    %3448 = vmatprep.subr.bf16.mxu0 0
    %3449 = vmatpush1.bf16.msra.mxu0 %v3091
    %3450 = vmatprep.subr.bf16.mxu0 0
    %3451 = vmatpush1.bf16.msra.mxu0 %v3092
    %3452 = vmatprep.subr.bf16.mxu0 0
    %3453 = vmatpush1.bf16.msra.mxu0 %v3093
    %3454 = vmatprep.subr.bf16.mxu0 0
    %3455 = vmatpush1.bf16.msra.mxu0 %v3094
    %3456 = vmatprep.subr.bf16.mxu0 0
    %3457 = vmatpush1.bf16.msra.mxu0 %v3095
    %3458 = vmatprep.subr.bf16.mxu0 0
    %3459 = vmatpush1.bf16.msra.mxu0 %v3096
    %3460 = vmatprep.subr.bf16.mxu0 0
    %3461 = vmatpush1.bf16.msra.mxu0 %v3097
    %3462 = vmatprep.subr.bf16.mxu0 0
    %3463 = vmatpush1.bf16.msra.mxu0 %v3098
    %3464 = vmatprep.subr.bf16.mxu0 0
    %3465 = vmatpush1.bf16.msra.mxu0 %v3099
    %3466 = vmatprep.subr.bf16.mxu0 0
    %3467 = vmatpush1.bf16.msra.mxu0 %v3100
    %3468 = vmatprep.subr.bf16.mxu0 0
    %3469 = vmatpush1.bf16.msra.mxu0 %v3101
    %3470 = vmatprep.mubr.bf16.mxu0 %v2240
    %3471 = vmatmul.mubr.bf16.gmra.mrb[0].mxu0 %v2239
    %v3472 = vpop.f32.mrb[0].mxu0
    %v3473 = vadd.f32 %v3433, %v3472
    %v3474 = vpop.f32.mrb[0].mxu0
    %v3475 = vpop.f32.mrb[0].mxu0
    %v3476 = vpop.f32.mrb[0].mxu0
    %3477 = vdwg.mxu0
    %3478 = vmatprep.subr.bf16.mxu0 0
    %3479 = vmatpush1.bf16.msra.mxu0 %v3102
    %3480 = vmatprep.subr.bf16.mxu0 0
    %3481 = vmatpush1.bf16.msra.mxu0 %v3103
    %3482 = vmatprep.subr.bf16.mxu0 0
    %3483 = vmatpush1.bf16.msra.mxu0 %v3104
    %3484 = vmatprep.subr.bf16.mxu0 0
    %3485 = vmatpush1.bf16.msra.mxu0 %v3105
    %3486 = vmatprep.subr.bf16.mxu0 0
    %3487 = vmatpush1.bf16.msra.mxu0 %v3106
    %3488 = vmatprep.subr.bf16.mxu0 0
    %3489 = vmatpush1.bf16.msra.mxu0 %v3107
    %3490 = vmatprep.subr.bf16.mxu0 0
    %3491 = vmatpush1.bf16.msra.mxu0 %v3108
    %3492 = vmatprep.subr.bf16.mxu0 0
    %3493 = vmatpush1.bf16.msra.mxu0 %v3109
    %3494 = vmatprep.subr.bf16.mxu0 0
    %3495 = vmatpush1.bf16.msra.mxu0 %v3110
    %3496 = vmatprep.subr.bf16.mxu0 0
    %3497 = vmatpush1.bf16.msra.mxu0 %v3111
    %3498 = vmatprep.subr.bf16.mxu0 0
    %3499 = vmatpush1.bf16.msra.mxu0 %v3112
    %3500 = vmatprep.subr.bf16.mxu0 0
    %3501 = vmatpush1.bf16.msra.mxu0 %v3113
    %3502 = vmatprep.subr.bf16.mxu0 0
    %3503 = vmatpush1.bf16.msra.mxu0 %v3114
    %3504 = vmatprep.subr.bf16.mxu0 0
    %3505 = vmatpush1.bf16.msra.mxu0 %v3115
    %3506 = vmatprep.subr.bf16.mxu0 0
    %3507 = vmatpush1.bf16.msra.mxu0 %v3116
    %3508 = vmatprep.subr.bf16.mxu0 0
    %3509 = vmatpush1.bf16.msra.mxu0 %v3117
    %3510 = vmatprep.mubr.bf16.mxu0 %v2242
    %3511 = vmatmul.mubr.bf16.gmra.mrb[0].mxu0 %v2241
    %v3512 = vpop.f32.mrb[0].mxu0
    %v3513 = vadd.f32 %v3473, %v3512
    %v3514 = vpop.f32.mrb[0].mxu0
    %v3515 = vpop.f32.mrb[0].mxu0
    %v3516 = vpop.f32.mrb[0].mxu0
    %3517 = vdwg.mxu0
    %3518 = vmatprep.subr.bf16.mxu0 0
    %3519 = vmatpush1.bf16.msra.mxu0 %v3118
    %3520 = vmatprep.subr.bf16.mxu0 0
    %3521 = vmatpush1.bf16.msra.mxu0 %v3119
    %3522 = vmatprep.subr.bf16.mxu0 0
    %3523 = vmatpush1.bf16.msra.mxu0 %v3120
    %3524 = vmatprep.subr.bf16.mxu0 0
    %3525 = vmatpush1.bf16.msra.mxu0 %v3121
    %3526 = vmatprep.subr.bf16.mxu0 0
    %3527 = vmatpush1.bf16.msra.mxu0 %v3122
    %3528 = vmatprep.subr.bf16.mxu0 0
    %3529 = vmatpush1.bf16.msra.mxu0 %v3123
    %3530 = vmatprep.subr.bf16.mxu0 0
    %3531 = vmatpush1.bf16.msra.mxu0 %v3124
    %3532 = vmatprep.subr.bf16.mxu0 0
    %3533 = vmatpush1.bf16.msra.mxu0 %v3125
    %3534 = vmatprep.subr.bf16.mxu0 0
    %3535 = vmatpush1.bf16.msra.mxu0 %v3126
    %3536 = vmatprep.subr.bf16.mxu0 0
    %3537 = vmatpush1.bf16.msra.mxu0 %v3127
    %3538 = vmatprep.subr.bf16.mxu0 0
    %3539 = vmatpush1.bf16.msra.mxu0 %v3128
    %3540 = vmatprep.subr.bf16.mxu0 0
    %3541 = vmatpush1.bf16.msra.mxu0 %v3129
    %3542 = vmatprep.subr.bf16.mxu0 0
    %3543 = vmatpush1.bf16.msra.mxu0 %v3130
    %3544 = vmatprep.subr.bf16.mxu0 0
    %3545 = vmatpush1.bf16.msra.mxu0 %v3131
    %3546 = vmatprep.subr.bf16.mxu0 0
    %3547 = vmatpush1.bf16.msra.mxu0 %v3132
    %3548 = vmatprep.subr.bf16.mxu0 0
    %3549 = vmatpush1.bf16.msra.mxu0 %v3133
    %3550 = vmatprep.mubr.bf16.mxu0 %v2244
    %3551 = vmatmul.mubr.bf16.gmra.mrb[0].mxu0 %v2243
    %v3552 = vpop.f32.mrb[0].mxu0
    %v3553 = vadd.f32 %v3513, %v3552
    %v3554 = vpop.f32.mrb[0].mxu0
    %v3555 = vpop.f32.mrb[0].mxu0
    %v3556 = vpop.f32.mrb[0].mxu0
    %3557 = vdwg.mxu0
    %3558 = vmatprep.subr.bf16.mxu0 0
    %3559 = vmatpush1.bf16.msra.mxu0 %v3134
    %3560 = vmatprep.subr.bf16.mxu0 0
    %3561 = vmatpush1.bf16.msra.mxu0 %v3135
    %3562 = vmatprep.subr.bf16.mxu0 0
    %3563 = vmatpush1.bf16.msra.mxu0 %v3136
    %3564 = vmatprep.subr.bf16.mxu0 0
    %3565 = vmatpush1.bf16.msra.mxu0 %v3137
    %3566 = vmatprep.subr.bf16.mxu0 0
    %3567 = vmatpush1.bf16.msra.mxu0 %v3138
    %3568 = vmatprep.subr.bf16.mxu0 0
    %3569 = vmatpush1.bf16.msra.mxu0 %v3139
    %3570 = vmatprep.subr.bf16.mxu0 0
    %3571 = vmatpush1.bf16.msra.mxu0 %v3140
    %3572 = vmatprep.subr.bf16.mxu0 0
    %3573 = vmatpush1.bf16.msra.mxu0 %v3141
    %3574 = vmatprep.subr.bf16.mxu0 0
    %3575 = vmatpush1.bf16.msra.mxu0 %v3142
    %3576 = vmatprep.subr.bf16.mxu0 0
    %3577 = vmatpush1.bf16.msra.mxu0 %v3143
    %3578 = vmatprep.subr.bf16.mxu0 0
    %3579 = vmatpush1.bf16.msra.mxu0 %v3144
    %3580 = vmatprep.subr.bf16.mxu0 0
    %3581 = vmatpush1.bf16.msra.mxu0 %v3145
    %3582 = vmatprep.subr.bf16.mxu0 0
    %3583 = vmatpush1.bf16.msra.mxu0 %v3146
    %3584 = vmatprep.subr.bf16.mxu0 0
    %3585 = vmatpush1.bf16.msra.mxu0 %v3147
    %3586 = vmatprep.subr.bf16.mxu0 0
    %3587 = vmatpush1.bf16.msra.mxu0 %v3148
    %3588 = vmatprep.subr.bf16.mxu0 0
    %3589 = vmatpush1.bf16.msra.mxu0 %v3149
    %3590 = vmatprep.mubr.bf16.mxu0 %v2246
    %3591 = vmatmul.mubr.bf16.gmra.mrb[0].mxu0 %v2245
    %v3592 = vpop.f32.mrb[0].mxu0
    %v3593 = vadd.f32 %v3553, %v3592
    %v3594 = vpop.f32.mrb[0].mxu0
    %v3595 = vpop.f32.mrb[0].mxu0
    %v3596 = vpop.f32.mrb[0].mxu0
    %3597 = vdwg.mxu0
    %v3598 = vadd.f32 %v1033, %v3593
    %v3599 = vld [vmem:[%s15] sm:$0x1]
    %v3600 = vld [vmem:[%s16] sm:$0x1]
    %v3601 = vsel %vm1005, %v3598, 0.0
    %3602 = vadd.xlane.f32.xlu0 %v3601
    %v3603 = vpop.xlane.xlu0 %3602
    %v3604 = vmul.f32 %v3603, %v1009
    %v3605 = vsub.f32 %v3598, %v3604
    %v3606 = vmul.f32 %v3605, %v3605
    %v3607 = vsel %vm1005, %v3606, 0.0
    %3608 = vadd.xlane.f32.xlu0 %v3607
    %v3609 = vpop.xlane.xlu0 %3608
    %v3610 = vmul.f32 %v3609, %v1009
    %v3611 = vadd.f32 %v3610, 1e-05
    %v3612 = vrsqrt.pop %v3611
    %v3613 = vmul.f32 %v3605, %v3612
    %v3615 = vlaneseq
    %v3616 = vshrl.u32 %v3615, 7
    %v3617 = vsub.s32 0, %v3616
    %v3618 = vrot.slane %v3599, %v3617
    %v3620 = vmul.f32 %v3613, %v3618
    %v3622 = vlaneseq
    %v3623 = vshrl.u32 %v3622, 7
    %v3624 = vsub.s32 0, %v3623
    %v3625 = vrot.slane %v3600, %v3624
    %v3627 = vadd.f32 %v3620, %v3625
    %v3629 = vrot.slane %v3627, 2
    %v3631 = vadd.f32 %v3627, %v3629
    %v3632 = vmul.f32 %v3631, 0.5
    %3633 = vst [vmem:[#allocation2] sm:$0x3] %v3632
    // Predicated region
    $region70: #{video_forward.3} parent=1 // pred_check
      _
    $region71: #{video_forward.3} parent=1 // pred_check_branch
      %3635 = sbr.rel (0) target = $region73
    $region72: #{video_forward.3} parent=1 // pred_region
      %s3637 = ssub.s32 32, 32
      %3638 = vsyncadd [#allocation3], %s3637
      %s3640 = sshll.u32 [#allocation2], 4
      %s3641 = int_to_ptr.vmem [resolvable:$true] %s3640
      %3643 = dma.vmem_to_hbm [thread:$0]  %s3641, 32, %s17, [#allocation3]
    $region73: #{video_forward.3} parent=1 // pred_fallthru
      _
    // Predicated region
    $region74: #{video_forward.3} parent=1 // pred_check
      _
    $region75: #{video_forward.3} parent=1 // pred_check_branch
      %3645 = sbr.rel (0) target = $region77
    $region76: #{video_forward.3} parent=1 // pred_region
      %3646 = dma.done [#allocation3], 32
    $region77: #{video_forward.3} parent=1 // pred_fallthru
      _
    %3647 = vsyncpa [#allocation3], 1

// kernel: video_forward.2
$region0: #{video_forward.2}
  #allocation0 [shape = 'u32[]', space=smem, size = 0x4, offset = 0x4, fixed_abs, tag = 'smem constant byte address 0x4 - core index']
  #allocation1 [shape = 'u32[144,128]{1,0:T(1,128)}', space=vmem, size = 0x12000, scoped, tag = 'internal scratch']
  %s0 = inlined_call_operand.vmem [shape: f32[2,2,16,512], index: 0, kind: input, shape index: {}, may-alias: {0,1}]
  %s1 = inlined_call_operand.vmem [shape: f32[2,2,16,512], index: 1, kind: input, shape index: {}, may-alias: {0,1}]
  %s2 = inlined_call_operand.vmem [shape: bf16[2,512,128], index: 2, kind: input, shape index: {}, may-alias: {2,6}]
  %s3 = inlined_call_operand.hbm [shape: f32[2,1,128], index: 3, kind: input, shape index: {}, may-alias: {3,7}]
  %s4 = inlined_call_operand.vmem [shape: bf16[2,128,128], index: 4, kind: input, shape index: {}, may-alias: {4,8}]
  %s5 = inlined_call_operand.hbm [shape: f32[2,1,128], index: 5, kind: input, shape index: {}, may-alias: {5,9}]
  %s6 = inlined_call_operand.vmem [shape: bf16[2,512,128], index: 6, kind: input, shape index: {}, may-alias: {2,6}]
  %s7 = inlined_call_operand.hbm [shape: f32[2,1,128], index: 7, kind: input, shape index: {}, may-alias: {3,7}]
  %s8 = inlined_call_operand.vmem [shape: bf16[2,128,128], index: 8, kind: input, shape index: {}, may-alias: {4,8}]
  %s9 = inlined_call_operand.hbm [shape: f32[2,1,128], index: 9, kind: input, shape index: {}, may-alias: {5,9}]
  %s10 = inlined_call_operand.hbm [shape: bf16[2,128,512], index: 10, kind: input, shape index: {}]
  %s11 = inlined_call_operand.hbm [shape: f32[2,1,512], index: 11, kind: input, shape index: {}]
  %s12 = inlined_call_operand.hbm [shape: bf16[2,128,512], index: 12, kind: input, shape index: {}]
  %s13 = inlined_call_operand.hbm [shape: f32[2,1,512], index: 13, kind: input, shape index: {}]
  %s14 = inlined_call_operand.hbm [shape: bf16[2,128,512], index: 14, kind: input, shape index: {}]
  %s15 = inlined_call_operand.hbm [shape: f32[2,1,512], index: 15, kind: input, shape index: {}]
  %s16 = inlined_call_operand.hbm [shape: bf16[2,512,128], index: 16, kind: input, shape index: {}]
  %s17 = inlined_call_operand.hbm [shape: f32[2,1,128], index: 17, kind: input, shape index: {}]
  %s18 = inlined_call_operand.hbm [shape: f32[2,1,128], index: 18, kind: input, shape index: {}]
  %s19 = inlined_call_operand.hbm [shape: f32[2,1,128], index: 19, kind: input, shape index: {}]
  %s20 = inlined_call_operand.hbm [shape: bf16[2,128,128], index: 20, kind: input, shape index: {}]
  %s21 = inlined_call_operand.hbm [shape: f32[2,1,128], index: 21, kind: input, shape index: {}]
  %s22 = inlined_call_operand.hbm [shape: bf16[2,128,128], index: 22, kind: input, shape index: {}]
  %s23 = inlined_call_operand.hbm [shape: f32[2,1,128], index: 23, kind: input, shape index: {}]
  %s24 = inlined_call_operand.hbm [shape: f32[2,1,128], index: 24, kind: input, shape index: {}]
  %s25 = inlined_call_operand.hbm [shape: f32[2,1,128], index: 25, kind: input, shape index: {}]
  %s26 = inlined_call_operand.vmem [shape: f32[2,2,128], index: 26, kind: output, shape index: {}]
  %s27 = sld [smem:[#allocation0]]
  $region217: #{video_forward.2} parent=0
    _
  %s29 = ssub.s32 1, %s27
  %s30 = scalar_select 0, %s29, %s27
  $region1: #{video_forward.2} parent=0
    #allocation2 [shape = 'u8[1024]{0}', space=vmem, size = 0x400, scoped, tag = 'input window, operand 3']
    #allocation3 [shape = 's32[2]{0}', space=sflag, size = 0x8, scoped, tag = 'scoped memory for video_forward.2']
    #allocation4 [shape = 'u8[1024]{0}', space=vmem, size = 0x400, scoped, tag = 'input window, operand 5']
    #allocation5 [shape = 's32[2]{0}', space=sflag, size = 0x8, scoped, tag = 'scoped memory for video_forward.2']
    #allocation6 [shape = 'u8[1024]{0}', space=vmem, size = 0x400, scoped, tag = 'input window, operand 7']
    #allocation7 [shape = 'u8[1024]{0}', space=vmem, size = 0x400, scoped, tag = 'input window, operand 9']
    #allocation8 [shape = 's32[2]{0}', space=sflag, size = 0x8, scoped, tag = 'scoped memory for video_forward.2']
    #allocation9 [shape = 'u8[262144]{0}', space=vmem, size = 0x40000, scoped, tag = 'input window, operand 10']
    #allocation10 [shape = 'u8[4096]{0}', space=vmem, size = 0x1000, scoped, tag = 'input window, operand 11']
    #allocation11 [shape = 's32[2]{0}', space=sflag, size = 0x8, scoped, tag = 'scoped memory for video_forward.2']
    #allocation12 [shape = 'u8[262144]{0}', space=vmem, size = 0x40000, scoped, tag = 'input window, operand 12']
    #allocation13 [shape = 'u8[4096]{0}', space=vmem, size = 0x1000, scoped, tag = 'input window, operand 13']
    #allocation14 [shape = 's32[2]{0}', space=sflag, size = 0x8, scoped, tag = 'scoped memory for video_forward.2']
    #allocation15 [shape = 'u8[262144]{0}', space=vmem, size = 0x40000, scoped, tag = 'input window, operand 14']
    #allocation16 [shape = 'u8[4096]{0}', space=vmem, size = 0x1000, scoped, tag = 'input window, operand 15']
    #allocation17 [shape = 's32[2]{0}', space=sflag, size = 0x8, scoped, tag = 'scoped memory for video_forward.2']
    #allocation18 [shape = 'u8[262144]{0}', space=vmem, size = 0x40000, scoped, tag = 'input window, operand 16']
    #allocation19 [shape = 'u8[1024]{0}', space=vmem, size = 0x400, scoped, tag = 'input window, operand 17']
    #allocation20 [shape = 's32[2]{0}', space=sflag, size = 0x8, scoped, tag = 'scoped memory for video_forward.2']
    #allocation21 [shape = 'u8[1024]{0}', space=vmem, size = 0x400, scoped, tag = 'input window, operand 18']
    #allocation22 [shape = 'u8[1024]{0}', space=vmem, size = 0x400, scoped, tag = 'input window, operand 19']
    #allocation23 [shape = 's32[2]{0}', space=sflag, size = 0x8, scoped, tag = 'scoped memory for video_forward.2']
    #allocation24 [shape = 'u8[65536]{0}', space=vmem, size = 0x10000, scoped, tag = 'input window, operand 20']
    #allocation25 [shape = 'u8[1024]{0}', space=vmem, size = 0x400, scoped, tag = 'input window, operand 21']
    #allocation26 [shape = 's32[2]{0}', space=sflag, size = 0x8, scoped, tag = 'scoped memory for video_forward.2']
    #allocation27 [shape = 'u8[65536]{0}', space=vmem, size = 0x10000, scoped, tag = 'input window, operand 22']
    #allocation28 [shape = 'u8[1024]{0}', space=vmem, size = 0x400, scoped, tag = 'input window, operand 23']
    #allocation29 [shape = 's32[2]{0}', space=sflag, size = 0x8, scoped, tag = 'scoped memory for video_forward.2']
    #allocation30 [shape = 'u8[1024]{0}', space=vmem, size = 0x400, scoped, tag = 'input window, operand 24']
    #allocation31 [shape = 'u8[1024]{0}', space=vmem, size = 0x400, scoped, tag = 'input window, operand 25']
    #allocation32 [shape = 's32[2]{0}', space=sflag, size = 0x8, scoped, tag = 'scoped memory for video_forward.2']
    %31 = vsyncpa [#allocation3], 0
    %s32 = scalar_lea.sflag [#allocation3], 1
    %33 = vsyncpa %s32, 0
    %34 = vsyncpa [#allocation5], 0
    %s35 = scalar_lea.sflag [#allocation5], 1
    %36 = vsyncpa %s35, 0
    %37 = vsyncpa [#allocation8], 0
    %s38 = scalar_lea.sflag [#allocation8], 1
    %39 = vsyncpa %s38, 0
    %40 = vsyncpa [#allocation11], 0
    %s41 = scalar_lea.sflag [#allocation11], 1
    %42 = vsyncpa %s41, 0
    %43 = vsyncpa [#allocation14], 0
    %s44 = scalar_lea.sflag [#allocation14], 1
    %45 = vsyncpa %s44, 0
    %46 = vsyncpa [#allocation17], 0
    %s47 = scalar_lea.sflag [#allocation17], 1
    %48 = vsyncpa %s47, 0
    %49 = vsyncpa [#allocation20], 0
    %s50 = scalar_lea.sflag [#allocation20], 1
    %51 = vsyncpa %s50, 0
    %52 = vsyncpa [#allocation23], 0
    %s53 = scalar_lea.sflag [#allocation23], 1
    %54 = vsyncpa %s53, 0
    %55 = vsyncpa [#allocation26], 0
    %s56 = scalar_lea.sflag [#allocation26], 1
    %57 = vsyncpa %s56, 0
    %58 = vsyncpa [#allocation29], 0
    %s59 = scalar_lea.sflag [#allocation29], 1
    %60 = vsyncpa %s59, 0
    %61 = vsyncpa [#allocation32], 0
    %s62 = scalar_lea.sflag [#allocation32], 1
    %63 = vsyncpa %s62, 0
    loop: start=0, step=1, limit=4
    $region2: #{video_forward.2} parent=1 // loop_pre_header
      _
    $region3: #{video_forward.2} parent=1 // loop_header
      %s65 = sphi 0, %s69
      %p66 = scmp.ge.s32.totalorder %s65, 4
      %s75 = sphi 0, %s77
      %s78 = sphi 0, %s75
      %s79 = sphi 0, %s78
      %s95 = sphi 0, %s79
      %s103 = sphi 0, %s105
      %s106 = sphi 0, %s103
      %s107 = sphi 0, %s106
      %s123 = sphi 0, %s107
      %s129 = sphi 0, %s131
      %s132 = sphi 0, %s129
      %s133 = sphi 0, %s132
      %s149 = sphi 0, %s133
      %s155 = sphi 0, %s157
      %s158 = sphi 0, %s155
      %s159 = sphi 0, %s158
      %s175 = sphi 0, %s159
      %s181 = sphi 0, %s183
      %s184 = sphi 0, %s181
      %s185 = sphi 0, %s184
      %s201 = sphi 0, %s185
      %s207 = sphi 0, %s209
      %s210 = sphi 0, %s207
      %s211 = sphi 0, %s210
      %s227 = sphi 0, %s211
      %s235 = sphi 0, %s237
      %s238 = sphi 0, %s235
      %s239 = sphi 0, %s238
      %s255 = sphi 0, %s239
      %s263 = sphi 0, %s265
      %s266 = sphi 0, %s263
      %s267 = sphi 0, %s266
      %s283 = sphi 0, %s267
      %s291 = sphi 0, %s293
      %s294 = sphi 0, %s291
      %s295 = sphi 0, %s294
      %s311 = sphi 0, %s295
      %s319 = sphi 0, %s321
      %s322 = sphi 0, %s319
      %s323 = sphi 0, %s322
      %s339 = sphi 0, %s323
      %s345 = sphi 0, %s347
      %s348 = sphi 0, %s345
      %s349 = sphi 0, %s348
      %s365 = sphi 0, %s349
      %s371 = sphi 0, %s373
      %s374 = sphi 0, %s371
      %s375 = sphi 0, %s374
      %s391 = sphi 0, %s375
      %s397 = sphi 0, %s399
      %s400 = sphi 0, %s397
      %s401 = sphi 0, %s400
      %s417 = sphi 0, %s401
      %s423 = sphi 0, %s425
      %s426 = sphi 0, %s423
      %s427 = sphi 0, %s426
      %s443 = sphi 0, %s427
      %s449 = sphi 0, %s451
      %s452 = sphi 0, %s449
      %s453 = sphi 0, %s452
      %s469 = sphi 0, %s453
      %s475 = sphi 0, %s477
      %s478 = sphi 0, %s475
      %s479 = sphi 0, %s478
      %s495 = sphi 0, %s479
      %s501 = sphi 0, %s503
      %s504 = sphi 0, %s501
      %s505 = sphi 0, %s504
      %s521 = sphi 0, %s505
      %s527 = sphi 0, %s529
      %s530 = sphi 0, %s527
      %s531 = sphi 0, %s530
      %s547 = sphi 0, %s531
      %s553 = sphi 0, %s555
      %s556 = sphi 0, %s553
      %s557 = sphi 0, %s556
      %s573 = sphi 0, %s557
      %s579 = sphi 0, %s581
      %s582 = sphi 0, %s579
      %s583 = sphi 0, %s582
      %s599 = sphi 0, %s583
      %s605 = sphi 0, %s607
      %s608 = sphi 0, %s605
      %s609 = sphi 0, %s608
      %s625 = sphi 0, %s609
      %s631 = sphi 0, %s633
      %s634 = sphi 0, %s631
      %s635 = sphi 0, %s634
      %s651 = sphi 0, %s635
      %s657 = sphi 0, %s659
      %s660 = sphi 0, %s657
      %s661 = sphi 0, %s660
      %s677 = sphi 0, %s661
      %s683 = sphi 0, %s685
      %s686 = sphi 0, %s683
      %s687 = sphi 0, %s686
      %s703 = sphi 0, %s687
      %s709 = sphi 0, %s711
      %s712 = sphi 0, %s709
      %s713 = sphi 0, %s712
      %s729 = sphi 0, %s713
      %s735 = sphi 0, %s737
      %s738 = sphi 0, %s735
      %s739 = sphi 0, %s738
      %s755 = sphi 0, %s739
      %s761 = sphi 0, %s763
      %s764 = sphi 0, %s761
      %s765 = sphi 0, %s764
      %s781 = sphi 0, %s765
    $region4: #{video_forward.2} parent=1 // loop_header_branch
      %68 = sbr.rel (%p66) target = $region8
    $region5: #{video_forward.2} parent=1 // loop_body
      %s70 = ssub.s32 %s65, 1
      %s71 = ssub.s32 %s65, 2
      %s72 = sadd.s32 %s65, 1
      %s73 = ssub.s32 %s65, %s72
      %p74 = scmp.eq.s32.totalorder %s73, 0
      %s76 = sadd.s32 %s75, 1
      %s77 = scalar_select %p74, %s75, %s76
      %p80 = pneg %p74
      %p81 = scmp.eq.s32.totalorder %s65, 1
      %p82 = por %p80, %p81
      %p83 = scmp.ne.s32.totalorder %s75, %s78
      %p84 = scmp.eq.s32.totalorder %s65, 0
      %p85 = por %p83, %p84
      %p86 = scmp.ne.s32.totalorder %s75, %s78
      %p87 = scmp.eq.s32.totalorder %s70, 1
      %p88 = por %p86, %p87
      %p89 = scmp.ne.s32.totalorder %s78, %s79
      %p90 = scmp.eq.s32.totalorder %s70, 0
      %p91 = por %p89, %p90
      %p92 = scmp.ne.s32.totalorder %s78, %s79
      %p93 = scmp.eq.s32.totalorder %s71, 1
      %p94 = por %p92, %p93
      %p96 = scmp.ne.s32.totalorder %s79, %s95
      %p97 = scmp.eq.s32.totalorder %s71, 0
      %p98 = por %p96, %p97
      %s99 = ssub.s32 1, %s65
      %s100 = ssub.s32 1, %s72
      %s101 = ssub.s32 %s99, %s100
      %p102 = scmp.eq.s32.totalorder %s101, 0
      %s104 = sadd.s32 %s103, 1
      %s105 = scalar_select %p102, %s103, %s104
      %p108 = pneg %p102
      %p109 = scmp.eq.s32.totalorder %s65, 1
      %p110 = por %p108, %p109
      %p111 = scmp.ne.s32.totalorder %s103, %s106
      %p112 = scmp.eq.s32.totalorder %s65, 0
      %p113 = por %p111, %p112
      %p114 = scmp.ne.s32.totalorder %s103, %s106
      %p115 = scmp.eq.s32.totalorder %s70, 1
      %p116 = por %p114, %p115
      %p117 = scmp.ne.s32.totalorder %s106, %s107
      %p118 = scmp.eq.s32.totalorder %s70, 0
      %p119 = por %p117, %p118
      %p120 = scmp.ne.s32.totalorder %s106, %s107
      %p121 = scmp.eq.s32.totalorder %s71, 1
      %p122 = por %p120, %p121
      %p124 = scmp.ne.s32.totalorder %s107, %s123
      %p125 = scmp.eq.s32.totalorder %s71, 0
      %p126 = por %p124, %p125
      %s127 = ssub.s32 %s65, %s72
      %p128 = scmp.eq.s32.totalorder %s127, 0
      %s130 = sadd.s32 %s129, 1
      %s131 = scalar_select %p128, %s129, %s130
      %p134 = pneg %p128
      %p135 = scmp.eq.s32.totalorder %s65, 1
      %p136 = por %p134, %p135
      %p137 = scmp.ne.s32.totalorder %s129, %s132
      %p138 = scmp.eq.s32.totalorder %s65, 0
      %p139 = por %p137, %p138
      %p140 = scmp.ne.s32.totalorder %s129, %s132
      %p141 = scmp.eq.s32.totalorder %s70, 1
      %p142 = por %p140, %p141
      %p143 = scmp.ne.s32.totalorder %s132, %s133
      %p144 = scmp.eq.s32.totalorder %s70, 0
      %p145 = por %p143, %p144
      %p146 = scmp.ne.s32.totalorder %s132, %s133
      %p147 = scmp.eq.s32.totalorder %s71, 1
      %p148 = por %p146, %p147
      %p150 = scmp.ne.s32.totalorder %s133, %s149
      %p151 = scmp.eq.s32.totalorder %s71, 0
      %p152 = por %p150, %p151
      %s153 = ssub.s32 %s65, %s72
      %p154 = scmp.eq.s32.totalorder %s153, 0
      %s156 = sadd.s32 %s155, 1
      %s157 = scalar_select %p154, %s155, %s156
      %p160 = pneg %p154
      %p161 = scmp.eq.s32.totalorder %s65, 1
      %p162 = por %p160, %p161
      %p163 = scmp.ne.s32.totalorder %s155, %s158
      %p164 = scmp.eq.s32.totalorder %s65, 0
      %p165 = por %p163, %p164
      %p166 = scmp.ne.s32.totalorder %s155, %s158
      %p167 = scmp.eq.s32.totalorder %s70, 1
      %p168 = por %p166, %p167
      %p169 = scmp.ne.s32.totalorder %s158, %s159
      %p170 = scmp.eq.s32.totalorder %s70, 0
      %p171 = por %p169, %p170
      %p172 = scmp.ne.s32.totalorder %s158, %s159
      %p173 = scmp.eq.s32.totalorder %s71, 1
      %p174 = por %p172, %p173
      %p176 = scmp.ne.s32.totalorder %s159, %s175
      %p177 = scmp.eq.s32.totalorder %s71, 0
      %p178 = por %p176, %p177
      %s179 = ssub.s32 %s65, %s72
      %p180 = scmp.eq.s32.totalorder %s179, 0
      %s182 = sadd.s32 %s181, 1
      %s183 = scalar_select %p180, %s181, %s182
      %p186 = pneg %p180
      %p187 = scmp.eq.s32.totalorder %s65, 1
      %p188 = por %p186, %p187
      %p189 = scmp.ne.s32.totalorder %s181, %s184
      %p190 = scmp.eq.s32.totalorder %s65, 0
      %p191 = por %p189, %p190
      %p192 = scmp.ne.s32.totalorder %s181, %s184
      %p193 = scmp.eq.s32.totalorder %s70, 1
      %p194 = por %p192, %p193
      %p195 = scmp.ne.s32.totalorder %s184, %s185
      %p196 = scmp.eq.s32.totalorder %s70, 0
      %p197 = por %p195, %p196
      %p198 = scmp.ne.s32.totalorder %s184, %s185
      %p199 = scmp.eq.s32.totalorder %s71, 1
      %p200 = por %p198, %p199
      %p202 = scmp.ne.s32.totalorder %s185, %s201
      %p203 = scmp.eq.s32.totalorder %s71, 0
      %p204 = por %p202, %p203
      %s205 = ssub.s32 %s65, %s72
      %p206 = scmp.eq.s32.totalorder %s205, 0
      %s208 = sadd.s32 %s207, 1
      %s209 = scalar_select %p206, %s207, %s208
      %p212 = pneg %p206
      %p213 = scmp.eq.s32.totalorder %s65, 1
      %p214 = por %p212, %p213
      %p215 = scmp.ne.s32.totalorder %s207, %s210
      %p216 = scmp.eq.s32.totalorder %s65, 0
      %p217 = por %p215, %p216
      %p218 = scmp.ne.s32.totalorder %s207, %s210
      %p219 = scmp.eq.s32.totalorder %s70, 1
      %p220 = por %p218, %p219
      %p221 = scmp.ne.s32.totalorder %s210, %s211
      %p222 = scmp.eq.s32.totalorder %s70, 0
      %p223 = por %p221, %p222
      %p224 = scmp.ne.s32.totalorder %s210, %s211
      %p225 = scmp.eq.s32.totalorder %s71, 1
      %p226 = por %p224, %p225
      %p228 = scmp.ne.s32.totalorder %s211, %s227
      %p229 = scmp.eq.s32.totalorder %s71, 0
      %p230 = por %p228, %p229
      %s231 = ssub.s32 1, %s65
      %s232 = ssub.s32 1, %s72
      %s233 = ssub.s32 %s231, %s232
      %p234 = scmp.eq.s32.totalorder %s233, 0
      %s236 = sadd.s32 %s235, 1
      %s237 = scalar_select %p234, %s235, %s236
      %p240 = pneg %p234
      %p241 = scmp.eq.s32.totalorder %s65, 1
      %p242 = por %p240, %p241
      %p243 = scmp.ne.s32.totalorder %s235, %s238
      %p244 = scmp.eq.s32.totalorder %s65, 0
      %p245 = por %p243, %p244
      %p246 = scmp.ne.s32.totalorder %s235, %s238
      %p247 = scmp.eq.s32.totalorder %s70, 1
      %p248 = por %p246, %p247
      %p249 = scmp.ne.s32.totalorder %s238, %s239
      %p250 = scmp.eq.s32.totalorder %s70, 0
      %p251 = por %p249, %p250
      %p252 = scmp.ne.s32.totalorder %s238, %s239
      %p253 = scmp.eq.s32.totalorder %s71, 1
      %p254 = por %p252, %p253
      %p256 = scmp.ne.s32.totalorder %s239, %s255
      %p257 = scmp.eq.s32.totalorder %s71, 0
      %p258 = por %p256, %p257
      %s259 = ssub.s32 1, %s65
      %s260 = ssub.s32 1, %s72
      %s261 = ssub.s32 %s259, %s260
      %p262 = scmp.eq.s32.totalorder %s261, 0
      %s264 = sadd.s32 %s263, 1
      %s265 = scalar_select %p262, %s263, %s264
      %p268 = pneg %p262
      %p269 = scmp.eq.s32.totalorder %s65, 1
      %p270 = por %p268, %p269
      %p271 = scmp.ne.s32.totalorder %s263, %s266
      %p272 = scmp.eq.s32.totalorder %s65, 0
      %p273 = por %p271, %p272
      %p274 = scmp.ne.s32.totalorder %s263, %s266
      %p275 = scmp.eq.s32.totalorder %s70, 1
      %p276 = por %p274, %p275
      %p277 = scmp.ne.s32.totalorder %s266, %s267
      %p278 = scmp.eq.s32.totalorder %s70, 0
      %p279 = por %p277, %p278
      %p280 = scmp.ne.s32.totalorder %s266, %s267
      %p281 = scmp.eq.s32.totalorder %s71, 1
      %p282 = por %p280, %p281
      %p284 = scmp.ne.s32.totalorder %s267, %s283
      %p285 = scmp.eq.s32.totalorder %s71, 0
      %p286 = por %p284, %p285
      %s287 = ssub.s32 1, %s65
      %s288 = ssub.s32 1, %s72
      %s289 = ssub.s32 %s287, %s288
      %p290 = scmp.eq.s32.totalorder %s289, 0
      %s292 = sadd.s32 %s291, 1
      %s293 = scalar_select %p290, %s291, %s292
      %p296 = pneg %p290
      %p297 = scmp.eq.s32.totalorder %s65, 1
      %p298 = por %p296, %p297
      %p299 = scmp.ne.s32.totalorder %s291, %s294
      %p300 = scmp.eq.s32.totalorder %s65, 0
      %p301 = por %p299, %p300
      %p302 = scmp.ne.s32.totalorder %s291, %s294
      %p303 = scmp.eq.s32.totalorder %s70, 1
      %p304 = por %p302, %p303
      %p305 = scmp.ne.s32.totalorder %s294, %s295
      %p306 = scmp.eq.s32.totalorder %s70, 0
      %p307 = por %p305, %p306
      %p308 = scmp.ne.s32.totalorder %s294, %s295
      %p309 = scmp.eq.s32.totalorder %s71, 1
      %p310 = por %p308, %p309
      %p312 = scmp.ne.s32.totalorder %s295, %s311
      %p313 = scmp.eq.s32.totalorder %s71, 0
      %p314 = por %p312, %p313
      %s315 = ssub.s32 1, %s65
      %s316 = ssub.s32 1, %s72
      %s317 = ssub.s32 %s315, %s316
      %p318 = scmp.eq.s32.totalorder %s317, 0
      %s320 = sadd.s32 %s319, 1
      %s321 = scalar_select %p318, %s319, %s320
      %p324 = pneg %p318
      %p325 = scmp.eq.s32.totalorder %s65, 1
      %p326 = por %p324, %p325
      %p327 = scmp.ne.s32.totalorder %s319, %s322
      %p328 = scmp.eq.s32.totalorder %s65, 0
      %p329 = por %p327, %p328
      %p330 = scmp.ne.s32.totalorder %s319, %s322
      %p331 = scmp.eq.s32.totalorder %s70, 1
      %p332 = por %p330, %p331
      %p333 = scmp.ne.s32.totalorder %s322, %s323
      %p334 = scmp.eq.s32.totalorder %s70, 0
      %p335 = por %p333, %p334
      %p336 = scmp.ne.s32.totalorder %s322, %s323
      %p337 = scmp.eq.s32.totalorder %s71, 1
      %p338 = por %p336, %p337
      %p340 = scmp.ne.s32.totalorder %s323, %s339
      %p341 = scmp.eq.s32.totalorder %s71, 0
      %p342 = por %p340, %p341
      %s343 = ssub.s32 %s65, %s72
      %p344 = scmp.eq.s32.totalorder %s343, 0
      %s346 = sadd.s32 %s345, 1
      %s347 = scalar_select %p344, %s345, %s346
      %p350 = pneg %p344
      %p351 = scmp.eq.s32.totalorder %s65, 1
      %p352 = por %p350, %p351
      %p353 = scmp.ne.s32.totalorder %s345, %s348
      %p354 = scmp.eq.s32.totalorder %s65, 0
      %p355 = por %p353, %p354
      %p356 = scmp.ne.s32.totalorder %s345, %s348
      %p357 = scmp.eq.s32.totalorder %s70, 1
      %p358 = por %p356, %p357
      %p359 = scmp.ne.s32.totalorder %s348, %s349
      %p360 = scmp.eq.s32.totalorder %s70, 0
      %p361 = por %p359, %p360
      %p362 = scmp.ne.s32.totalorder %s348, %s349
      %p363 = scmp.eq.s32.totalorder %s71, 1
      %p364 = por %p362, %p363
      %p366 = scmp.ne.s32.totalorder %s349, %s365
      %p367 = scmp.eq.s32.totalorder %s71, 0
      %p368 = por %p366, %p367
      %s369 = ssub.s32 %s65, %s72
      %p370 = scmp.eq.s32.totalorder %s369, 0
      %s372 = sadd.s32 %s371, 1
      %s373 = scalar_select %p370, %s371, %s372
      %p376 = pneg %p370
      %p377 = scmp.eq.s32.totalorder %s65, 1
      %p378 = por %p376, %p377
      %p379 = scmp.ne.s32.totalorder %s371, %s374
      %p380 = scmp.eq.s32.totalorder %s65, 0
      %p381 = por %p379, %p380
      %p382 = scmp.ne.s32.totalorder %s371, %s374
      %p383 = scmp.eq.s32.totalorder %s70, 1
      %p384 = por %p382, %p383
      %p385 = scmp.ne.s32.totalorder %s374, %s375
      %p386 = scmp.eq.s32.totalorder %s70, 0
      %p387 = por %p385, %p386
      %p388 = scmp.ne.s32.totalorder %s374, %s375
      %p389 = scmp.eq.s32.totalorder %s71, 1
      %p390 = por %p388, %p389
      %p392 = scmp.ne.s32.totalorder %s375, %s391
      %p393 = scmp.eq.s32.totalorder %s71, 0
      %p394 = por %p392, %p393
      %s395 = ssub.s32 %s65, %s72
      %p396 = scmp.eq.s32.totalorder %s395, 0
      %s398 = sadd.s32 %s397, 1
      %s399 = scalar_select %p396, %s397, %s398
      %p402 = pneg %p396
      %p403 = scmp.eq.s32.totalorder %s65, 1
      %p404 = por %p402, %p403
      %p405 = scmp.ne.s32.totalorder %s397, %s400
      %p406 = scmp.eq.s32.totalorder %s65, 0
      %p407 = por %p405, %p406
      %p408 = scmp.ne.s32.totalorder %s397, %s400
      %p409 = scmp.eq.s32.totalorder %s70, 1
      %p410 = por %p408, %p409
      %p411 = scmp.ne.s32.totalorder %s400, %s401
      %p412 = scmp.eq.s32.totalorder %s70, 0
      %p413 = por %p411, %p412
      %p414 = scmp.ne.s32.totalorder %s400, %s401
      %p415 = scmp.eq.s32.totalorder %s71, 1
      %p416 = por %p414, %p415
      %p418 = scmp.ne.s32.totalorder %s401, %s417
      %p419 = scmp.eq.s32.totalorder %s71, 0
      %p420 = por %p418, %p419
      %s421 = ssub.s32 %s65, %s72
      %p422 = scmp.eq.s32.totalorder %s421, 0
      %s424 = sadd.s32 %s423, 1
      %s425 = scalar_select %p422, %s423, %s424
      %p428 = pneg %p422
      %p429 = scmp.eq.s32.totalorder %s65, 1
      %p430 = por %p428, %p429
      %p431 = scmp.ne.s32.totalorder %s423, %s426
      %p432 = scmp.eq.s32.totalorder %s65, 0
      %p433 = por %p431, %p432
      %p434 = scmp.ne.s32.totalorder %s423, %s426
      %p435 = scmp.eq.s32.totalorder %s70, 1
      %p436 = por %p434, %p435
      %p437 = scmp.ne.s32.totalorder %s426, %s427
      %p438 = scmp.eq.s32.totalorder %s70, 0
      %p439 = por %p437, %p438
      %p440 = scmp.ne.s32.totalorder %s426, %s427
      %p441 = scmp.eq.s32.totalorder %s71, 1
      %p442 = por %p440, %p441
      %p444 = scmp.ne.s32.totalorder %s427, %s443
      %p445 = scmp.eq.s32.totalorder %s71, 0
      %p446 = por %p444, %p445
      %s447 = ssub.s32 %s65, %s72
      %p448 = scmp.eq.s32.totalorder %s447, 0
      %s450 = sadd.s32 %s449, 1
      %s451 = scalar_select %p448, %s449, %s450
      %p454 = pneg %p448
      %p455 = scmp.eq.s32.totalorder %s65, 1
      %p456 = por %p454, %p455
      %p457 = scmp.ne.s32.totalorder %s449, %s452
      %p458 = scmp.eq.s32.totalorder %s65, 0
      %p459 = por %p457, %p458
      %p460 = scmp.ne.s32.totalorder %s449, %s452
      %p461 = scmp.eq.s32.totalorder %s70, 1
      %p462 = por %p460, %p461
      %p463 = scmp.ne.s32.totalorder %s452, %s453
      %p464 = scmp.eq.s32.totalorder %s70, 0
      %p465 = por %p463, %p464
      %p466 = scmp.ne.s32.totalorder %s452, %s453
      %p467 = scmp.eq.s32.totalorder %s71, 1
      %p468 = por %p466, %p467
      %p470 = scmp.ne.s32.totalorder %s453, %s469
      %p471 = scmp.eq.s32.totalorder %s71, 0
      %p472 = por %p470, %p471
      %s473 = ssub.s32 %s65, %s72
      %p474 = scmp.eq.s32.totalorder %s473, 0
      %s476 = sadd.s32 %s475, 1
      %s477 = scalar_select %p474, %s475, %s476
      %p480 = pneg %p474
      %p481 = scmp.eq.s32.totalorder %s65, 1
      %p482 = por %p480, %p481
      %p483 = scmp.ne.s32.totalorder %s475, %s478
      %p484 = scmp.eq.s32.totalorder %s65, 0
      %p485 = por %p483, %p484
      %p486 = scmp.ne.s32.totalorder %s475, %s478
      %p487 = scmp.eq.s32.totalorder %s70, 1
      %p488 = por %p486, %p487
      %p489 = scmp.ne.s32.totalorder %s478, %s479
      %p490 = scmp.eq.s32.totalorder %s70, 0
      %p491 = por %p489, %p490
      %p492 = scmp.ne.s32.totalorder %s478, %s479
      %p493 = scmp.eq.s32.totalorder %s71, 1
      %p494 = por %p492, %p493
      %p496 = scmp.ne.s32.totalorder %s479, %s495
      %p497 = scmp.eq.s32.totalorder %s71, 0
      %p498 = por %p496, %p497
      %s499 = ssub.s32 %s65, %s72
      %p500 = scmp.eq.s32.totalorder %s499, 0
      %s502 = sadd.s32 %s501, 1
      %s503 = scalar_select %p500, %s501, %s502
      %p506 = pneg %p500
      %p507 = scmp.eq.s32.totalorder %s65, 1
      %p508 = por %p506, %p507
      %p509 = scmp.ne.s32.totalorder %s501, %s504
      %p510 = scmp.eq.s32.totalorder %s65, 0
      %p511 = por %p509, %p510
      %p512 = scmp.ne.s32.totalorder %s501, %s504
      %p513 = scmp.eq.s32.totalorder %s70, 1
      %p514 = por %p512, %p513
      %p515 = scmp.ne.s32.totalorder %s504, %s505
      %p516 = scmp.eq.s32.totalorder %s70, 0
      %p517 = por %p515, %p516
      %p518 = scmp.ne.s32.totalorder %s504, %s505
      %p519 = scmp.eq.s32.totalorder %s71, 1
      %p520 = por %p518, %p519
      %p522 = scmp.ne.s32.totalorder %s505, %s521
      %p523 = scmp.eq.s32.totalorder %s71, 0
      %p524 = por %p522, %p523
      %s525 = ssub.s32 %s65, %s72
      %p526 = scmp.eq.s32.totalorder %s525, 0
      %s528 = sadd.s32 %s527, 1
      %s529 = scalar_select %p526, %s527, %s528
      %p532 = pneg %p526
      %p533 = scmp.eq.s32.totalorder %s65, 1
      %p534 = por %p532, %p533
      %p535 = scmp.ne.s32.totalorder %s527, %s530
      %p536 = scmp.eq.s32.totalorder %s65, 0
      %p537 = por %p535, %p536
      %p538 = scmp.ne.s32.totalorder %s527, %s530
      %p539 = scmp.eq.s32.totalorder %s70, 1
      %p540 = por %p538, %p539
      %p541 = scmp.ne.s32.totalorder %s530, %s531
      %p542 = scmp.eq.s32.totalorder %s70, 0
      %p543 = por %p541, %p542
      %p544 = scmp.ne.s32.totalorder %s530, %s531
      %p545 = scmp.eq.s32.totalorder %s71, 1
      %p546 = por %p544, %p545
      %p548 = scmp.ne.s32.totalorder %s531, %s547
      %p549 = scmp.eq.s32.totalorder %s71, 0
      %p550 = por %p548, %p549
      %s551 = ssub.s32 %s65, %s72
      %p552 = scmp.eq.s32.totalorder %s551, 0
      %s554 = sadd.s32 %s553, 1
      %s555 = scalar_select %p552, %s553, %s554
      %p558 = pneg %p552
      %p559 = scmp.eq.s32.totalorder %s65, 1
      %p560 = por %p558, %p559
      %p561 = scmp.ne.s32.totalorder %s553, %s556
      %p562 = scmp.eq.s32.totalorder %s65, 0
      %p563 = por %p561, %p562
      %p564 = scmp.ne.s32.totalorder %s553, %s556
      %p565 = scmp.eq.s32.totalorder %s70, 1
      %p566 = por %p564, %p565
      %p567 = scmp.ne.s32.totalorder %s556, %s557
      %p568 = scmp.eq.s32.totalorder %s70, 0
      %p569 = por %p567, %p568
      %p570 = scmp.ne.s32.totalorder %s556, %s557
      %p571 = scmp.eq.s32.totalorder %s71, 1
      %p572 = por %p570, %p571
      %p574 = scmp.ne.s32.totalorder %s557, %s573
      %p575 = scmp.eq.s32.totalorder %s71, 0
      %p576 = por %p574, %p575
      %s577 = ssub.s32 %s65, %s72
      %p578 = scmp.eq.s32.totalorder %s577, 0
      %s580 = sadd.s32 %s579, 1
      %s581 = scalar_select %p578, %s579, %s580
      %p584 = pneg %p578
      %p585 = scmp.eq.s32.totalorder %s65, 1
      %p586 = por %p584, %p585
      %p587 = scmp.ne.s32.totalorder %s579, %s582
      %p588 = scmp.eq.s32.totalorder %s65, 0
      %p589 = por %p587, %p588
      %p590 = scmp.ne.s32.totalorder %s579, %s582
      %p591 = scmp.eq.s32.totalorder %s70, 1
      %p592 = por %p590, %p591
      %p593 = scmp.ne.s32.totalorder %s582, %s583
      %p594 = scmp.eq.s32.totalorder %s70, 0
      %p595 = por %p593, %p594
      %p596 = scmp.ne.s32.totalorder %s582, %s583
      %p597 = scmp.eq.s32.totalorder %s71, 1
      %p598 = por %p596, %p597
      %p600 = scmp.ne.s32.totalorder %s583, %s599
      %p601 = scmp.eq.s32.totalorder %s71, 0
      %p602 = por %p600, %p601
      %s603 = ssub.s32 %s65, %s72
      %p604 = scmp.eq.s32.totalorder %s603, 0
      %s606 = sadd.s32 %s605, 1
      %s607 = scalar_select %p604, %s605, %s606
      %p610 = pneg %p604
      %p611 = scmp.eq.s32.totalorder %s65, 1
      %p612 = por %p610, %p611
      %p613 = scmp.ne.s32.totalorder %s605, %s608
      %p614 = scmp.eq.s32.totalorder %s65, 0
      %p615 = por %p613, %p614
      %p616 = scmp.ne.s32.totalorder %s605, %s608
      %p617 = scmp.eq.s32.totalorder %s70, 1
      %p618 = por %p616, %p617
      %p619 = scmp.ne.s32.totalorder %s608, %s609
      %p620 = scmp.eq.s32.totalorder %s70, 0
      %p621 = por %p619, %p620
      %p622 = scmp.ne.s32.totalorder %s608, %s609
      %p623 = scmp.eq.s32.totalorder %s71, 1
      %p624 = por %p622, %p623
      %p626 = scmp.ne.s32.totalorder %s609, %s625
      %p627 = scmp.eq.s32.totalorder %s71, 0
      %p628 = por %p626, %p627
      %s629 = ssub.s32 %s65, %s72
      %p630 = scmp.eq.s32.totalorder %s629, 0
      %s632 = sadd.s32 %s631, 1
      %s633 = scalar_select %p630, %s631, %s632
      %p636 = pneg %p630
      %p637 = scmp.eq.s32.totalorder %s65, 1
      %p638 = por %p636, %p637
      %p639 = scmp.ne.s32.totalorder %s631, %s634
      %p640 = scmp.eq.s32.totalorder %s65, 0
      %p641 = por %p639, %p640
      %p642 = scmp.ne.s32.totalorder %s631, %s634
      %p643 = scmp.eq.s32.totalorder %s70, 1
      %p644 = por %p642, %p643
      %p645 = scmp.ne.s32.totalorder %s634, %s635
      %p646 = scmp.eq.s32.totalorder %s70, 0
      %p647 = por %p645, %p646
      %p648 = scmp.ne.s32.totalorder %s634, %s635
      %p649 = scmp.eq.s32.totalorder %s71, 1
      %p650 = por %p648, %p649
      %p652 = scmp.ne.s32.totalorder %s635, %s651
      %p653 = scmp.eq.s32.totalorder %s71, 0
      %p654 = por %p652, %p653
      %s655 = ssub.s32 %s65, %s72
      %p656 = scmp.eq.s32.totalorder %s655, 0
      %s658 = sadd.s32 %s657, 1
      %s659 = scalar_select %p656, %s657, %s658
      %p662 = pneg %p656
      %p663 = scmp.eq.s32.totalorder %s65, 1
      %p664 = por %p662, %p663
      %p665 = scmp.ne.s32.totalorder %s657, %s660
      %p666 = scmp.eq.s32.totalorder %s65, 0
      %p667 = por %p665, %p666
      %p668 = scmp.ne.s32.totalorder %s657, %s660
      %p669 = scmp.eq.s32.totalorder %s70, 1
      %p670 = por %p668, %p669
      %p671 = scmp.ne.s32.totalorder %s660, %s661
      %p672 = scmp.eq.s32.totalorder %s70, 0
      %p673 = por %p671, %p672
      %p674 = scmp.ne.s32.totalorder %s660, %s661
      %p675 = scmp.eq.s32.totalorder %s71, 1
      %p676 = por %p674, %p675
      %p678 = scmp.ne.s32.totalorder %s661, %s677
      %p679 = scmp.eq.s32.totalorder %s71, 0
      %p680 = por %p678, %p679
      %s681 = ssub.s32 %s65, %s72
      %p682 = scmp.eq.s32.totalorder %s681, 0
      %s684 = sadd.s32 %s683, 1
      %s685 = scalar_select %p682, %s683, %s684
      %p688 = pneg %p682
      %p689 = scmp.eq.s32.totalorder %s65, 1
      %p690 = por %p688, %p689
      %p691 = scmp.ne.s32.totalorder %s683, %s686
      %p692 = scmp.eq.s32.totalorder %s65, 0
      %p693 = por %p691, %p692
      %p694 = scmp.ne.s32.totalorder %s683, %s686
      %p695 = scmp.eq.s32.totalorder %s70, 1
      %p696 = por %p694, %p695
      %p697 = scmp.ne.s32.totalorder %s686, %s687
      %p698 = scmp.eq.s32.totalorder %s70, 0
      %p699 = por %p697, %p698
      %p700 = scmp.ne.s32.totalorder %s686, %s687
      %p701 = scmp.eq.s32.totalorder %s71, 1
      %p702 = por %p700, %p701
      %p704 = scmp.ne.s32.totalorder %s687, %s703
      %p705 = scmp.eq.s32.totalorder %s71, 0
      %p706 = por %p704, %p705
      %s707 = ssub.s32 %s65, %s72
      %p708 = scmp.eq.s32.totalorder %s707, 0
      %s710 = sadd.s32 %s709, 1
      %s711 = scalar_select %p708, %s709, %s710
      %p714 = pneg %p708
      %p715 = scmp.eq.s32.totalorder %s65, 1
      %p716 = por %p714, %p715
      %p717 = scmp.ne.s32.totalorder %s709, %s712
      %p718 = scmp.eq.s32.totalorder %s65, 0
      %p719 = por %p717, %p718
      %p720 = scmp.ne.s32.totalorder %s709, %s712
      %p721 = scmp.eq.s32.totalorder %s70, 1
      %p722 = por %p720, %p721
      %p723 = scmp.ne.s32.totalorder %s712, %s713
      %p724 = scmp.eq.s32.totalorder %s70, 0
      %p725 = por %p723, %p724
      %p726 = scmp.ne.s32.totalorder %s712, %s713
      %p727 = scmp.eq.s32.totalorder %s71, 1
      %p728 = por %p726, %p727
      %p730 = scmp.ne.s32.totalorder %s713, %s729
      %p731 = scmp.eq.s32.totalorder %s71, 0
      %p732 = por %p730, %p731
      %s733 = ssub.s32 %s65, %s72
      %p734 = scmp.eq.s32.totalorder %s733, 0
      %s736 = sadd.s32 %s735, 1
      %s737 = scalar_select %p734, %s735, %s736
      %p740 = pneg %p734
      %p741 = scmp.eq.s32.totalorder %s65, 1
      %p742 = por %p740, %p741
      %p743 = scmp.ne.s32.totalorder %s735, %s738
      %p744 = scmp.eq.s32.totalorder %s65, 0
      %p745 = por %p743, %p744
      %p746 = scmp.ne.s32.totalorder %s735, %s738
      %p747 = scmp.eq.s32.totalorder %s70, 1
      %p748 = por %p746, %p747
      %p749 = scmp.ne.s32.totalorder %s738, %s739
      %p750 = scmp.eq.s32.totalorder %s70, 0
      %p751 = por %p749, %p750
      %p752 = scmp.ne.s32.totalorder %s738, %s739
      %p753 = scmp.eq.s32.totalorder %s71, 1
      %p754 = por %p752, %p753
      %p756 = scmp.ne.s32.totalorder %s739, %s755
      %p757 = scmp.eq.s32.totalorder %s71, 0
      %p758 = por %p756, %p757
      %s759 = ssub.s32 %s65, %s72
      %p760 = scmp.eq.s32.totalorder %s759, 0
      %s762 = sadd.s32 %s761, 1
      %s763 = scalar_select %p760, %s761, %s762
      %p766 = pneg %p760
      %p767 = scmp.eq.s32.totalorder %s65, 1
      %p768 = por %p766, %p767
      %p769 = scmp.ne.s32.totalorder %s761, %s764
      %p770 = scmp.eq.s32.totalorder %s65, 0
      %p771 = por %p769, %p770
      %p772 = scmp.ne.s32.totalorder %s761, %s764
      %p773 = scmp.eq.s32.totalorder %s70, 1
      %p774 = por %p772, %p773
      %p775 = scmp.ne.s32.totalorder %s764, %s765
      %p776 = scmp.eq.s32.totalorder %s70, 0
      %p777 = por %p775, %p776
      %p778 = scmp.ne.s32.totalorder %s764, %s765
      %p779 = scmp.eq.s32.totalorder %s71, 1
      %p780 = por %p778, %p779
      %p782 = scmp.ne.s32.totalorder %s765, %s781
      %p783 = scmp.eq.s32.totalorder %s71, 0
      %p784 = por %p782, %p783
      %p785 = scmp.le.s32.totalorder 1, %s65
      %p786 = scmp.lt.s32.totalorder %s65, 3
      %p787 = pnand %p785, %p786
      %p788 = pneg %p787
      // Predicated region
      $region9: #{video_forward.2} parent=5 // pred_check
        _
      $region10: #{video_forward.2} parent=5 // pred_check_branch
        %790 = sbr.rel (%p787) target = $region12
      $region11: #{video_forward.2} parent=5 // pred_region
        %s791 = ssub.s32 %s65, 1
      $region12: #{video_forward.2} parent=5 // pred_fallthru
        _
      %p792 = scmp.lt.s32.totalorder %s65, 2
      // Predicated region
      $region13: #{video_forward.2} parent=5 // pred_check
        %p793 = pneg %p792
      $region14: #{video_forward.2} parent=5 // pred_check_branch
        %795 = sbr.rel (%p793) target = $region16
      $region15: #{video_forward.2} parent=5 // pred_region
        // Predicated region
        $region17: #{video_forward.2} parent=15 // pred_check
          %p796 = pneg %p85
        $region18: #{video_forward.2} parent=15 // pred_check_branch
          %798 = sbr.rel (%p796) target = $region20
        $region19: #{video_forward.2} parent=15 // pred_region
          %p799 = scmp.lt.s32.totalorder %s65, 1
          %s800 = scalar_select %p799, %s65, 1
          %s801 = smul.addr %s800, 16
          %s802 = smul.addr %s801, 8
          %s803 = scalar_lea.vmem %s0, %s802
        $region20: #{video_forward.2} parent=15 // pred_fallthru
          _
        // Predicated region
        $region21: #{video_forward.2} parent=15 // pred_check
          %p804 = pneg %p113
        $region22: #{video_forward.2} parent=15 // pred_check_branch
          %806 = sbr.rel (%p804) target = $region24
        $region23: #{video_forward.2} parent=15 // pred_region
          %s807 = ssub.s32 1, %s65
          %p808 = scmp.lt.s32.totalorder %s807, 1
          %s809 = scalar_select %p808, %s807, 1
          %s810 = smul.addr %s809, 16
          %s811 = smul.addr %s810, 8
          %s812 = scalar_lea.vmem %s1, %s811
          %s813 = ssub.s32 1, %s65
        $region24: #{video_forward.2} parent=15 // pred_fallthru
          _
        // Predicated region
        $region25: #{video_forward.2} parent=15 // pred_check
          %p814 = pneg %p139
        $region26: #{video_forward.2} parent=15 // pred_check_branch
          %816 = sbr.rel (%p814) target = $region28
        $region27: #{video_forward.2} parent=15 // pred_region
          %p817 = scmp.lt.s32.totalorder %s65, 1
          %s818 = scalar_select %p817, %s65, 1
          %s819 = smul.addr %s818, 64
          %s820 = smul.addr %s819, 4
          %s821 = scalar_lea.vmem %s2, %s820
        $region28: #{video_forward.2} parent=15 // pred_fallthru
          _
        // Predicated region
        $region29: #{video_forward.2} parent=15 // pred_check
          %p822 = pneg %p165
        $region30: #{video_forward.2} parent=15 // pred_check_branch
          %824 = sbr.rel (%p822) target = $region32
        $region31: #{video_forward.2} parent=15 // pred_region
          %s825 = sand.u32 %s155, 1
          %s826 = scalar_lea.sflag [#allocation3], %s825
          %s827 = sand.u32 %s155, 1
          %s828 = scalar_lea.vmem [#allocation2], %s827
          %s830 = ssub.s32 16, 16
          %831 = vsyncadd %s826, %s830
          %s832 = smul.addr %s65, 16
          %s833 = scalar_lea.hbm %s3, %s832
          %s835 = sshll.u32 %s828, 4
          %s836 = int_to_ptr.vmem [resolvable:$true] %s835
          %838 = dma.hbm_to_vmem [thread:$0]  %s833, 16, %s836, %s826
        $region32: #{video_forward.2} parent=15 // pred_fallthru
          _
        // Predicated region
        $region33: #{video_forward.2} parent=15 // pred_check
          %p839 = pneg %p191
        $region34: #{video_forward.2} parent=15 // pred_check_branch
          %841 = sbr.rel (%p839) target = $region36
        $region35: #{video_forward.2} parent=15 // pred_region
          %p842 = scmp.lt.s32.totalorder %s65, 1
          %s843 = scalar_select %p842, %s65, 1
          %s844 = smul.addr %s843, 16
          %s845 = smul.addr %s844, 4
          %s846 = scalar_lea.vmem %s4, %s845
        $region36: #{video_forward.2} parent=15 // pred_fallthru
          _
        // Predicated region
        $region37: #{video_forward.2} parent=15 // pred_check
          %p847 = pneg %p217
        $region38: #{video_forward.2} parent=15 // pred_check_branch
          %849 = sbr.rel (%p847) target = $region40
        $region39: #{video_forward.2} parent=15 // pred_region
          %s850 = sand.u32 %s65, 1
          %s851 = scalar_lea.sflag [#allocation5], %s850
          %s852 = sand.u32 %s207, 1
          %s853 = scalar_lea.vmem [#allocation4], %s852
          %s855 = ssub.s32 16, 16
          %856 = vsyncadd %s851, %s855
          %s857 = smul.addr %s65, 16
          %s858 = scalar_lea.hbm %s5, %s857
          %s860 = sshll.u32 %s853, 4
          %s861 = int_to_ptr.vmem [resolvable:$true] %s860
          %863 = dma.hbm_to_vmem [thread:$0]  %s858, 16, %s861, %s851
        $region40: #{video_forward.2} parent=15 // pred_fallthru
          _
        // Predicated region
        $region41: #{video_forward.2} parent=15 // pred_check
          %p864 = pneg %p245
        $region42: #{video_forward.2} parent=15 // pred_check_branch
          %866 = sbr.rel (%p864) target = $region44
        $region43: #{video_forward.2} parent=15 // pred_region
          %s867 = ssub.s32 1, %s65
          %p868 = scmp.lt.s32.totalorder %s867, 1
          %s869 = scalar_select %p868, %s867, 1
          %s870 = smul.addr %s869, 64
          %s871 = smul.addr %s870, 4
          %s872 = scalar_lea.vmem %s6, %s871
          %s873 = ssub.s32 1, %s65
        $region44: #{video_forward.2} parent=15 // pred_fallthru
          _
        // Predicated region
        $region45: #{video_forward.2} parent=15 // pred_check
          %p874 = pneg %p273
        $region46: #{video_forward.2} parent=15 // pred_check_branch
          %876 = sbr.rel (%p874) target = $region48
        $region47: #{video_forward.2} parent=15 // pred_region
          %s877 = sand.u32 %s65, 1
          %s878 = scalar_lea.sflag [#allocation5], %s877
          %s879 = sand.u32 %s263, 1
          %s880 = scalar_lea.vmem [#allocation6], %s879
          %s881 = ssub.s32 1, %s65
          %s883 = ssub.s32 16, 16
          %884 = vsyncadd %s878, %s883
          %s885 = smul.addr %s881, 16
          %s886 = scalar_lea.hbm %s7, %s885
          %s888 = sshll.u32 %s880, 4
          %s889 = int_to_ptr.vmem [resolvable:$true] %s888
          %891 = dma.hbm_to_vmem [thread:$0]  %s886, 16, %s889, %s878
        $region48: #{video_forward.2} parent=15 // pred_fallthru
          _
        // Predicated region
        $region49: #{video_forward.2} parent=15 // pred_check
          %p892 = pneg %p301
        $region50: #{video_forward.2} parent=15 // pred_check_branch
          %894 = sbr.rel (%p892) target = $region52
        $region51: #{video_forward.2} parent=15 // pred_region
          %s895 = ssub.s32 1, %s65
          %p896 = scmp.lt.s32.totalorder %s895, 1
          %s897 = scalar_select %p896, %s895, 1
          %s898 = smul.addr %s897, 16
          %s899 = smul.addr %s898, 4
          %s900 = scalar_lea.vmem %s8, %s899
          %s901 = ssub.s32 1, %s65
        $region52: #{video_forward.2} parent=15 // pred_fallthru
          _
        // Predicated region
        $region53: #{video_forward.2} parent=15 // pred_check
          %p902 = pneg %p329
        $region54: #{video_forward.2} parent=15 // pred_check_branch
          %904 = sbr.rel (%p902) target = $region56
        $region55: #{video_forward.2} parent=15 // pred_region
          %s905 = sand.u32 %s65, 1
          %s906 = scalar_lea.sflag [#allocation8], %s905
          %s907 = sand.u32 %s319, 1
          %s908 = scalar_lea.vmem [#allocation7], %s907
          %s909 = ssub.s32 1, %s65
          %s911 = ssub.s32 16, 16
          %912 = vsyncadd %s906, %s911
          %s913 = smul.addr %s909, 16
          %s914 = scalar_lea.hbm %s9, %s913
          %s916 = sshll.u32 %s908, 4
          %s917 = int_to_ptr.vmem [resolvable:$true] %s916
          %919 = dma.hbm_to_vmem [thread:$0]  %s914, 16, %s917, %s906
        $region56: #{video_forward.2} parent=15 // pred_fallthru
          _
        // Predicated region
        $region57: #{video_forward.2} parent=15 // pred_check
          %p920 = pneg %p355
        $region58: #{video_forward.2} parent=15 // pred_check_branch
          %922 = sbr.rel (%p920) target = $region60
        $region59: #{video_forward.2} parent=15 // pred_region
          %s923 = sand.u32 %s65, 1
          %s924 = scalar_lea.sflag [#allocation8], %s923
          %s925 = sand.u32 %s345, 1
          %s926 = smul.addr %s925, 256
          %s927 = scalar_lea.vmem [#allocation9], %s926
          %s929 = ssub.s32 4096, 4096
          %930 = vsyncadd %s924, %s929
          %s931 = smul.addr %s65, 64
          %s932 = smul.addr %s931, 64
          %s933 = scalar_lea.hbm %s10, %s932
          %s934 = sshll.u32 %s927, 4
          %s935 = int_to_ptr.vmem [resolvable:$true] %s934
          %940 = dma.hbm_to_vmem [thread:$0]  %s933, 4096, %s935, %s924, 256, 256, 16
        $region60: #{video_forward.2} parent=15 // pred_fallthru
          _
        // Predicated region
        $region61: #{video_forward.2} parent=15 // pred_check
          %p941 = pneg %p381
        $region62: #{video_forward.2} parent=15 // pred_check_branch
          %943 = sbr.rel (%p941) target = $region64
        $region63: #{video_forward.2} parent=15 // pred_region
          %s944 = sand.u32 %s65, 1
          %s945 = scalar_lea.sflag [#allocation11], %s944
          %s946 = sand.u32 %s371, 1
          %s947 = smul.addr %s946, 4
          %s948 = scalar_lea.vmem [#allocation10], %s947
          %s950 = ssub.s32 64, 64
          %951 = vsyncadd %s945, %s950
          %s952 = smul.addr %s65, 4
          %s953 = smul.addr %s952, 16
          %s954 = scalar_lea.hbm %s11, %s953
          %s956 = sshll.u32 %s948, 4
          %s957 = int_to_ptr.vmem [resolvable:$true] %s956
          %959 = dma.hbm_to_vmem [thread:$0]  %s954, 64, %s957, %s945
        $region64: #{video_forward.2} parent=15 // pred_fallthru
          _
        // Predicated region
        $region65: #{video_forward.2} parent=15 // pred_check
          %p960 = pneg %p407
        $region66: #{video_forward.2} parent=15 // pred_check_branch
          %962 = sbr.rel (%p960) target = $region68
        $region67: #{video_forward.2} parent=15 // pred_region
          %s963 = sand.u32 %s65, 1
          %s964 = scalar_lea.sflag [#allocation11], %s963
          %s965 = sand.u32 %s397, 1
          %s966 = smul.addr %s965, 256
          %s967 = scalar_lea.vmem [#allocation12], %s966
          %s969 = ssub.s32 4096, 4096
          %970 = vsyncadd %s964, %s969
          %s971 = smul.addr %s65, 64
          %s972 = smul.addr %s971, 64
          %s973 = scalar_lea.hbm %s12, %s972
          %s974 = sshll.u32 %s967, 4
          %s975 = int_to_ptr.vmem [resolvable:$true] %s974
          %980 = dma.hbm_to_vmem [thread:$0]  %s973, 4096, %s975, %s964, 256, 256, 16
        $region68: #{video_forward.2} parent=15 // pred_fallthru
          _
        // Predicated region
        $region69: #{video_forward.2} parent=15 // pred_check
          %p981 = pneg %p433
        $region70: #{video_forward.2} parent=15 // pred_check_branch
          %983 = sbr.rel (%p981) target = $region72
        $region71: #{video_forward.2} parent=15 // pred_region
          %s984 = sand.u32 %s65, 1
          %s985 = scalar_lea.sflag [#allocation14], %s984
          %s986 = sand.u32 %s423, 1
          %s987 = smul.addr %s986, 4
          %s988 = scalar_lea.vmem [#allocation13], %s987
          %s990 = ssub.s32 64, 64
          %991 = vsyncadd %s985, %s990
          %s992 = smul.addr %s65, 4
          %s993 = smul.addr %s992, 16
          %s994 = scalar_lea.hbm %s13, %s993
          %s996 = sshll.u32 %s988, 4
          %s997 = int_to_ptr.vmem [resolvable:$true] %s996
          %999 = dma.hbm_to_vmem [thread:$0]  %s994, 64, %s997, %s985
        $region72: #{video_forward.2} parent=15 // pred_fallthru
          _
        // Predicated region
        $region73: #{video_forward.2} parent=15 // pred_check
          %p1000 = pneg %p459
        $region74: #{video_forward.2} parent=15 // pred_check_branch
          %1002 = sbr.rel (%p1000) target = $region76
        $region75: #{video_forward.2} parent=15 // pred_region
          %s1003 = sand.u32 %s65, 1
          %s1004 = scalar_lea.sflag [#allocation14], %s1003
          %s1005 = sand.u32 %s449, 1
          %s1006 = smul.addr %s1005, 256
          %s1007 = scalar_lea.vmem [#allocation15], %s1006
          %s1009 = ssub.s32 4096, 4096
          %1010 = vsyncadd %s1004, %s1009
          %s1011 = smul.addr %s65, 64
          %s1012 = smul.addr %s1011, 64
          %s1013 = scalar_lea.hbm %s14, %s1012
          %s1014 = sshll.u32 %s1007, 4
          %s1015 = int_to_ptr.vmem [resolvable:$true] %s1014
          %1020 = dma.hbm_to_vmem [thread:$0]  %s1013, 4096, %s1015, %s1004, 256, 256, 16
        $region76: #{video_forward.2} parent=15 // pred_fallthru
          _
        // Predicated region
        $region77: #{video_forward.2} parent=15 // pred_check
          %p1021 = pneg %p485
        $region78: #{video_forward.2} parent=15 // pred_check_branch
          %1023 = sbr.rel (%p1021) target = $region80
        $region79: #{video_forward.2} parent=15 // pred_region
          %s1024 = sand.u32 %s65, 1
          %s1025 = scalar_lea.sflag [#allocation17], %s1024
          %s1026 = sand.u32 %s475, 1
          %s1027 = smul.addr %s1026, 4
          %s1028 = scalar_lea.vmem [#allocation16], %s1027
          %s1030 = ssub.s32 64, 64
          %1031 = vsyncadd %s1025, %s1030
          %s1032 = smul.addr %s65, 4
          %s1033 = smul.addr %s1032, 16
          %s1034 = scalar_lea.hbm %s15, %s1033
          %s1036 = sshll.u32 %s1028, 4
          %s1037 = int_to_ptr.vmem [resolvable:$true] %s1036
          %1039 = dma.hbm_to_vmem [thread:$0]  %s1034, 64, %s1037, %s1025
        $region80: #{video_forward.2} parent=15 // pred_fallthru
          _
        // Predicated region
        $region81: #{video_forward.2} parent=15 // pred_check
          %p1040 = pneg %p511
        $region82: #{video_forward.2} parent=15 // pred_check_branch
          %1042 = sbr.rel (%p1040) target = $region84
        $region83: #{video_forward.2} parent=15 // pred_region
          %s1043 = sand.u32 %s65, 1
          %s1044 = scalar_lea.sflag [#allocation17], %s1043
          %s1045 = sand.u32 %s501, 1
          %s1046 = smul.addr %s1045, 256
          %s1047 = scalar_lea.vmem [#allocation18], %s1046
          %s1049 = ssub.s32 4096, 4096
          %1050 = vsyncadd %s1044, %s1049
          %s1051 = smul.addr %s65, 64
          %s1052 = smul.addr %s1051, 64
          %s1053 = scalar_lea.hbm %s16, %s1052
          %s1054 = sshll.u32 %s1047, 4
          %s1055 = int_to_ptr.vmem [resolvable:$true] %s1054
          %1060 = dma.hbm_to_vmem [thread:$0]  %s1053, 4096, %s1055, %s1044, 64, 64, 4
        $region84: #{video_forward.2} parent=15 // pred_fallthru
          _
        // Predicated region
        $region85: #{video_forward.2} parent=15 // pred_check
          %p1061 = pneg %p537
        $region86: #{video_forward.2} parent=15 // pred_check_branch
          %1063 = sbr.rel (%p1061) target = $region88
        $region87: #{video_forward.2} parent=15 // pred_region
          %s1064 = sand.u32 %s65, 1
          %s1065 = scalar_lea.sflag [#allocation20], %s1064
          %s1066 = sand.u32 %s527, 1
          %s1067 = scalar_lea.vmem [#allocation19], %s1066
          %s1069 = ssub.s32 16, 16
          %1070 = vsyncadd %s1065, %s1069
          %s1071 = smul.addr %s65, 16
          %s1072 = scalar_lea.hbm %s17, %s1071
          %s1074 = sshll.u32 %s1067, 4
          %s1075 = int_to_ptr.vmem [resolvable:$true] %s1074
          %1077 = dma.hbm_to_vmem [thread:$0]  %s1072, 16, %s1075, %s1065
        $region88: #{video_forward.2} parent=15 // pred_fallthru
          _
        // Predicated region
        $region89: #{video_forward.2} parent=15 // pred_check
          %p1078 = pneg %p563
        $region90: #{video_forward.2} parent=15 // pred_check_branch
          %1080 = sbr.rel (%p1078) target = $region92
        $region91: #{video_forward.2} parent=15 // pred_region
          %s1081 = sand.u32 %s65, 1
          %s1082 = scalar_lea.sflag [#allocation20], %s1081
          %s1083 = sand.u32 %s553, 1
          %s1084 = scalar_lea.vmem [#allocation21], %s1083
          %s1086 = ssub.s32 16, 16
          %1087 = vsyncadd %s1082, %s1086
          %s1088 = smul.addr %s65, 16
          %s1089 = scalar_lea.hbm %s18, %s1088
          %s1091 = sshll.u32 %s1084, 4
          %s1092 = int_to_ptr.vmem [resolvable:$true] %s1091
          %1094 = dma.hbm_to_vmem [thread:$0]  %s1089, 16, %s1092, %s1082
        $region92: #{video_forward.2} parent=15 // pred_fallthru
          _
        // Predicated region
        $region93: #{video_forward.2} parent=15 // pred_check
          %p1095 = pneg %p589
        $region94: #{video_forward.2} parent=15 // pred_check_branch
          %1097 = sbr.rel (%p1095) target = $region96
        $region95: #{video_forward.2} parent=15 // pred_region
          %s1098 = sand.u32 %s65, 1
          %s1099 = scalar_lea.sflag [#allocation23], %s1098
          %s1100 = sand.u32 %s579, 1
          %s1101 = scalar_lea.vmem [#allocation22], %s1100
          %s1103 = ssub.s32 16, 16
          %1104 = vsyncadd %s1099, %s1103
          %s1105 = smul.addr %s65, 16
          %s1106 = scalar_lea.hbm %s19, %s1105
          %s1108 = sshll.u32 %s1101, 4
          %s1109 = int_to_ptr.vmem [resolvable:$true] %s1108
          %1111 = dma.hbm_to_vmem [thread:$0]  %s1106, 16, %s1109, %s1099
        $region96: #{video_forward.2} parent=15 // pred_fallthru
          _
        // Predicated region
        $region97: #{video_forward.2} parent=15 // pred_check
          %p1112 = pneg %p615
        $region98: #{video_forward.2} parent=15 // pred_check_branch
          %1114 = sbr.rel (%p1112) target = $region100
        $region99: #{video_forward.2} parent=15 // pred_region
          %s1115 = sand.u32 %s65, 1
          %s1116 = scalar_lea.sflag [#allocation23], %s1115
          %s1117 = sand.u32 %s605, 1
          %s1118 = smul.addr %s1117, 64
          %s1119 = scalar_lea.vmem [#allocation24], %s1118
          %s1121 = ssub.s32 1024, 1024
          %1122 = vsyncadd %s1116, %s1121
          %s1123 = smul.addr %s65, 16
          %s1124 = smul.addr %s1123, 64
          %s1125 = scalar_lea.hbm %s20, %s1124
          %s1126 = sshll.u32 %s1119, 4
          %s1127 = int_to_ptr.vmem [resolvable:$true] %s1126
          %1132 = dma.hbm_to_vmem [thread:$0]  %s1125, 1024, %s1127, %s1116, 64, 64, 4
        $region100: #{video_forward.2} parent=15 // pred_fallthru
          _
        // Predicated region
        $region101: #{video_forward.2} parent=15 // pred_check
          %p1133 = pneg %p641
        $region102: #{video_forward.2} parent=15 // pred_check_branch
          %1135 = sbr.rel (%p1133) target = $region104
        $region103: #{video_forward.2} parent=15 // pred_region
          %s1136 = sand.u32 %s65, 1
          %s1137 = scalar_lea.sflag [#allocation26], %s1136
          %s1138 = sand.u32 %s631, 1
          %s1139 = scalar_lea.vmem [#allocation25], %s1138
          %s1141 = ssub.s32 16, 16
          %1142 = vsyncadd %s1137, %s1141
          %s1143 = smul.addr %s65, 16
          %s1144 = scalar_lea.hbm %s21, %s1143
          %s1146 = sshll.u32 %s1139, 4
          %s1147 = int_to_ptr.vmem [resolvable:$true] %s1146
          %1149 = dma.hbm_to_vmem [thread:$0]  %s1144, 16, %s1147, %s1137
        $region104: #{video_forward.2} parent=15 // pred_fallthru
          _
        // Predicated region
        $region105: #{video_forward.2} parent=15 // pred_check
          %p1150 = pneg %p667
        $region106: #{video_forward.2} parent=15 // pred_check_branch
          %1152 = sbr.rel (%p1150) target = $region108
        $region107: #{video_forward.2} parent=15 // pred_region
          %s1153 = sand.u32 %s65, 1
          %s1154 = scalar_lea.sflag [#allocation26], %s1153
          %s1155 = sand.u32 %s657, 1
          %s1156 = smul.addr %s1155, 64
          %s1157 = scalar_lea.vmem [#allocation27], %s1156
          %s1159 = ssub.s32 1024, 1024
          %1160 = vsyncadd %s1154, %s1159
          %s1161 = smul.addr %s65, 16
          %s1162 = smul.addr %s1161, 64
          %s1163 = scalar_lea.hbm %s22, %s1162
          %s1164 = sshll.u32 %s1157, 4
          %s1165 = int_to_ptr.vmem [resolvable:$true] %s1164
          %1170 = dma.hbm_to_vmem [thread:$0]  %s1163, 1024, %s1165, %s1154, 64, 64, 4
        $region108: #{video_forward.2} parent=15 // pred_fallthru
          _
        // Predicated region
        $region109: #{video_forward.2} parent=15 // pred_check
          %p1171 = pneg %p693
        $region110: #{video_forward.2} parent=15 // pred_check_branch
          %1173 = sbr.rel (%p1171) target = $region112
        $region111: #{video_forward.2} parent=15 // pred_region
          %s1174 = sand.u32 %s65, 1
          %s1175 = scalar_lea.sflag [#allocation29], %s1174
          %s1176 = sand.u32 %s683, 1
          %s1177 = scalar_lea.vmem [#allocation28], %s1176
          %s1179 = ssub.s32 16, 16
          %1180 = vsyncadd %s1175, %s1179
          %s1181 = smul.addr %s65, 16
          %s1182 = scalar_lea.hbm %s23, %s1181
          %s1184 = sshll.u32 %s1177, 4
          %s1185 = int_to_ptr.vmem [resolvable:$true] %s1184
          %1187 = dma.hbm_to_vmem [thread:$0]  %s1182, 16, %s1185, %s1175
        $region112: #{video_forward.2} parent=15 // pred_fallthru
          _
        // Predicated region
        $region113: #{video_forward.2} parent=15 // pred_check
          %p1188 = pneg %p719
        $region114: #{video_forward.2} parent=15 // pred_check_branch
          %1190 = sbr.rel (%p1188) target = $region116
        $region115: #{video_forward.2} parent=15 // pred_region
          %s1191 = sand.u32 %s65, 1
          %s1192 = scalar_lea.sflag [#allocation29], %s1191
          %s1193 = sand.u32 %s709, 1
          %s1194 = scalar_lea.vmem [#allocation30], %s1193
          %s1196 = ssub.s32 16, 16
          %1197 = vsyncadd %s1192, %s1196
          %s1198 = smul.addr %s65, 16
          %s1199 = scalar_lea.hbm %s24, %s1198
          %s1201 = sshll.u32 %s1194, 4
          %s1202 = int_to_ptr.vmem [resolvable:$true] %s1201
          %1204 = dma.hbm_to_vmem [thread:$0]  %s1199, 16, %s1202, %s1192
        $region116: #{video_forward.2} parent=15 // pred_fallthru
          _
        // Predicated region
        $region117: #{video_forward.2} parent=15 // pred_check
          %p1205 = pneg %p745
        $region118: #{video_forward.2} parent=15 // pred_check_branch
          %1207 = sbr.rel (%p1205) target = $region120
        $region119: #{video_forward.2} parent=15 // pred_region
          %s1208 = sand.u32 %s735, 1
          %s1209 = scalar_lea.sflag [#allocation32], %s1208
          %s1210 = sand.u32 %s735, 1
          %s1211 = scalar_lea.vmem [#allocation31], %s1210
          %s1213 = ssub.s32 16, 16
          %1214 = vsyncadd %s1209, %s1213
          %s1215 = smul.addr %s65, 16
          %s1216 = scalar_lea.hbm %s25, %s1215
          %s1218 = sshll.u32 %s1211, 4
          %s1219 = int_to_ptr.vmem [resolvable:$true] %s1218
          %1221 = dma.hbm_to_vmem [thread:$0]  %s1216, 16, %s1219, %s1209
        $region120: #{video_forward.2} parent=15 // pred_fallthru
          _
      $region16: #{video_forward.2} parent=5 // pred_fallthru
        _
      %p1222 = scmp.le.s32.totalorder 1, %s65
      %p1223 = scmp.lt.s32.totalorder %s65, 3
      %p1224 = pnand %p1222, %p1223
      %p1225 = pneg %p1224
      // Predicated region
      $region121: #{video_forward.2} parent=5 // pred_check
        _
      $region122: #{video_forward.2} parent=5 // pred_check_branch
        %1227 = sbr.rel (%p1224) target = $region124
      $region123: #{video_forward.2} parent=5 // pred_region
        %s1228 = ssub.s32 %s65, 1
        %s1229 = sand.u32 %s158, 1
        %s1230 = scalar_lea.sflag [#allocation3], %s1229
        %s1231 = sand.u32 %s158, 1
        %s1232 = scalar_lea.vmem [#allocation2], %s1231
        // Predicated region
        $region125: #{video_forward.2} parent=123 // pred_check
          %p1233 = pneg %p171
        $region126: #{video_forward.2} parent=123 // pred_check_branch
          %1235 = sbr.rel (%p1233) target = $region128
        $region127: #{video_forward.2} parent=123 // pred_region
          %1236 = dma.done %s1230, 16
        $region128: #{video_forward.2} parent=123 // pred_fallthru
          _
        %s1237 = sand.u32 %s70, 1
        %s1238 = scalar_lea.sflag [#allocation5], %s1237
        %s1239 = sand.u32 %s210, 1
        %s1240 = scalar_lea.vmem [#allocation4], %s1239
        // Predicated region
        $region129: #{video_forward.2} parent=123 // pred_check
          %p1241 = pneg %p223
        $region130: #{video_forward.2} parent=123 // pred_check_branch
          %1243 = sbr.rel (%p1241) target = $region132
        $region131: #{video_forward.2} parent=123 // pred_region
          %1244 = dma.done %s1238, 16
        $region132: #{video_forward.2} parent=123 // pred_fallthru
          _
        %s1245 = sand.u32 %s70, 1
        %s1246 = scalar_lea.sflag [#allocation5], %s1245
        %s1247 = sand.u32 %s266, 1
        %s1248 = scalar_lea.vmem [#allocation6], %s1247
        // Predicated region
        $region133: #{video_forward.2} parent=123 // pred_check
          %p1249 = pneg %p279
        $region134: #{video_forward.2} parent=123 // pred_check_branch
          %1251 = sbr.rel (%p1249) target = $region136
        $region135: #{video_forward.2} parent=123 // pred_region
          %1252 = dma.done %s1246, 16
        $region136: #{video_forward.2} parent=123 // pred_fallthru
          _
        %s1253 = sand.u32 %s70, 1
        %s1254 = scalar_lea.sflag [#allocation8], %s1253
        %s1255 = sand.u32 %s322, 1
        %s1256 = scalar_lea.vmem [#allocation7], %s1255
        // Predicated region
        $region137: #{video_forward.2} parent=123 // pred_check
          %p1257 = pneg %p335
        $region138: #{video_forward.2} parent=123 // pred_check_branch
          %1259 = sbr.rel (%p1257) target = $region140
        $region139: #{video_forward.2} parent=123 // pred_region
          %1260 = dma.done %s1254, 16
        $region140: #{video_forward.2} parent=123 // pred_fallthru
          _
        %s1261 = sand.u32 %s70, 1
        %s1262 = scalar_lea.sflag [#allocation8], %s1261
        %s1263 = sand.u32 %s348, 1
        %s1264 = smul.addr %s1263, 256
        %s1265 = scalar_lea.vmem [#allocation9], %s1264
        // Predicated region
        $region141: #{video_forward.2} parent=123 // pred_check
          %p1266 = pneg %p361
        $region142: #{video_forward.2} parent=123 // pred_check_branch
          %1268 = sbr.rel (%p1266) target = $region144
        $region143: #{video_forward.2} parent=123 // pred_region
          %1269 = dma.done %s1262, 4096
        $region144: #{video_forward.2} parent=123 // pred_fallthru
          _
        %s1270 = sand.u32 %s70, 1
        %s1271 = scalar_lea.sflag [#allocation11], %s1270
        %s1272 = sand.u32 %s374, 1
        %s1273 = smul.addr %s1272, 4
        %s1274 = scalar_lea.vmem [#allocation10], %s1273
        // Predicated region
        $region145: #{video_forward.2} parent=123 // pred_check
          %p1275 = pneg %p387
        $region146: #{video_forward.2} parent=123 // pred_check_branch
          %1277 = sbr.rel (%p1275) target = $region148
        $region147: #{video_forward.2} parent=123 // pred_region
          %1278 = dma.done %s1271, 64
        $region148: #{video_forward.2} parent=123 // pred_fallthru
          _
        %s1279 = sand.u32 %s70, 1
        %s1280 = scalar_lea.sflag [#allocation11], %s1279
        %s1281 = sand.u32 %s400, 1
        %s1282 = smul.addr %s1281, 256
        %s1283 = scalar_lea.vmem [#allocation12], %s1282
        // Predicated region
        $region149: #{video_forward.2} parent=123 // pred_check
          %p1284 = pneg %p413
        $region150: #{video_forward.2} parent=123 // pred_check_branch
          %1286 = sbr.rel (%p1284) target = $region152
        $region151: #{video_forward.2} parent=123 // pred_region
          %1287 = dma.done %s1280, 4096
        $region152: #{video_forward.2} parent=123 // pred_fallthru
          _
        %s1288 = sand.u32 %s70, 1
        %s1289 = scalar_lea.sflag [#allocation14], %s1288
        %s1290 = sand.u32 %s426, 1
        %s1291 = smul.addr %s1290, 4
        %s1292 = scalar_lea.vmem [#allocation13], %s1291
        // Predicated region
        $region153: #{video_forward.2} parent=123 // pred_check
          %p1293 = pneg %p439
        $region154: #{video_forward.2} parent=123 // pred_check_branch
          %1295 = sbr.rel (%p1293) target = $region156
        $region155: #{video_forward.2} parent=123 // pred_region
          %1296 = dma.done %s1289, 64
        $region156: #{video_forward.2} parent=123 // pred_fallthru
          _
        %s1297 = sand.u32 %s70, 1
        %s1298 = scalar_lea.sflag [#allocation14], %s1297
        %s1299 = sand.u32 %s452, 1
        %s1300 = smul.addr %s1299, 256
        %s1301 = scalar_lea.vmem [#allocation15], %s1300
        // Predicated region
        $region157: #{video_forward.2} parent=123 // pred_check
          %p1302 = pneg %p465
        $region158: #{video_forward.2} parent=123 // pred_check_branch
          %1304 = sbr.rel (%p1302) target = $region160
        $region159: #{video_forward.2} parent=123 // pred_region
          %1305 = dma.done %s1298, 4096
        $region160: #{video_forward.2} parent=123 // pred_fallthru
          _
        %s1306 = sand.u32 %s70, 1
        %s1307 = scalar_lea.sflag [#allocation17], %s1306
        %s1308 = sand.u32 %s478, 1
        %s1309 = smul.addr %s1308, 4
        %s1310 = scalar_lea.vmem [#allocation16], %s1309
        // Predicated region
        $region161: #{video_forward.2} parent=123 // pred_check
          %p1311 = pneg %p491
        $region162: #{video_forward.2} parent=123 // pred_check_branch
          %1313 = sbr.rel (%p1311) target = $region164
        $region163: #{video_forward.2} parent=123 // pred_region
          %1314 = dma.done %s1307, 64
        $region164: #{video_forward.2} parent=123 // pred_fallthru
          _
        %s1315 = sand.u32 %s70, 1
        %s1316 = scalar_lea.sflag [#allocation17], %s1315
        %s1317 = sand.u32 %s504, 1
        %s1318 = smul.addr %s1317, 256
        %s1319 = scalar_lea.vmem [#allocation18], %s1318
        // Predicated region
        $region165: #{video_forward.2} parent=123 // pred_check
          %p1320 = pneg %p517
        $region166: #{video_forward.2} parent=123 // pred_check_branch
          %1322 = sbr.rel (%p1320) target = $region168
        $region167: #{video_forward.2} parent=123 // pred_region
          %1323 = dma.done %s1316, 4096
        $region168: #{video_forward.2} parent=123 // pred_fallthru
          _
        %s1324 = sand.u32 %s70, 1
        %s1325 = scalar_lea.sflag [#allocation20], %s1324
        %s1326 = sand.u32 %s530, 1
        %s1327 = scalar_lea.vmem [#allocation19], %s1326
        // Predicated region
        $region169: #{video_forward.2} parent=123 // pred_check
          %p1328 = pneg %p543
        $region170: #{video_forward.2} parent=123 // pred_check_branch
          %1330 = sbr.rel (%p1328) target = $region172
        $region171: #{video_forward.2} parent=123 // pred_region
          %1331 = dma.done %s1325, 16
        $region172: #{video_forward.2} parent=123 // pred_fallthru
          _
        %s1332 = sand.u32 %s70, 1
        %s1333 = scalar_lea.sflag [#allocation20], %s1332
        %s1334 = sand.u32 %s556, 1
        %s1335 = scalar_lea.vmem [#allocation21], %s1334
        // Predicated region
        $region173: #{video_forward.2} parent=123 // pred_check
          %p1336 = pneg %p569
        $region174: #{video_forward.2} parent=123 // pred_check_branch
          %1338 = sbr.rel (%p1336) target = $region176
        $region175: #{video_forward.2} parent=123 // pred_region
          %1339 = dma.done %s1333, 16
        $region176: #{video_forward.2} parent=123 // pred_fallthru
          _
        %s1340 = sand.u32 %s70, 1
        %s1341 = scalar_lea.sflag [#allocation23], %s1340
        %s1342 = sand.u32 %s582, 1
        %s1343 = scalar_lea.vmem [#allocation22], %s1342
        // Predicated region
        $region177: #{video_forward.2} parent=123 // pred_check
          %p1344 = pneg %p595
        $region178: #{video_forward.2} parent=123 // pred_check_branch
          %1346 = sbr.rel (%p1344) target = $region180
        $region179: #{video_forward.2} parent=123 // pred_region
          %1347 = dma.done %s1341, 16
        $region180: #{video_forward.2} parent=123 // pred_fallthru
          _
        %s1348 = sand.u32 %s70, 1
        %s1349 = scalar_lea.sflag [#allocation23], %s1348
        %s1350 = sand.u32 %s608, 1
        %s1351 = smul.addr %s1350, 64
        %s1352 = scalar_lea.vmem [#allocation24], %s1351
        // Predicated region
        $region181: #{video_forward.2} parent=123 // pred_check
          %p1353 = pneg %p621
        $region182: #{video_forward.2} parent=123 // pred_check_branch
          %1355 = sbr.rel (%p1353) target = $region184
        $region183: #{video_forward.2} parent=123 // pred_region
          %1356 = dma.done %s1349, 1024
        $region184: #{video_forward.2} parent=123 // pred_fallthru
          _
        %s1357 = sand.u32 %s70, 1
        %s1358 = scalar_lea.sflag [#allocation26], %s1357
        %s1359 = sand.u32 %s634, 1
        %s1360 = scalar_lea.vmem [#allocation25], %s1359
        // Predicated region
        $region185: #{video_forward.2} parent=123 // pred_check
          %p1361 = pneg %p647
        $region186: #{video_forward.2} parent=123 // pred_check_branch
          %1363 = sbr.rel (%p1361) target = $region188
        $region187: #{video_forward.2} parent=123 // pred_region
          %1364 = dma.done %s1358, 16
        $region188: #{video_forward.2} parent=123 // pred_fallthru
          _
        %s1365 = sand.u32 %s70, 1
        %s1366 = scalar_lea.sflag [#allocation26], %s1365
        %s1367 = sand.u32 %s660, 1
        %s1368 = smul.addr %s1367, 64
        %s1369 = scalar_lea.vmem [#allocation27], %s1368
        // Predicated region
        $region189: #{video_forward.2} parent=123 // pred_check
          %p1370 = pneg %p673
        $region190: #{video_forward.2} parent=123 // pred_check_branch
          %1372 = sbr.rel (%p1370) target = $region192
        $region191: #{video_forward.2} parent=123 // pred_region
          %1373 = dma.done %s1366, 1024
        $region192: #{video_forward.2} parent=123 // pred_fallthru
          _
        %s1374 = sand.u32 %s70, 1
        %s1375 = scalar_lea.sflag [#allocation29], %s1374
        %s1376 = sand.u32 %s686, 1
        %s1377 = scalar_lea.vmem [#allocation28], %s1376
        // Predicated region
        $region193: #{video_forward.2} parent=123 // pred_check
          %p1378 = pneg %p699
        $region194: #{video_forward.2} parent=123 // pred_check_branch
          %1380 = sbr.rel (%p1378) target = $region196
        $region195: #{video_forward.2} parent=123 // pred_region
          %1381 = dma.done %s1375, 16
        $region196: #{video_forward.2} parent=123 // pred_fallthru
          _
        %s1382 = sand.u32 %s70, 1
        %s1383 = scalar_lea.sflag [#allocation29], %s1382
        %s1384 = sand.u32 %s712, 1
        %s1385 = scalar_lea.vmem [#allocation30], %s1384
        // Predicated region
        $region197: #{video_forward.2} parent=123 // pred_check
          %p1386 = pneg %p725
        $region198: #{video_forward.2} parent=123 // pred_check_branch
          %1388 = sbr.rel (%p1386) target = $region200
        $region199: #{video_forward.2} parent=123 // pred_region
          %1389 = dma.done %s1383, 16
        $region200: #{video_forward.2} parent=123 // pred_fallthru
          _
        %s1390 = sand.u32 %s738, 1
        %s1391 = scalar_lea.sflag [#allocation32], %s1390
        %s1392 = sand.u32 %s738, 1
        %s1393 = scalar_lea.vmem [#allocation31], %s1392
        // Predicated region
        $region201: #{video_forward.2} parent=123 // pred_check
          %p1394 = pneg %p751
        $region202: #{video_forward.2} parent=123 // pred_check_branch
          %1396 = sbr.rel (%p1394) target = $region204
        $region203: #{video_forward.2} parent=123 // pred_region
          %1397 = dma.done %s1391, 16
        $region204: #{video_forward.2} parent=123 // pred_fallthru
          _
        %p1398 = scmp.lt.s32.totalorder %s70, 1
        %s1399 = scalar_select %p1398, %s70, 1
        %s1400 = smul.addr %s1399, 16
        %s1401 = smul.addr %s1400, 8
        %s1402 = scalar_lea.vmem %s0, %s1401
        %p1403 = pneg %p91
        %p1404 = pneg %p88
        %s1405 = ssub.s32 1, %s70
        %p1406 = scmp.lt.s32.totalorder %s1405, 1
        %s1407 = scalar_select %p1406, %s1405, 1
        %s1408 = smul.addr %s1407, 16
        %s1409 = smul.addr %s1408, 8
        %s1410 = scalar_lea.vmem %s1, %s1409
        %p1411 = pneg %p119
        %p1412 = pneg %p116
        %p1413 = scmp.lt.s32.totalorder %s70, 1
        %s1414 = scalar_select %p1413, %s70, 1
        %s1415 = smul.addr %s1414, 64
        %s1416 = smul.addr %s1415, 4
        %s1417 = scalar_lea.vmem %s2, %s1416
        %p1418 = pneg %p145
        %p1419 = pneg %p142
        %s1420 = sand.u32 %s158, 1
        %s1421 = scalar_lea.sflag [#allocation3], %s1420
        %s1422 = sand.u32 %s158, 1
        %s1423 = scalar_lea.vmem [#allocation2], %s1422
        %p1424 = pneg %p171
        %p1425 = pneg %p168
        %p1426 = scmp.lt.s32.totalorder %s70, 1
        %s1427 = scalar_select %p1426, %s70, 1
        %s1428 = smul.addr %s1427, 16
        %s1429 = smul.addr %s1428, 4
        %s1430 = scalar_lea.vmem %s4, %s1429
        %p1431 = pneg %p197
        %p1432 = pneg %p194
        %s1433 = sand.u32 %s70, 1
        %s1434 = scalar_lea.sflag [#allocation5], %s1433
        %s1435 = sand.u32 %s210, 1
        %s1436 = scalar_lea.vmem [#allocation4], %s1435
        %p1437 = pneg %p223
        %p1438 = pneg %p220
        %s1439 = ssub.s32 1, %s70
        %p1440 = scmp.lt.s32.totalorder %s1439, 1
        %s1441 = scalar_select %p1440, %s1439, 1
        %s1442 = smul.addr %s1441, 64
        %s1443 = smul.addr %s1442, 4
        %s1444 = scalar_lea.vmem %s6, %s1443
        %p1445 = pneg %p251
        %p1446 = pneg %p248
        %s1447 = sand.u32 %s70, 1
        %s1448 = scalar_lea.sflag [#allocation5], %s1447
        %s1449 = sand.u32 %s266, 1
        %s1450 = scalar_lea.vmem [#allocation6], %s1449
        %p1451 = pneg %p279
        %p1452 = pneg %p276
        %s1453 = ssub.s32 1, %s70
        %p1454 = scmp.lt.s32.totalorder %s1453, 1
        %s1455 = scalar_select %p1454, %s1453, 1
        %s1456 = smul.addr %s1455, 16
        %s1457 = smul.addr %s1456, 4
        %s1458 = scalar_lea.vmem %s8, %s1457
        %p1459 = pneg %p307
        %p1460 = pneg %p304
        %s1461 = sand.u32 %s70, 1
        %s1462 = scalar_lea.sflag [#allocation8], %s1461
        %s1463 = sand.u32 %s322, 1
        %s1464 = scalar_lea.vmem [#allocation7], %s1463
        %p1465 = pneg %p335
        %p1466 = pneg %p332
        %s1467 = sand.u32 %s70, 1
        %s1468 = scalar_lea.sflag [#allocation8], %s1467
        %s1469 = sand.u32 %s348, 1
        %s1470 = smul.addr %s1469, 256
        %s1471 = scalar_lea.vmem [#allocation9], %s1470
        %p1472 = pneg %p361
        %p1473 = pneg %p358
        %s1474 = sand.u32 %s70, 1
        %s1475 = scalar_lea.sflag [#allocation11], %s1474
        %s1476 = sand.u32 %s374, 1
        %s1477 = smul.addr %s1476, 4
        %s1478 = scalar_lea.vmem [#allocation10], %s1477
        %p1479 = pneg %p387
        %p1480 = pneg %p384
        %s1481 = sand.u32 %s70, 1
        %s1482 = scalar_lea.sflag [#allocation11], %s1481
        %s1483 = sand.u32 %s400, 1
        %s1484 = smul.addr %s1483, 256
        %s1485 = scalar_lea.vmem [#allocation12], %s1484
        %p1486 = pneg %p413
        %p1487 = pneg %p410
        %s1488 = sand.u32 %s70, 1
        %s1489 = scalar_lea.sflag [#allocation14], %s1488
        %s1490 = sand.u32 %s426, 1
        %s1491 = smul.addr %s1490, 4
        %s1492 = scalar_lea.vmem [#allocation13], %s1491
        %p1493 = pneg %p439
        %p1494 = pneg %p436
        %s1495 = sand.u32 %s70, 1
        %s1496 = scalar_lea.sflag [#allocation14], %s1495
        %s1497 = sand.u32 %s452, 1
        %s1498 = smul.addr %s1497, 256
        %s1499 = scalar_lea.vmem [#allocation15], %s1498
        %p1500 = pneg %p465
        %p1501 = pneg %p462
        %s1502 = sand.u32 %s70, 1
        %s1503 = scalar_lea.sflag [#allocation17], %s1502
        %s1504 = sand.u32 %s478, 1
        %s1505 = smul.addr %s1504, 4
        %s1506 = scalar_lea.vmem [#allocation16], %s1505
        %p1507 = pneg %p491
        %p1508 = pneg %p488
        %s1509 = sand.u32 %s70, 1
        %s1510 = scalar_lea.sflag [#allocation17], %s1509
        %s1511 = sand.u32 %s504, 1
        %s1512 = smul.addr %s1511, 256
        %s1513 = scalar_lea.vmem [#allocation18], %s1512
        %p1514 = pneg %p517
        %p1515 = pneg %p514
        %s1516 = sand.u32 %s70, 1
        %s1517 = scalar_lea.sflag [#allocation20], %s1516
        %s1518 = sand.u32 %s530, 1
        %s1519 = scalar_lea.vmem [#allocation19], %s1518
        %p1520 = pneg %p543
        %p1521 = pneg %p540
        %s1522 = sand.u32 %s70, 1
        %s1523 = scalar_lea.sflag [#allocation20], %s1522
        %s1524 = sand.u32 %s556, 1
        %s1525 = scalar_lea.vmem [#allocation21], %s1524
        %p1526 = pneg %p569
        %p1527 = pneg %p566
        %s1528 = sand.u32 %s70, 1
        %s1529 = scalar_lea.sflag [#allocation23], %s1528
        %s1530 = sand.u32 %s582, 1
        %s1531 = scalar_lea.vmem [#allocation22], %s1530
        %p1532 = pneg %p595
        %p1533 = pneg %p592
        %s1534 = sand.u32 %s70, 1
        %s1535 = scalar_lea.sflag [#allocation23], %s1534
        %s1536 = sand.u32 %s608, 1
        %s1537 = smul.addr %s1536, 64
        %s1538 = scalar_lea.vmem [#allocation24], %s1537
        %p1539 = pneg %p621
        %p1540 = pneg %p618
        %s1541 = sand.u32 %s70, 1
        %s1542 = scalar_lea.sflag [#allocation26], %s1541
        %s1543 = sand.u32 %s634, 1
        %s1544 = scalar_lea.vmem [#allocation25], %s1543
        %p1545 = pneg %p647
        %p1546 = pneg %p644
        %s1547 = sand.u32 %s70, 1
        %s1548 = scalar_lea.sflag [#allocation26], %s1547
        %s1549 = sand.u32 %s660, 1
        %s1550 = smul.addr %s1549, 64
        %s1551 = scalar_lea.vmem [#allocation27], %s1550
        %p1552 = pneg %p673
        %p1553 = pneg %p670
        %s1554 = sand.u32 %s70, 1
        %s1555 = scalar_lea.sflag [#allocation29], %s1554
        %s1556 = sand.u32 %s686, 1
        %s1557 = scalar_lea.vmem [#allocation28], %s1556
        %p1558 = pneg %p699
        %p1559 = pneg %p696
        %s1560 = sand.u32 %s70, 1
        %s1561 = scalar_lea.sflag [#allocation29], %s1560
        %s1562 = sand.u32 %s712, 1
        %s1563 = scalar_lea.vmem [#allocation30], %s1562
        %p1564 = pneg %p725
        %p1565 = pneg %p722
        %s1566 = sand.u32 %s738, 1
        %s1567 = scalar_lea.sflag [#allocation32], %s1566
        %s1568 = sand.u32 %s738, 1
        %s1569 = scalar_lea.vmem [#allocation31], %s1568
        %p1570 = pneg %p751
        %p1571 = pneg %p748
        %p1572 = pneg %p777
        %p1573 = pneg %p774
        %p1574 = scmp.lt.s32.totalorder %s70, 1
        %s1575 = scalar_select %p1574, %s70, 1
        %s1576 = smul.addr %s1575, 2
        %s1577 = scalar_lea.vmem %s26, %s1576
        %p1578 = scmp.lt.s32.totalorder %s70, 1
        %s1579 = scalar_select %p1578, %s70, 1
        %s1580 = smul.addr %s1579, 16
        %s1581 = smul.addr %s1580, 8
        %s1582 = scalar_lea.vmem %s0, %s1581
        %s1583 = ssub.s32 1, %s70
        %p1584 = scmp.lt.s32.totalorder %s1583, 1
        %s1585 = scalar_select %p1584, %s1583, 1
        %s1586 = smul.addr %s1585, 16
        %s1587 = smul.addr %s1586, 8
        %s1588 = scalar_lea.vmem %s1, %s1587
        %s1589 = ssub.s32 1, %s70
        %p1590 = scmp.lt.s32.totalorder %s70, 1
        %s1591 = scalar_select %p1590, %s70, 1
        %s1592 = smul.addr %s1591, 64
        %s1593 = smul.addr %s1592, 4
        %s1594 = scalar_lea.vmem %s2, %s1593
        %p1595 = scmp.lt.s32.totalorder %s70, 1
        %s1596 = scalar_select %p1595, %s70, 1
        %s1597 = smul.addr %s1596, 16
        %s1598 = smul.addr %s1597, 4
        %s1599 = scalar_lea.vmem %s4, %s1598
        %s1600 = ssub.s32 1, %s70
        %p1601 = scmp.lt.s32.totalorder %s1600, 1
        %s1602 = scalar_select %p1601, %s1600, 1
        %s1603 = smul.addr %s1602, 64
        %s1604 = smul.addr %s1603, 4
        %s1605 = scalar_lea.vmem %s6, %s1604
        %s1606 = ssub.s32 1, %s70
        %s1607 = ssub.s32 1, %s70
        %s1608 = ssub.s32 1, %s70
        %p1609 = scmp.lt.s32.totalorder %s1608, 1
        %s1610 = scalar_select %p1609, %s1608, 1
        %s1611 = smul.addr %s1610, 16
        %s1612 = smul.addr %s1611, 4
        %s1613 = scalar_lea.vmem %s8, %s1612
        %s1614 = ssub.s32 1, %s70
        %s1615 = ssub.s32 1, %s70
        %p1616 = scmp.lt.s32.totalorder %s70, 1
        %s1617 = scalar_select %p1616, %s70, 1
        %s1618 = smul.addr %s1617, 2
        %s1619 = scalar_lea.vmem %s26, %s1618
        %p1621 = scmp.eq.s32.totalorder %s70, 0
        %s1622 = scalar_select %p1621, 16, 8
        %s1623 = scalar_select %p1621, 8, 16
        %v1624 = vld [vmem:[%s1582] sm:$0xff]
        %v1625 = vld [vmem:[%s1582 + $0x8] sm:$0xff]
        %v1626 = vld [vmem:[%s1582 + $0x10] sm:$0xff]
        %v1627 = vld [vmem:[%s1582 + $0x18] sm:$0xff]
        %v1628 = vld [vmem:[%s1582 + $0x20] sm:$0xff]
        %v1629 = vld [vmem:[%s1582 + $0x28] sm:$0xff]
        %v1630 = vld [vmem:[%s1582 + $0x30] sm:$0xff]
        %v1631 = vld [vmem:[%s1582 + $0x38] sm:$0xff]
        %v1632 = vld [vmem:[%s1582 + $0x40] sm:$0xff]
        %v1633 = vld [vmem:[%s1582 + $0x48] sm:$0xff]
        %v1634 = vld [vmem:[%s1582 + $0x50] sm:$0xff]
        %v1635 = vld [vmem:[%s1582 + $0x58] sm:$0xff]
        %v1636 = vld [vmem:[%s1582 + $0x60] sm:$0xff]
        %v1637 = vld [vmem:[%s1582 + $0x68] sm:$0xff]
        %v1638 = vld [vmem:[%s1582 + $0x70] sm:$0xff]
        %v1639 = vld [vmem:[%s1582 + $0x78] sm:$0xff]
        %v1640 = vpack.c.bf16 %v1628, %v1624
        %v1641 = vpack.c.bf16 %v1629, %v1625
        %v1642 = vpack.c.bf16 %v1630, %v1626
        %v1643 = vpack.c.bf16 %v1631, %v1627
        %v1644 = vpack.c.bf16 %v1636, %v1632
        %v1645 = vpack.c.bf16 %v1637, %v1633
        %v1646 = vpack.c.bf16 %v1638, %v1634
        %v1647 = vpack.c.bf16 %v1639, %v1635
        %v1648 = vld [vmem:[%s1594] sm:$0xf]
        %v1649 = vld [vmem:[%s1594 + $0x4] sm:$0xf]
        %v1650 = vld [vmem:[%s1594 + $0x8] sm:$0xf]
        %v1651 = vld [vmem:[%s1594 + $0xc] sm:$0xf]
        %v1652 = vld [vmem:[%s1594 + $0x10] sm:$0xf]
        %v1653 = vld [vmem:[%s1594 + $0x14] sm:$0xf]
        %v1654 = vld [vmem:[%s1594 + $0x18] sm:$0xf]
        %v1655 = vld [vmem:[%s1594 + $0x1c] sm:$0xf]
        %v1656 = vld [vmem:[%s1594 + $0x20] sm:$0xf]
        %v1657 = vld [vmem:[%s1594 + $0x24] sm:$0xf]
        %v1658 = vld [vmem:[%s1594 + $0x28] sm:$0xf]
        %v1659 = vld [vmem:[%s1594 + $0x2c] sm:$0xf]
        %v1660 = vld [vmem:[%s1594 + $0x30] sm:$0xf]
        %v1661 = vld [vmem:[%s1594 + $0x34] sm:$0xf]
        %v1662 = vld [vmem:[%s1594 + $0x38] sm:$0xf]
        %v1663 = vld [vmem:[%s1594 + $0x3c] sm:$0xf]
        %v1664 = vld [vmem:[%s1594 + $0x40] sm:$0xf]
        %v1665 = vld [vmem:[%s1594 + $0x44] sm:$0xf]
        %v1666 = vld [vmem:[%s1594 + $0x48] sm:$0xf]
        %v1667 = vld [vmem:[%s1594 + $0x4c] sm:$0xf]
        %v1668 = vld [vmem:[%s1594 + $0x50] sm:$0xf]
        %v1669 = vld [vmem:[%s1594 + $0x54] sm:$0xf]
        %v1670 = vld [vmem:[%s1594 + $0x58] sm:$0xf]
        %v1671 = vld [vmem:[%s1594 + $0x5c] sm:$0xf]
        %v1672 = vld [vmem:[%s1594 + $0x60] sm:$0xf]
        %v1673 = vld [vmem:[%s1594 + $0x64] sm:$0xf]
        %v1674 = vld [vmem:[%s1594 + $0x68] sm:$0xf]
        %v1675 = vld [vmem:[%s1594 + $0x6c] sm:$0xf]
        %v1676 = vld [vmem:[%s1594 + $0x70] sm:$0xf]
        %v1677 = vld [vmem:[%s1594 + $0x74] sm:$0xf]
        %v1678 = vld [vmem:[%s1594 + $0x78] sm:$0xf]
        %v1679 = vld [vmem:[%s1594 + $0x7c] sm:$0xf]
        %v1680 = vld [vmem:[%s1594 + $0x80] sm:$0xf]
        %v1681 = vld [vmem:[%s1594 + $0x84] sm:$0xf]
        %v1682 = vld [vmem:[%s1594 + $0x88] sm:$0xf]
        %v1683 = vld [vmem:[%s1594 + $0x8c] sm:$0xf]
        %v1684 = vld [vmem:[%s1594 + $0x90] sm:$0xf]
        %v1685 = vld [vmem:[%s1594 + $0x94] sm:$0xf]
        %v1686 = vld [vmem:[%s1594 + $0x98] sm:$0xf]
        %v1687 = vld [vmem:[%s1594 + $0x9c] sm:$0xf]
        %v1688 = vld [vmem:[%s1594 + $0xa0] sm:$0xf]
        %v1689 = vld [vmem:[%s1594 + $0xa4] sm:$0xf]
        %v1690 = vld [vmem:[%s1594 + $0xa8] sm:$0xf]
        %v1691 = vld [vmem:[%s1594 + $0xac] sm:$0xf]
        %v1692 = vld [vmem:[%s1594 + $0xb0] sm:$0xf]
        %v1693 = vld [vmem:[%s1594 + $0xb4] sm:$0xf]
        %v1694 = vld [vmem:[%s1594 + $0xb8] sm:$0xf]
        %v1695 = vld [vmem:[%s1594 + $0xbc] sm:$0xf]
        %v1696 = vld [vmem:[%s1594 + $0xc0] sm:$0xf]
        %v1697 = vld [vmem:[%s1594 + $0xc4] sm:$0xf]
        %v1698 = vld [vmem:[%s1594 + $0xc8] sm:$0xf]
        %v1699 = vld [vmem:[%s1594 + $0xcc] sm:$0xf]
        %v1700 = vld [vmem:[%s1594 + $0xd0] sm:$0xf]
        %v1701 = vld [vmem:[%s1594 + $0xd4] sm:$0xf]
        %v1702 = vld [vmem:[%s1594 + $0xd8] sm:$0xf]
        %v1703 = vld [vmem:[%s1594 + $0xdc] sm:$0xf]
        %v1704 = vld [vmem:[%s1594 + $0xe0] sm:$0xf]
        %v1705 = vld [vmem:[%s1594 + $0xe4] sm:$0xf]
        %v1706 = vld [vmem:[%s1594 + $0xe8] sm:$0xf]
        %v1707 = vld [vmem:[%s1594 + $0xec] sm:$0xf]
        %v1708 = vld [vmem:[%s1594 + $0xf0] sm:$0xf]
        %v1709 = vld [vmem:[%s1594 + $0xf4] sm:$0xf]
        %v1710 = vld [vmem:[%s1594 + $0xf8] sm:$0xf]
        %v1711 = vld [vmem:[%s1594 + $0xfc] sm:$0xf]
        %v1712 = vld [vmem:[%s1232] sm:$0x1]
        %v1714 = vlaneseq
        %v1715 = vshrl.u32 %v1714, 7
        %v1716 = vsub.s32 0, %v1715
        %v1717 = vrot.slane %v1712, %v1716
        %v1783 = vunpack.c.l.b16 %v1648
        %v1784 = vunpack.c.l.b16 %v1649
        %v1785 = vunpack.c.l.b16 %v1650
        %v1786 = vunpack.c.l.b16 %v1651
        %v1787 = vunpack.c.l.b16 %v1652
        %v1788 = vunpack.c.l.b16 %v1653
        %v1789 = vunpack.c.l.b16 %v1654
        %v1790 = vunpack.c.l.b16 %v1655
        %v1791 = vunpack.c.l.b16 %v1656
        %v1792 = vunpack.c.l.b16 %v1657
        %v1793 = vunpack.c.l.b16 %v1658
        %v1794 = vunpack.c.l.b16 %v1659
        %v1795 = vunpack.c.l.b16 %v1660
        %v1796 = vunpack.c.l.b16 %v1661
        %v1797 = vunpack.c.l.b16 %v1662
        %v1798 = vunpack.c.l.b16 %v1663
        %v1799 = vunpack.c.l.b16 %v1664
        %v1800 = vunpack.c.l.b16 %v1665
        %v1801 = vunpack.c.l.b16 %v1666
        %v1802 = vunpack.c.l.b16 %v1667
        %v1803 = vunpack.c.l.b16 %v1668
        %v1804 = vunpack.c.l.b16 %v1669
        %v1805 = vunpack.c.l.b16 %v1670
        %v1806 = vunpack.c.l.b16 %v1671
        %v1807 = vunpack.c.l.b16 %v1672
        %v1808 = vunpack.c.l.b16 %v1673
        %v1809 = vunpack.c.l.b16 %v1674
        %v1810 = vunpack.c.l.b16 %v1675
        %v1811 = vunpack.c.l.b16 %v1676
        %v1812 = vunpack.c.l.b16 %v1677
        %v1813 = vunpack.c.l.b16 %v1678
        %v1814 = vunpack.c.l.b16 %v1679
        %v1815 = vunpack.c.l.b16 %v1680
        %v1816 = vunpack.c.l.b16 %v1681
        %v1817 = vunpack.c.l.b16 %v1682
        %v1818 = vunpack.c.l.b16 %v1683
        %v1819 = vunpack.c.l.b16 %v1684
        %v1820 = vunpack.c.l.b16 %v1685
        %v1821 = vunpack.c.l.b16 %v1686
        %v1822 = vunpack.c.l.b16 %v1687
        %v1823 = vunpack.c.l.b16 %v1688
        %v1824 = vunpack.c.l.b16 %v1689
        %v1825 = vunpack.c.l.b16 %v1690
        %v1826 = vunpack.c.l.b16 %v1691
        %v1827 = vunpack.c.l.b16 %v1692
        %v1828 = vunpack.c.l.b16 %v1693
        %v1829 = vunpack.c.l.b16 %v1694
        %v1830 = vunpack.c.l.b16 %v1695
        %v1831 = vunpack.c.l.b16 %v1696
        %v1832 = vunpack.c.l.b16 %v1697
        %v1833 = vunpack.c.l.b16 %v1698
        %v1834 = vunpack.c.l.b16 %v1699
        %v1835 = vunpack.c.l.b16 %v1700
        %v1836 = vunpack.c.l.b16 %v1701
        %v1837 = vunpack.c.l.b16 %v1702
        %v1838 = vunpack.c.l.b16 %v1703
        %v1839 = vunpack.c.l.b16 %v1704
        %v1840 = vunpack.c.l.b16 %v1705
        %v1841 = vunpack.c.l.b16 %v1706
        %v1842 = vunpack.c.l.b16 %v1707
        %v1843 = vunpack.c.l.b16 %v1708
        %v1844 = vunpack.c.l.b16 %v1709
        %v1845 = vunpack.c.l.b16 %v1710
        %v1846 = vunpack.c.l.b16 %v1711
        %v1847 = vpack.c.b16 %v1784, %v1783
        %v1848 = vpack.c.b16 %v1786, %v1785
        %v1849 = vpack.c.b16 %v1788, %v1787
        %v1850 = vpack.c.b16 %v1790, %v1789
        %v1851 = vpack.c.b16 %v1792, %v1791
        %v1852 = vpack.c.b16 %v1794, %v1793
        %v1853 = vpack.c.b16 %v1796, %v1795
        %v1854 = vpack.c.b16 %v1798, %v1797
        %v1855 = vpack.c.b16 %v1800, %v1799
        %v1856 = vpack.c.b16 %v1802, %v1801
        %v1857 = vpack.c.b16 %v1804, %v1803
        %v1858 = vpack.c.b16 %v1806, %v1805
        %v1859 = vpack.c.b16 %v1808, %v1807
        %v1860 = vpack.c.b16 %v1810, %v1809
        %v1861 = vpack.c.b16 %v1812, %v1811
        %v1862 = vpack.c.b16 %v1814, %v1813
        %v1863 = vpack.c.b16 %v1816, %v1815
        %v1864 = vpack.c.b16 %v1818, %v1817
        %v1865 = vpack.c.b16 %v1820, %v1819
        %v1866 = vpack.c.b16 %v1822, %v1821
        %v1867 = vpack.c.b16 %v1824, %v1823
        %v1868 = vpack.c.b16 %v1826, %v1825
        %v1869 = vpack.c.b16 %v1828, %v1827
        %v1870 = vpack.c.b16 %v1830, %v1829
        %v1871 = vpack.c.b16 %v1832, %v1831
        %v1872 = vpack.c.b16 %v1834, %v1833
        %v1873 = vpack.c.b16 %v1836, %v1835
        %v1874 = vpack.c.b16 %v1838, %v1837
        %v1875 = vpack.c.b16 %v1840, %v1839
        %v1876 = vpack.c.b16 %v1842, %v1841
        %v1877 = vpack.c.b16 %v1844, %v1843
        %v1878 = vpack.c.b16 %v1846, %v1845
        %1911 = vmatprep.subr.bf16.mxu0 0
        %1912 = vmatpush1.bf16.msra.mxu0 %v1847
        %1913 = vmatprep.subr.bf16.mxu0 0
        %1914 = vmatpush1.bf16.msra.mxu0 %v1848
        %1915 = vmatprep.subr.bf16.mxu0 0
        %1916 = vmatpush1.bf16.msra.mxu0 %v1849
        %1917 = vmatprep.subr.bf16.mxu0 0
        %1918 = vmatpush1.bf16.msra.mxu0 %v1850
        %1919 = vmatprep.subr.bf16.mxu0 0
        %1920 = vmatpush1.bf16.msra.mxu0 %v1851
        %1921 = vmatprep.subr.bf16.mxu0 0
        %1922 = vmatpush1.bf16.msra.mxu0 %v1852
        %1923 = vmatprep.subr.bf16.mxu0 0
        %1924 = vmatpush1.bf16.msra.mxu0 %v1853
        %1925 = vmatprep.subr.bf16.mxu0 0
        %1926 = vmatpush1.bf16.msra.mxu0 %v1854
        %1927 = vmatprep.subr.bf16.mxu0 0
        %1928 = vmatpush1.bf16.msra.mxu0 %v1855
        %1929 = vmatprep.subr.bf16.mxu0 0
        %1930 = vmatpush1.bf16.msra.mxu0 %v1856
        %1931 = vmatprep.subr.bf16.mxu0 0
        %1932 = vmatpush1.bf16.msra.mxu0 %v1857
        %1933 = vmatprep.subr.bf16.mxu0 0
        %1934 = vmatpush1.bf16.msra.mxu0 %v1858
        %1935 = vmatprep.subr.bf16.mxu0 0
        %1936 = vmatpush1.bf16.msra.mxu0 %v1859
        %1937 = vmatprep.subr.bf16.mxu0 0
        %1938 = vmatpush1.bf16.msra.mxu0 %v1860
        %1939 = vmatprep.subr.bf16.mxu0 0
        %1940 = vmatpush1.bf16.msra.mxu0 %v1861
        %1941 = vmatprep.subr.bf16.mxu0 0
        %1942 = vmatpush1.bf16.msra.mxu0 %v1862
        %1943 = vmatprep.mubr.bf16.mxu0 %v1641
        %1944 = vmatmul.mubr.bf16.gmra.mrb[0].mxu0 %v1640
        %v1945 = vpop.f32.mrb[0].mxu0
        %v1946 = vadd.f32 %v1717, %v1945
        %v1947 = vpop.f32.mrb[0].mxu0
        %v1948 = vpop.f32.mrb[0].mxu0
        %v1949 = vadd.f32 %v1717, %v1948
        %v1950 = vpop.f32.mrb[0].mxu0
        %1951 = vmatprep.mubr.bf16.mxu0 %v1645
        %1952 = vmatmul.mubr.bf16.gmra.mrb[0].mxu0 %v1644
        %v1953 = vpop.f32.mrb[0].mxu0
        %v1954 = vadd.f32 %v1717, %v1953
        %v1955 = vpop.f32.mrb[0].mxu0
        %v1956 = vpop.f32.mrb[0].mxu0
        %v1957 = vadd.f32 %v1717, %v1956
        %v1958 = vpop.f32.mrb[0].mxu0
        %1959 = vdwg.mxu0
        %1960 = vmatprep.subr.bf16.mxu0 0
        %1961 = vmatpush1.bf16.msra.mxu0 %v1863
        %1962 = vmatprep.subr.bf16.mxu0 0
        %1963 = vmatpush1.bf16.msra.mxu0 %v1864
        %1964 = vmatprep.subr.bf16.mxu0 0
        %1965 = vmatpush1.bf16.msra.mxu0 %v1865
        %1966 = vmatprep.subr.bf16.mxu0 0
        %1967 = vmatpush1.bf16.msra.mxu0 %v1866
        %1968 = vmatprep.subr.bf16.mxu0 0
        %1969 = vmatpush1.bf16.msra.mxu0 %v1867
        %1970 = vmatprep.subr.bf16.mxu0 0
        %1971 = vmatpush1.bf16.msra.mxu0 %v1868
        %1972 = vmatprep.subr.bf16.mxu0 0
        %1973 = vmatpush1.bf16.msra.mxu0 %v1869
        %1974 = vmatprep.subr.bf16.mxu0 0
        %1975 = vmatpush1.bf16.msra.mxu0 %v1870
        %1976 = vmatprep.subr.bf16.mxu0 0
        %1977 = vmatpush1.bf16.msra.mxu0 %v1871
        %1978 = vmatprep.subr.bf16.mxu0 0
        %1979 = vmatpush1.bf16.msra.mxu0 %v1872
        %1980 = vmatprep.subr.bf16.mxu0 0
        %1981 = vmatpush1.bf16.msra.mxu0 %v1873
        %1982 = vmatprep.subr.bf16.mxu0 0
        %1983 = vmatpush1.bf16.msra.mxu0 %v1874
        %1984 = vmatprep.subr.bf16.mxu0 0
        %1985 = vmatpush1.bf16.msra.mxu0 %v1875
        %1986 = vmatprep.subr.bf16.mxu0 0
        %1987 = vmatpush1.bf16.msra.mxu0 %v1876
        %1988 = vmatprep.subr.bf16.mxu0 0
        %1989 = vmatpush1.bf16.msra.mxu0 %v1877
        %1990 = vmatprep.subr.bf16.mxu0 0
        %1991 = vmatpush1.bf16.msra.mxu0 %v1878
        %1992 = vmatprep.mubr.bf16.mxu0 %v1643
        %1993 = vmatmul.mubr.bf16.gmra.mrb[0].mxu0 %v1642
        %v1994 = vpop.f32.mrb[0].mxu0
        %v1995 = vadd.f32 %v1946, %v1994
        %v1996 = vpop.f32.mrb[0].mxu0
        %v1997 = vpop.f32.mrb[0].mxu0
        %v1998 = vadd.f32 %v1949, %v1997
        %v1999 = vpop.f32.mrb[0].mxu0
        %2000 = vmatprep.mubr.bf16.mxu0 %v1647
        %2001 = vmatmul.mubr.bf16.gmra.mrb[0].mxu0 %v1646
        %v2002 = vpop.f32.mrb[0].mxu0
        %v2003 = vadd.f32 %v1954, %v2002
        %v2004 = vpop.f32.mrb[0].mxu0
        %v2005 = vpop.f32.mrb[0].mxu0
        %v2006 = vadd.f32 %v1957, %v2005
        %v2007 = vpop.f32.mrb[0].mxu0
        %2008 = vdwg.mxu0
        %v2009 = vmax.f32 %v1995, 0.0
        %v2010 = vmax.f32 %v1998, 0.0
        %v2011 = vmax.f32 %v2003, 0.0
        %v2012 = vmax.f32 %v2006, 0.0
        %v2013 = vpack.c.bf16 %v2010, %v2009
        %v2014 = vpack.c.bf16 %v2012, %v2011
        %v2015 = vld [vmem:[%s1599] sm:$0xf]
        %v2016 = vld [vmem:[%s1599 + $0x4] sm:$0xf]
        %v2017 = vld [vmem:[%s1599 + $0x8] sm:$0xf]
        %v2018 = vld [vmem:[%s1599 + $0xc] sm:$0xf]
        %v2019 = vld [vmem:[%s1599 + $0x10] sm:$0xf]
        %v2020 = vld [vmem:[%s1599 + $0x14] sm:$0xf]
        %v2021 = vld [vmem:[%s1599 + $0x18] sm:$0xf]
        %v2022 = vld [vmem:[%s1599 + $0x1c] sm:$0xf]
        %v2023 = vld [vmem:[%s1599 + $0x20] sm:$0xf]
        %v2024 = vld [vmem:[%s1599 + $0x24] sm:$0xf]
        %v2025 = vld [vmem:[%s1599 + $0x28] sm:$0xf]
        %v2026 = vld [vmem:[%s1599 + $0x2c] sm:$0xf]
        %v2027 = vld [vmem:[%s1599 + $0x30] sm:$0xf]
        %v2028 = vld [vmem:[%s1599 + $0x34] sm:$0xf]
        %v2029 = vld [vmem:[%s1599 + $0x38] sm:$0xf]
        %v2030 = vld [vmem:[%s1599 + $0x3c] sm:$0xf]
        %v2031 = vld [vmem:[%s1240] sm:$0x1]
        %v2033 = vlaneseq
        %v2034 = vshrl.u32 %v2033, 7
        %v2035 = vsub.s32 0, %v2034
        %v2036 = vrot.slane %v2031, %v2035
        %v2054 = vunpack.c.l.b16 %v2015
        %v2055 = vunpack.c.l.b16 %v2016
        %v2056 = vunpack.c.l.b16 %v2017
        %v2057 = vunpack.c.l.b16 %v2018
        %v2058 = vunpack.c.l.b16 %v2019
        %v2059 = vunpack.c.l.b16 %v2020
        %v2060 = vunpack.c.l.b16 %v2021
        %v2061 = vunpack.c.l.b16 %v2022
        %v2062 = vunpack.c.l.b16 %v2023
        %v2063 = vunpack.c.l.b16 %v2024
        %v2064 = vunpack.c.l.b16 %v2025
        %v2065 = vunpack.c.l.b16 %v2026
        %v2066 = vunpack.c.l.b16 %v2027
        %v2067 = vunpack.c.l.b16 %v2028
        %v2068 = vunpack.c.l.b16 %v2029
        %v2069 = vunpack.c.l.b16 %v2030
        %v2070 = vpack.c.b16 %v2055, %v2054
        %v2071 = vpack.c.b16 %v2057, %v2056
        %v2072 = vpack.c.b16 %v2059, %v2058
        %v2073 = vpack.c.b16 %v2061, %v2060
        %v2074 = vpack.c.b16 %v2063, %v2062
        %v2075 = vpack.c.b16 %v2065, %v2064
        %v2076 = vpack.c.b16 %v2067, %v2066
        %v2077 = vpack.c.b16 %v2069, %v2068
        %2086 = vmatprep.subr.bf16.mxu0 0
        %2087 = vmatpush1.bf16.msra.mxu0 %v2070
        %2088 = vmatprep.subr.bf16.mxu0 0
        %2089 = vmatpush1.bf16.msra.mxu0 %v2071
        %2090 = vmatprep.subr.bf16.mxu0 0
        %2091 = vmatpush1.bf16.msra.mxu0 %v2072
        %2092 = vmatprep.subr.bf16.mxu0 0
        %2093 = vmatpush1.bf16.msra.mxu0 %v2073
        %2094 = vmatprep.subr.bf16.mxu0 0
        %2095 = vmatpush1.bf16.msra.mxu0 %v2074
        %2096 = vmatprep.subr.bf16.mxu0 0
        %2097 = vmatpush1.bf16.msra.mxu0 %v2075
        %2098 = vmatprep.subr.bf16.mxu0 0
        %2099 = vmatpush1.bf16.msra.mxu0 %v2076
        %2100 = vmatprep.subr.bf16.mxu0 0
        %2101 = vmatpush1.bf16.msra.mxu0 %v2077
        %2102 = vmatprep.subr.bf16.mxu0 0
        %2103 = vmatpush1.bf16.msra.mxu0 0
        %2104 = vmatprep.subr.bf16.mxu0 0
        %2105 = vmatpush1.bf16.msra.mxu0 0
        %2106 = vmatprep.subr.bf16.mxu0 0
        %2107 = vmatpush1.bf16.msra.mxu0 0
        %2108 = vmatprep.subr.bf16.mxu0 0
        %2109 = vmatpush1.bf16.msra.mxu0 0
        %2110 = vmatprep.subr.bf16.mxu0 0
        %2111 = vmatpush1.bf16.msra.mxu0 0
        %2112 = vmatprep.subr.bf16.mxu0 0
        %2113 = vmatpush1.bf16.msra.mxu0 0
        %2114 = vmatprep.subr.bf16.mxu0 0
        %2115 = vmatpush1.bf16.msra.mxu0 0
        %2116 = vmatprep.subr.bf16.mxu0 0
        %2117 = vmatpush1.bf16.msra.mxu0 0
        %2118 = vmatprep.mubr.bf16.mxu0 0
        %2119 = vmatmul.mubr.bf16.gmra.mrb[0].mxu0 %v2013
        %v2120 = vpop.f32.mrb[0].mxu0
        %v2121 = vadd.f32 %v2036, %v2120
        %v2122 = vpop.f32.mrb[0].mxu0
        %v2123 = vpop.f32.mrb[0].mxu0
        %v2124 = vadd.f32 %v2036, %v2123
        %v2125 = vpop.f32.mrb[0].mxu0
        %2126 = vmatprep.mubr.bf16.mxu0 0
        %2127 = vmatmul.mubr.bf16.gmra.mrb[0].mxu0 %v2014
        %v2128 = vpop.f32.mrb[0].mxu0
        %v2129 = vadd.f32 %v2036, %v2128
        %v2130 = vpop.f32.mrb[0].mxu0
        %v2131 = vpop.f32.mrb[0].mxu0
        %v2132 = vadd.f32 %v2036, %v2131
        %v2133 = vpop.f32.mrb[0].mxu0
        %2134 = vdwg.mxu0
        %v2135 = vld [vmem:[%s1588] sm:$0xff]
        %v2136 = vld [vmem:[%s1588 + $0x8] sm:$0xff]
        %v2137 = vld [vmem:[%s1588 + $0x10] sm:$0xff]
        %v2138 = vld [vmem:[%s1588 + $0x18] sm:$0xff]
        %v2139 = vld [vmem:[%s1588 + $0x20] sm:$0xff]
        %v2140 = vld [vmem:[%s1588 + $0x28] sm:$0xff]
        %v2141 = vld [vmem:[%s1588 + $0x30] sm:$0xff]
        %v2142 = vld [vmem:[%s1588 + $0x38] sm:$0xff]
        %v2143 = vld [vmem:[%s1588 + $0x40] sm:$0xff]
        %v2144 = vld [vmem:[%s1588 + $0x48] sm:$0xff]
        %v2145 = vld [vmem:[%s1588 + $0x50] sm:$0xff]
        %v2146 = vld [vmem:[%s1588 + $0x58] sm:$0xff]
        %v2147 = vld [vmem:[%s1588 + $0x60] sm:$0xff]
        %v2148 = vld [vmem:[%s1588 + $0x68] sm:$0xff]
        %v2149 = vld [vmem:[%s1588 + $0x70] sm:$0xff]
        %v2150 = vld [vmem:[%s1588 + $0x78] sm:$0xff]
        %v2151 = vpack.c.bf16 %v2139, %v2135
        %v2152 = vpack.c.bf16 %v2140, %v2136
        %v2153 = vpack.c.bf16 %v2141, %v2137
        %v2154 = vpack.c.bf16 %v2142, %v2138
        %v2155 = vpack.c.bf16 %v2147, %v2143
        %v2156 = vpack.c.bf16 %v2148, %v2144
        %v2157 = vpack.c.bf16 %v2149, %v2145
        %v2158 = vpack.c.bf16 %v2150, %v2146
        %v2159 = vld [vmem:[%s1605] sm:$0xf]
        %v2160 = vld [vmem:[%s1605 + $0x4] sm:$0xf]
        %v2161 = vld [vmem:[%s1605 + $0x8] sm:$0xf]
        %v2162 = vld [vmem:[%s1605 + $0xc] sm:$0xf]
        %v2163 = vld [vmem:[%s1605 + $0x10] sm:$0xf]
        %v2164 = vld [vmem:[%s1605 + $0x14] sm:$0xf]
        %v2165 = vld [vmem:[%s1605 + $0x18] sm:$0xf]
        %v2166 = vld [vmem:[%s1605 + $0x1c] sm:$0xf]
        %v2167 = vld [vmem:[%s1605 + $0x20] sm:$0xf]
        %v2168 = vld [vmem:[%s1605 + $0x24] sm:$0xf]
        %v2169 = vld [vmem:[%s1605 + $0x28] sm:$0xf]
        %v2170 = vld [vmem:[%s1605 + $0x2c] sm:$0xf]
        %v2171 = vld [vmem:[%s1605 + $0x30] sm:$0xf]
        %v2172 = vld [vmem:[%s1605 + $0x34] sm:$0xf]
        %v2173 = vld [vmem:[%s1605 + $0x38] sm:$0xf]
        %v2174 = vld [vmem:[%s1605 + $0x3c] sm:$0xf]
        %v2175 = vld [vmem:[%s1605 + $0x40] sm:$0xf]
        %v2176 = vld [vmem:[%s1605 + $0x44] sm:$0xf]
        %v2177 = vld [vmem:[%s1605 + $0x48] sm:$0xf]
        %v2178 = vld [vmem:[%s1605 + $0x4c] sm:$0xf]
        %v2179 = vld [vmem:[%s1605 + $0x50] sm:$0xf]
        %v2180 = vld [vmem:[%s1605 + $0x54] sm:$0xf]
        %v2181 = vld [vmem:[%s1605 + $0x58] sm:$0xf]
        %v2182 = vld [vmem:[%s1605 + $0x5c] sm:$0xf]
        %v2183 = vld [vmem:[%s1605 + $0x60] sm:$0xf]
        %v2184 = vld [vmem:[%s1605 + $0x64] sm:$0xf]
        %v2185 = vld [vmem:[%s1605 + $0x68] sm:$0xf]
        %v2186 = vld [vmem:[%s1605 + $0x6c] sm:$0xf]
        %v2187 = vld [vmem:[%s1605 + $0x70] sm:$0xf]
        %v2188 = vld [vmem:[%s1605 + $0x74] sm:$0xf]
        %v2189 = vld [vmem:[%s1605 + $0x78] sm:$0xf]
        %v2190 = vld [vmem:[%s1605 + $0x7c] sm:$0xf]
        %v2191 = vld [vmem:[%s1605 + $0x80] sm:$0xf]
        %v2192 = vld [vmem:[%s1605 + $0x84] sm:$0xf]
        %v2193 = vld [vmem:[%s1605 + $0x88] sm:$0xf]
        %v2194 = vld [vmem:[%s1605 + $0x8c] sm:$0xf]
        %v2195 = vld [vmem:[%s1605 + $0x90] sm:$0xf]
        %v2196 = vld [vmem:[%s1605 + $0x94] sm:$0xf]
        %v2197 = vld [vmem:[%s1605 + $0x98] sm:$0xf]
        %v2198 = vld [vmem:[%s1605 + $0x9c] sm:$0xf]
        %v2199 = vld [vmem:[%s1605 + $0xa0] sm:$0xf]
        %v2200 = vld [vmem:[%s1605 + $0xa4] sm:$0xf]
        %v2201 = vld [vmem:[%s1605 + $0xa8] sm:$0xf]
        %v2202 = vld [vmem:[%s1605 + $0xac] sm:$0xf]
        %v2203 = vld [vmem:[%s1605 + $0xb0] sm:$0xf]
        %v2204 = vld [vmem:[%s1605 + $0xb4] sm:$0xf]
        %v2205 = vld [vmem:[%s1605 + $0xb8] sm:$0xf]
        %v2206 = vld [vmem:[%s1605 + $0xbc] sm:$0xf]
        %v2207 = vld [vmem:[%s1605 + $0xc0] sm:$0xf]
        %v2208 = vld [vmem:[%s1605 + $0xc4] sm:$0xf]
        %v2209 = vld [vmem:[%s1605 + $0xc8] sm:$0xf]
        %v2210 = vld [vmem:[%s1605 + $0xcc] sm:$0xf]
        %v2211 = vld [vmem:[%s1605 + $0xd0] sm:$0xf]
        %v2212 = vld [vmem:[%s1605 + $0xd4] sm:$0xf]
        %v2213 = vld [vmem:[%s1605 + $0xd8] sm:$0xf]
        %v2214 = vld [vmem:[%s1605 + $0xdc] sm:$0xf]
        %v2215 = vld [vmem:[%s1605 + $0xe0] sm:$0xf]
        %v2216 = vld [vmem:[%s1605 + $0xe4] sm:$0xf]
        %v2217 = vld [vmem:[%s1605 + $0xe8] sm:$0xf]
        %v2218 = vld [vmem:[%s1605 + $0xec] sm:$0xf]
        %v2219 = vld [vmem:[%s1605 + $0xf0] sm:$0xf]
        %v2220 = vld [vmem:[%s1605 + $0xf4] sm:$0xf]
        %v2221 = vld [vmem:[%s1605 + $0xf8] sm:$0xf]
        %v2222 = vld [vmem:[%s1605 + $0xfc] sm:$0xf]
        %v2223 = vld [vmem:[%s1248] sm:$0x1]
        %v2225 = vlaneseq
        %v2226 = vshrl.u32 %v2225, 7
        %v2227 = vsub.s32 0, %v2226
        %v2228 = vrot.slane %v2223, %v2227
        %v2294 = vunpack.c.l.b16 %v2159
        %v2295 = vunpack.c.l.b16 %v2160
        %v2296 = vunpack.c.l.b16 %v2161
        %v2297 = vunpack.c.l.b16 %v2162
        %v2298 = vunpack.c.l.b16 %v2163
        %v2299 = vunpack.c.l.b16 %v2164
        %v2300 = vunpack.c.l.b16 %v2165
        %v2301 = vunpack.c.l.b16 %v2166
        %v2302 = vunpack.c.l.b16 %v2167
        %v2303 = vunpack.c.l.b16 %v2168
        %v2304 = vunpack.c.l.b16 %v2169
        %v2305 = vunpack.c.l.b16 %v2170
        %v2306 = vunpack.c.l.b16 %v2171
        %v2307 = vunpack.c.l.b16 %v2172
        %v2308 = vunpack.c.l.b16 %v2173
        %v2309 = vunpack.c.l.b16 %v2174
        %v2310 = vunpack.c.l.b16 %v2175
        %v2311 = vunpack.c.l.b16 %v2176
        %v2312 = vunpack.c.l.b16 %v2177
        %v2313 = vunpack.c.l.b16 %v2178
        %v2314 = vunpack.c.l.b16 %v2179
        %v2315 = vunpack.c.l.b16 %v2180
        %v2316 = vunpack.c.l.b16 %v2181
        %v2317 = vunpack.c.l.b16 %v2182
        %v2318 = vunpack.c.l.b16 %v2183
        %v2319 = vunpack.c.l.b16 %v2184
        %v2320 = vunpack.c.l.b16 %v2185
        %v2321 = vunpack.c.l.b16 %v2186
        %v2322 = vunpack.c.l.b16 %v2187
        %v2323 = vunpack.c.l.b16 %v2188
        %v2324 = vunpack.c.l.b16 %v2189
        %v2325 = vunpack.c.l.b16 %v2190
        %v2326 = vunpack.c.l.b16 %v2191
        %v2327 = vunpack.c.l.b16 %v2192
        %v2328 = vunpack.c.l.b16 %v2193
        %v2329 = vunpack.c.l.b16 %v2194
        %v2330 = vunpack.c.l.b16 %v2195
        %v2331 = vunpack.c.l.b16 %v2196
        %v2332 = vunpack.c.l.b16 %v2197
        %v2333 = vunpack.c.l.b16 %v2198
        %v2334 = vunpack.c.l.b16 %v2199
        %v2335 = vunpack.c.l.b16 %v2200
        %v2336 = vunpack.c.l.b16 %v2201
        %v2337 = vunpack.c.l.b16 %v2202
        %v2338 = vunpack.c.l.b16 %v2203
        %v2339 = vunpack.c.l.b16 %v2204
        %v2340 = vunpack.c.l.b16 %v2205
        %v2341 = vunpack.c.l.b16 %v2206
        %v2342 = vunpack.c.l.b16 %v2207
        %v2343 = vunpack.c.l.b16 %v2208
        %v2344 = vunpack.c.l.b16 %v2209
        %v2345 = vunpack.c.l.b16 %v2210
        %v2346 = vunpack.c.l.b16 %v2211
        %v2347 = vunpack.c.l.b16 %v2212
        %v2348 = vunpack.c.l.b16 %v2213
        %v2349 = vunpack.c.l.b16 %v2214
        %v2350 = vunpack.c.l.b16 %v2215
        %v2351 = vunpack.c.l.b16 %v2216
        %v2352 = vunpack.c.l.b16 %v2217
        %v2353 = vunpack.c.l.b16 %v2218
        %v2354 = vunpack.c.l.b16 %v2219
        %v2355 = vunpack.c.l.b16 %v2220
        %v2356 = vunpack.c.l.b16 %v2221
        %v2357 = vunpack.c.l.b16 %v2222
        %v2358 = vpack.c.b16 %v2295, %v2294
        %v2359 = vpack.c.b16 %v2297, %v2296
        %v2360 = vpack.c.b16 %v2299, %v2298
        %v2361 = vpack.c.b16 %v2301, %v2300
        %v2362 = vpack.c.b16 %v2303, %v2302
        %v2363 = vpack.c.b16 %v2305, %v2304
        %v2364 = vpack.c.b16 %v2307, %v2306
        %v2365 = vpack.c.b16 %v2309, %v2308
        %v2366 = vpack.c.b16 %v2311, %v2310
        %v2367 = vpack.c.b16 %v2313, %v2312
        %v2368 = vpack.c.b16 %v2315, %v2314
        %v2369 = vpack.c.b16 %v2317, %v2316
        %v2370 = vpack.c.b16 %v2319, %v2318
        %v2371 = vpack.c.b16 %v2321, %v2320
        %v2372 = vpack.c.b16 %v2323, %v2322
        %v2373 = vpack.c.b16 %v2325, %v2324
        %v2374 = vpack.c.b16 %v2327, %v2326
        %v2375 = vpack.c.b16 %v2329, %v2328
        %v2376 = vpack.c.b16 %v2331, %v2330
        %v2377 = vpack.c.b16 %v2333, %v2332
        %v2378 = vpack.c.b16 %v2335, %v2334
        %v2379 = vpack.c.b16 %v2337, %v2336
        %v2380 = vpack.c.b16 %v2339, %v2338
        %v2381 = vpack.c.b16 %v2341, %v2340
        %v2382 = vpack.c.b16 %v2343, %v2342
        %v2383 = vpack.c.b16 %v2345, %v2344
        %v2384 = vpack.c.b16 %v2347, %v2346
        %v2385 = vpack.c.b16 %v2349, %v2348
        %v2386 = vpack.c.b16 %v2351, %v2350
        %v2387 = vpack.c.b16 %v2353, %v2352
        %v2388 = vpack.c.b16 %v2355, %v2354
        %v2389 = vpack.c.b16 %v2357, %v2356
        %2422 = vmatprep.subr.bf16.mxu0 0
        %2423 = vmatpush1.bf16.msra.mxu0 %v2358
        %2424 = vmatprep.subr.bf16.mxu0 0
        %2425 = vmatpush1.bf16.msra.mxu0 %v2359
        %2426 = vmatprep.subr.bf16.mxu0 0
        %2427 = vmatpush1.bf16.msra.mxu0 %v2360
        %2428 = vmatprep.subr.bf16.mxu0 0
        %2429 = vmatpush1.bf16.msra.mxu0 %v2361
        %2430 = vmatprep.subr.bf16.mxu0 0
        %2431 = vmatpush1.bf16.msra.mxu0 %v2362
        %2432 = vmatprep.subr.bf16.mxu0 0
        %2433 = vmatpush1.bf16.msra.mxu0 %v2363
        %2434 = vmatprep.subr.bf16.mxu0 0
        %2435 = vmatpush1.bf16.msra.mxu0 %v2364
        %2436 = vmatprep.subr.bf16.mxu0 0
        %2437 = vmatpush1.bf16.msra.mxu0 %v2365
        %2438 = vmatprep.subr.bf16.mxu0 0
        %2439 = vmatpush1.bf16.msra.mxu0 %v2366
        %2440 = vmatprep.subr.bf16.mxu0 0
        %2441 = vmatpush1.bf16.msra.mxu0 %v2367
        %2442 = vmatprep.subr.bf16.mxu0 0
        %2443 = vmatpush1.bf16.msra.mxu0 %v2368
        %2444 = vmatprep.subr.bf16.mxu0 0
        %2445 = vmatpush1.bf16.msra.mxu0 %v2369
        %2446 = vmatprep.subr.bf16.mxu0 0
        %2447 = vmatpush1.bf16.msra.mxu0 %v2370
        %2448 = vmatprep.subr.bf16.mxu0 0
        %2449 = vmatpush1.bf16.msra.mxu0 %v2371
        %2450 = vmatprep.subr.bf16.mxu0 0
        %2451 = vmatpush1.bf16.msra.mxu0 %v2372
        %2452 = vmatprep.subr.bf16.mxu0 0
        %2453 = vmatpush1.bf16.msra.mxu0 %v2373
        %2454 = vmatprep.mubr.bf16.mxu0 %v2152
        %2455 = vmatmul.mubr.bf16.gmra.mrb[0].mxu0 %v2151
        %v2456 = vpop.f32.mrb[0].mxu0
        %v2457 = vadd.f32 %v2228, %v2456
        %v2458 = vpop.f32.mrb[0].mxu0
        %v2459 = vpop.f32.mrb[0].mxu0
        %v2460 = vadd.f32 %v2228, %v2459
        %v2461 = vpop.f32.mrb[0].mxu0
        %2462 = vmatprep.mubr.bf16.mxu0 %v2156
        %2463 = vmatmul.mubr.bf16.gmra.mrb[0].mxu0 %v2155
        %v2464 = vpop.f32.mrb[0].mxu0
        %v2465 = vadd.f32 %v2228, %v2464
        %v2466 = vpop.f32.mrb[0].mxu0
        %v2467 = vpop.f32.mrb[0].mxu0
        %v2468 = vadd.f32 %v2228, %v2467
        %v2469 = vpop.f32.mrb[0].mxu0
        %2470 = vdwg.mxu0
        %2471 = vmatprep.subr.bf16.mxu0 0
        %2472 = vmatpush1.bf16.msra.mxu0 %v2374
        %2473 = vmatprep.subr.bf16.mxu0 0
        %2474 = vmatpush1.bf16.msra.mxu0 %v2375
        %2475 = vmatprep.subr.bf16.mxu0 0
        %2476 = vmatpush1.bf16.msra.mxu0 %v2376
        %2477 = vmatprep.subr.bf16.mxu0 0
        %2478 = vmatpush1.bf16.msra.mxu0 %v2377
        %2479 = vmatprep.subr.bf16.mxu0 0
        %2480 = vmatpush1.bf16.msra.mxu0 %v2378
        %2481 = vmatprep.subr.bf16.mxu0 0
        %2482 = vmatpush1.bf16.msra.mxu0 %v2379
        %2483 = vmatprep.subr.bf16.mxu0 0
        %2484 = vmatpush1.bf16.msra.mxu0 %v2380
        %2485 = vmatprep.subr.bf16.mxu0 0
        %2486 = vmatpush1.bf16.msra.mxu0 %v2381
        %2487 = vmatprep.subr.bf16.mxu0 0
        %2488 = vmatpush1.bf16.msra.mxu0 %v2382
        %2489 = vmatprep.subr.bf16.mxu0 0
        %2490 = vmatpush1.bf16.msra.mxu0 %v2383
        %2491 = vmatprep.subr.bf16.mxu0 0
        %2492 = vmatpush1.bf16.msra.mxu0 %v2384
        %2493 = vmatprep.subr.bf16.mxu0 0
        %2494 = vmatpush1.bf16.msra.mxu0 %v2385
        %2495 = vmatprep.subr.bf16.mxu0 0
        %2496 = vmatpush1.bf16.msra.mxu0 %v2386
        %2497 = vmatprep.subr.bf16.mxu0 0
        %2498 = vmatpush1.bf16.msra.mxu0 %v2387
        %2499 = vmatprep.subr.bf16.mxu0 0
        %2500 = vmatpush1.bf16.msra.mxu0 %v2388
        %2501 = vmatprep.subr.bf16.mxu0 0
        %2502 = vmatpush1.bf16.msra.mxu0 %v2389
        %2503 = vmatprep.mubr.bf16.mxu0 %v2154
        %2504 = vmatmul.mubr.bf16.gmra.mrb[0].mxu0 %v2153
        %v2505 = vpop.f32.mrb[0].mxu0
        %v2506 = vadd.f32 %v2457, %v2505
        %v2507 = vpop.f32.mrb[0].mxu0
        %v2508 = vpop.f32.mrb[0].mxu0
        %v2509 = vadd.f32 %v2460, %v2508
        %v2510 = vpop.f32.mrb[0].mxu0
        %2511 = vmatprep.mubr.bf16.mxu0 %v2158
        %2512 = vmatmul.mubr.bf16.gmra.mrb[0].mxu0 %v2157
        %v2513 = vpop.f32.mrb[0].mxu0
        %v2514 = vadd.f32 %v2465, %v2513
        %v2515 = vpop.f32.mrb[0].mxu0
        %v2516 = vpop.f32.mrb[0].mxu0
        %v2517 = vadd.f32 %v2468, %v2516
        %v2518 = vpop.f32.mrb[0].mxu0
        %2519 = vdwg.mxu0
        %v2520 = vmax.f32 %v2506, 0.0
        %v2521 = vmax.f32 %v2509, 0.0
        %v2522 = vmax.f32 %v2514, 0.0
        %v2523 = vmax.f32 %v2517, 0.0
        %v2524 = vpack.c.bf16 %v2521, %v2520
        %v2525 = vpack.c.bf16 %v2523, %v2522
        %v2526 = vld [vmem:[%s1613] sm:$0xf]
        %v2527 = vld [vmem:[%s1613 + $0x4] sm:$0xf]
        %v2528 = vld [vmem:[%s1613 + $0x8] sm:$0xf]
        %v2529 = vld [vmem:[%s1613 + $0xc] sm:$0xf]
        %v2530 = vld [vmem:[%s1613 + $0x10] sm:$0xf]
        %v2531 = vld [vmem:[%s1613 + $0x14] sm:$0xf]
        %v2532 = vld [vmem:[%s1613 + $0x18] sm:$0xf]
        %v2533 = vld [vmem:[%s1613 + $0x1c] sm:$0xf]
        %v2534 = vld [vmem:[%s1613 + $0x20] sm:$0xf]
        %v2535 = vld [vmem:[%s1613 + $0x24] sm:$0xf]
        %v2536 = vld [vmem:[%s1613 + $0x28] sm:$0xf]
        %v2537 = vld [vmem:[%s1613 + $0x2c] sm:$0xf]
        %v2538 = vld [vmem:[%s1613 + $0x30] sm:$0xf]
        %v2539 = vld [vmem:[%s1613 + $0x34] sm:$0xf]
        %v2540 = vld [vmem:[%s1613 + $0x38] sm:$0xf]
        %v2541 = vld [vmem:[%s1613 + $0x3c] sm:$0xf]
        %v2542 = vld [vmem:[%s1256] sm:$0x1]
        %v2544 = vlaneseq
        %v2545 = vshrl.u32 %v2544, 7
        %v2546 = vsub.s32 0, %v2545
        %v2547 = vrot.slane %v2542, %v2546
        %v2565 = vunpack.c.l.b16 %v2526
        %v2566 = vunpack.c.l.b16 %v2527
        %v2567 = vunpack.c.l.b16 %v2528
        %v2568 = vunpack.c.l.b16 %v2529
        %v2569 = vunpack.c.l.b16 %v2530
        %v2570 = vunpack.c.l.b16 %v2531
        %v2571 = vunpack.c.l.b16 %v2532
        %v2572 = vunpack.c.l.b16 %v2533
        %v2573 = vunpack.c.l.b16 %v2534
        %v2574 = vunpack.c.l.b16 %v2535
        %v2575 = vunpack.c.l.b16 %v2536
        %v2576 = vunpack.c.l.b16 %v2537
        %v2577 = vunpack.c.l.b16 %v2538
        %v2578 = vunpack.c.l.b16 %v2539
        %v2579 = vunpack.c.l.b16 %v2540
        %v2580 = vunpack.c.l.b16 %v2541
        %v2581 = vpack.c.b16 %v2566, %v2565
        %v2582 = vpack.c.b16 %v2568, %v2567
        %v2583 = vpack.c.b16 %v2570, %v2569
        %v2584 = vpack.c.b16 %v2572, %v2571
        %v2585 = vpack.c.b16 %v2574, %v2573
        %v2586 = vpack.c.b16 %v2576, %v2575
        %v2587 = vpack.c.b16 %v2578, %v2577
        %v2588 = vpack.c.b16 %v2580, %v2579
        %2597 = vmatprep.subr.bf16.mxu0 0
        %2598 = vmatpush1.bf16.msra.mxu0 %v2581
        %2599 = vmatprep.subr.bf16.mxu0 0
        %2600 = vmatpush1.bf16.msra.mxu0 %v2582
        %2601 = vmatprep.subr.bf16.mxu0 0
        %2602 = vmatpush1.bf16.msra.mxu0 %v2583
        %2603 = vmatprep.subr.bf16.mxu0 0
        %2604 = vmatpush1.bf16.msra.mxu0 %v2584
        %2605 = vmatprep.subr.bf16.mxu0 0
        %2606 = vmatpush1.bf16.msra.mxu0 %v2585
        %2607 = vmatprep.subr.bf16.mxu0 0
        %2608 = vmatpush1.bf16.msra.mxu0 %v2586
        %2609 = vmatprep.subr.bf16.mxu0 0
        %2610 = vmatpush1.bf16.msra.mxu0 %v2587
        %2611 = vmatprep.subr.bf16.mxu0 0
        %2612 = vmatpush1.bf16.msra.mxu0 %v2588
        %2613 = vmatprep.subr.bf16.mxu0 0
        %2614 = vmatpush1.bf16.msra.mxu0 0
        %2615 = vmatprep.subr.bf16.mxu0 0
        %2616 = vmatpush1.bf16.msra.mxu0 0
        %2617 = vmatprep.subr.bf16.mxu0 0
        %2618 = vmatpush1.bf16.msra.mxu0 0
        %2619 = vmatprep.subr.bf16.mxu0 0
        %2620 = vmatpush1.bf16.msra.mxu0 0
        %2621 = vmatprep.subr.bf16.mxu0 0
        %2622 = vmatpush1.bf16.msra.mxu0 0
        %2623 = vmatprep.subr.bf16.mxu0 0
        %2624 = vmatpush1.bf16.msra.mxu0 0
        %2625 = vmatprep.subr.bf16.mxu0 0
        %2626 = vmatpush1.bf16.msra.mxu0 0
        %2627 = vmatprep.subr.bf16.mxu0 0
        %2628 = vmatpush1.bf16.msra.mxu0 0
        %2629 = vmatprep.mubr.bf16.mxu0 0
        %2630 = vmatmul.mubr.bf16.gmra.mrb[0].mxu0 %v2524
        %v2631 = vpop.f32.mrb[0].mxu0
        %v2632 = vadd.f32 %v2547, %v2631
        %v2633 = vpop.f32.mrb[0].mxu0
        %v2634 = vpop.f32.mrb[0].mxu0
        %v2635 = vadd.f32 %v2547, %v2634
        %v2636 = vpop.f32.mrb[0].mxu0
        %2637 = vmatprep.mubr.bf16.mxu0 0
        %2638 = vmatmul.mubr.bf16.gmra.mrb[0].mxu0 %v2525
        %v2639 = vpop.f32.mrb[0].mxu0
        %v2640 = vadd.f32 %v2547, %v2639
        %v2641 = vpop.f32.mrb[0].mxu0
        %v2642 = vpop.f32.mrb[0].mxu0
        %v2643 = vadd.f32 %v2547, %v2642
        %v2644 = vpop.f32.mrb[0].mxu0
        %2645 = vdwg.mxu0
        %v2646 = vpack.c.bf16 %v2124, %v2121
        %v2647 = vpack.c.bf16 %v2132, %v2129
        %v2648 = vld [vmem:[%s1265] sm:$0xff]
        %v2649 = vld [vmem:[%s1265 + $0x8] sm:$0xff]
        %v2650 = vld [vmem:[%s1265 + $0x10] sm:$0xff]
        %v2651 = vld [vmem:[%s1265 + $0x18] sm:$0xff]
        %v2652 = vld [vmem:[%s1265 + $0x20] sm:$0xff]
        %v2653 = vld [vmem:[%s1265 + $0x28] sm:$0xff]
        %v2654 = vld [vmem:[%s1265 + $0x30] sm:$0xff]
        %v2655 = vld [vmem:[%s1265 + $0x38] sm:$0xff]
        %v2656 = vld [vmem:[%s1265 + $0x40] sm:$0xff]
        %v2657 = vld [vmem:[%s1265 + $0x48] sm:$0xff]
        %v2658 = vld [vmem:[%s1265 + $0x50] sm:$0xff]
        %v2659 = vld [vmem:[%s1265 + $0x58] sm:$0xff]
        %v2660 = vld [vmem:[%s1265 + $0x60] sm:$0xff]
        %v2661 = vld [vmem:[%s1265 + $0x68] sm:$0xff]
        %v2662 = vld [vmem:[%s1265 + $0x70] sm:$0xff]
        %v2663 = vld [vmem:[%s1265 + $0x78] sm:$0xff]
        %v2664 = vld [vmem:[%s1265 + $0x80] sm:$0xff]
        %v2665 = vld [vmem:[%s1265 + $0x88] sm:$0xff]
        %v2666 = vld [vmem:[%s1265 + $0x90] sm:$0xff]
        %v2667 = vld [vmem:[%s1265 + $0x98] sm:$0xff]
        %v2668 = vld [vmem:[%s1265 + $0xa0] sm:$0xff]
        %v2669 = vld [vmem:[%s1265 + $0xa8] sm:$0xff]
        %v2670 = vld [vmem:[%s1265 + $0xb0] sm:$0xff]
        %v2671 = vld [vmem:[%s1265 + $0xb8] sm:$0xff]
        %v2672 = vld [vmem:[%s1265 + $0xc0] sm:$0xff]
        %v2673 = vld [vmem:[%s1265 + $0xc8] sm:$0xff]
        %v2674 = vld [vmem:[%s1265 + $0xd0] sm:$0xff]
        %v2675 = vld [vmem:[%s1265 + $0xd8] sm:$0xff]
        %v2676 = vld [vmem:[%s1265 + $0xe0] sm:$0xff]
        %v2677 = vld [vmem:[%s1265 + $0xe8] sm:$0xff]
        %v2678 = vld [vmem:[%s1265 + $0xf0] sm:$0xff]
        %v2679 = vld [vmem:[%s1265 + $0xf8] sm:$0xff]
        %v2680 = vld [vmem:[%s1274] sm:$0xf]
        %v2682 = vlaneseq
        %v2683 = vshrl.u32 %v2682, 7
        %v2684 = vsub.s32 0, %v2683
        %v2685 = vrot.slane %v2680, %v2684
        %v2686 = vlaneseq
        %v2687 = vshrl.u32 %v2686, 7
        %v2688 = vsub.s32 1, %v2687
        %v2689 = vrot.slane %v2680, %v2688
        %v2690 = vlaneseq
        %v2691 = vshrl.u32 %v2690, 7
        %v2692 = vsub.s32 2, %v2691
        %v2693 = vrot.slane %v2680, %v2692
        %v2694 = vlaneseq
        %v2695 = vshrl.u32 %v2694, 7
        %v2696 = vsub.s32 3, %v2695
        %v2697 = vrot.slane %v2680, %v2696
        %v2734 = vunpack.c.l.b16 %v2648
        %v2735 = vunpack.c.h.b16 %v2648
        %v2736 = vunpack.c.l.b16 %v2649
        %v2737 = vunpack.c.h.b16 %v2649
        %v2738 = vunpack.c.l.b16 %v2650
        %v2739 = vunpack.c.h.b16 %v2650
        %v2740 = vunpack.c.l.b16 %v2651
        %v2741 = vunpack.c.h.b16 %v2651
        %v2742 = vunpack.c.l.b16 %v2652
        %v2743 = vunpack.c.h.b16 %v2652
        %v2744 = vunpack.c.l.b16 %v2653
        %v2745 = vunpack.c.h.b16 %v2653
        %v2746 = vunpack.c.l.b16 %v2654
        %v2747 = vunpack.c.h.b16 %v2654
        %v2748 = vunpack.c.l.b16 %v2655
        %v2749 = vunpack.c.h.b16 %v2655
        %v2750 = vunpack.c.l.b16 %v2656
        %v2751 = vunpack.c.h.b16 %v2656
        %v2752 = vunpack.c.l.b16 %v2657
        %v2753 = vunpack.c.h.b16 %v2657
        %v2754 = vunpack.c.l.b16 %v2658
        %v2755 = vunpack.c.h.b16 %v2658
        %v2756 = vunpack.c.l.b16 %v2659
        %v2757 = vunpack.c.h.b16 %v2659
        %v2758 = vunpack.c.l.b16 %v2660
        %v2759 = vunpack.c.h.b16 %v2660
        %v2760 = vunpack.c.l.b16 %v2661
        %v2761 = vunpack.c.h.b16 %v2661
        %v2762 = vunpack.c.l.b16 %v2662
        %v2763 = vunpack.c.h.b16 %v2662
        %v2764 = vunpack.c.l.b16 %v2663
        %v2765 = vunpack.c.h.b16 %v2663
        %v2766 = vunpack.c.l.b16 %v2664
        %v2767 = vunpack.c.h.b16 %v2664
        %v2768 = vunpack.c.l.b16 %v2665
        %v2769 = vunpack.c.h.b16 %v2665
        %v2770 = vunpack.c.l.b16 %v2666
        %v2771 = vunpack.c.h.b16 %v2666
        %v2772 = vunpack.c.l.b16 %v2667
        %v2773 = vunpack.c.h.b16 %v2667
        %v2774 = vunpack.c.l.b16 %v2668
        %v2775 = vunpack.c.h.b16 %v2668
        %v2776 = vunpack.c.l.b16 %v2669
        %v2777 = vunpack.c.h.b16 %v2669
        %v2778 = vunpack.c.l.b16 %v2670
        %v2779 = vunpack.c.h.b16 %v2670
        %v2780 = vunpack.c.l.b16 %v2671
        %v2781 = vunpack.c.h.b16 %v2671
        %v2782 = vunpack.c.l.b16 %v2672
        %v2783 = vunpack.c.h.b16 %v2672
        %v2784 = vunpack.c.l.b16 %v2673
        %v2785 = vunpack.c.h.b16 %v2673
        %v2786 = vunpack.c.l.b16 %v2674
        %v2787 = vunpack.c.h.b16 %v2674
        %v2788 = vunpack.c.l.b16 %v2675
        %v2789 = vunpack.c.h.b16 %v2675
        %v2790 = vunpack.c.l.b16 %v2676
        %v2791 = vunpack.c.h.b16 %v2676
        %v2792 = vunpack.c.l.b16 %v2677
        %v2793 = vunpack.c.h.b16 %v2677
        %v2794 = vunpack.c.l.b16 %v2678
        %v2795 = vunpack.c.h.b16 %v2678
        %v2796 = vunpack.c.l.b16 %v2679
        %v2797 = vunpack.c.h.b16 %v2679
        %v2798 = vpack.c.b16 %v2738, %v2734
        %v2799 = vpack.c.b16 %v2739, %v2735
        %v2800 = vpack.c.b16 %v2740, %v2736
        %v2801 = vpack.c.b16 %v2741, %v2737
        %v2802 = vpack.c.b16 %v2746, %v2742
        %v2803 = vpack.c.b16 %v2747, %v2743
        %v2804 = vpack.c.b16 %v2748, %v2744
        %v2805 = vpack.c.b16 %v2749, %v2745
        %v2806 = vpack.c.b16 %v2754, %v2750
        %v2807 = vpack.c.b16 %v2755, %v2751
        %v2808 = vpack.c.b16 %v2756, %v2752
        %v2809 = vpack.c.b16 %v2757, %v2753
        %v2810 = vpack.c.b16 %v2762, %v2758
        %v2811 = vpack.c.b16 %v2763, %v2759
        %v2812 = vpack.c.b16 %v2764, %v2760
        %v2813 = vpack.c.b16 %v2765, %v2761
        %v2814 = vpack.c.b16 %v2770, %v2766
        %v2815 = vpack.c.b16 %v2771, %v2767
        %v2816 = vpack.c.b16 %v2772, %v2768
        %v2817 = vpack.c.b16 %v2773, %v2769
        %v2818 = vpack.c.b16 %v2778, %v2774
        %v2819 = vpack.c.b16 %v2779, %v2775
        %v2820 = vpack.c.b16 %v2780, %v2776
        %v2821 = vpack.c.b16 %v2781, %v2777
        %v2822 = vpack.c.b16 %v2786, %v2782
        %v2823 = vpack.c.b16 %v2787, %v2783
        %v2824 = vpack.c.b16 %v2788, %v2784
        %v2825 = vpack.c.b16 %v2789, %v2785
        %v2826 = vpack.c.b16 %v2794, %v2790
        %v2827 = vpack.c.b16 %v2795, %v2791
        %v2828 = vpack.c.b16 %v2796, %v2792
        %v2829 = vpack.c.b16 %v2797, %v2793
        %2862 = vmatprep.subr.bf16.mxu0 %v2799
        %2863 = vmatpush1.bf16.msra.mxu0 %v2798
        %2864 = vmatprep.subr.bf16.mxu0 %v2803
        %2865 = vmatpush1.bf16.msra.mxu0 %v2802
        %2866 = vmatprep.subr.bf16.mxu0 %v2807
        %2867 = vmatpush1.bf16.msra.mxu0 %v2806
        %2868 = vmatprep.subr.bf16.mxu0 %v2811
        %2869 = vmatpush1.bf16.msra.mxu0 %v2810
        %2870 = vmatprep.subr.bf16.mxu0 %v2815
        %2871 = vmatpush1.bf16.msra.mxu0 %v2814
        %2872 = vmatprep.subr.bf16.mxu0 %v2819
        %2873 = vmatpush1.bf16.msra.mxu0 %v2818
        %2874 = vmatprep.subr.bf16.mxu0 %v2823
        %2875 = vmatpush1.bf16.msra.mxu0 %v2822
        %2876 = vmatprep.subr.bf16.mxu0 %v2827
        %2877 = vmatpush1.bf16.msra.mxu0 %v2826
        %2878 = vmatprep.subr.bf16.mxu0 0
        %2879 = vmatpush1.bf16.msra.mxu0 0
        %2880 = vmatprep.subr.bf16.mxu0 0
        %2881 = vmatpush1.bf16.msra.mxu0 0
        %2882 = vmatprep.subr.bf16.mxu0 0
        %2883 = vmatpush1.bf16.msra.mxu0 0
        %2884 = vmatprep.subr.bf16.mxu0 0
        %2885 = vmatpush1.bf16.msra.mxu0 0
        %2886 = vmatprep.subr.bf16.mxu0 0
        %2887 = vmatpush1.bf16.msra.mxu0 0
        %2888 = vmatprep.subr.bf16.mxu0 0
        %2889 = vmatpush1.bf16.msra.mxu0 0
        %2890 = vmatprep.subr.bf16.mxu0 0
        %2891 = vmatpush1.bf16.msra.mxu0 0
        %2892 = vmatprep.subr.bf16.mxu0 0
        %2893 = vmatpush1.bf16.msra.mxu0 0
        %2894 = vmatprep.mubr.bf16.mxu0 0
        %2895 = vmatmul.mubr.bf16.gmra.mrb[0].mxu0 %v2646
        %v2896 = vpop.f32.mrb[0].mxu0
        %v2897 = vadd.f32 %v2685, %v2896
        %v2898 = vpop.f32.mrb[0].mxu0
        %v2899 = vadd.f32 %v2689, %v2898
        %v2900 = vpop.f32.mrb[0].mxu0
        %v2901 = vadd.f32 %v2685, %v2900
        %v2902 = vpop.f32.mrb[0].mxu0
        %v2903 = vadd.f32 %v2689, %v2902
        %2904 = vmatprep.mubr.bf16.mxu0 0
        %2905 = vmatmul.mubr.bf16.gmra.mrb[0].mxu0 %v2647
        %v2906 = vpop.f32.mrb[0].mxu0
        %v2907 = vadd.f32 %v2685, %v2906
        %v2908 = vpop.f32.mrb[0].mxu0
        %v2909 = vadd.f32 %v2689, %v2908
        %v2910 = vpop.f32.mrb[0].mxu0
        %v2911 = vadd.f32 %v2685, %v2910
        %v2912 = vpop.f32.mrb[0].mxu0
        %v2913 = vadd.f32 %v2689, %v2912
        %2914 = vdwg.mxu0
        %2915 = vmatprep.subr.bf16.mxu0 %v2801
        %2916 = vmatpush1.bf16.msra.mxu0 %v2800
        %2917 = vmatprep.subr.bf16.mxu0 %v2805
        %2918 = vmatpush1.bf16.msra.mxu0 %v2804
        %2919 = vmatprep.subr.bf16.mxu0 %v2809
        %2920 = vmatpush1.bf16.msra.mxu0 %v2808
        %2921 = vmatprep.subr.bf16.mxu0 %v2813
        %2922 = vmatpush1.bf16.msra.mxu0 %v2812
        %2923 = vmatprep.subr.bf16.mxu0 %v2817
        %2924 = vmatpush1.bf16.msra.mxu0 %v2816
        %2925 = vmatprep.subr.bf16.mxu0 %v2821
        %2926 = vmatpush1.bf16.msra.mxu0 %v2820
        %2927 = vmatprep.subr.bf16.mxu0 %v2825
        %2928 = vmatpush1.bf16.msra.mxu0 %v2824
        %2929 = vmatprep.subr.bf16.mxu0 %v2829
        %2930 = vmatpush1.bf16.msra.mxu0 %v2828
        %2931 = vmatprep.subr.bf16.mxu0 0
        %2932 = vmatpush1.bf16.msra.mxu0 0
        %2933 = vmatprep.subr.bf16.mxu0 0
        %2934 = vmatpush1.bf16.msra.mxu0 0
        %2935 = vmatprep.subr.bf16.mxu0 0
        %2936 = vmatpush1.bf16.msra.mxu0 0
        %2937 = vmatprep.subr.bf16.mxu0 0
        %2938 = vmatpush1.bf16.msra.mxu0 0
        %2939 = vmatprep.subr.bf16.mxu0 0
        %2940 = vmatpush1.bf16.msra.mxu0 0
        %2941 = vmatprep.subr.bf16.mxu0 0
        %2942 = vmatpush1.bf16.msra.mxu0 0
        %2943 = vmatprep.subr.bf16.mxu0 0
        %2944 = vmatpush1.bf16.msra.mxu0 0
        %2945 = vmatprep.subr.bf16.mxu0 0
        %2946 = vmatpush1.bf16.msra.mxu0 0
        %2947 = vmatprep.mubr.bf16.mxu0 0
        %2948 = vmatmul.mubr.bf16.gmra.mrb[0].mxu0 %v2646
        %v2949 = vpop.f32.mrb[0].mxu0
        %v2950 = vadd.f32 %v2693, %v2949
        %v2951 = vpop.f32.mrb[0].mxu0
        %v2952 = vadd.f32 %v2697, %v2951
        %v2953 = vpop.f32.mrb[0].mxu0
        %v2954 = vadd.f32 %v2693, %v2953
        %v2955 = vpop.f32.mrb[0].mxu0
        %v2956 = vadd.f32 %v2697, %v2955
        %2957 = vmatprep.mubr.bf16.mxu0 0
        %2958 = vmatmul.mubr.bf16.gmra.mrb[0].mxu0 %v2647
        %v2959 = vpop.f32.mrb[0].mxu0
        %v2960 = vadd.f32 %v2693, %v2959
        %v2961 = vpop.f32.mrb[0].mxu0
        %v2962 = vadd.f32 %v2697, %v2961
        %v2963 = vpop.f32.mrb[0].mxu0
        %v2964 = vadd.f32 %v2693, %v2963
        %v2965 = vpop.f32.mrb[0].mxu0
        %v2966 = vadd.f32 %v2697, %v2965
        %2967 = vdwg.mxu0
        %v2968 = vpack.c.bf16 %v2635, %v2632
        %v2969 = vpack.c.bf16 %v2643, %v2640
        %v2970 = vld [vmem:[%s1283] sm:$0xff]
        %v2971 = vld [vmem:[%s1283 + $0x8] sm:$0xff]
        %v2972 = vld [vmem:[%s1283 + $0x10] sm:$0xff]
        %v2973 = vld [vmem:[%s1283 + $0x18] sm:$0xff]
        %v2974 = vld [vmem:[%s1283 + $0x20] sm:$0xff]
        %v2975 = vld [vmem:[%s1283 + $0x28] sm:$0xff]
        %v2976 = vld [vmem:[%s1283 + $0x30] sm:$0xff]
        %v2977 = vld [vmem:[%s1283 + $0x38] sm:$0xff]
        %v2978 = vld [vmem:[%s1283 + $0x40] sm:$0xff]
        %v2979 = vld [vmem:[%s1283 + $0x48] sm:$0xff]
        %v2980 = vld [vmem:[%s1283 + $0x50] sm:$0xff]
        %v2981 = vld [vmem:[%s1283 + $0x58] sm:$0xff]
        %v2982 = vld [vmem:[%s1283 + $0x60] sm:$0xff]
        %v2983 = vld [vmem:[%s1283 + $0x68] sm:$0xff]
        %v2984 = vld [vmem:[%s1283 + $0x70] sm:$0xff]
        %v2985 = vld [vmem:[%s1283 + $0x78] sm:$0xff]
        %v2986 = vld [vmem:[%s1283 + $0x80] sm:$0xff]
        %v2987 = vld [vmem:[%s1283 + $0x88] sm:$0xff]
        %v2988 = vld [vmem:[%s1283 + $0x90] sm:$0xff]
        %v2989 = vld [vmem:[%s1283 + $0x98] sm:$0xff]
        %v2990 = vld [vmem:[%s1283 + $0xa0] sm:$0xff]
        %v2991 = vld [vmem:[%s1283 + $0xa8] sm:$0xff]
        %v2992 = vld [vmem:[%s1283 + $0xb0] sm:$0xff]
        %v2993 = vld [vmem:[%s1283 + $0xb8] sm:$0xff]
        %v2994 = vld [vmem:[%s1283 + $0xc0] sm:$0xff]
        %v2995 = vld [vmem:[%s1283 + $0xc8] sm:$0xff]
        %v2996 = vld [vmem:[%s1283 + $0xd0] sm:$0xff]
        %v2997 = vld [vmem:[%s1283 + $0xd8] sm:$0xff]
        %v2998 = vld [vmem:[%s1283 + $0xe0] sm:$0xff]
        %v2999 = vld [vmem:[%s1283 + $0xe8] sm:$0xff]
        %v3000 = vld [vmem:[%s1283 + $0xf0] sm:$0xff]
        %v3001 = vld [vmem:[%s1283 + $0xf8] sm:$0xff]
        %v3002 = vld [vmem:[%s1292] sm:$0xf]
        %v3004 = vlaneseq
        %v3005 = vshrl.u32 %v3004, 7
        %v3006 = vsub.s32 0, %v3005
        %v3007 = vrot.slane %v3002, %v3006
        %v3008 = vlaneseq
        %v3009 = vshrl.u32 %v3008, 7
        %v3010 = vsub.s32 1, %v3009
        %v3011 = vrot.slane %v3002, %v3010
        %v3012 = vlaneseq
        %v3013 = vshrl.u32 %v3012, 7
        %v3014 = vsub.s32 2, %v3013
        %v3015 = vrot.slane %v3002, %v3014
        %v3016 = vlaneseq
        %v3017 = vshrl.u32 %v3016, 7
        %v3018 = vsub.s32 3, %v3017
        %v3019 = vrot.slane %v3002, %v3018
        %v3056 = vunpack.c.l.b16 %v2970
        %v3057 = vunpack.c.h.b16 %v2970
        %v3058 = vunpack.c.l.b16 %v2971
        %v3059 = vunpack.c.h.b16 %v2971
        %v3060 = vunpack.c.l.b16 %v2972
        %v3061 = vunpack.c.h.b16 %v2972
        %v3062 = vunpack.c.l.b16 %v2973
        %v3063 = vunpack.c.h.b16 %v2973
        %v3064 = vunpack.c.l.b16 %v2974
        %v3065 = vunpack.c.h.b16 %v2974
        %v3066 = vunpack.c.l.b16 %v2975
        %v3067 = vunpack.c.h.b16 %v2975
        %v3068 = vunpack.c.l.b16 %v2976
        %v3069 = vunpack.c.h.b16 %v2976
        %v3070 = vunpack.c.l.b16 %v2977
        %v3071 = vunpack.c.h.b16 %v2977
        %v3072 = vunpack.c.l.b16 %v2978
        %v3073 = vunpack.c.h.b16 %v2978
        %v3074 = vunpack.c.l.b16 %v2979
        %v3075 = vunpack.c.h.b16 %v2979
        %v3076 = vunpack.c.l.b16 %v2980
        %v3077 = vunpack.c.h.b16 %v2980
        %v3078 = vunpack.c.l.b16 %v2981
        %v3079 = vunpack.c.h.b16 %v2981
        %v3080 = vunpack.c.l.b16 %v2982
        %v3081 = vunpack.c.h.b16 %v2982
        %v3082 = vunpack.c.l.b16 %v2983
        %v3083 = vunpack.c.h.b16 %v2983
        %v3084 = vunpack.c.l.b16 %v2984
        %v3085 = vunpack.c.h.b16 %v2984
        %v3086 = vunpack.c.l.b16 %v2985
        %v3087 = vunpack.c.h.b16 %v2985
        %v3088 = vunpack.c.l.b16 %v2986
        %v3089 = vunpack.c.h.b16 %v2986
        %v3090 = vunpack.c.l.b16 %v2987
        %v3091 = vunpack.c.h.b16 %v2987
        %v3092 = vunpack.c.l.b16 %v2988
        %v3093 = vunpack.c.h.b16 %v2988
        %v3094 = vunpack.c.l.b16 %v2989
        %v3095 = vunpack.c.h.b16 %v2989
        %v3096 = vunpack.c.l.b16 %v2990
        %v3097 = vunpack.c.h.b16 %v2990
        %v3098 = vunpack.c.l.b16 %v2991
        %v3099 = vunpack.c.h.b16 %v2991
        %v3100 = vunpack.c.l.b16 %v2992
        %v3101 = vunpack.c.h.b16 %v2992
        %v3102 = vunpack.c.l.b16 %v2993
        %v3103 = vunpack.c.h.b16 %v2993
        %v3104 = vunpack.c.l.b16 %v2994
        %v3105 = vunpack.c.h.b16 %v2994
        %v3106 = vunpack.c.l.b16 %v2995
        %v3107 = vunpack.c.h.b16 %v2995
        %v3108 = vunpack.c.l.b16 %v2996
        %v3109 = vunpack.c.h.b16 %v2996
        %v3110 = vunpack.c.l.b16 %v2997
        %v3111 = vunpack.c.h.b16 %v2997
        %v3112 = vunpack.c.l.b16 %v2998
        %v3113 = vunpack.c.h.b16 %v2998
        %v3114 = vunpack.c.l.b16 %v2999
        %v3115 = vunpack.c.h.b16 %v2999
        %v3116 = vunpack.c.l.b16 %v3000
        %v3117 = vunpack.c.h.b16 %v3000
        %v3118 = vunpack.c.l.b16 %v3001
        %v3119 = vunpack.c.h.b16 %v3001
        %v3120 = vpack.c.b16 %v3060, %v3056
        %v3121 = vpack.c.b16 %v3061, %v3057
        %v3122 = vpack.c.b16 %v3062, %v3058
        %v3123 = vpack.c.b16 %v3063, %v3059
        %v3124 = vpack.c.b16 %v3068, %v3064
        %v3125 = vpack.c.b16 %v3069, %v3065
        %v3126 = vpack.c.b16 %v3070, %v3066
        %v3127 = vpack.c.b16 %v3071, %v3067
        %v3128 = vpack.c.b16 %v3076, %v3072
        %v3129 = vpack.c.b16 %v3077, %v3073
        %v3130 = vpack.c.b16 %v3078, %v3074
        %v3131 = vpack.c.b16 %v3079, %v3075
        %v3132 = vpack.c.b16 %v3084, %v3080
        %v3133 = vpack.c.b16 %v3085, %v3081
        %v3134 = vpack.c.b16 %v3086, %v3082
        %v3135 = vpack.c.b16 %v3087, %v3083
        %v3136 = vpack.c.b16 %v3092, %v3088
        %v3137 = vpack.c.b16 %v3093, %v3089
        %v3138 = vpack.c.b16 %v3094, %v3090
        %v3139 = vpack.c.b16 %v3095, %v3091
        %v3140 = vpack.c.b16 %v3100, %v3096
        %v3141 = vpack.c.b16 %v3101, %v3097
        %v3142 = vpack.c.b16 %v3102, %v3098
        %v3143 = vpack.c.b16 %v3103, %v3099
        %v3144 = vpack.c.b16 %v3108, %v3104
        %v3145 = vpack.c.b16 %v3109, %v3105
        %v3146 = vpack.c.b16 %v3110, %v3106
        %v3147 = vpack.c.b16 %v3111, %v3107
        %v3148 = vpack.c.b16 %v3116, %v3112
        %v3149 = vpack.c.b16 %v3117, %v3113
        %v3150 = vpack.c.b16 %v3118, %v3114
        %v3151 = vpack.c.b16 %v3119, %v3115
        %3184 = vmatprep.subr.bf16.mxu0 %v3121
        %3185 = vmatpush1.bf16.msra.mxu0 %v3120
        %3186 = vmatprep.subr.bf16.mxu0 %v3125
        %3187 = vmatpush1.bf16.msra.mxu0 %v3124
        %3188 = vmatprep.subr.bf16.mxu0 %v3129
        %3189 = vmatpush1.bf16.msra.mxu0 %v3128
        %3190 = vmatprep.subr.bf16.mxu0 %v3133
        %3191 = vmatpush1.bf16.msra.mxu0 %v3132
        %3192 = vmatprep.subr.bf16.mxu0 %v3137
        %3193 = vmatpush1.bf16.msra.mxu0 %v3136
        %3194 = vmatprep.subr.bf16.mxu0 %v3141
        %3195 = vmatpush1.bf16.msra.mxu0 %v3140
        %3196 = vmatprep.subr.bf16.mxu0 %v3145
        %3197 = vmatpush1.bf16.msra.mxu0 %v3144
        %3198 = vmatprep.subr.bf16.mxu0 %v3149
        %3199 = vmatpush1.bf16.msra.mxu0 %v3148
        %3200 = vmatprep.subr.bf16.mxu0 0
        %3201 = vmatpush1.bf16.msra.mxu0 0
        %3202 = vmatprep.subr.bf16.mxu0 0
        %3203 = vmatpush1.bf16.msra.mxu0 0
        %3204 = vmatprep.subr.bf16.mxu0 0
        %3205 = vmatpush1.bf16.msra.mxu0 0
        %3206 = vmatprep.subr.bf16.mxu0 0
        %3207 = vmatpush1.bf16.msra.mxu0 0
        %3208 = vmatprep.subr.bf16.mxu0 0
        %3209 = vmatpush1.bf16.msra.mxu0 0
        %3210 = vmatprep.subr.bf16.mxu0 0
        %3211 = vmatpush1.bf16.msra.mxu0 0
        %3212 = vmatprep.subr.bf16.mxu0 0
        %3213 = vmatpush1.bf16.msra.mxu0 0
        %3214 = vmatprep.subr.bf16.mxu0 0
        %3215 = vmatpush1.bf16.msra.mxu0 0
        %3216 = vmatprep.mubr.bf16.mxu0 0
        %3217 = vmatmul.mubr.bf16.gmra.mrb[0].mxu0 %v2968
        %v3218 = vpop.f32.mrb[0].mxu0
        %v3219 = vadd.f32 %v3007, %v3218
        %v3220 = vpop.f32.mrb[0].mxu0
        %v3221 = vadd.f32 %v3011, %v3220
        %v3222 = vpop.f32.mrb[0].mxu0
        %v3223 = vadd.f32 %v3007, %v3222
        %v3224 = vpop.f32.mrb[0].mxu0
        %v3225 = vadd.f32 %v3011, %v3224
        %3226 = vmatprep.mubr.bf16.mxu0 0
        %3227 = vmatmul.mubr.bf16.gmra.mrb[0].mxu0 %v2969
        %v3228 = vpop.f32.mrb[0].mxu0
        %v3229 = vadd.f32 %v3007, %v3228
        %v3230 = vpop.f32.mrb[0].mxu0
        %v3231 = vadd.f32 %v3011, %v3230
        %v3232 = vpop.f32.mrb[0].mxu0
        %v3233 = vadd.f32 %v3007, %v3232
        %v3234 = vpop.f32.mrb[0].mxu0
        %v3235 = vadd.f32 %v3011, %v3234
        %3236 = vdwg.mxu0
        %3237 = vmatprep.subr.bf16.mxu0 %v3123
        %3238 = vmatpush1.bf16.msra.mxu0 %v3122
        %3239 = vmatprep.subr.bf16.mxu0 %v3127
        %3240 = vmatpush1.bf16.msra.mxu0 %v3126
        %3241 = vmatprep.subr.bf16.mxu0 %v3131
        %3242 = vmatpush1.bf16.msra.mxu0 %v3130
        %3243 = vmatprep.subr.bf16.mxu0 %v3135
        %3244 = vmatpush1.bf16.msra.mxu0 %v3134
        %3245 = vmatprep.subr.bf16.mxu0 %v3139
        %3246 = vmatpush1.bf16.msra.mxu0 %v3138
        %3247 = vmatprep.subr.bf16.mxu0 %v3143
        %3248 = vmatpush1.bf16.msra.mxu0 %v3142
        %3249 = vmatprep.subr.bf16.mxu0 %v3147
        %3250 = vmatpush1.bf16.msra.mxu0 %v3146
        %3251 = vmatprep.subr.bf16.mxu0 %v3151
        %3252 = vmatpush1.bf16.msra.mxu0 %v3150
        %3253 = vmatprep.subr.bf16.mxu0 0
        %3254 = vmatpush1.bf16.msra.mxu0 0
        %3255 = vmatprep.subr.bf16.mxu0 0
        %3256 = vmatpush1.bf16.msra.mxu0 0
        %3257 = vmatprep.subr.bf16.mxu0 0
        %3258 = vmatpush1.bf16.msra.mxu0 0
        %3259 = vmatprep.subr.bf16.mxu0 0
        %3260 = vmatpush1.bf16.msra.mxu0 0
        %3261 = vmatprep.subr.bf16.mxu0 0
        %3262 = vmatpush1.bf16.msra.mxu0 0
        %3263 = vmatprep.subr.bf16.mxu0 0
        %3264 = vmatpush1.bf16.msra.mxu0 0
        %3265 = vmatprep.subr.bf16.mxu0 0
        %3266 = vmatpush1.bf16.msra.mxu0 0
        %3267 = vmatprep.subr.bf16.mxu0 0
        %3268 = vmatpush1.bf16.msra.mxu0 0
        %3269 = vmatprep.mubr.bf16.mxu0 0
        %3270 = vmatmul.mubr.bf16.gmra.mrb[0].mxu0 %v2968
        %v3271 = vpop.f32.mrb[0].mxu0
        %v3272 = vadd.f32 %v3015, %v3271
        %v3273 = vpop.f32.mrb[0].mxu0
        %v3274 = vadd.f32 %v3019, %v3273
        %v3275 = vpop.f32.mrb[0].mxu0
        %v3276 = vadd.f32 %v3015, %v3275
        %v3277 = vpop.f32.mrb[0].mxu0
        %v3278 = vadd.f32 %v3019, %v3277
        %3279 = vmatprep.mubr.bf16.mxu0 0
        %3280 = vmatmul.mubr.bf16.gmra.mrb[0].mxu0 %v2969
        %v3281 = vpop.f32.mrb[0].mxu0
        %v3282 = vadd.f32 %v3015, %v3281
        %v3283 = vpop.f32.mrb[0].mxu0
        %v3284 = vadd.f32 %v3019, %v3283
        %v3285 = vpop.f32.mrb[0].mxu0
        %v3286 = vadd.f32 %v3015, %v3285
        %v3287 = vpop.f32.mrb[0].mxu0
        %v3288 = vadd.f32 %v3019, %v3287
        %3289 = vdwg.mxu0
        %v3290 = vld [vmem:[%s1301] sm:$0xff]
        %v3291 = vld [vmem:[%s1301 + $0x8] sm:$0xff]
        %v3292 = vld [vmem:[%s1301 + $0x10] sm:$0xff]
        %v3293 = vld [vmem:[%s1301 + $0x18] sm:$0xff]
        %v3294 = vld [vmem:[%s1301 + $0x20] sm:$0xff]
        %v3295 = vld [vmem:[%s1301 + $0x28] sm:$0xff]
        %v3296 = vld [vmem:[%s1301 + $0x30] sm:$0xff]
        %v3297 = vld [vmem:[%s1301 + $0x38] sm:$0xff]
        %v3298 = vld [vmem:[%s1301 + $0x40] sm:$0xff]
        %v3299 = vld [vmem:[%s1301 + $0x48] sm:$0xff]
        %v3300 = vld [vmem:[%s1301 + $0x50] sm:$0xff]
        %v3301 = vld [vmem:[%s1301 + $0x58] sm:$0xff]
        %v3302 = vld [vmem:[%s1301 + $0x60] sm:$0xff]
        %v3303 = vld [vmem:[%s1301 + $0x68] sm:$0xff]
        %v3304 = vld [vmem:[%s1301 + $0x70] sm:$0xff]
        %v3305 = vld [vmem:[%s1301 + $0x78] sm:$0xff]
        %v3306 = vld [vmem:[%s1301 + $0x80] sm:$0xff]
        %v3307 = vld [vmem:[%s1301 + $0x88] sm:$0xff]
        %v3308 = vld [vmem:[%s1301 + $0x90] sm:$0xff]
        %v3309 = vld [vmem:[%s1301 + $0x98] sm:$0xff]
        %v3310 = vld [vmem:[%s1301 + $0xa0] sm:$0xff]
        %v3311 = vld [vmem:[%s1301 + $0xa8] sm:$0xff]
        %v3312 = vld [vmem:[%s1301 + $0xb0] sm:$0xff]
        %v3313 = vld [vmem:[%s1301 + $0xb8] sm:$0xff]
        %v3314 = vld [vmem:[%s1301 + $0xc0] sm:$0xff]
        %v3315 = vld [vmem:[%s1301 + $0xc8] sm:$0xff]
        %v3316 = vld [vmem:[%s1301 + $0xd0] sm:$0xff]
        %v3317 = vld [vmem:[%s1301 + $0xd8] sm:$0xff]
        %v3318 = vld [vmem:[%s1301 + $0xe0] sm:$0xff]
        %v3319 = vld [vmem:[%s1301 + $0xe8] sm:$0xff]
        %v3320 = vld [vmem:[%s1301 + $0xf0] sm:$0xff]
        %v3321 = vld [vmem:[%s1301 + $0xf8] sm:$0xff]
        %v3322 = vld [vmem:[%s1310] sm:$0xf]
        %v3324 = vlaneseq
        %v3325 = vshrl.u32 %v3324, 7
        %v3326 = vsub.s32 0, %v3325
        %v3327 = vrot.slane %v3322, %v3326
        %v3328 = vlaneseq
        %v3329 = vshrl.u32 %v3328, 7
        %v3330 = vsub.s32 1, %v3329
        %v3331 = vrot.slane %v3322, %v3330
        %v3332 = vlaneseq
        %v3333 = vshrl.u32 %v3332, 7
        %v3334 = vsub.s32 2, %v3333
        %v3335 = vrot.slane %v3322, %v3334
        %v3336 = vlaneseq
        %v3337 = vshrl.u32 %v3336, 7
        %v3338 = vsub.s32 3, %v3337
        %v3339 = vrot.slane %v3322, %v3338
        %v3376 = vunpack.c.l.b16 %v3290
        %v3377 = vunpack.c.h.b16 %v3290
        %v3378 = vunpack.c.l.b16 %v3291
        %v3379 = vunpack.c.h.b16 %v3291
        %v3380 = vunpack.c.l.b16 %v3292
        %v3381 = vunpack.c.h.b16 %v3292
        %v3382 = vunpack.c.l.b16 %v3293
        %v3383 = vunpack.c.h.b16 %v3293
        %v3384 = vunpack.c.l.b16 %v3294
        %v3385 = vunpack.c.h.b16 %v3294
        %v3386 = vunpack.c.l.b16 %v3295
        %v3387 = vunpack.c.h.b16 %v3295
        %v3388 = vunpack.c.l.b16 %v3296
        %v3389 = vunpack.c.h.b16 %v3296
        %v3390 = vunpack.c.l.b16 %v3297
        %v3391 = vunpack.c.h.b16 %v3297
        %v3392 = vunpack.c.l.b16 %v3298
        %v3393 = vunpack.c.h.b16 %v3298
        %v3394 = vunpack.c.l.b16 %v3299
        %v3395 = vunpack.c.h.b16 %v3299
        %v3396 = vunpack.c.l.b16 %v3300
        %v3397 = vunpack.c.h.b16 %v3300
        %v3398 = vunpack.c.l.b16 %v3301
        %v3399 = vunpack.c.h.b16 %v3301
        %v3400 = vunpack.c.l.b16 %v3302
        %v3401 = vunpack.c.h.b16 %v3302
        %v3402 = vunpack.c.l.b16 %v3303
        %v3403 = vunpack.c.h.b16 %v3303
        %v3404 = vunpack.c.l.b16 %v3304
        %v3405 = vunpack.c.h.b16 %v3304
        %v3406 = vunpack.c.l.b16 %v3305
        %v3407 = vunpack.c.h.b16 %v3305
        %v3408 = vunpack.c.l.b16 %v3306
        %v3409 = vunpack.c.h.b16 %v3306
        %v3410 = vunpack.c.l.b16 %v3307
        %v3411 = vunpack.c.h.b16 %v3307
        %v3412 = vunpack.c.l.b16 %v3308
        %v3413 = vunpack.c.h.b16 %v3308
        %v3414 = vunpack.c.l.b16 %v3309
        %v3415 = vunpack.c.h.b16 %v3309
        %v3416 = vunpack.c.l.b16 %v3310
        %v3417 = vunpack.c.h.b16 %v3310
        %v3418 = vunpack.c.l.b16 %v3311
        %v3419 = vunpack.c.h.b16 %v3311
        %v3420 = vunpack.c.l.b16 %v3312
        %v3421 = vunpack.c.h.b16 %v3312
        %v3422 = vunpack.c.l.b16 %v3313
        %v3423 = vunpack.c.h.b16 %v3313
        %v3424 = vunpack.c.l.b16 %v3314
        %v3425 = vunpack.c.h.b16 %v3314
        %v3426 = vunpack.c.l.b16 %v3315
        %v3427 = vunpack.c.h.b16 %v3315
        %v3428 = vunpack.c.l.b16 %v3316
        %v3429 = vunpack.c.h.b16 %v3316
        %v3430 = vunpack.c.l.b16 %v3317
        %v3431 = vunpack.c.h.b16 %v3317
        %v3432 = vunpack.c.l.b16 %v3318
        %v3433 = vunpack.c.h.b16 %v3318
        %v3434 = vunpack.c.l.b16 %v3319
        %v3435 = vunpack.c.h.b16 %v3319
        %v3436 = vunpack.c.l.b16 %v3320
        %v3437 = vunpack.c.h.b16 %v3320
        %v3438 = vunpack.c.l.b16 %v3321
        %v3439 = vunpack.c.h.b16 %v3321
        %v3440 = vpack.c.b16 %v3380, %v3376
        %v3441 = vpack.c.b16 %v3381, %v3377
        %v3442 = vpack.c.b16 %v3382, %v3378
        %v3443 = vpack.c.b16 %v3383, %v3379
        %v3444 = vpack.c.b16 %v3388, %v3384
        %v3445 = vpack.c.b16 %v3389, %v3385
        %v3446 = vpack.c.b16 %v3390, %v3386
        %v3447 = vpack.c.b16 %v3391, %v3387
        %v3448 = vpack.c.b16 %v3396, %v3392
        %v3449 = vpack.c.b16 %v3397, %v3393
        %v3450 = vpack.c.b16 %v3398, %v3394
        %v3451 = vpack.c.b16 %v3399, %v3395
        %v3452 = vpack.c.b16 %v3404, %v3400
        %v3453 = vpack.c.b16 %v3405, %v3401
        %v3454 = vpack.c.b16 %v3406, %v3402
        %v3455 = vpack.c.b16 %v3407, %v3403
        %v3456 = vpack.c.b16 %v3412, %v3408
        %v3457 = vpack.c.b16 %v3413, %v3409
        %v3458 = vpack.c.b16 %v3414, %v3410
        %v3459 = vpack.c.b16 %v3415, %v3411
        %v3460 = vpack.c.b16 %v3420, %v3416
        %v3461 = vpack.c.b16 %v3421, %v3417
        %v3462 = vpack.c.b16 %v3422, %v3418
        %v3463 = vpack.c.b16 %v3423, %v3419
        %v3464 = vpack.c.b16 %v3428, %v3424
        %v3465 = vpack.c.b16 %v3429, %v3425
        %v3466 = vpack.c.b16 %v3430, %v3426
        %v3467 = vpack.c.b16 %v3431, %v3427
        %v3468 = vpack.c.b16 %v3436, %v3432
        %v3469 = vpack.c.b16 %v3437, %v3433
        %v3470 = vpack.c.b16 %v3438, %v3434
        %v3471 = vpack.c.b16 %v3439, %v3435
        %3504 = vmatprep.subr.bf16.mxu0 %v3441
        %3505 = vmatpush1.bf16.msra.mxu0 %v3440
        %3506 = vmatprep.subr.bf16.mxu0 %v3445
        %3507 = vmatpush1.bf16.msra.mxu0 %v3444
        %3508 = vmatprep.subr.bf16.mxu0 %v3449
        %3509 = vmatpush1.bf16.msra.mxu0 %v3448
        %3510 = vmatprep.subr.bf16.mxu0 %v3453
        %3511 = vmatpush1.bf16.msra.mxu0 %v3452
        %3512 = vmatprep.subr.bf16.mxu0 %v3457
        %3513 = vmatpush1.bf16.msra.mxu0 %v3456
        %3514 = vmatprep.subr.bf16.mxu0 %v3461
        %3515 = vmatpush1.bf16.msra.mxu0 %v3460
        %3516 = vmatprep.subr.bf16.mxu0 %v3465
        %3517 = vmatpush1.bf16.msra.mxu0 %v3464
        %3518 = vmatprep.subr.bf16.mxu0 %v3469
        %3519 = vmatpush1.bf16.msra.mxu0 %v3468
        %3520 = vmatprep.subr.bf16.mxu0 0
        %3521 = vmatpush1.bf16.msra.mxu0 0
        %3522 = vmatprep.subr.bf16.mxu0 0
        %3523 = vmatpush1.bf16.msra.mxu0 0
        %3524 = vmatprep.subr.bf16.mxu0 0
        %3525 = vmatpush1.bf16.msra.mxu0 0
        %3526 = vmatprep.subr.bf16.mxu0 0
        %3527 = vmatpush1.bf16.msra.mxu0 0
        %3528 = vmatprep.subr.bf16.mxu0 0
        %3529 = vmatpush1.bf16.msra.mxu0 0
        %3530 = vmatprep.subr.bf16.mxu0 0
        %3531 = vmatpush1.bf16.msra.mxu0 0
        %3532 = vmatprep.subr.bf16.mxu0 0
        %3533 = vmatpush1.bf16.msra.mxu0 0
        %3534 = vmatprep.subr.bf16.mxu0 0
        %3535 = vmatpush1.bf16.msra.mxu0 0
        %3536 = vmatprep.mubr.bf16.mxu0 0
        %3537 = vmatmul.mubr.bf16.gmra.mrb[0].mxu0 %v2968
        %v3538 = vpop.f32.mrb[0].mxu0
        %v3539 = vadd.f32 %v3327, %v3538
        %v3540 = vpop.f32.mrb[0].mxu0
        %v3541 = vadd.f32 %v3331, %v3540
        %v3542 = vpop.f32.mrb[0].mxu0
        %v3543 = vadd.f32 %v3327, %v3542
        %v3544 = vpop.f32.mrb[0].mxu0
        %v3545 = vadd.f32 %v3331, %v3544
        %3546 = vmatprep.mubr.bf16.mxu0 0
        %3547 = vmatmul.mubr.bf16.gmra.mrb[0].mxu0 %v2969
        %v3548 = vpop.f32.mrb[0].mxu0
        %v3549 = vadd.f32 %v3327, %v3548
        %v3550 = vpop.f32.mrb[0].mxu0
        %v3551 = vadd.f32 %v3331, %v3550
        %v3552 = vpop.f32.mrb[0].mxu0
        %v3553 = vadd.f32 %v3327, %v3552
        %v3554 = vpop.f32.mrb[0].mxu0
        %v3555 = vadd.f32 %v3331, %v3554
        %3556 = vdwg.mxu0
        %3557 = vmatprep.subr.bf16.mxu0 %v3443
        %3558 = vmatpush1.bf16.msra.mxu0 %v3442
        %3559 = vmatprep.subr.bf16.mxu0 %v3447
        %3560 = vmatpush1.bf16.msra.mxu0 %v3446
        %3561 = vmatprep.subr.bf16.mxu0 %v3451
        %3562 = vmatpush1.bf16.msra.mxu0 %v3450
        %3563 = vmatprep.subr.bf16.mxu0 %v3455
        %3564 = vmatpush1.bf16.msra.mxu0 %v3454
        %3565 = vmatprep.subr.bf16.mxu0 %v3459
        %3566 = vmatpush1.bf16.msra.mxu0 %v3458
        %3567 = vmatprep.subr.bf16.mxu0 %v3463
        %3568 = vmatpush1.bf16.msra.mxu0 %v3462
        %3569 = vmatprep.subr.bf16.mxu0 %v3467
        %3570 = vmatpush1.bf16.msra.mxu0 %v3466
        %3571 = vmatprep.subr.bf16.mxu0 %v3471
        %3572 = vmatpush1.bf16.msra.mxu0 %v3470
        %3573 = vmatprep.subr.bf16.mxu0 0
        %3574 = vmatpush1.bf16.msra.mxu0 0
        %3575 = vmatprep.subr.bf16.mxu0 0
        %3576 = vmatpush1.bf16.msra.mxu0 0
        %3577 = vmatprep.subr.bf16.mxu0 0
        %3578 = vmatpush1.bf16.msra.mxu0 0
        %3579 = vmatprep.subr.bf16.mxu0 0
        %3580 = vmatpush1.bf16.msra.mxu0 0
        %3581 = vmatprep.subr.bf16.mxu0 0
        %3582 = vmatpush1.bf16.msra.mxu0 0
        %3583 = vmatprep.subr.bf16.mxu0 0
        %3584 = vmatpush1.bf16.msra.mxu0 0
        %3585 = vmatprep.subr.bf16.mxu0 0
        %3586 = vmatpush1.bf16.msra.mxu0 0
        %3587 = vmatprep.subr.bf16.mxu0 0
        %3588 = vmatpush1.bf16.msra.mxu0 0
        %3589 = vmatprep.mubr.bf16.mxu0 0
        %3590 = vmatmul.mubr.bf16.gmra.mrb[0].mxu0 %v2968
        %v3591 = vpop.f32.mrb[0].mxu0
        %v3592 = vadd.f32 %v3335, %v3591
        %v3593 = vpop.f32.mrb[0].mxu0
        %v3594 = vadd.f32 %v3339, %v3593
        %v3595 = vpop.f32.mrb[0].mxu0
        %v3596 = vadd.f32 %v3335, %v3595
        %v3597 = vpop.f32.mrb[0].mxu0
        %v3598 = vadd.f32 %v3339, %v3597
        %3599 = vmatprep.mubr.bf16.mxu0 0
        %3600 = vmatmul.mubr.bf16.gmra.mrb[0].mxu0 %v2969
        %v3601 = vpop.f32.mrb[0].mxu0
        %v3602 = vadd.f32 %v3335, %v3601
        %v3603 = vpop.f32.mrb[0].mxu0
        %v3604 = vadd.f32 %v3339, %v3603
        %v3605 = vpop.f32.mrb[0].mxu0
        %v3606 = vadd.f32 %v3335, %v3605
        %v3607 = vpop.f32.mrb[0].mxu0
        %v3608 = vadd.f32 %v3339, %v3607
        %3609 = vdwg.mxu0
        %v3610 = vlaneseq
        %v3611 = vand.u32 %v3610, 127
        %v3612 = vstv %s1623
        %vm3613 = vcmp.lt.s32.totalorder %v3611, %v3612
        %v3614 = vsel %vm3613, 0.0, -1e+30
        %v3615 = vpack.c.bf16 %v2901, %v2897
        %v3616 = vpack.c.bf16 %v3223, %v3219
        %3617 = vmatprep.subr.bf16.mxu0 0
        %3618 = vmatpush1.bf16.xpose.msra.mxu0 %v3616
        %3619 = vmatprep.subr.bf16.mxu0 0
        %3620 = vmatpush1.bf16.xpose.msra.mxu0 0
        %3621 = vmatprep.subr.bf16.mxu0 0
        %3622 = vmatpush1.bf16.xpose.msra.mxu0 0
        %3623 = vmatprep.subr.bf16.mxu0 0
        %3624 = vmatpush1.bf16.xpose.msra.mxu0 0
        %3625 = vmatprep.subr.bf16.mxu0 0
        %3626 = vmatpush1.bf16.xpose.msra.mxu0 0
        %3627 = vmatprep.subr.bf16.mxu0 0
        %3628 = vmatpush1.bf16.xpose.msra.mxu0 0
        %3629 = vmatprep.subr.bf16.mxu0 0
        %3630 = vmatpush1.bf16.xpose.msra.mxu0 0
        %3631 = vmatprep.subr.bf16.mxu0 0
        %3632 = vmatpush1.bf16.xpose.msra.mxu0 0
        %3633 = vmatprep.subr.bf16.mxu0 0
        %3634 = vmatpush1.bf16.xpose.msra.mxu0 0
        %3635 = vmatprep.subr.bf16.mxu0 0
        %3636 = vmatpush1.bf16.xpose.msra.mxu0 0
        %3637 = vmatprep.subr.bf16.mxu0 0
        %3638 = vmatpush1.bf16.xpose.msra.mxu0 0
        %3639 = vmatprep.subr.bf16.mxu0 0
        %3640 = vmatpush1.bf16.xpose.msra.mxu0 0
        %3641 = vmatprep.subr.bf16.mxu0 0
        %3642 = vmatpush1.bf16.xpose.msra.mxu0 0
        %3643 = vmatprep.subr.bf16.mxu0 0
        %3644 = vmatpush1.bf16.xpose.msra.mxu0 0
        %3645 = vmatprep.subr.bf16.mxu0 0
        %3646 = vmatpush1.bf16.xpose.msra.mxu0 0
        %3647 = vmatprep.subr.bf16.mxu0 0
        %3648 = vmatpush1.bf16.xpose.msra.mxu0 0
        %3649 = vmatprep.mubr.bf16.mxu0 0
        %3650 = vmatmul.mubr.bf16.gmra.mrb[0].mxu0 %v3615
        %v3651 = vpop.f32.mrb[0].mxu0
        %v3652 = vadd.f32 0.0, %v3651
        %v3653 = vpop.f32.mrb[0].mxu0
        %v3654 = vpop.f32.mrb[0].mxu0
        %v3655 = vadd.f32 0.0, %v3654
        %v3656 = vpop.f32.mrb[0].mxu0
        %3657 = vdwg.mxu0
        %v3658 = vmul.f32 %v3652, 0.088388346
        %v3659 = vmul.f32 %v3655, 0.088388346
        %v3660 = vadd.f32 %v3658, %v3614
        %v3661 = vadd.f32 %v3659, %v3614
        %vm3662 = vcmask 130048
        %v3663 = vsel %vm3662, %v3660, -inf
        %3664 = vmax.xlane.f32.xlu0 %v3663
        %v3665 = vpop.xlane.xlu0 %3664
        %v3666 = vsel %vm3662, %v3661, -inf
        %3667 = vmax.xlane.f32.xlu0 %v3666
        %v3668 = vpop.xlane.xlu0 %3667
        %v3669 = vsub.f32 %v3660, %v3665
        %v3670 = vsub.f32 %v3661, %v3668
        %v3671 = vmul.f32 %v3669, 1.442695
        %v3672 = vpow.pop %v3671
        %v3673 = vmul.f32 %v3670, 1.442695
        %v3674 = vpow.pop %v3673
        %v3675 = vsel %vm3662, %v3672, 0.0
        %3676 = vadd.xlane.f32.xlu0 %v3675
        %v3677 = vpop.xlane.xlu0 %3676
        %v3678 = vsel %vm3662, %v3674, 0.0
        %3679 = vadd.xlane.f32.xlu0 %v3678
        %v3680 = vpop.xlane.xlu0 %3679
        %v3681 = vrcp.pop %v3677
        %v3682 = vrcp.pop %v3680
        %v3683 = vmul.f32 %v3672, %v3681
        %v3684 = vmul.f32 %v3674, %v3682
        %v3685 = vpack.c.bf16 %v3684, %v3683
        %v3686 = vpack.c.bf16 %v3543, %v3539
        %v3688 = vsel %vm3662, %v3685, 0
        %3690 = vmatprep.subr.bf16.mxu0 0
        %3691 = vmatpush1.bf16.msra.mxu0 %v3686
        %3692 = vmatprep.subr.bf16.mxu0 0
        %3693 = vmatpush1.bf16.msra.mxu0 0
        %3694 = vmatprep.subr.bf16.mxu0 0
        %3695 = vmatpush1.bf16.msra.mxu0 0
        %3696 = vmatprep.subr.bf16.mxu0 0
        %3697 = vmatpush1.bf16.msra.mxu0 0
        %3698 = vmatprep.subr.bf16.mxu0 0
        %3699 = vmatpush1.bf16.msra.mxu0 0
        %3700 = vmatprep.subr.bf16.mxu0 0
        %3701 = vmatpush1.bf16.msra.mxu0 0
        %3702 = vmatprep.subr.bf16.mxu0 0
        %3703 = vmatpush1.bf16.msra.mxu0 0
        %3704 = vmatprep.subr.bf16.mxu0 0
        %3705 = vmatpush1.bf16.msra.mxu0 0
        %3706 = vmatprep.subr.bf16.mxu0 0
        %3707 = vmatpush1.bf16.msra.mxu0 0
        %3708 = vmatprep.subr.bf16.mxu0 0
        %3709 = vmatpush1.bf16.msra.mxu0 0
        %3710 = vmatprep.subr.bf16.mxu0 0
        %3711 = vmatpush1.bf16.msra.mxu0 0
        %3712 = vmatprep.subr.bf16.mxu0 0
        %3713 = vmatpush1.bf16.msra.mxu0 0
        %3714 = vmatprep.subr.bf16.mxu0 0
        %3715 = vmatpush1.bf16.msra.mxu0 0
        %3716 = vmatprep.subr.bf16.mxu0 0
        %3717 = vmatpush1.bf16.msra.mxu0 0
        %3718 = vmatprep.subr.bf16.mxu0 0
        %3719 = vmatpush1.bf16.msra.mxu0 0
        %3720 = vmatprep.subr.bf16.mxu0 0
        %3721 = vmatpush1.bf16.msra.mxu0 0
        %3722 = vmatprep.mubr.bf16.mxu0 0
        %3723 = vmatmul.mubr.bf16.gmra.mrb[0].mxu0 %v3688
        %v3724 = vpop.f32.mrb[0].mxu0
        %v3725 = vadd.f32 0.0, %v3724
        %v3726 = vpop.f32.mrb[0].mxu0
        %v3727 = vpop.f32.mrb[0].mxu0
        %v3728 = vadd.f32 0.0, %v3727
        %v3729 = vpop.f32.mrb[0].mxu0
        %3730 = vdwg.mxu0
        %v3731 = vpack.c.bf16 %v2903, %v2899
        %v3732 = vpack.c.bf16 %v3225, %v3221
        %3733 = vmatprep.subr.bf16.mxu0 0
        %3734 = vmatpush1.bf16.xpose.msra.mxu0 %v3732
        %3735 = vmatprep.subr.bf16.mxu0 0
        %3736 = vmatpush1.bf16.xpose.msra.mxu0 0
        %3737 = vmatprep.subr.bf16.mxu0 0
        %3738 = vmatpush1.bf16.xpose.msra.mxu0 0
        %3739 = vmatprep.subr.bf16.mxu0 0
        %3740 = vmatpush1.bf16.xpose.msra.mxu0 0
        %3741 = vmatprep.subr.bf16.mxu0 0
        %3742 = vmatpush1.bf16.xpose.msra.mxu0 0
        %3743 = vmatprep.subr.bf16.mxu0 0
        %3744 = vmatpush1.bf16.xpose.msra.mxu0 0
        %3745 = vmatprep.subr.bf16.mxu0 0
        %3746 = vmatpush1.bf16.xpose.msra.mxu0 0
        %3747 = vmatprep.subr.bf16.mxu0 0
        %3748 = vmatpush1.bf16.xpose.msra.mxu0 0
        %3749 = vmatprep.subr.bf16.mxu0 0
        %3750 = vmatpush1.bf16.xpose.msra.mxu0 0
        %3751 = vmatprep.subr.bf16.mxu0 0
        %3752 = vmatpush1.bf16.xpose.msra.mxu0 0
        %3753 = vmatprep.subr.bf16.mxu0 0
        %3754 = vmatpush1.bf16.xpose.msra.mxu0 0
        %3755 = vmatprep.subr.bf16.mxu0 0
        %3756 = vmatpush1.bf16.xpose.msra.mxu0 0
        %3757 = vmatprep.subr.bf16.mxu0 0
        %3758 = vmatpush1.bf16.xpose.msra.mxu0 0
        %3759 = vmatprep.subr.bf16.mxu0 0
        %3760 = vmatpush1.bf16.xpose.msra.mxu0 0
        %3761 = vmatprep.subr.bf16.mxu0 0
        %3762 = vmatpush1.bf16.xpose.msra.mxu0 0
        %3763 = vmatprep.subr.bf16.mxu0 0
        %3764 = vmatpush1.bf16.xpose.msra.mxu0 0
        %3765 = vmatprep.mubr.bf16.mxu0 0
        %3766 = vmatmul.mubr.bf16.gmra.mrb[0].mxu0 %v3731
        %v3767 = vpop.f32.mrb[0].mxu0
        %v3768 = vadd.f32 0.0, %v3767
        %v3769 = vpop.f32.mrb[0].mxu0
        %v3770 = vpop.f32.mrb[0].mxu0
        %v3771 = vadd.f32 0.0, %v3770
        %v3772 = vpop.f32.mrb[0].mxu0
        %3773 = vdwg.mxu0
        %v3774 = vmul.f32 %v3768, 0.088388346
        %v3775 = vmul.f32 %v3771, 0.088388346
        %v3776 = vadd.f32 %v3774, %v3614
        %v3777 = vadd.f32 %v3775, %v3614
        %v3778 = vsel %vm3662, %v3776, -inf
        %3779 = vmax.xlane.f32.xlu0 %v3778
        %v3780 = vpop.xlane.xlu0 %3779
        %v3781 = vsel %vm3662, %v3777, -inf
        %3782 = vmax.xlane.f32.xlu0 %v3781
        %v3783 = vpop.xlane.xlu0 %3782
        %v3784 = vsub.f32 %v3776, %v3780
        %v3785 = vsub.f32 %v3777, %v3783
        %v3786 = vmul.f32 %v3784, 1.442695
        %v3787 = vpow.pop %v3786
        %v3788 = vmul.f32 %v3785, 1.442695
        %v3789 = vpow.pop %v3788
        %v3790 = vsel %vm3662, %v3787, 0.0
        %3791 = vadd.xlane.f32.xlu0 %v3790
        %v3792 = vpop.xlane.xlu0 %3791
        %v3793 = vsel %vm3662, %v3789, 0.0
        %3794 = vadd.xlane.f32.xlu0 %v3793
        %v3795 = vpop.xlane.xlu0 %3794
        %v3796 = vrcp.pop %v3792
        %v3797 = vrcp.pop %v3795
        %v3798 = vmul.f32 %v3787, %v3796
        %v3799 = vmul.f32 %v3789, %v3797
        %v3800 = vpack.c.bf16 %v3799, %v3798
        %v3801 = vpack.c.bf16 %v3545, %v3541
        %v3803 = vsel %vm3662, %v3800, 0
        %3805 = vmatprep.subr.bf16.mxu0 0
        %3806 = vmatpush1.bf16.msra.mxu0 %v3801
        %3807 = vmatprep.subr.bf16.mxu0 0
        %3808 = vmatpush1.bf16.msra.mxu0 0
        %3809 = vmatprep.subr.bf16.mxu0 0
        %3810 = vmatpush1.bf16.msra.mxu0 0
        %3811 = vmatprep.subr.bf16.mxu0 0
        %3812 = vmatpush1.bf16.msra.mxu0 0
        %3813 = vmatprep.subr.bf16.mxu0 0
        %3814 = vmatpush1.bf16.msra.mxu0 0
        %3815 = vmatprep.subr.bf16.mxu0 0
        %3816 = vmatpush1.bf16.msra.mxu0 0
        %3817 = vmatprep.subr.bf16.mxu0 0
        %3818 = vmatpush1.bf16.msra.mxu0 0
        %3819 = vmatprep.subr.bf16.mxu0 0
        %3820 = vmatpush1.bf16.msra.mxu0 0
        %3821 = vmatprep.subr.bf16.mxu0 0
        %3822 = vmatpush1.bf16.msra.mxu0 0
        %3823 = vmatprep.subr.bf16.mxu0 0
        %3824 = vmatpush1.bf16.msra.mxu0 0
        %3825 = vmatprep.subr.bf16.mxu0 0
        %3826 = vmatpush1.bf16.msra.mxu0 0
        %3827 = vmatprep.subr.bf16.mxu0 0
        %3828 = vmatpush1.bf16.msra.mxu0 0
        %3829 = vmatprep.subr.bf16.mxu0 0
        %3830 = vmatpush1.bf16.msra.mxu0 0
        %3831 = vmatprep.subr.bf16.mxu0 0
        %3832 = vmatpush1.bf16.msra.mxu0 0
        %3833 = vmatprep.subr.bf16.mxu0 0
        %3834 = vmatpush1.bf16.msra.mxu0 0
        %3835 = vmatprep.subr.bf16.mxu0 0
        %3836 = vmatpush1.bf16.msra.mxu0 0
        %3837 = vmatprep.mubr.bf16.mxu0 0
        %3838 = vmatmul.mubr.bf16.gmra.mrb[0].mxu0 %v3803
        %v3839 = vpop.f32.mrb[0].mxu0
        %v3840 = vadd.f32 0.0, %v3839
        %v3841 = vpop.f32.mrb[0].mxu0
        %v3842 = vpop.f32.mrb[0].mxu0
        %v3843 = vadd.f32 0.0, %v3842
        %v3844 = vpop.f32.mrb[0].mxu0
        %3845 = vdwg.mxu0
        %v3846 = vpack.c.bf16 %v2954, %v2950
        %v3847 = vpack.c.bf16 %v3276, %v3272
        %3848 = vmatprep.subr.bf16.mxu0 0
        %3849 = vmatpush1.bf16.xpose.msra.mxu0 %v3847
        %3850 = vmatprep.subr.bf16.mxu0 0
        %3851 = vmatpush1.bf16.xpose.msra.mxu0 0
        %3852 = vmatprep.subr.bf16.mxu0 0
        %3853 = vmatpush1.bf16.xpose.msra.mxu0 0
        %3854 = vmatprep.subr.bf16.mxu0 0
        %3855 = vmatpush1.bf16.xpose.msra.mxu0 0
        %3856 = vmatprep.subr.bf16.mxu0 0
        %3857 = vmatpush1.bf16.xpose.msra.mxu0 0
        %3858 = vmatprep.subr.bf16.mxu0 0
        %3859 = vmatpush1.bf16.xpose.msra.mxu0 0
        %3860 = vmatprep.subr.bf16.mxu0 0
        %3861 = vmatpush1.bf16.xpose.msra.mxu0 0
        %3862 = vmatprep.subr.bf16.mxu0 0
        %3863 = vmatpush1.bf16.xpose.msra.mxu0 0
        %3864 = vmatprep.subr.bf16.mxu0 0
        %3865 = vmatpush1.bf16.xpose.msra.mxu0 0
        %3866 = vmatprep.subr.bf16.mxu0 0
        %3867 = vmatpush1.bf16.xpose.msra.mxu0 0
        %3868 = vmatprep.subr.bf16.mxu0 0
        %3869 = vmatpush1.bf16.xpose.msra.mxu0 0
        %3870 = vmatprep.subr.bf16.mxu0 0
        %3871 = vmatpush1.bf16.xpose.msra.mxu0 0
        %3872 = vmatprep.subr.bf16.mxu0 0
        %3873 = vmatpush1.bf16.xpose.msra.mxu0 0
        %3874 = vmatprep.subr.bf16.mxu0 0
        %3875 = vmatpush1.bf16.xpose.msra.mxu0 0
        %3876 = vmatprep.subr.bf16.mxu0 0
        %3877 = vmatpush1.bf16.xpose.msra.mxu0 0
        %3878 = vmatprep.subr.bf16.mxu0 0
        %3879 = vmatpush1.bf16.xpose.msra.mxu0 0
        %3880 = vmatprep.mubr.bf16.mxu0 0
        %3881 = vmatmul.mubr.bf16.gmra.mrb[0].mxu0 %v3846
        %v3882 = vpop.f32.mrb[0].mxu0
        %v3883 = vadd.f32 0.0, %v3882
        %v3884 = vpop.f32.mrb[0].mxu0
        %v3885 = vpop.f32.mrb[0].mxu0
        %v3886 = vadd.f32 0.0, %v3885
        %v3887 = vpop.f32.mrb[0].mxu0
        %3888 = vdwg.mxu0
        %v3889 = vmul.f32 %v3883, 0.088388346
        %v3890 = vmul.f32 %v3886, 0.088388346
        %v3891 = vadd.f32 %v3889, %v3614
        %v3892 = vadd.f32 %v3890, %v3614
        %v3893 = vsel %vm3662, %v3891, -inf
        %3894 = vmax.xlane.f32.xlu0 %v3893
        %v3895 = vpop.xlane.xlu0 %3894
        %v3896 = vsel %vm3662, %v3892, -inf
        %3897 = vmax.xlane.f32.xlu0 %v3896
        %v3898 = vpop.xlane.xlu0 %3897
        %v3899 = vsub.f32 %v3891, %v3895
        %v3900 = vsub.f32 %v3892, %v3898
        %v3901 = vmul.f32 %v3899, 1.442695
        %v3902 = vpow.pop %v3901
        %v3903 = vmul.f32 %v3900, 1.442695
        %v3904 = vpow.pop %v3903
        %v3905 = vsel %vm3662, %v3902, 0.0
        %3906 = vadd.xlane.f32.xlu0 %v3905
        %v3907 = vpop.xlane.xlu0 %3906
        %v3908 = vsel %vm3662, %v3904, 0.0
        %3909 = vadd.xlane.f32.xlu0 %v3908
        %v3910 = vpop.xlane.xlu0 %3909
        %v3911 = vrcp.pop %v3907
        %v3912 = vrcp.pop %v3910
        %v3913 = vmul.f32 %v3902, %v3911
        %v3914 = vmul.f32 %v3904, %v3912
        %v3915 = vpack.c.bf16 %v3914, %v3913
        %v3916 = vpack.c.bf16 %v3596, %v3592
        %v3918 = vsel %vm3662, %v3915, 0
        %3920 = vmatprep.subr.bf16.mxu0 0
        %3921 = vmatpush1.bf16.msra.mxu0 %v3916
        %3922 = vmatprep.subr.bf16.mxu0 0
        %3923 = vmatpush1.bf16.msra.mxu0 0
        %3924 = vmatprep.subr.bf16.mxu0 0
        %3925 = vmatpush1.bf16.msra.mxu0 0
        %3926 = vmatprep.subr.bf16.mxu0 0
        %3927 = vmatpush1.bf16.msra.mxu0 0
        %3928 = vmatprep.subr.bf16.mxu0 0
        %3929 = vmatpush1.bf16.msra.mxu0 0
        %3930 = vmatprep.subr.bf16.mxu0 0
        %3931 = vmatpush1.bf16.msra.mxu0 0
        %3932 = vmatprep.subr.bf16.mxu0 0
        %3933 = vmatpush1.bf16.msra.mxu0 0
        %3934 = vmatprep.subr.bf16.mxu0 0
        %3935 = vmatpush1.bf16.msra.mxu0 0
        %3936 = vmatprep.subr.bf16.mxu0 0
        %3937 = vmatpush1.bf16.msra.mxu0 0
        %3938 = vmatprep.subr.bf16.mxu0 0
        %3939 = vmatpush1.bf16.msra.mxu0 0
        %3940 = vmatprep.subr.bf16.mxu0 0
        %3941 = vmatpush1.bf16.msra.mxu0 0
        %3942 = vmatprep.subr.bf16.mxu0 0
        %3943 = vmatpush1.bf16.msra.mxu0 0
        %3944 = vmatprep.subr.bf16.mxu0 0
        %3945 = vmatpush1.bf16.msra.mxu0 0
        %3946 = vmatprep.subr.bf16.mxu0 0
        %3947 = vmatpush1.bf16.msra.mxu0 0
        %3948 = vmatprep.subr.bf16.mxu0 0
        %3949 = vmatpush1.bf16.msra.mxu0 0
        %3950 = vmatprep.subr.bf16.mxu0 0
        %3951 = vmatpush1.bf16.msra.mxu0 0
        %3952 = vmatprep.mubr.bf16.mxu0 0
        %3953 = vmatmul.mubr.bf16.gmra.mrb[0].mxu0 %v3918
        %v3954 = vpop.f32.mrb[0].mxu0
        %v3955 = vadd.f32 0.0, %v3954
        %v3956 = vpop.f32.mrb[0].mxu0
        %v3957 = vpop.f32.mrb[0].mxu0
        %v3958 = vadd.f32 0.0, %v3957
        %v3959 = vpop.f32.mrb[0].mxu0
        %3960 = vdwg.mxu0
        %v3961 = vpack.c.bf16 %v2956, %v2952
        %v3962 = vpack.c.bf16 %v3278, %v3274
        %3963 = vmatprep.subr.bf16.mxu0 0
        %3964 = vmatpush1.bf16.xpose.msra.mxu0 %v3962
        %3965 = vmatprep.subr.bf16.mxu0 0
        %3966 = vmatpush1.bf16.xpose.msra.mxu0 0
        %3967 = vmatprep.subr.bf16.mxu0 0
        %3968 = vmatpush1.bf16.xpose.msra.mxu0 0
        %3969 = vmatprep.subr.bf16.mxu0 0
        %3970 = vmatpush1.bf16.xpose.msra.mxu0 0
        %3971 = vmatprep.subr.bf16.mxu0 0
        %3972 = vmatpush1.bf16.xpose.msra.mxu0 0
        %3973 = vmatprep.subr.bf16.mxu0 0
        %3974 = vmatpush1.bf16.xpose.msra.mxu0 0
        %3975 = vmatprep.subr.bf16.mxu0 0
        %3976 = vmatpush1.bf16.xpose.msra.mxu0 0
        %3977 = vmatprep.subr.bf16.mxu0 0
        %3978 = vmatpush1.bf16.xpose.msra.mxu0 0
        %3979 = vmatprep.subr.bf16.mxu0 0
        %3980 = vmatpush1.bf16.xpose.msra.mxu0 0
        %3981 = vmatprep.subr.bf16.mxu0 0
        %3982 = vmatpush1.bf16.xpose.msra.mxu0 0
        %3983 = vmatprep.subr.bf16.mxu0 0
        %3984 = vmatpush1.bf16.xpose.msra.mxu0 0
        %3985 = vmatprep.subr.bf16.mxu0 0
        %3986 = vmatpush1.bf16.xpose.msra.mxu0 0
        %3987 = vmatprep.subr.bf16.mxu0 0
        %3988 = vmatpush1.bf16.xpose.msra.mxu0 0
        %3989 = vmatprep.subr.bf16.mxu0 0
        %3990 = vmatpush1.bf16.xpose.msra.mxu0 0
        %3991 = vmatprep.subr.bf16.mxu0 0
        %3992 = vmatpush1.bf16.xpose.msra.mxu0 0
        %3993 = vmatprep.subr.bf16.mxu0 0
        %3994 = vmatpush1.bf16.xpose.msra.mxu0 0
        %3995 = vmatprep.mubr.bf16.mxu0 0
        %3996 = vmatmul.mubr.bf16.gmra.mrb[0].mxu0 %v3961
        %v3997 = vpop.f32.mrb[0].mxu0
        %v3998 = vadd.f32 0.0, %v3997
        %v3999 = vpop.f32.mrb[0].mxu0
        %v4000 = vpop.f32.mrb[0].mxu0
        %v4001 = vadd.f32 0.0, %v4000
        %v4002 = vpop.f32.mrb[0].mxu0
        %4003 = vdwg.mxu0
        %v4004 = vmul.f32 %v3998, 0.088388346
        %v4005 = vmul.f32 %v4001, 0.088388346
        %v4006 = vadd.f32 %v4004, %v3614
        %v4007 = vadd.f32 %v4005, %v3614
        %v4008 = vsel %vm3662, %v4006, -inf
        %4009 = vmax.xlane.f32.xlu0 %v4008
        %v4010 = vpop.xlane.xlu0 %4009
        %v4011 = vsel %vm3662, %v4007, -inf
        %4012 = vmax.xlane.f32.xlu0 %v4011
        %v4013 = vpop.xlane.xlu0 %4012
        %v4014 = vsub.f32 %v4006, %v4010
        %v4015 = vsub.f32 %v4007, %v4013
        %v4016 = vmul.f32 %v4014, 1.442695
        %v4017 = vpow.pop %v4016
        %v4018 = vmul.f32 %v4015, 1.442695
        %v4019 = vpow.pop %v4018
        %v4020 = vsel %vm3662, %v4017, 0.0
        %4021 = vadd.xlane.f32.xlu0 %v4020
        %v4022 = vpop.xlane.xlu0 %4021
        %v4023 = vsel %vm3662, %v4019, 0.0
        %4024 = vadd.xlane.f32.xlu0 %v4023
        %v4025 = vpop.xlane.xlu0 %4024
        %v4026 = vrcp.pop %v4022
        %v4027 = vrcp.pop %v4025
        %v4028 = vmul.f32 %v4017, %v4026
        %v4029 = vmul.f32 %v4019, %v4027
        %v4030 = vpack.c.bf16 %v4029, %v4028
        %v4031 = vpack.c.bf16 %v3598, %v3594
        %v4033 = vsel %vm3662, %v4030, 0
        %4035 = vmatprep.subr.bf16.mxu0 0
        %4036 = vmatpush1.bf16.msra.mxu0 %v4031
        %4037 = vmatprep.subr.bf16.mxu0 0
        %4038 = vmatpush1.bf16.msra.mxu0 0
        %4039 = vmatprep.subr.bf16.mxu0 0
        %4040 = vmatpush1.bf16.msra.mxu0 0
        %4041 = vmatprep.subr.bf16.mxu0 0
        %4042 = vmatpush1.bf16.msra.mxu0 0
        %4043 = vmatprep.subr.bf16.mxu0 0
        %4044 = vmatpush1.bf16.msra.mxu0 0
        %4045 = vmatprep.subr.bf16.mxu0 0
        %4046 = vmatpush1.bf16.msra.mxu0 0
        %4047 = vmatprep.subr.bf16.mxu0 0
        %4048 = vmatpush1.bf16.msra.mxu0 0
        %4049 = vmatprep.subr.bf16.mxu0 0
        %4050 = vmatpush1.bf16.msra.mxu0 0
        %4051 = vmatprep.subr.bf16.mxu0 0
        %4052 = vmatpush1.bf16.msra.mxu0 0
        %4053 = vmatprep.subr.bf16.mxu0 0
        %4054 = vmatpush1.bf16.msra.mxu0 0
        %4055 = vmatprep.subr.bf16.mxu0 0
        %4056 = vmatpush1.bf16.msra.mxu0 0
        %4057 = vmatprep.subr.bf16.mxu0 0
        %4058 = vmatpush1.bf16.msra.mxu0 0
        %4059 = vmatprep.subr.bf16.mxu0 0
        %4060 = vmatpush1.bf16.msra.mxu0 0
        %4061 = vmatprep.subr.bf16.mxu0 0
        %4062 = vmatpush1.bf16.msra.mxu0 0
        %4063 = vmatprep.subr.bf16.mxu0 0
        %4064 = vmatpush1.bf16.msra.mxu0 0
        %4065 = vmatprep.subr.bf16.mxu0 0
        %4066 = vmatpush1.bf16.msra.mxu0 0
        %4067 = vmatprep.mubr.bf16.mxu0 0
        %4068 = vmatmul.mubr.bf16.gmra.mrb[0].mxu0 %v4033
        %v4069 = vpop.f32.mrb[0].mxu0
        %v4070 = vadd.f32 0.0, %v4069
        %v4071 = vpop.f32.mrb[0].mxu0
        %v4072 = vpop.f32.mrb[0].mxu0
        %v4073 = vadd.f32 0.0, %v4072
        %v4074 = vpop.f32.mrb[0].mxu0
        %4075 = vdwg.mxu0
        %v4076 = vpack.c.bf16 %v2911, %v2907
        %v4077 = vpack.c.bf16 %v3233, %v3229
        %4078 = vmatprep.subr.bf16.mxu0 0
        %4079 = vmatpush1.bf16.xpose.msra.mxu0 %v4077
        %4080 = vmatprep.subr.bf16.mxu0 0
        %4081 = vmatpush1.bf16.xpose.msra.mxu0 0
        %4082 = vmatprep.subr.bf16.mxu0 0
        %4083 = vmatpush1.bf16.xpose.msra.mxu0 0
        %4084 = vmatprep.subr.bf16.mxu0 0
        %4085 = vmatpush1.bf16.xpose.msra.mxu0 0
        %4086 = vmatprep.subr.bf16.mxu0 0
        %4087 = vmatpush1.bf16.xpose.msra.mxu0 0
        %4088 = vmatprep.subr.bf16.mxu0 0
        %4089 = vmatpush1.bf16.xpose.msra.mxu0 0
        %4090 = vmatprep.subr.bf16.mxu0 0
        %4091 = vmatpush1.bf16.xpose.msra.mxu0 0
        %4092 = vmatprep.subr.bf16.mxu0 0
        %4093 = vmatpush1.bf16.xpose.msra.mxu0 0
        %4094 = vmatprep.subr.bf16.mxu0 0
        %4095 = vmatpush1.bf16.xpose.msra.mxu0 0
        %4096 = vmatprep.subr.bf16.mxu0 0
        %4097 = vmatpush1.bf16.xpose.msra.mxu0 0
        %4098 = vmatprep.subr.bf16.mxu0 0
        %4099 = vmatpush1.bf16.xpose.msra.mxu0 0
        %4100 = vmatprep.subr.bf16.mxu0 0
        %4101 = vmatpush1.bf16.xpose.msra.mxu0 0
        %4102 = vmatprep.subr.bf16.mxu0 0
        %4103 = vmatpush1.bf16.xpose.msra.mxu0 0
        %4104 = vmatprep.subr.bf16.mxu0 0
        %4105 = vmatpush1.bf16.xpose.msra.mxu0 0
        %4106 = vmatprep.subr.bf16.mxu0 0
        %4107 = vmatpush1.bf16.xpose.msra.mxu0 0
        %4108 = vmatprep.subr.bf16.mxu0 0
        %4109 = vmatpush1.bf16.xpose.msra.mxu0 0
        %4110 = vmatprep.mubr.bf16.mxu0 0
        %4111 = vmatmul.mubr.bf16.gmra.mrb[0].mxu0 %v4076
        %v4112 = vpop.f32.mrb[0].mxu0
        %v4113 = vadd.f32 0.0, %v4112
        %v4114 = vpop.f32.mrb[0].mxu0
        %v4115 = vpop.f32.mrb[0].mxu0
        %v4116 = vadd.f32 0.0, %v4115
        %v4117 = vpop.f32.mrb[0].mxu0
        %4118 = vdwg.mxu0
        %v4119 = vmul.f32 %v4113, 0.088388346
        %v4120 = vmul.f32 %v4116, 0.088388346
        %v4121 = vadd.f32 %v4119, %v3614
        %v4122 = vadd.f32 %v4120, %v3614
        %v4123 = vsel %vm3662, %v4121, -inf
        %4124 = vmax.xlane.f32.xlu0 %v4123
        %v4125 = vpop.xlane.xlu0 %4124
        %v4126 = vsel %vm3662, %v4122, -inf
        %4127 = vmax.xlane.f32.xlu0 %v4126
        %v4128 = vpop.xlane.xlu0 %4127
        %v4129 = vsub.f32 %v4121, %v4125
        %v4130 = vsub.f32 %v4122, %v4128
        %v4131 = vmul.f32 %v4129, 1.442695
        %v4132 = vpow.pop %v4131
        %v4133 = vmul.f32 %v4130, 1.442695
        %v4134 = vpow.pop %v4133
        %v4135 = vsel %vm3662, %v4132, 0.0
        %4136 = vadd.xlane.f32.xlu0 %v4135
        %v4137 = vpop.xlane.xlu0 %4136
        %v4138 = vsel %vm3662, %v4134, 0.0
        %4139 = vadd.xlane.f32.xlu0 %v4138
        %v4140 = vpop.xlane.xlu0 %4139
        %v4141 = vrcp.pop %v4137
        %v4142 = vrcp.pop %v4140
        %v4143 = vmul.f32 %v4132, %v4141
        %v4144 = vmul.f32 %v4134, %v4142
        %v4145 = vpack.c.bf16 %v4144, %v4143
        %v4146 = vpack.c.bf16 %v3553, %v3549
        %v4148 = vsel %vm3662, %v4145, 0
        %4150 = vmatprep.subr.bf16.mxu0 0
        %4151 = vmatpush1.bf16.msra.mxu0 %v4146
        %4152 = vmatprep.subr.bf16.mxu0 0
        %4153 = vmatpush1.bf16.msra.mxu0 0
        %4154 = vmatprep.subr.bf16.mxu0 0
        %4155 = vmatpush1.bf16.msra.mxu0 0
        %4156 = vmatprep.subr.bf16.mxu0 0
        %4157 = vmatpush1.bf16.msra.mxu0 0
        %4158 = vmatprep.subr.bf16.mxu0 0
        %4159 = vmatpush1.bf16.msra.mxu0 0
        %4160 = vmatprep.subr.bf16.mxu0 0
        %4161 = vmatpush1.bf16.msra.mxu0 0
        %4162 = vmatprep.subr.bf16.mxu0 0
        %4163 = vmatpush1.bf16.msra.mxu0 0
        %4164 = vmatprep.subr.bf16.mxu0 0
        %4165 = vmatpush1.bf16.msra.mxu0 0
        %4166 = vmatprep.subr.bf16.mxu0 0
        %4167 = vmatpush1.bf16.msra.mxu0 0
        %4168 = vmatprep.subr.bf16.mxu0 0
        %4169 = vmatpush1.bf16.msra.mxu0 0
        %4170 = vmatprep.subr.bf16.mxu0 0
        %4171 = vmatpush1.bf16.msra.mxu0 0
        %4172 = vmatprep.subr.bf16.mxu0 0
        %4173 = vmatpush1.bf16.msra.mxu0 0
        %4174 = vmatprep.subr.bf16.mxu0 0
        %4175 = vmatpush1.bf16.msra.mxu0 0
        %4176 = vmatprep.subr.bf16.mxu0 0
        %4177 = vmatpush1.bf16.msra.mxu0 0
        %4178 = vmatprep.subr.bf16.mxu0 0
        %4179 = vmatpush1.bf16.msra.mxu0 0
        %4180 = vmatprep.subr.bf16.mxu0 0
        %4181 = vmatpush1.bf16.msra.mxu0 0
        %4182 = vmatprep.mubr.bf16.mxu0 0
        %4183 = vmatmul.mubr.bf16.gmra.mrb[0].mxu0 %v4148
        %v4184 = vpop.f32.mrb[0].mxu0
        %v4185 = vadd.f32 0.0, %v4184
        %v4186 = vpop.f32.mrb[0].mxu0
        %v4187 = vpop.f32.mrb[0].mxu0
        %v4188 = vadd.f32 0.0, %v4187
        %v4189 = vpop.f32.mrb[0].mxu0
        %4190 = vdwg.mxu0
        %v4191 = vpack.c.bf16 %v2913, %v2909
        %v4192 = vpack.c.bf16 %v3235, %v3231
        %4193 = vmatprep.subr.bf16.mxu0 0
        %4194 = vmatpush1.bf16.xpose.msra.mxu0 %v4192
        %4195 = vmatprep.subr.bf16.mxu0 0
        %4196 = vmatpush1.bf16.xpose.msra.mxu0 0
        %4197 = vmatprep.subr.bf16.mxu0 0
        %4198 = vmatpush1.bf16.xpose.msra.mxu0 0
        %4199 = vmatprep.subr.bf16.mxu0 0
        %4200 = vmatpush1.bf16.xpose.msra.mxu0 0
        %4201 = vmatprep.subr.bf16.mxu0 0
        %4202 = vmatpush1.bf16.xpose.msra.mxu0 0
        %4203 = vmatprep.subr.bf16.mxu0 0
        %4204 = vmatpush1.bf16.xpose.msra.mxu0 0
        %4205 = vmatprep.subr.bf16.mxu0 0
        %4206 = vmatpush1.bf16.xpose.msra.mxu0 0
        %4207 = vmatprep.subr.bf16.mxu0 0
        %4208 = vmatpush1.bf16.xpose.msra.mxu0 0
        %4209 = vmatprep.subr.bf16.mxu0 0
        %4210 = vmatpush1.bf16.xpose.msra.mxu0 0
        %4211 = vmatprep.subr.bf16.mxu0 0
        %4212 = vmatpush1.bf16.xpose.msra.mxu0 0
        %4213 = vmatprep.subr.bf16.mxu0 0
        %4214 = vmatpush1.bf16.xpose.msra.mxu0 0
        %4215 = vmatprep.subr.bf16.mxu0 0
        %4216 = vmatpush1.bf16.xpose.msra.mxu0 0
        %4217 = vmatprep.subr.bf16.mxu0 0
        %4218 = vmatpush1.bf16.xpose.msra.mxu0 0
        %4219 = vmatprep.subr.bf16.mxu0 0
        %4220 = vmatpush1.bf16.xpose.msra.mxu0 0
        %4221 = vmatprep.subr.bf16.mxu0 0
        %4222 = vmatpush1.bf16.xpose.msra.mxu0 0
        %4223 = vmatprep.subr.bf16.mxu0 0
        %4224 = vmatpush1.bf16.xpose.msra.mxu0 0
        %4225 = vmatprep.mubr.bf16.mxu0 0
        %4226 = vmatmul.mubr.bf16.gmra.mrb[0].mxu0 %v4191
        %v4227 = vpop.f32.mrb[0].mxu0
        %v4228 = vadd.f32 0.0, %v4227
        %v4229 = vpop.f32.mrb[0].mxu0
        %v4230 = vpop.f32.mrb[0].mxu0
        %v4231 = vadd.f32 0.0, %v4230
        %v4232 = vpop.f32.mrb[0].mxu0
        %4233 = vdwg.mxu0
        %v4234 = vmul.f32 %v4228, 0.088388346
        %v4235 = vmul.f32 %v4231, 0.088388346
        %v4236 = vadd.f32 %v4234, %v3614
        %v4237 = vadd.f32 %v4235, %v3614
        %v4238 = vsel %vm3662, %v4236, -inf
        %4239 = vmax.xlane.f32.xlu0 %v4238
        %v4240 = vpop.xlane.xlu0 %4239
        %v4241 = vsel %vm3662, %v4237, -inf
        %4242 = vmax.xlane.f32.xlu0 %v4241
        %v4243 = vpop.xlane.xlu0 %4242
        %v4244 = vsub.f32 %v4236, %v4240
        %v4245 = vsub.f32 %v4237, %v4243
        %v4246 = vmul.f32 %v4244, 1.442695
        %v4247 = vpow.pop %v4246
        %v4248 = vmul.f32 %v4245, 1.442695
        %v4249 = vpow.pop %v4248
        %v4250 = vsel %vm3662, %v4247, 0.0
        %4251 = vadd.xlane.f32.xlu0 %v4250
        %v4252 = vpop.xlane.xlu0 %4251
        %v4253 = vsel %vm3662, %v4249, 0.0
        %4254 = vadd.xlane.f32.xlu0 %v4253
        %v4255 = vpop.xlane.xlu0 %4254
        %v4256 = vrcp.pop %v4252
        %v4257 = vrcp.pop %v4255
        %v4258 = vmul.f32 %v4247, %v4256
        %v4259 = vmul.f32 %v4249, %v4257
        %v4260 = vpack.c.bf16 %v4259, %v4258
        %v4261 = vpack.c.bf16 %v3555, %v3551
        %v4263 = vsel %vm3662, %v4260, 0
        %4265 = vmatprep.subr.bf16.mxu0 0
        %4266 = vmatpush1.bf16.msra.mxu0 %v4261
        %4267 = vmatprep.subr.bf16.mxu0 0
        %4268 = vmatpush1.bf16.msra.mxu0 0
        %4269 = vmatprep.subr.bf16.mxu0 0
        %4270 = vmatpush1.bf16.msra.mxu0 0
        %4271 = vmatprep.subr.bf16.mxu0 0
        %4272 = vmatpush1.bf16.msra.mxu0 0
        %4273 = vmatprep.subr.bf16.mxu0 0
        %4274 = vmatpush1.bf16.msra.mxu0 0
        %4275 = vmatprep.subr.bf16.mxu0 0
        %4276 = vmatpush1.bf16.msra.mxu0 0
        %4277 = vmatprep.subr.bf16.mxu0 0
        %4278 = vmatpush1.bf16.msra.mxu0 0
        %4279 = vmatprep.subr.bf16.mxu0 0
        %4280 = vmatpush1.bf16.msra.mxu0 0
        %4281 = vmatprep.subr.bf16.mxu0 0
        %4282 = vmatpush1.bf16.msra.mxu0 0
        %4283 = vmatprep.subr.bf16.mxu0 0
        %4284 = vmatpush1.bf16.msra.mxu0 0
        %4285 = vmatprep.subr.bf16.mxu0 0
        %4286 = vmatpush1.bf16.msra.mxu0 0
        %4287 = vmatprep.subr.bf16.mxu0 0
        %4288 = vmatpush1.bf16.msra.mxu0 0
        %4289 = vmatprep.subr.bf16.mxu0 0
        %4290 = vmatpush1.bf16.msra.mxu0 0
        %4291 = vmatprep.subr.bf16.mxu0 0
        %4292 = vmatpush1.bf16.msra.mxu0 0
        %4293 = vmatprep.subr.bf16.mxu0 0
        %4294 = vmatpush1.bf16.msra.mxu0 0
        %4295 = vmatprep.subr.bf16.mxu0 0
        %4296 = vmatpush1.bf16.msra.mxu0 0
        %4297 = vmatprep.mubr.bf16.mxu0 0
        %4298 = vmatmul.mubr.bf16.gmra.mrb[0].mxu0 %v4263
        %v4299 = vpop.f32.mrb[0].mxu0
        %v4300 = vadd.f32 0.0, %v4299
        %v4301 = vpop.f32.mrb[0].mxu0
        %v4302 = vpop.f32.mrb[0].mxu0
        %v4303 = vadd.f32 0.0, %v4302
        %v4304 = vpop.f32.mrb[0].mxu0
        %4305 = vdwg.mxu0
        %v4306 = vpack.c.bf16 %v2964, %v2960
        %v4307 = vpack.c.bf16 %v3286, %v3282
        %4308 = vmatprep.subr.bf16.mxu0 0
        %4309 = vmatpush1.bf16.xpose.msra.mxu0 %v4307
        %4310 = vmatprep.subr.bf16.mxu0 0
        %4311 = vmatpush1.bf16.xpose.msra.mxu0 0
        %4312 = vmatprep.subr.bf16.mxu0 0
        %4313 = vmatpush1.bf16.xpose.msra.mxu0 0
        %4314 = vmatprep.subr.bf16.mxu0 0
        %4315 = vmatpush1.bf16.xpose.msra.mxu0 0
        %4316 = vmatprep.subr.bf16.mxu0 0
        %4317 = vmatpush1.bf16.xpose.msra.mxu0 0
        %4318 = vmatprep.subr.bf16.mxu0 0
        %4319 = vmatpush1.bf16.xpose.msra.mxu0 0
        %4320 = vmatprep.subr.bf16.mxu0 0
        %4321 = vmatpush1.bf16.xpose.msra.mxu0 0
        %4322 = vmatprep.subr.bf16.mxu0 0
        %4323 = vmatpush1.bf16.xpose.msra.mxu0 0
        %4324 = vmatprep.subr.bf16.mxu0 0
        %4325 = vmatpush1.bf16.xpose.msra.mxu0 0
        %4326 = vmatprep.subr.bf16.mxu0 0
        %4327 = vmatpush1.bf16.xpose.msra.mxu0 0
        %4328 = vmatprep.subr.bf16.mxu0 0
        %4329 = vmatpush1.bf16.xpose.msra.mxu0 0
        %4330 = vmatprep.subr.bf16.mxu0 0
        %4331 = vmatpush1.bf16.xpose.msra.mxu0 0
        %4332 = vmatprep.subr.bf16.mxu0 0
        %4333 = vmatpush1.bf16.xpose.msra.mxu0 0
        %4334 = vmatprep.subr.bf16.mxu0 0
        %4335 = vmatpush1.bf16.xpose.msra.mxu0 0
        %4336 = vmatprep.subr.bf16.mxu0 0
        %4337 = vmatpush1.bf16.xpose.msra.mxu0 0
        %4338 = vmatprep.subr.bf16.mxu0 0
        %4339 = vmatpush1.bf16.xpose.msra.mxu0 0
        %4340 = vmatprep.mubr.bf16.mxu0 0
        %4341 = vmatmul.mubr.bf16.gmra.mrb[0].mxu0 %v4306
        %v4342 = vpop.f32.mrb[0].mxu0
        %v4343 = vadd.f32 0.0, %v4342
        %v4344 = vpop.f32.mrb[0].mxu0
        %v4345 = vpop.f32.mrb[0].mxu0
        %v4346 = vadd.f32 0.0, %v4345
        %v4347 = vpop.f32.mrb[0].mxu0
        %4348 = vdwg.mxu0
        %v4349 = vmul.f32 %v4343, 0.088388346
        %v4350 = vmul.f32 %v4346, 0.088388346
        %v4351 = vadd.f32 %v4349, %v3614
        %v4352 = vadd.f32 %v4350, %v3614
        %v4353 = vsel %vm3662, %v4351, -inf
        %4354 = vmax.xlane.f32.xlu0 %v4353
        %v4355 = vpop.xlane.xlu0 %4354
        %v4356 = vsel %vm3662, %v4352, -inf
        %4357 = vmax.xlane.f32.xlu0 %v4356
        %v4358 = vpop.xlane.xlu0 %4357
        %v4359 = vsub.f32 %v4351, %v4355
        %v4360 = vsub.f32 %v4352, %v4358
        %v4361 = vmul.f32 %v4359, 1.442695
        %v4362 = vpow.pop %v4361
        %v4363 = vmul.f32 %v4360, 1.442695
        %v4364 = vpow.pop %v4363
        %v4365 = vsel %vm3662, %v4362, 0.0
        %4366 = vadd.xlane.f32.xlu0 %v4365
        %v4367 = vpop.xlane.xlu0 %4366
        %v4368 = vsel %vm3662, %v4364, 0.0
        %4369 = vadd.xlane.f32.xlu0 %v4368
        %v4370 = vpop.xlane.xlu0 %4369
        %v4371 = vrcp.pop %v4367
        %v4372 = vrcp.pop %v4370
        %v4373 = vmul.f32 %v4362, %v4371
        %v4374 = vmul.f32 %v4364, %v4372
        %v4375 = vpack.c.bf16 %v4374, %v4373
        %v4376 = vpack.c.bf16 %v3606, %v3602
        %v4378 = vsel %vm3662, %v4375, 0
        %4380 = vmatprep.subr.bf16.mxu0 0
        %4381 = vmatpush1.bf16.msra.mxu0 %v4376
        %4382 = vmatprep.subr.bf16.mxu0 0
        %4383 = vmatpush1.bf16.msra.mxu0 0
        %4384 = vmatprep.subr.bf16.mxu0 0
        %4385 = vmatpush1.bf16.msra.mxu0 0
        %4386 = vmatprep.subr.bf16.mxu0 0
        %4387 = vmatpush1.bf16.msra.mxu0 0
        %4388 = vmatprep.subr.bf16.mxu0 0
        %4389 = vmatpush1.bf16.msra.mxu0 0
        %4390 = vmatprep.subr.bf16.mxu0 0
        %4391 = vmatpush1.bf16.msra.mxu0 0
        %4392 = vmatprep.subr.bf16.mxu0 0
        %4393 = vmatpush1.bf16.msra.mxu0 0
        %4394 = vmatprep.subr.bf16.mxu0 0
        %4395 = vmatpush1.bf16.msra.mxu0 0
        %4396 = vmatprep.subr.bf16.mxu0 0
        %4397 = vmatpush1.bf16.msra.mxu0 0
        %4398 = vmatprep.subr.bf16.mxu0 0
        %4399 = vmatpush1.bf16.msra.mxu0 0
        %4400 = vmatprep.subr.bf16.mxu0 0
        %4401 = vmatpush1.bf16.msra.mxu0 0
        %4402 = vmatprep.subr.bf16.mxu0 0
        %4403 = vmatpush1.bf16.msra.mxu0 0
        %4404 = vmatprep.subr.bf16.mxu0 0
        %4405 = vmatpush1.bf16.msra.mxu0 0
        %4406 = vmatprep.subr.bf16.mxu0 0
        %4407 = vmatpush1.bf16.msra.mxu0 0
        %4408 = vmatprep.subr.bf16.mxu0 0
        %4409 = vmatpush1.bf16.msra.mxu0 0
        %4410 = vmatprep.subr.bf16.mxu0 0
        %4411 = vmatpush1.bf16.msra.mxu0 0
        %4412 = vmatprep.mubr.bf16.mxu0 0
        %4413 = vmatmul.mubr.bf16.gmra.mrb[0].mxu0 %v4378
        %v4414 = vpop.f32.mrb[0].mxu0
        %v4415 = vadd.f32 0.0, %v4414
        %v4416 = vpop.f32.mrb[0].mxu0
        %v4417 = vpop.f32.mrb[0].mxu0
        %v4418 = vadd.f32 0.0, %v4417
        %v4419 = vpop.f32.mrb[0].mxu0
        %4420 = vdwg.mxu0
        %v4421 = vpack.c.bf16 %v2966, %v2962
        %v4422 = vpack.c.bf16 %v3288, %v3284
        %4423 = vmatprep.subr.bf16.mxu0 0
        %4424 = vmatpush1.bf16.xpose.msra.mxu0 %v4422
        %4425 = vmatprep.subr.bf16.mxu0 0
        %4426 = vmatpush1.bf16.xpose.msra.mxu0 0
        %4427 = vmatprep.subr.bf16.mxu0 0
        %4428 = vmatpush1.bf16.xpose.msra.mxu0 0
        %4429 = vmatprep.subr.bf16.mxu0 0
        %4430 = vmatpush1.bf16.xpose.msra.mxu0 0
        %4431 = vmatprep.subr.bf16.mxu0 0
        %4432 = vmatpush1.bf16.xpose.msra.mxu0 0
        %4433 = vmatprep.subr.bf16.mxu0 0
        %4434 = vmatpush1.bf16.xpose.msra.mxu0 0
        %4435 = vmatprep.subr.bf16.mxu0 0
        %4436 = vmatpush1.bf16.xpose.msra.mxu0 0
        %4437 = vmatprep.subr.bf16.mxu0 0
        %4438 = vmatpush1.bf16.xpose.msra.mxu0 0
        %4439 = vmatprep.subr.bf16.mxu0 0
        %4440 = vmatpush1.bf16.xpose.msra.mxu0 0
        %4441 = vmatprep.subr.bf16.mxu0 0
        %4442 = vmatpush1.bf16.xpose.msra.mxu0 0
        %4443 = vmatprep.subr.bf16.mxu0 0
        %4444 = vmatpush1.bf16.xpose.msra.mxu0 0
        %4445 = vmatprep.subr.bf16.mxu0 0
        %4446 = vmatpush1.bf16.xpose.msra.mxu0 0
        %4447 = vmatprep.subr.bf16.mxu0 0
        %4448 = vmatpush1.bf16.xpose.msra.mxu0 0
        %4449 = vmatprep.subr.bf16.mxu0 0
        %4450 = vmatpush1.bf16.xpose.msra.mxu0 0
        %4451 = vmatprep.subr.bf16.mxu0 0
        %4452 = vmatpush1.bf16.xpose.msra.mxu0 0
        %4453 = vmatprep.subr.bf16.mxu0 0
        %4454 = vmatpush1.bf16.xpose.msra.mxu0 0
        %4455 = vmatprep.mubr.bf16.mxu0 0
        %4456 = vmatmul.mubr.bf16.gmra.mrb[0].mxu0 %v4421
        %v4457 = vpop.f32.mrb[0].mxu0
        %v4458 = vadd.f32 0.0, %v4457
        %v4459 = vpop.f32.mrb[0].mxu0
        %v4460 = vpop.f32.mrb[0].mxu0
        %v4461 = vadd.f32 0.0, %v4460
        %v4462 = vpop.f32.mrb[0].mxu0
        %4463 = vdwg.mxu0
        %v4464 = vmul.f32 %v4458, 0.088388346
        %v4465 = vmul.f32 %v4461, 0.088388346
        %v4466 = vadd.f32 %v4464, %v3614
        %v4467 = vadd.f32 %v4465, %v3614
        %v4468 = vsel %vm3662, %v4466, -inf
        %4469 = vmax.xlane.f32.xlu0 %v4468
        %v4470 = vpop.xlane.xlu0 %4469
        %v4471 = vsel %vm3662, %v4467, -inf
        %4472 = vmax.xlane.f32.xlu0 %v4471
        %v4473 = vpop.xlane.xlu0 %4472
        %v4474 = vsub.f32 %v4466, %v4470
        %v4475 = vsub.f32 %v4467, %v4473
        %v4476 = vmul.f32 %v4474, 1.442695
        %v4477 = vpow.pop %v4476
        %v4478 = vmul.f32 %v4475, 1.442695
        %v4479 = vpow.pop %v4478
        %v4480 = vsel %vm3662, %v4477, 0.0
        %4481 = vadd.xlane.f32.xlu0 %v4480
        %v4482 = vpop.xlane.xlu0 %4481
        %v4483 = vsel %vm3662, %v4479, 0.0
        %4484 = vadd.xlane.f32.xlu0 %v4483
        %v4485 = vpop.xlane.xlu0 %4484
        %v4486 = vrcp.pop %v4482
        %v4487 = vrcp.pop %v4485
        %v4488 = vmul.f32 %v4477, %v4486
        %v4489 = vmul.f32 %v4479, %v4487
        %v4490 = vpack.c.bf16 %v4489, %v4488
        %v4491 = vpack.c.bf16 %v3608, %v3604
        %v4493 = vsel %vm3662, %v4490, 0
        %4495 = vmatprep.subr.bf16.mxu0 0
        %4496 = vmatpush1.bf16.msra.mxu0 %v4491
        %4497 = vmatprep.subr.bf16.mxu0 0
        %4498 = vmatpush1.bf16.msra.mxu0 0
        %4499 = vmatprep.subr.bf16.mxu0 0
        %4500 = vmatpush1.bf16.msra.mxu0 0
        %4501 = vmatprep.subr.bf16.mxu0 0
        %4502 = vmatpush1.bf16.msra.mxu0 0
        %4503 = vmatprep.subr.bf16.mxu0 0
        %4504 = vmatpush1.bf16.msra.mxu0 0
        %4505 = vmatprep.subr.bf16.mxu0 0
        %4506 = vmatpush1.bf16.msra.mxu0 0
        %4507 = vmatprep.subr.bf16.mxu0 0
        %4508 = vmatpush1.bf16.msra.mxu0 0
        %4509 = vmatprep.subr.bf16.mxu0 0
        %4510 = vmatpush1.bf16.msra.mxu0 0
        %4511 = vmatprep.subr.bf16.mxu0 0
        %4512 = vmatpush1.bf16.msra.mxu0 0
        %4513 = vmatprep.subr.bf16.mxu0 0
        %4514 = vmatpush1.bf16.msra.mxu0 0
        %4515 = vmatprep.subr.bf16.mxu0 0
        %4516 = vmatpush1.bf16.msra.mxu0 0
        %4517 = vmatprep.subr.bf16.mxu0 0
        %4518 = vmatpush1.bf16.msra.mxu0 0
        %4519 = vmatprep.subr.bf16.mxu0 0
        %4520 = vmatpush1.bf16.msra.mxu0 0
        %4521 = vmatprep.subr.bf16.mxu0 0
        %4522 = vmatpush1.bf16.msra.mxu0 0
        %4523 = vmatprep.subr.bf16.mxu0 0
        %4524 = vmatpush1.bf16.msra.mxu0 0
        %4525 = vmatprep.subr.bf16.mxu0 0
        %4526 = vmatpush1.bf16.msra.mxu0 0
        %4527 = vmatprep.mubr.bf16.mxu0 0
        %4528 = vmatmul.mubr.bf16.gmra.mrb[0].mxu0 %v4493
        %v4529 = vpop.f32.mrb[0].mxu0
        %v4530 = vadd.f32 0.0, %v4529
        %v4531 = vpop.f32.mrb[0].mxu0
        %v4532 = vpop.f32.mrb[0].mxu0
        %v4533 = vadd.f32 0.0, %v4532
        %v4534 = vpop.f32.mrb[0].mxu0
        %4535 = vdwg.mxu0
        %v4536 = vpack.c.bf16 %v3728, %v3725
        %v4537 = vpack.c.bf16 %v3843, %v3840
        %v4538 = vpack.c.bf16 %v3958, %v3955
        %v4539 = vpack.c.bf16 %v4073, %v4070
        %v4540 = vpack.c.bf16 %v4188, %v4185
        %v4541 = vpack.c.bf16 %v4303, %v4300
        %v4542 = vpack.c.bf16 %v4418, %v4415
        %v4543 = vpack.c.bf16 %v4533, %v4530
        %v4544 = vld [vmem:[%s1319] sm:$0xf]
        %v4545 = vld [vmem:[%s1319 + $0x4] sm:$0xf]
        %v4546 = vld [vmem:[%s1319 + $0x8] sm:$0xf]
        %v4547 = vld [vmem:[%s1319 + $0xc] sm:$0xf]
        %v4548 = vld [vmem:[%s1319 + $0x10] sm:$0xf]
        %v4549 = vld [vmem:[%s1319 + $0x14] sm:$0xf]
        %v4550 = vld [vmem:[%s1319 + $0x18] sm:$0xf]
        %v4551 = vld [vmem:[%s1319 + $0x1c] sm:$0xf]
        %v4552 = vld [vmem:[%s1319 + $0x20] sm:$0xf]
        %v4553 = vld [vmem:[%s1319 + $0x24] sm:$0xf]
        %v4554 = vld [vmem:[%s1319 + $0x28] sm:$0xf]
        %v4555 = vld [vmem:[%s1319 + $0x2c] sm:$0xf]
        %v4556 = vld [vmem:[%s1319 + $0x30] sm:$0xf]
        %v4557 = vld [vmem:[%s1319 + $0x34] sm:$0xf]
        %v4558 = vld [vmem:[%s1319 + $0x38] sm:$0xf]
        %v4559 = vld [vmem:[%s1319 + $0x3c] sm:$0xf]
        %v4560 = vld [vmem:[%s1319 + $0x40] sm:$0xf]
        %v4561 = vld [vmem:[%s1319 + $0x44] sm:$0xf]
        %v4562 = vld [vmem:[%s1319 + $0x48] sm:$0xf]
        %v4563 = vld [vmem:[%s1319 + $0x4c] sm:$0xf]
        %v4564 = vld [vmem:[%s1319 + $0x50] sm:$0xf]
        %v4565 = vld [vmem:[%s1319 + $0x54] sm:$0xf]
        %v4566 = vld [vmem:[%s1319 + $0x58] sm:$0xf]
        %v4567 = vld [vmem:[%s1319 + $0x5c] sm:$0xf]
        %v4568 = vld [vmem:[%s1319 + $0x60] sm:$0xf]
        %v4569 = vld [vmem:[%s1319 + $0x64] sm:$0xf]
        %v4570 = vld [vmem:[%s1319 + $0x68] sm:$0xf]
        %v4571 = vld [vmem:[%s1319 + $0x6c] sm:$0xf]
        %v4572 = vld [vmem:[%s1319 + $0x70] sm:$0xf]
        %v4573 = vld [vmem:[%s1319 + $0x74] sm:$0xf]
        %v4574 = vld [vmem:[%s1319 + $0x78] sm:$0xf]
        %v4575 = vld [vmem:[%s1319 + $0x7c] sm:$0xf]
        %v4576 = vld [vmem:[%s1319 + $0x80] sm:$0xf]
        %v4577 = vld [vmem:[%s1319 + $0x84] sm:$0xf]
        %v4578 = vld [vmem:[%s1319 + $0x88] sm:$0xf]
        %v4579 = vld [vmem:[%s1319 + $0x8c] sm:$0xf]
        %v4580 = vld [vmem:[%s1319 + $0x90] sm:$0xf]
        %v4581 = vld [vmem:[%s1319 + $0x94] sm:$0xf]
        %v4582 = vld [vmem:[%s1319 + $0x98] sm:$0xf]
        %v4583 = vld [vmem:[%s1319 + $0x9c] sm:$0xf]
        %v4584 = vld [vmem:[%s1319 + $0xa0] sm:$0xf]
        %v4585 = vld [vmem:[%s1319 + $0xa4] sm:$0xf]
        %v4586 = vld [vmem:[%s1319 + $0xa8] sm:$0xf]
        %v4587 = vld [vmem:[%s1319 + $0xac] sm:$0xf]
        %v4588 = vld [vmem:[%s1319 + $0xb0] sm:$0xf]
        %v4589 = vld [vmem:[%s1319 + $0xb4] sm:$0xf]
        %v4590 = vld [vmem:[%s1319 + $0xb8] sm:$0xf]
        %v4591 = vld [vmem:[%s1319 + $0xbc] sm:$0xf]
        %v4592 = vld [vmem:[%s1319 + $0xc0] sm:$0xf]
        %v4593 = vld [vmem:[%s1319 + $0xc4] sm:$0xf]
        %v4594 = vld [vmem:[%s1319 + $0xc8] sm:$0xf]
        %v4595 = vld [vmem:[%s1319 + $0xcc] sm:$0xf]
        %v4596 = vld [vmem:[%s1319 + $0xd0] sm:$0xf]
        %v4597 = vld [vmem:[%s1319 + $0xd4] sm:$0xf]
        %v4598 = vld [vmem:[%s1319 + $0xd8] sm:$0xf]
        %v4599 = vld [vmem:[%s1319 + $0xdc] sm:$0xf]
        %v4600 = vld [vmem:[%s1319 + $0xe0] sm:$0xf]
        %v4601 = vld [vmem:[%s1319 + $0xe4] sm:$0xf]
        %v4602 = vld [vmem:[%s1319 + $0xe8] sm:$0xf]
        %v4603 = vld [vmem:[%s1319 + $0xec] sm:$0xf]
        %v4604 = vld [vmem:[%s1319 + $0xf0] sm:$0xf]
        %v4605 = vld [vmem:[%s1319 + $0xf4] sm:$0xf]
        %v4606 = vld [vmem:[%s1319 + $0xf8] sm:$0xf]
        %v4607 = vld [vmem:[%s1319 + $0xfc] sm:$0xf]
        %v4608 = vld [vmem:[%s1327] sm:$0x1]
        %v4610 = vlaneseq
        %v4611 = vshrl.u32 %v4610, 7
        %v4612 = vsub.s32 0, %v4611
        %v4613 = vrot.slane %v4608, %v4612
        %v4679 = vunpack.c.l.b16 %v4544
        %v4680 = vunpack.c.l.b16 %v4545
        %v4681 = vunpack.c.l.b16 %v4546
        %v4682 = vunpack.c.l.b16 %v4547
        %v4683 = vunpack.c.l.b16 %v4548
        %v4684 = vunpack.c.l.b16 %v4549
        %v4685 = vunpack.c.l.b16 %v4550
        %v4686 = vunpack.c.l.b16 %v4551
        %v4687 = vunpack.c.l.b16 %v4552
        %v4688 = vunpack.c.l.b16 %v4553
        %v4689 = vunpack.c.l.b16 %v4554
        %v4690 = vunpack.c.l.b16 %v4555
        %v4691 = vunpack.c.l.b16 %v4556
        %v4692 = vunpack.c.l.b16 %v4557
        %v4693 = vunpack.c.l.b16 %v4558
        %v4694 = vunpack.c.l.b16 %v4559
        %v4695 = vunpack.c.l.b16 %v4560
        %v4696 = vunpack.c.l.b16 %v4561
        %v4697 = vunpack.c.l.b16 %v4562
        %v4698 = vunpack.c.l.b16 %v4563
        %v4699 = vunpack.c.l.b16 %v4564
        %v4700 = vunpack.c.l.b16 %v4565
        %v4701 = vunpack.c.l.b16 %v4566
        %v4702 = vunpack.c.l.b16 %v4567
        %v4703 = vunpack.c.l.b16 %v4568
        %v4704 = vunpack.c.l.b16 %v4569
        %v4705 = vunpack.c.l.b16 %v4570
        %v4706 = vunpack.c.l.b16 %v4571
        %v4707 = vunpack.c.l.b16 %v4572
        %v4708 = vunpack.c.l.b16 %v4573
        %v4709 = vunpack.c.l.b16 %v4574
        %v4710 = vunpack.c.l.b16 %v4575
        %v4711 = vunpack.c.l.b16 %v4576
        %v4712 = vunpack.c.l.b16 %v4577
        %v4713 = vunpack.c.l.b16 %v4578
        %v4714 = vunpack.c.l.b16 %v4579
        %v4715 = vunpack.c.l.b16 %v4580
        %v4716 = vunpack.c.l.b16 %v4581
        %v4717 = vunpack.c.l.b16 %v4582
        %v4718 = vunpack.c.l.b16 %v4583
        %v4719 = vunpack.c.l.b16 %v4584
        %v4720 = vunpack.c.l.b16 %v4585
        %v4721 = vunpack.c.l.b16 %v4586
        %v4722 = vunpack.c.l.b16 %v4587
        %v4723 = vunpack.c.l.b16 %v4588
        %v4724 = vunpack.c.l.b16 %v4589
        %v4725 = vunpack.c.l.b16 %v4590
        %v4726 = vunpack.c.l.b16 %v4591
        %v4727 = vunpack.c.l.b16 %v4592
        %v4728 = vunpack.c.l.b16 %v4593
        %v4729 = vunpack.c.l.b16 %v4594
        %v4730 = vunpack.c.l.b16 %v4595
        %v4731 = vunpack.c.l.b16 %v4596
        %v4732 = vunpack.c.l.b16 %v4597
        %v4733 = vunpack.c.l.b16 %v4598
        %v4734 = vunpack.c.l.b16 %v4599
        %v4735 = vunpack.c.l.b16 %v4600
        %v4736 = vunpack.c.l.b16 %v4601
        %v4737 = vunpack.c.l.b16 %v4602
        %v4738 = vunpack.c.l.b16 %v4603
        %v4739 = vunpack.c.l.b16 %v4604
        %v4740 = vunpack.c.l.b16 %v4605
        %v4741 = vunpack.c.l.b16 %v4606
        %v4742 = vunpack.c.l.b16 %v4607
        %v4743 = vpack.c.b16 %v4680, %v4679
        %v4744 = vpack.c.b16 %v4682, %v4681
        %v4745 = vpack.c.b16 %v4684, %v4683
        %v4746 = vpack.c.b16 %v4686, %v4685
        %v4747 = vpack.c.b16 %v4688, %v4687
        %v4748 = vpack.c.b16 %v4690, %v4689
        %v4749 = vpack.c.b16 %v4692, %v4691
        %v4750 = vpack.c.b16 %v4694, %v4693
        %v4751 = vpack.c.b16 %v4696, %v4695
        %v4752 = vpack.c.b16 %v4698, %v4697
        %v4753 = vpack.c.b16 %v4700, %v4699
        %v4754 = vpack.c.b16 %v4702, %v4701
        %v4755 = vpack.c.b16 %v4704, %v4703
        %v4756 = vpack.c.b16 %v4706, %v4705
        %v4757 = vpack.c.b16 %v4708, %v4707
        %v4758 = vpack.c.b16 %v4710, %v4709
        %v4759 = vpack.c.b16 %v4712, %v4711
        %v4760 = vpack.c.b16 %v4714, %v4713
        %v4761 = vpack.c.b16 %v4716, %v4715
        %v4762 = vpack.c.b16 %v4718, %v4717
        %v4763 = vpack.c.b16 %v4720, %v4719
        %v4764 = vpack.c.b16 %v4722, %v4721
        %v4765 = vpack.c.b16 %v4724, %v4723
        %v4766 = vpack.c.b16 %v4726, %v4725
        %v4767 = vpack.c.b16 %v4728, %v4727
        %v4768 = vpack.c.b16 %v4730, %v4729
        %v4769 = vpack.c.b16 %v4732, %v4731
        %v4770 = vpack.c.b16 %v4734, %v4733
        %v4771 = vpack.c.b16 %v4736, %v4735
        %v4772 = vpack.c.b16 %v4738, %v4737
        %v4773 = vpack.c.b16 %v4740, %v4739
        %v4774 = vpack.c.b16 %v4742, %v4741
        %4807 = vmatprep.subr.bf16.mxu0 0
        %4808 = vmatpush1.bf16.msra.mxu0 %v4743
        %4809 = vmatprep.subr.bf16.mxu0 0
        %4810 = vmatpush1.bf16.msra.mxu0 %v4744
        %4811 = vmatprep.subr.bf16.mxu0 0
        %4812 = vmatpush1.bf16.msra.mxu0 %v4745
        %4813 = vmatprep.subr.bf16.mxu0 0
        %4814 = vmatpush1.bf16.msra.mxu0 %v4746
        %4815 = vmatprep.subr.bf16.mxu0 0
        %4816 = vmatpush1.bf16.msra.mxu0 %v4747
        %4817 = vmatprep.subr.bf16.mxu0 0
        %4818 = vmatpush1.bf16.msra.mxu0 %v4748
        %4819 = vmatprep.subr.bf16.mxu0 0
        %4820 = vmatpush1.bf16.msra.mxu0 %v4749
        %4821 = vmatprep.subr.bf16.mxu0 0
        %4822 = vmatpush1.bf16.msra.mxu0 %v4750
        %4823 = vmatprep.subr.bf16.mxu0 0
        %4824 = vmatpush1.bf16.msra.mxu0 %v4751
        %4825 = vmatprep.subr.bf16.mxu0 0
        %4826 = vmatpush1.bf16.msra.mxu0 %v4752
        %4827 = vmatprep.subr.bf16.mxu0 0
        %4828 = vmatpush1.bf16.msra.mxu0 %v4753
        %4829 = vmatprep.subr.bf16.mxu0 0
        %4830 = vmatpush1.bf16.msra.mxu0 %v4754
        %4831 = vmatprep.subr.bf16.mxu0 0
        %4832 = vmatpush1.bf16.msra.mxu0 %v4755
        %4833 = vmatprep.subr.bf16.mxu0 0
        %4834 = vmatpush1.bf16.msra.mxu0 %v4756
        %4835 = vmatprep.subr.bf16.mxu0 0
        %4836 = vmatpush1.bf16.msra.mxu0 %v4757
        %4837 = vmatprep.subr.bf16.mxu0 0
        %4838 = vmatpush1.bf16.msra.mxu0 %v4758
        %4839 = vmatprep.mubr.bf16.mxu0 %v4537
        %4840 = vmatmul.mubr.bf16.gmra.mrb[0].mxu0 %v4536
        %v4841 = vpop.f32.mrb[0].mxu0
        %v4842 = vadd.f32 %v4613, %v4841
        %v4843 = vpop.f32.mrb[0].mxu0
        %v4844 = vpop.f32.mrb[0].mxu0
        %v4845 = vadd.f32 %v4613, %v4844
        %v4846 = vpop.f32.mrb[0].mxu0
        %4847 = vmatprep.mubr.bf16.mxu0 %v4541
        %4848 = vmatmul.mubr.bf16.gmra.mrb[0].mxu0 %v4540
        %v4849 = vpop.f32.mrb[0].mxu0
        %v4850 = vadd.f32 %v4613, %v4849
        %v4851 = vpop.f32.mrb[0].mxu0
        %v4852 = vpop.f32.mrb[0].mxu0
        %v4853 = vadd.f32 %v4613, %v4852
        %v4854 = vpop.f32.mrb[0].mxu0
        %4855 = vdwg.mxu0
        %4856 = vmatprep.subr.bf16.mxu0 0
        %4857 = vmatpush1.bf16.msra.mxu0 %v4759
        %4858 = vmatprep.subr.bf16.mxu0 0
        %4859 = vmatpush1.bf16.msra.mxu0 %v4760
        %4860 = vmatprep.subr.bf16.mxu0 0
        %4861 = vmatpush1.bf16.msra.mxu0 %v4761
        %4862 = vmatprep.subr.bf16.mxu0 0
        %4863 = vmatpush1.bf16.msra.mxu0 %v4762
        %4864 = vmatprep.subr.bf16.mxu0 0
        %4865 = vmatpush1.bf16.msra.mxu0 %v4763
        %4866 = vmatprep.subr.bf16.mxu0 0
        %4867 = vmatpush1.bf16.msra.mxu0 %v4764
        %4868 = vmatprep.subr.bf16.mxu0 0
        %4869 = vmatpush1.bf16.msra.mxu0 %v4765
        %4870 = vmatprep.subr.bf16.mxu0 0
        %4871 = vmatpush1.bf16.msra.mxu0 %v4766
        %4872 = vmatprep.subr.bf16.mxu0 0
        %4873 = vmatpush1.bf16.msra.mxu0 %v4767
        %4874 = vmatprep.subr.bf16.mxu0 0
        %4875 = vmatpush1.bf16.msra.mxu0 %v4768
        %4876 = vmatprep.subr.bf16.mxu0 0
        %4877 = vmatpush1.bf16.msra.mxu0 %v4769
        %4878 = vmatprep.subr.bf16.mxu0 0
        %4879 = vmatpush1.bf16.msra.mxu0 %v4770
        %4880 = vmatprep.subr.bf16.mxu0 0
        %4881 = vmatpush1.bf16.msra.mxu0 %v4771
        %4882 = vmatprep.subr.bf16.mxu0 0
        %4883 = vmatpush1.bf16.msra.mxu0 %v4772
        %4884 = vmatprep.subr.bf16.mxu0 0
        %4885 = vmatpush1.bf16.msra.mxu0 %v4773
        %4886 = vmatprep.subr.bf16.mxu0 0
        %4887 = vmatpush1.bf16.msra.mxu0 %v4774
        %4888 = vmatprep.mubr.bf16.mxu0 %v4539
        %4889 = vmatmul.mubr.bf16.gmra.mrb[0].mxu0 %v4538
        %v4890 = vpop.f32.mrb[0].mxu0
        %v4891 = vadd.f32 %v4842, %v4890
        %v4892 = vpop.f32.mrb[0].mxu0
        %v4893 = vpop.f32.mrb[0].mxu0
        %v4894 = vadd.f32 %v4845, %v4893
        %v4895 = vpop.f32.mrb[0].mxu0
        %4896 = vmatprep.mubr.bf16.mxu0 %v4543
        %4897 = vmatmul.mubr.bf16.gmra.mrb[0].mxu0 %v4542
        %v4898 = vpop.f32.mrb[0].mxu0
        %v4899 = vadd.f32 %v4850, %v4898
        %v4900 = vpop.f32.mrb[0].mxu0
        %v4901 = vpop.f32.mrb[0].mxu0
        %v4902 = vadd.f32 %v4853, %v4901
        %v4903 = vpop.f32.mrb[0].mxu0
        %4904 = vdwg.mxu0
        %v4905 = vadd.f32 %v4891, %v2121
        %v4906 = vadd.f32 %v4894, %v2124
        %v4907 = vadd.f32 %v4899, %v2129
        %v4908 = vadd.f32 %v4902, %v2132
        %v4909 = vld [vmem:[%s1335] sm:$0x1]
        %v4910 = vld [vmem:[%s1343] sm:$0x1]
        %4911 = vadd.xlane.f32.xlu0 %v4905
        %v4912 = vpop.xlane.xlu0 %4911
        %4913 = vadd.xlane.f32.xlu0 %v4906
        %v4914 = vpop.xlane.xlu0 %4913
        %4915 = vadd.xlane.f32.xlu0 %v4907
        %v4916 = vpop.xlane.xlu0 %4915
        %4917 = vadd.xlane.f32.xlu0 %v4908
        %v4918 = vpop.xlane.xlu0 %4917
        %v4919 = vrcp.pop 128.0
        %v4920 = vmul.f32 %v4912, %v4919
        %v4921 = vmul.f32 %v4914, %v4919
        %v4922 = vmul.f32 %v4916, %v4919
        %v4923 = vmul.f32 %v4918, %v4919
        %v4924 = vsub.f32 %v4905, %v4920
        %v4925 = vsub.f32 %v4906, %v4921
        %v4926 = vsub.f32 %v4907, %v4922
        %v4927 = vsub.f32 %v4908, %v4923
        %v4928 = vmul.f32 %v4924, %v4924
        %v4929 = vmul.f32 %v4925, %v4925
        %v4930 = vmul.f32 %v4926, %v4926
        %v4931 = vmul.f32 %v4927, %v4927
        %4932 = vadd.xlane.f32.xlu0 %v4928
        %v4933 = vpop.xlane.xlu0 %4932
        %4934 = vadd.xlane.f32.xlu0 %v4929
        %v4935 = vpop.xlane.xlu0 %4934
        %4936 = vadd.xlane.f32.xlu0 %v4930
        %v4937 = vpop.xlane.xlu0 %4936
        %4938 = vadd.xlane.f32.xlu0 %v4931
        %v4939 = vpop.xlane.xlu0 %4938
        %v4940 = vmul.f32 %v4933, %v4919
        %v4941 = vmul.f32 %v4935, %v4919
        %v4942 = vmul.f32 %v4937, %v4919
        %v4943 = vmul.f32 %v4939, %v4919
        %v4944 = vadd.f32 %v4940, 1e-05
        %v4945 = vadd.f32 %v4941, 1e-05
        %v4946 = vadd.f32 %v4942, 1e-05
        %v4947 = vadd.f32 %v4943, 1e-05
        %v4948 = vrsqrt.pop %v4944
        %v4949 = vrsqrt.pop %v4945
        %v4950 = vrsqrt.pop %v4946
        %v4951 = vrsqrt.pop %v4947
        %v4952 = vmul.f32 %v4924, %v4948
        %v4953 = vmul.f32 %v4925, %v4949
        %v4954 = vmul.f32 %v4926, %v4950
        %v4955 = vmul.f32 %v4927, %v4951
        %v4957 = vlaneseq
        %v4958 = vshrl.u32 %v4957, 7
        %v4959 = vsub.s32 0, %v4958
        %v4960 = vrot.slane %v4909, %v4959
        %v4962 = vmul.f32 %v4952, %v4960
        %v4963 = vmul.f32 %v4953, %v4960
        %v4964 = vmul.f32 %v4954, %v4960
        %v4965 = vmul.f32 %v4955, %v4960
        %v4967 = vlaneseq
        %v4968 = vshrl.u32 %v4967, 7
        %v4969 = vsub.s32 0, %v4968
        %v4970 = vrot.slane %v4910, %v4969
        %v4972 = vadd.f32 %v4962, %v4970
        %v4973 = vadd.f32 %v4963, %v4970
        %v4974 = vadd.f32 %v4964, %v4970
        %v4975 = vadd.f32 %v4965, %v4970
        %v4976 = vpack.c.bf16 %v4973, %v4972
        %v4977 = vpack.c.bf16 %v4975, %v4974
        %v4978 = vld [vmem:[%s1352] sm:$0xf]
        %v4979 = vld [vmem:[%s1352 + $0x4] sm:$0xf]
        %v4980 = vld [vmem:[%s1352 + $0x8] sm:$0xf]
        %v4981 = vld [vmem:[%s1352 + $0xc] sm:$0xf]
        %v4982 = vld [vmem:[%s1352 + $0x10] sm:$0xf]
        %v4983 = vld [vmem:[%s1352 + $0x14] sm:$0xf]
        %v4984 = vld [vmem:[%s1352 + $0x18] sm:$0xf]
        %v4985 = vld [vmem:[%s1352 + $0x1c] sm:$0xf]
        %v4986 = vld [vmem:[%s1352 + $0x20] sm:$0xf]
        %v4987 = vld [vmem:[%s1352 + $0x24] sm:$0xf]
        %v4988 = vld [vmem:[%s1352 + $0x28] sm:$0xf]
        %v4989 = vld [vmem:[%s1352 + $0x2c] sm:$0xf]
        %v4990 = vld [vmem:[%s1352 + $0x30] sm:$0xf]
        %v4991 = vld [vmem:[%s1352 + $0x34] sm:$0xf]
        %v4992 = vld [vmem:[%s1352 + $0x38] sm:$0xf]
        %v4993 = vld [vmem:[%s1352 + $0x3c] sm:$0xf]
        %v4994 = vld [vmem:[%s1360] sm:$0x1]
        %v4996 = vlaneseq
        %v4997 = vshrl.u32 %v4996, 7
        %v4998 = vsub.s32 0, %v4997
        %v4999 = vrot.slane %v4994, %v4998
        %v5017 = vunpack.c.l.b16 %v4978
        %v5018 = vunpack.c.l.b16 %v4979
        %v5019 = vunpack.c.l.b16 %v4980
        %v5020 = vunpack.c.l.b16 %v4981
        %v5021 = vunpack.c.l.b16 %v4982
        %v5022 = vunpack.c.l.b16 %v4983
        %v5023 = vunpack.c.l.b16 %v4984
        %v5024 = vunpack.c.l.b16 %v4985
        %v5025 = vunpack.c.l.b16 %v4986
        %v5026 = vunpack.c.l.b16 %v4987
        %v5027 = vunpack.c.l.b16 %v4988
        %v5028 = vunpack.c.l.b16 %v4989
        %v5029 = vunpack.c.l.b16 %v4990
        %v5030 = vunpack.c.l.b16 %v4991
        %v5031 = vunpack.c.l.b16 %v4992
        %v5032 = vunpack.c.l.b16 %v4993
        %v5033 = vpack.c.b16 %v5018, %v5017
        %v5034 = vpack.c.b16 %v5020, %v5019
        %v5035 = vpack.c.b16 %v5022, %v5021
        %v5036 = vpack.c.b16 %v5024, %v5023
        %v5037 = vpack.c.b16 %v5026, %v5025
        %v5038 = vpack.c.b16 %v5028, %v5027
        %v5039 = vpack.c.b16 %v5030, %v5029
        %v5040 = vpack.c.b16 %v5032, %v5031
        %5049 = vmatprep.subr.bf16.mxu0 0
        %5050 = vmatpush1.bf16.msra.mxu0 %v5033
        %5051 = vmatprep.subr.bf16.mxu0 0
        %5052 = vmatpush1.bf16.msra.mxu0 %v5034
        %5053 = vmatprep.subr.bf16.mxu0 0
        %5054 = vmatpush1.bf16.msra.mxu0 %v5035
        %5055 = vmatprep.subr.bf16.mxu0 0
        %5056 = vmatpush1.bf16.msra.mxu0 %v5036
        %5057 = vmatprep.subr.bf16.mxu0 0
        %5058 = vmatpush1.bf16.msra.mxu0 %v5037
        %5059 = vmatprep.subr.bf16.mxu0 0
        %5060 = vmatpush1.bf16.msra.mxu0 %v5038
        %5061 = vmatprep.subr.bf16.mxu0 0
        %5062 = vmatpush1.bf16.msra.mxu0 %v5039
        %5063 = vmatprep.subr.bf16.mxu0 0
        %5064 = vmatpush1.bf16.msra.mxu0 %v5040
        %5065 = vmatprep.subr.bf16.mxu0 0
        %5066 = vmatpush1.bf16.msra.mxu0 0
        %5067 = vmatprep.subr.bf16.mxu0 0
        %5068 = vmatpush1.bf16.msra.mxu0 0
        %5069 = vmatprep.subr.bf16.mxu0 0
        %5070 = vmatpush1.bf16.msra.mxu0 0
        %5071 = vmatprep.subr.bf16.mxu0 0
        %5072 = vmatpush1.bf16.msra.mxu0 0
        %5073 = vmatprep.subr.bf16.mxu0 0
        %5074 = vmatpush1.bf16.msra.mxu0 0
        %5075 = vmatprep.subr.bf16.mxu0 0
        %5076 = vmatpush1.bf16.msra.mxu0 0
        %5077 = vmatprep.subr.bf16.mxu0 0
        %5078 = vmatpush1.bf16.msra.mxu0 0
        %5079 = vmatprep.subr.bf16.mxu0 0
        %5080 = vmatpush1.bf16.msra.mxu0 0
        %5081 = vmatprep.mubr.bf16.mxu0 0
        %5082 = vmatmul.mubr.bf16.gmra.mrb[0].mxu0 %v4976
        %v5083 = vpop.f32.mrb[0].mxu0
        %v5084 = vadd.f32 %v4999, %v5083
        %v5085 = vpop.f32.mrb[0].mxu0
        %v5086 = vpop.f32.mrb[0].mxu0
        %v5087 = vadd.f32 %v4999, %v5086
        %v5088 = vpop.f32.mrb[0].mxu0
        %5089 = vmatprep.mubr.bf16.mxu0 0
        %5090 = vmatmul.mubr.bf16.gmra.mrb[0].mxu0 %v4977
        %v5091 = vpop.f32.mrb[0].mxu0
        %v5092 = vadd.f32 %v4999, %v5091
        %v5093 = vpop.f32.mrb[0].mxu0
        %v5094 = vpop.f32.mrb[0].mxu0
        %v5095 = vadd.f32 %v4999, %v5094
        %v5096 = vpop.f32.mrb[0].mxu0
        %5097 = vdwg.mxu0
        %v5098 = vmax.f32 %v5084, 0.0
        %v5099 = vmax.f32 %v5087, 0.0
        %v5100 = vmax.f32 %v5092, 0.0
        %v5101 = vmax.f32 %v5095, 0.0
        %v5102 = vpack.c.bf16 %v5099, %v5098
        %v5103 = vpack.c.bf16 %v5101, %v5100
        %v5104 = vld [vmem:[%s1369] sm:$0xf]
        %v5105 = vld [vmem:[%s1369 + $0x4] sm:$0xf]
        %v5106 = vld [vmem:[%s1369 + $0x8] sm:$0xf]
        %v5107 = vld [vmem:[%s1369 + $0xc] sm:$0xf]
        %v5108 = vld [vmem:[%s1369 + $0x10] sm:$0xf]
        %v5109 = vld [vmem:[%s1369 + $0x14] sm:$0xf]
        %v5110 = vld [vmem:[%s1369 + $0x18] sm:$0xf]
        %v5111 = vld [vmem:[%s1369 + $0x1c] sm:$0xf]
        %v5112 = vld [vmem:[%s1369 + $0x20] sm:$0xf]
        %v5113 = vld [vmem:[%s1369 + $0x24] sm:$0xf]
        %v5114 = vld [vmem:[%s1369 + $0x28] sm:$0xf]
        %v5115 = vld [vmem:[%s1369 + $0x2c] sm:$0xf]
        %v5116 = vld [vmem:[%s1369 + $0x30] sm:$0xf]
        %v5117 = vld [vmem:[%s1369 + $0x34] sm:$0xf]
        %v5118 = vld [vmem:[%s1369 + $0x38] sm:$0xf]
        %v5119 = vld [vmem:[%s1369 + $0x3c] sm:$0xf]
        %v5120 = vld [vmem:[%s1377] sm:$0x1]
        %v5122 = vlaneseq
        %v5123 = vshrl.u32 %v5122, 7
        %v5124 = vsub.s32 0, %v5123
        %v5125 = vrot.slane %v5120, %v5124
        %v5143 = vunpack.c.l.b16 %v5104
        %v5144 = vunpack.c.l.b16 %v5105
        %v5145 = vunpack.c.l.b16 %v5106
        %v5146 = vunpack.c.l.b16 %v5107
        %v5147 = vunpack.c.l.b16 %v5108
        %v5148 = vunpack.c.l.b16 %v5109
        %v5149 = vunpack.c.l.b16 %v5110
        %v5150 = vunpack.c.l.b16 %v5111
        %v5151 = vunpack.c.l.b16 %v5112
        %v5152 = vunpack.c.l.b16 %v5113
        %v5153 = vunpack.c.l.b16 %v5114
        %v5154 = vunpack.c.l.b16 %v5115
        %v5155 = vunpack.c.l.b16 %v5116
        %v5156 = vunpack.c.l.b16 %v5117
        %v5157 = vunpack.c.l.b16 %v5118
        %v5158 = vunpack.c.l.b16 %v5119
        %v5159 = vpack.c.b16 %v5144, %v5143
        %v5160 = vpack.c.b16 %v5146, %v5145
        %v5161 = vpack.c.b16 %v5148, %v5147
        %v5162 = vpack.c.b16 %v5150, %v5149
        %v5163 = vpack.c.b16 %v5152, %v5151
        %v5164 = vpack.c.b16 %v5154, %v5153
        %v5165 = vpack.c.b16 %v5156, %v5155
        %v5166 = vpack.c.b16 %v5158, %v5157
        %5175 = vmatprep.subr.bf16.mxu0 0
        %5176 = vmatpush1.bf16.msra.mxu0 %v5159
        %5177 = vmatprep.subr.bf16.mxu0 0
        %5178 = vmatpush1.bf16.msra.mxu0 %v5160
        %5179 = vmatprep.subr.bf16.mxu0 0
        %5180 = vmatpush1.bf16.msra.mxu0 %v5161
        %5181 = vmatprep.subr.bf16.mxu0 0
        %5182 = vmatpush1.bf16.msra.mxu0 %v5162
        %5183 = vmatprep.subr.bf16.mxu0 0
        %5184 = vmatpush1.bf16.msra.mxu0 %v5163
        %5185 = vmatprep.subr.bf16.mxu0 0
        %5186 = vmatpush1.bf16.msra.mxu0 %v5164
        %5187 = vmatprep.subr.bf16.mxu0 0
        %5188 = vmatpush1.bf16.msra.mxu0 %v5165
        %5189 = vmatprep.subr.bf16.mxu0 0
        %5190 = vmatpush1.bf16.msra.mxu0 %v5166
        %5191 = vmatprep.subr.bf16.mxu0 0
        %5192 = vmatpush1.bf16.msra.mxu0 0
        %5193 = vmatprep.subr.bf16.mxu0 0
        %5194 = vmatpush1.bf16.msra.mxu0 0
        %5195 = vmatprep.subr.bf16.mxu0 0
        %5196 = vmatpush1.bf16.msra.mxu0 0
        %5197 = vmatprep.subr.bf16.mxu0 0
        %5198 = vmatpush1.bf16.msra.mxu0 0
        %5199 = vmatprep.subr.bf16.mxu0 0
        %5200 = vmatpush1.bf16.msra.mxu0 0
        %5201 = vmatprep.subr.bf16.mxu0 0
        %5202 = vmatpush1.bf16.msra.mxu0 0
        %5203 = vmatprep.subr.bf16.mxu0 0
        %5204 = vmatpush1.bf16.msra.mxu0 0
        %5205 = vmatprep.subr.bf16.mxu0 0
        %5206 = vmatpush1.bf16.msra.mxu0 0
        %5207 = vmatprep.mubr.bf16.mxu0 0
        %5208 = vmatmul.mubr.bf16.gmra.mrb[0].mxu0 %v5102
        %v5209 = vpop.f32.mrb[0].mxu0
        %v5210 = vadd.f32 %v5125, %v5209
        %v5211 = vpop.f32.mrb[0].mxu0
        %v5212 = vpop.f32.mrb[0].mxu0
        %v5213 = vadd.f32 %v5125, %v5212
        %v5214 = vpop.f32.mrb[0].mxu0
        %5215 = vmatprep.mubr.bf16.mxu0 0
        %5216 = vmatmul.mubr.bf16.gmra.mrb[0].mxu0 %v5103
        %v5217 = vpop.f32.mrb[0].mxu0
        %v5218 = vadd.f32 %v5125, %v5217
        %v5219 = vpop.f32.mrb[0].mxu0
        %v5220 = vpop.f32.mrb[0].mxu0
        %v5221 = vadd.f32 %v5125, %v5220
        %v5222 = vpop.f32.mrb[0].mxu0
        %5223 = vdwg.mxu0
        %v5224 = vadd.f32 %v5210, %v4972
        %v5225 = vadd.f32 %v5213, %v4973
        %v5226 = vadd.f32 %v5218, %v4974
        %v5227 = vadd.f32 %v5221, %v4975
        %v5228 = vld [vmem:[%s1385] sm:$0x1]
        %v5229 = vld [vmem:[%s1393] sm:$0x1]
        %5230 = vadd.xlane.f32.xlu0 %v5224
        %v5231 = vpop.xlane.xlu0 %5230
        %5232 = vadd.xlane.f32.xlu0 %v5225
        %v5233 = vpop.xlane.xlu0 %5232
        %5234 = vadd.xlane.f32.xlu0 %v5226
        %v5235 = vpop.xlane.xlu0 %5234
        %5236 = vadd.xlane.f32.xlu0 %v5227
        %v5237 = vpop.xlane.xlu0 %5236
        %v5238 = vmul.f32 %v5231, %v4919
        %v5239 = vmul.f32 %v5233, %v4919
        %v5240 = vmul.f32 %v5235, %v4919
        %v5241 = vmul.f32 %v5237, %v4919
        %v5242 = vsub.f32 %v5224, %v5238
        %v5243 = vsub.f32 %v5225, %v5239
        %v5244 = vsub.f32 %v5226, %v5240
        %v5245 = vsub.f32 %v5227, %v5241
        %v5246 = vmul.f32 %v5242, %v5242
        %v5247 = vmul.f32 %v5243, %v5243
        %v5248 = vmul.f32 %v5244, %v5244
        %v5249 = vmul.f32 %v5245, %v5245
        %5250 = vadd.xlane.f32.xlu0 %v5246
        %v5251 = vpop.xlane.xlu0 %5250
        %5252 = vadd.xlane.f32.xlu0 %v5247
        %v5253 = vpop.xlane.xlu0 %5252
        %5254 = vadd.xlane.f32.xlu0 %v5248
        %v5255 = vpop.xlane.xlu0 %5254
        %5256 = vadd.xlane.f32.xlu0 %v5249
        %v5257 = vpop.xlane.xlu0 %5256
        %v5258 = vmul.f32 %v5251, %v4919
        %v5259 = vmul.f32 %v5253, %v4919
        %v5260 = vmul.f32 %v5255, %v4919
        %v5261 = vmul.f32 %v5257, %v4919
        %v5262 = vadd.f32 %v5258, 1e-05
        %v5263 = vadd.f32 %v5259, 1e-05
        %v5264 = vadd.f32 %v5260, 1e-05
        %v5265 = vadd.f32 %v5261, 1e-05
        %v5266 = vrsqrt.pop %v5262
        %v5267 = vrsqrt.pop %v5263
        %v5268 = vrsqrt.pop %v5264
        %v5269 = vrsqrt.pop %v5265
        %v5270 = vmul.f32 %v5242, %v5266
        %v5271 = vmul.f32 %v5243, %v5267
        %v5272 = vmul.f32 %v5244, %v5268
        %v5273 = vmul.f32 %v5245, %v5269
        %v5275 = vlaneseq
        %v5276 = vshrl.u32 %v5275, 7
        %v5277 = vsub.s32 0, %v5276
        %v5278 = vrot.slane %v5228, %v5277
        %v5280 = vmul.f32 %v5270, %v5278
        %v5281 = vmul.f32 %v5271, %v5278
        %v5282 = vmul.f32 %v5272, %v5278
        %v5283 = vmul.f32 %v5273, %v5278
        %v5285 = vlaneseq
        %v5286 = vshrl.u32 %v5285, 7
        %v5287 = vsub.s32 0, %v5286
        %v5288 = vrot.slane %v5229, %v5287
        %v5290 = vadd.f32 %v5280, %v5288
        %v5291 = vadd.f32 %v5281, %v5288
        %v5292 = vadd.f32 %v5282, %v5288
        %v5293 = vadd.f32 %v5283, %v5288
        %v5294 = vlaneseq
        %v5295 = vshrl.u32 %v5294, 7
        %v5296 = vadd.s32 %v5295, 8
        %v5297 = vstv %s1622
        %vm5298 = vcmp.lt.s32.totalorder %v5295, %v5297
        %vm5299 = vcmp.lt.s32.totalorder %v5296, %v5297
        %v5300 = vsel %vm5298, 1, 0
        %v5301 = vsel %vm5299, 1, 0
        %v5302 = vcvt.s32.f32 %v5300
        %v5303 = vcvt.s32.f32 %v5301
        %v5304 = vmul.f32 %v5290, %v5302
        %v5305 = vmul.f32 %v5291, %v5303
        %v5306 = vmul.f32 %v5292, %v5302
        %v5307 = vmul.f32 %v5293, %v5303
        %v5308 = vadd.f32 %v5304, %v5305
        %v5309 = vrot.slane %v5308, 4
        %v5310 = vadd.f32 %v5308, %v5309
        %v5311 = vrot.slane %v5310, 2
        %v5312 = vadd.f32 %v5310, %v5311
        %v5313 = vrot.slane %v5312, 1
        %v5314 = vadd.f32 %v5312, %v5313
        %v5315 = vadd.f32 %v5306, %v5307
        %v5316 = vrot.slane %v5315, 4
        %v5317 = vadd.f32 %v5315, %v5316
        %v5318 = vrot.slane %v5317, 2
        %v5319 = vadd.f32 %v5317, %v5318
        %v5320 = vrot.slane %v5319, 1
        %v5321 = vadd.f32 %v5319, %v5320
        %s5322 = scvt.s32.f32 %s1622
        %v5323 = vstv %s5322
        %v5324 = vrcp.pop %v5323
        %v5325 = vmul.f32 %v5314, %v5324
        %v5326 = vmul.f32 %v5321, %v5324
        %vm5329 = vcmask 1041409
        %v5330 = vsel %vm5329, %v5326, %v5325
        %5332 = vst [vmem:[%s1619] sm:$0x3] %v5330
        %p5333 = scmp.lt.s32.totalorder %s70, 1
        %s5334 = scalar_select %p5333, %s70, 1
        %s5335 = smul.addr %s5334, 2
        %s5336 = scalar_lea.vmem %s26, %s5335
        // Predicated region
        $region205: #{video_forward.2} parent=123 // pred_check
          %p5337 = pneg %p774
        $region206: #{video_forward.2} parent=123 // pred_check_branch
          %5339 = sbr.rel (%p5337) target = $region208
        $region207: #{video_forward.2} parent=123 // pred_region
          _
        $region208: #{video_forward.2} parent=123 // pred_fallthru
          _
      $region124: #{video_forward.2} parent=5 // pred_fallthru
        _
      %p5340 = scmp.le.s32.totalorder 2, %s65
      // Predicated region
      $region209: #{video_forward.2} parent=5 // pred_check
        %p5341 = pneg %p5340
      $region210: #{video_forward.2} parent=5 // pred_check_branch
        %5343 = sbr.rel (%p5341) target = $region212
      $region211: #{video_forward.2} parent=5 // pred_region
        %s5344 = ssub.s32 %s65, 2
        // Predicated region
        $region213: #{video_forward.2} parent=211 // pred_check
          %p5345 = pneg %p780
        $region214: #{video_forward.2} parent=211 // pred_check_branch
          %5347 = sbr.rel (%p5345) target = $region216
        $region215: #{video_forward.2} parent=211 // pred_region
          %p5348 = scmp.lt.s32.totalorder %s71, 1
          %s5349 = scalar_select %p5348, %s71, 1
          %s5350 = smul.addr %s5349, 2
          %s5351 = scalar_lea.vmem %s26, %s5350
        $region216: #{video_forward.2} parent=211 // pred_fallthru
          _
      $region212: #{video_forward.2} parent=5 // pred_fallthru
        _
    $region6: #{video_forward.2} parent=1 // loop_footer
      %s69 = sadd.s32 1, %s65
    $region7: #{video_forward.2} parent=1 // loop_footer_branch
      %64 = sbr.rel target = $region3
    $region8: #{video_forward.2} parent=1 // loop_exit
      _
    %5352 = vsyncpa [#allocation3], 1
    %s5353 = scalar_lea.sflag [#allocation3], 1
    %5354 = vsyncpa %s5353, 1
    %5355 = vsyncpa [#allocation5], 1
    %s5356 = scalar_lea.sflag [#allocation5], 1
    %5357 = vsyncpa %s5356, 1
    %5358 = vsyncpa [#allocation8], 1
    %s5359 = scalar_lea.sflag [#allocation8], 1
    %5360 = vsyncpa %s5359, 1
    %5361 = vsyncpa [#allocation11], 1
    %s5362 = scalar_lea.sflag [#allocation11], 1
    %5363 = vsyncpa %s5362, 1
    %5364 = vsyncpa [#allocation14], 1
    %s5365 = scalar_lea.sflag [#allocation14], 1
    %5366 = vsyncpa %s5365, 1
    %5367 = vsyncpa [#allocation17], 1
    %s5368 = scalar_lea.sflag [#allocation17], 1
    %5369 = vsyncpa %s5368, 1
    %5370 = vsyncpa [#allocation20], 1
    %s5371 = scalar_lea.sflag [#allocation20], 1
    %5372 = vsyncpa %s5371, 1
    %5373 = vsyncpa [#allocation23], 1
    %s5374 = scalar_lea.sflag [#allocation23], 1
    %5375 = vsyncpa %s5374, 1
    %5376 = vsyncpa [#allocation26], 1
    %s5377 = scalar_lea.sflag [#allocation26], 1
    %5378 = vsyncpa %s5377, 1
    %5379 = vsyncpa [#allocation29], 1
    %s5380 = scalar_lea.sflag [#allocation29], 1
    %5381 = vsyncpa %s5380, 1
    %5382 = vsyncpa [#allocation32], 1
    %s5383 = scalar_lea.sflag [#allocation32], 1
    %5384 = vsyncpa %s5383, 1

</llo_original>
